<compile_context>
chip_gen: v6e
topology: v6e:2x2x1
jax: 0.10.0
libtpu: 0.0.40
codegen_flags: <defaults>
</compile_context>

<pallas_src>
import functools

import jax
import jax.numpy as jnp
from jax.experimental import pallas as pl
from jax.experimental.pallas import tpu as pltpu

EPS = 1e-5
EXPANSION = 4

# Rows (pixels) per tile for the 1x1-conv / elementwise kernels.
# 512 is safe for v7x's 64 MiB VMEM; v6e (128 MiB) can go 1024-2048.
_TM_TARGET = 512


def _pick_tile(m, target=_TM_TARGET):
    if m <= target:
        return m
    t = (target // 8) * 8
    while t >= 8:
        if m % t == 0:
            return t
        t -= 8
    return m  # fall back to a single whole-array block


def _mosaic_params():
    return pltpu.CompilerParams(
        dimension_semantics=("parallel",),
        vmem_limit_bytes=64 * 1024 * 1024,
    )


# ---------------------------------------------------------------------------
# Kernels
# ---------------------------------------------------------------------------
def _emit_stats(y, stats_ref):
    # Per-tile partial BatchNorm statistics: (1, 2, C) = [sum, sum of squares].
    s1 = jnp.sum(y, axis=0, keepdims=True)
    s2 = jnp.sum(y * y, axis=0, keepdims=True)
    stats_ref[...] = jnp.concatenate([s1, s2], axis=0)[None]


def _mm_stats_kernel(x_ref, w_ref, y_ref, stats_ref):
    # (TM, K) @ (K, Cout) with bf16 inputs, f32 accumulation, + partial BN stats.
    y = jnp.dot(x_ref[...].astype(jnp.bfloat16), w_ref[...],
                preferred_element_type=jnp.float32)
    y_ref[...] = y
    _emit_stats(y, stats_ref)


def _bn_mm_stats_kernel(x_ref, scale_ref, shift_ref, w_ref, y_ref, stats_ref):
    # Fuses the previous stage's BatchNorm (scale/shift) + ReLU into this matmul.
    a = jnp.maximum(x_ref[...] * scale_ref[...] + shift_ref[...], 0.0)
    y = jnp.dot(a.astype(jnp.bfloat16), w_ref[...],
                preferred_element_type=jnp.float32)
    y_ref[...] = y
    _emit_stats(y, stats_ref)


def _conv3x3_stats_kernel(y1_ref, scale_ref, shift_ref, w2_ref,
                          y2_ref, stats_ref, pad_ref, rows_ref,
                          *, stride, ho, wo):
    # One image per grid step: BN1+ReLU -> zero-pad in VMEM -> 9-tap matmul accum.
    _, h, w, c = y1_ref.shape
    sc = scale_ref[...].reshape(1, 1, c)
    sh = shift_ref[...].reshape(1, 1, c)
    a = jnp.maximum(y1_ref[0] * sc + sh, 0.0)                 # (H, W, C)

    # zero-pad by 1 on H and W (conv2 padding=1), built via concatenation in VMEM
    zc = jnp.zeros((h, 1, c), jnp.float32)
    a = jnp.concatenate([zc, a, zc], axis=1)                  # (H, W+2, C)
    zr = jnp.zeros((1, w + 2, c), jnp.float32)
    pad_ref[...] = jnp.concatenate([zr, a, zr], axis=0)       # (H+2, W+2, C)

    acc = jnp.zeros((ho * wo, c), jnp.float32)
    for kh in range(3):
        if stride != 1:
            # strided row selection for this tap (outer-dim stride)
            rows_ref[...] = pad_ref[pl.ds(kh, ho, stride=stride), :, :]
        for kw in range(3):
            if stride == 1:
                slab = pad_ref[kh:kh + ho, kw:kw + wo, :]
            else:
                slab = rows_ref[:, pl.ds(kw, wo, stride=stride), :]
            acc = acc + jnp.dot(
                slab.reshape(ho * wo, c).astype(jnp.bfloat16),
                w2_ref[kh * 3 + kw],
                preferred_element_type=jnp.float32)

    y2_ref[...] = acc[None]
    _emit_stats(acc, stats_ref)


def _bn_add_relu_kernel(y_ref, scale_ref, shift_ref, r_ref, rscale_ref,
                        rshift_ref, o_ref):
    # BN3 (scale/shift) + BN_shortcut (scale/shift) + residual add + ReLU.
    y = y_ref[...] * scale_ref[...] + shift_ref[...]
    r = r_ref[...] * rscale_ref[...] + rshift_ref[...]
    o_ref[...] = jnp.maximum(y + r, 0.0)


def _bn_add_relu_identity_kernel(y_ref, scale_ref, shift_ref, r_ref, o_ref):
    y = y_ref[...] * scale_ref[...] + shift_ref[...]
    o_ref[...] = jnp.maximum(y + r_ref[...], 0.0)


# ---------------------------------------------------------------------------
# pallas_call wrappers
# ---------------------------------------------------------------------------
def matmul_stats(x2d, w_bf16, scale=None, shift=None):
    """Tiled (M,K)@(K,Cout) matmul + per-tile BN partial stats.

    If scale/shift are given, the input tile is first transformed with
    relu(x*scale + shift) (fusing the previous stage's BatchNorm + ReLU).
    """
    m, k = x2d.shape
    cout = w_bf16.shape[1]
    tm = _pick_tile(m)
    nt = m // tm
    mat_in = pl.BlockSpec((tm, k), lambda i: (i, 0))
    w_spec = pl.BlockSpec((k, cout), lambda i: (0, 0))
    vec_in = pl.BlockSpec((1, k), lambda i: (0, 0))
    y_spec = pl.BlockSpec((tm, cout), lambda i: (i, 0))
    st_spec = pl.BlockSpec((1, 2, cout), lambda i: (i, 0, 0))
    if scale is None:
        kernel, in_specs, args = _mm_stats_kernel, [mat_in, w_spec], (x2d, w_bf16)
    else:
        kernel = _bn_mm_stats_kernel
        in_specs = [mat_in, vec_in, vec_in, w_spec]
        args = (x2d, scale, shift, w_bf16)
    return pl.pallas_call(
        kernel,
        out_shape=(jax.ShapeDtypeStruct((m, cout), jnp.float32),
                   jax.ShapeDtypeStruct((nt, 2, cout), jnp.float32)),
        grid=(nt,),
        in_specs=in_specs,
        out_specs=(y_spec, st_spec),
        compiler_params=_mosaic_params(),
    )(*args)


def conv3x3_stats(y1_nhwc, scale, shift, w2_bf16, stride):
    """3x3 conv (pad=1, stride) with BN(prev)+ReLU fused on the input, + BN stats."""
    n, h, w, c = y1_nhwc.shape
    ho = (h + 2 - 3) // stride + 1
    wo = (w + 2 - 3) // stride + 1
    kernel = functools.partial(_conv3x3_stats_kernel, stride=stride, ho=ho, wo=wo)
    y2, st = pl.pallas_call(
        kernel,
        out_shape=(jax.ShapeDtypeStruct((n, ho * wo, c), jnp.float32),
                   jax.ShapeDtypeStruct((n, 2, c), jnp.float32)),
        grid=(n,),
        in_specs=[pl.BlockSpec((1, h, w, c), lambda i: (i, 0, 0, 0)),
                  pl.BlockSpec((1, c), lambda i: (0, 0)),
                  pl.BlockSpec((1, c), lambda i: (0, 0)),
                  pl.BlockSpec((9, c, c), lambda i: (0, 0, 0))],
        out_specs=(pl.BlockSpec((1, ho * wo, c), lambda i: (i, 0, 0)),
                   pl.BlockSpec((1, 2, c), lambda i: (i, 0, 0))),
        scratch_shapes=[pltpu.VMEM((h + 2, w + 2, c), jnp.float32),
                        pltpu.VMEM((ho, w + 2, c), jnp.float32)],
        compiler_params=_mosaic_params(),
    )(y1_nhwc, scale, shift, w2_bf16)
    return y2.reshape(n * ho * wo, c), st


def bn_add_relu(y3, scale, shift, res, rscale=None, rshift=None):
    """Final fused epilogue: BN3 + (BN_shortcut) + residual add + ReLU, tiled over M."""
    m, cout = y3.shape
    tm = _pick_tile(m)
    nt = m // tm
    mat = pl.BlockSpec((tm, cout), lambda i: (i, 0))
    vec = pl.BlockSpec((1, cout), lambda i: (0, 0))
    if rscale is None:
        kernel, in_specs, args = (_bn_add_relu_identity_kernel,
                                  [mat, vec, vec, mat],
                                  (y3, scale, shift, res))
    else:
        kernel, in_specs, args = (_bn_add_relu_kernel,
                                  [mat, vec, vec, mat, vec, vec],
                                  (y3, scale, shift, res, rscale, rshift))
    return pl.pallas_call(
        kernel,
        out_shape=jax.ShapeDtypeStruct((m, cout), jnp.float32),
        grid=(nt,),
        in_specs=in_specs,
        out_specs=mat,
        compiler_params=_mosaic_params(),
    )(*args)


# ---------------------------------------------------------------------------
# Host glue: stats -> scale/shift, params, forward
# ---------------------------------------------------------------------------
def _bn_scale_shift(stats, count, gamma, beta):
    # stats: (T, 2, C) partial sums -> biased batch mean/var -> per-channel FMA.
    s = jnp.sum(stats, axis=0)                 # (2, C)
    mean = s[0:1] / count                      # (1, C)
    var = s[1:2] / count - mean * mean         # (1, C), biased (training-mode BN)
    scale = gamma * jax.lax.rsqrt(var + EPS)
    shift = beta - mean * scale
    return scale, shift


def init_params(key, in_channels, channels, stride):
    out_channels = channels * EXPANSION
    k1, k2, k3, k4 = jax.random.split(key, 4)

    def kinit(k, shape, fan_in):
        bound = 1.0 / float(fan_in) ** 0.5
        return jax.random.uniform(k, shape, jnp.float32, -bound, bound)

    params = {
        "w1": kinit(k1, (in_channels, channels), in_channels),          # 1x1 (Cin, C)
        "w2": kinit(k2, (3, 3, channels, channels), 9 * channels),      # 3x3 HWIO
        "w3": kinit(k3, (channels, out_channels), channels),            # 1x1 (C, 4C)
        "bn1_g": jnp.ones((1, channels), jnp.float32),
        "bn1_b": jnp.zeros((1, channels), jnp.float32),
        "bn2_g": jnp.ones((1, channels), jnp.float32),
        "bn2_b": jnp.zeros((1, channels), jnp.float32),
        "bn3_g": jnp.ones((1, out_channels), jnp.float32),
        "bn3_b": jnp.zeros((1, out_channels), jnp.float32),
    }
    if stride != 1 or in_channels != out_channels:
        params["ws"] = kinit(k4, (in_channels, out_channels), in_channels)
        params["bns_g"] = jnp.ones((1, out_channels), jnp.float32)
        params["bns_b"] = jnp.zeros((1, out_channels), jnp.float32)
    return params


@functools.partial(jax.jit, static_argnames=("stride",))
def bottleneck_forward(params, x_nchw, stride):
    x = jnp.transpose(x_nchw, (0, 2, 3, 1)).astype(jnp.float32)   # NHWC
    nb, h, w, cin = x.shape
    c = params["w1"].shape[1]
    cout = params["w3"].shape[1]
    ho = (h + 2 - 3) // stride + 1
    wo = (w + 2 - 3) // stride + 1
    m1, m2 = nb * h * w, nb * ho * wo

    w1 = params["w1"].astype(jnp.bfloat16)
    w2 = params["w2"].reshape(9, c, c).astype(jnp.bfloat16)
    w3 = params["w3"].astype(jnp.bfloat16)

    # stage 1: conv1 (1x1) + batch statistics
    x2d = x.reshape(m1, cin)
    y1, st1 = matmul_stats(x2d, w1)
    sc1, sh1 = _bn_scale_shift(st1, m1, params["bn1_g"], params["bn1_b"])

    # stage 2: fused BN1+ReLU -> 3x3 conv (pad=1, stride) + batch statistics
    y2, st2 = conv3x3_stats(y1.reshape(nb, h, w, c), sc1, sh1, w2, stride)
    sc2, sh2 = _bn_scale_shift(st2, m2, params["bn2_g"], params["bn2_b"])

    # stage 3: fused BN2+ReLU -> conv3 (1x1) + batch statistics
    y3, st3 = matmul_stats(y2, w3, sc2, sh2)
    sc3, sh3 = _bn_scale_shift(st3, m2, params["bn3_g"], params["bn3_b"])

    # shortcut path + final fused BN3 + residual add + ReLU
    if "ws" in params:
        # TODO(synk): fold the shortcut's spatial subsample into the BlockSpec
        # index_map instead of materializing the strided slice in HBM first.
        xs = x[:, ::stride, ::stride, :].reshape(m2, cin)
        ys, sts = matmul_stats(xs, params["ws"].astype(jnp.bfloat16))
        scs, shs = _bn_scale_shift(sts, m2, params["bns_g"], params["bns_b"])
        out = bn_add_relu(y3, sc3, sh3, ys, scs, shs)
    else:
        out = bn_add_relu(y3, sc3, sh3, x2d)

    return jnp.transpose(out.reshape(nb, ho, wo, cout), (0, 3, 1, 2))  # NCHW


# ---------------------------------------------------------------------------
# Pure-JAX reference (lax.conv, f32 HIGHEST) for the correctness check
# ---------------------------------------------------------------------------
def _ref_forward(params, x_nchw, stride):
    x = jnp.transpose(x_nchw, (0, 2, 3, 1)).astype(jnp.float32)

    def conv(v, w_hwio, strides, padding):
        return jax.lax.conv_general_dilated(
            v, w_hwio, strides, padding,
            dimension_numbers=("NHWC", "HWIO", "NHWC"),
            precision=jax.lax.Precision.HIGHEST)

    def bn(y, g, b):
        mean = jnp.mean(y, axis=(0, 1, 2), keepdims=True)
        var = jnp.mean(jnp.square(y - mean), axis=(0, 1, 2), keepdims=True)
        return ((y - mean) * jax.lax.rsqrt(var + EPS) * g.reshape(1, 1, 1, -1)
                + b.reshape(1, 1, 1, -1))

    cin = x.shape[-1]
    c = params["w1"].shape[1]
    out = jnp.maximum(bn(conv(x, params["w1"].reshape(1, 1, cin, c), (1, 1), "VALID"),
                         params["bn1_g"], params["bn1_b"]), 0.0)
    out = jnp.maximum(bn(conv(out, params["w2"], (stride, stride), ((1, 1), (1, 1))),
                         params["bn2_g"], params["bn2_b"]), 0.0)
    out = bn(conv(out, params["w3"].reshape(1, 1, c, -1), (1, 1), "VALID"),
             params["bn3_g"], params["bn3_b"])
    if "ws" in params:
        res = bn(conv(x, params["ws"].reshape(1, 1, cin, -1), (stride, stride), "VALID"),
                 params["bns_g"], params["bns_b"])
    else:
        res = x
    out = jnp.maximum(out + res, 0.0)
    return jnp.transpose(out, (0, 3, 1, 2))


if __name__ == "__main__":
    key = jax.random.PRNGKey(0)
    batch, spatial = 2, 16
    configs = [
        (4, 4, 1),    # projection shortcut (channel expansion), stride 1
        (4, 4, 2),    # projection shortcut, stride 2 (strided 3x3 path)
        (16, 4, 1),   # identity shortcut (cin == channels*expansion)
    ]
    for idx, (in_channels, channels, stride) in enumerate(configs):
        kx, kp = jax.random.split(jax.random.fold_in(key, idx))
        x = jax.random.normal(kx, (batch, in_channels, spatial, spatial), jnp.float32)
        params = init_params(kp, in_channels, channels, stride)

        out = jax.block_until_ready(bottleneck_forward(params, x, stride=stride))
        ref = jax.block_until_ready(_ref_forward(params, x, stride))

        assert out.shape == (batch, channels * EXPANSION,
                             spatial // stride, spatial // stride), out.shape
        err = jnp.max(jnp.abs(out - ref))
        assert jnp.allclose(out, ref, atol=5e-2, rtol=5e-2), \
            f"mismatch (cin={in_channels}, stride={stride}): max abs err {err}"

    print("KERNEL_OK")
</pallas_src>

<mosaic_0001>
module attributes {stable_mosaic.version = 11 : i64} {
  func.func @_mm_stats_kernel(%arg0: i32, %arg1: memref<512x4xf32, #tpu.memory_space<vmem>>, %arg2: memref<4x4xbf16, #tpu.memory_space<vmem>>, %arg3: memref<512x4xf32, #tpu.memory_space<vmem>>, %arg4: memref<1x2x4xf32, #tpu.memory_space<vmem>>) attributes {dimension_semantics = [#tpu.dimension_semantics<parallel>], iteration_bounds = array<i64: 1>, scalar_prefetch = 0 : i64, scratch_operands = 0 : i64, tpu.core_type = #tpu.core_type<tc>, window_params = [{transform_indices = @transform_0, window_bounds = array<i64: 512, 4>}, {pipeline_mode = #tpu.pipeline_mode<synchronous>, transform_indices = @transform_1, window_bounds = array<i64: 4, 4>}, {transform_indices = @transform_2, window_bounds = array<i64: 512, 4>}, {transform_indices = @transform_3, window_bounds = array<i64: 1, 2, 4>}]} {
    %c0 = arith.constant 0 : index
    %c0_0 = arith.constant 0 : index
    %0 = vector.load %arg1[%c0, %c0_0] : memref<512x4xf32, #tpu.memory_space<vmem>>, vector<512x4xf32>
    %1 = arith.truncf %0 : vector<512x4xf32> to vector<512x4xbf16>
    %c0_1 = arith.constant 0 : index
    %c0_2 = arith.constant 0 : index
    %2 = vector.load %arg2[%c0_1, %c0_2] : memref<4x4xbf16, #tpu.memory_space<vmem>>, vector<4x4xbf16>
    %cst = arith.constant dense<0.000000e+00> : vector<512x4xf32>
    %3 = tpu.matmul %1, %2, %cst {dimension_numbers = #tpu.dot_dimension_numbers<[1], [0], [0], [1], [0, 0, 1, 1], [], []>} : vector<512x4xbf16>, vector<4x4xbf16>, vector<512x4xf32> -> vector<512x4xf32>
    %c0_3 = arith.constant 0 : index
    %c0_4 = arith.constant 0 : index
    %4 = vector.load %arg3[%c0_3, %c0_4] : memref<512x4xf32, #tpu.memory_space<vmem>>, vector<512x4xf32>
    tpu.vector_store %arg3[%c0_3, %c0_4], %3 {strides = array<i32>} : memref<512x4xf32, #tpu.memory_space<vmem>>, vector<512x4xf32>,
    %cst_5 = arith.constant dense<0.000000e+00> : vector<4xf32>
    %5 = vector.multi_reduction <add>, %3, %cst_5 [0] : vector<512x4xf32> to vector<4xf32>
    %6 = vector.shape_cast %5 : vector<4xf32> to vector<1x4xf32>
    %7 = arith.mulf %3, %3 : vector<512x4xf32>
    %cst_6 = arith.constant dense<0.000000e+00> : vector<4xf32>
    %8 = vector.multi_reduction <add>, %7, %cst_6 [0] : vector<512x4xf32> to vector<4xf32>
    %9 = vector.shape_cast %8 : vector<4xf32> to vector<1x4xf32>
    %10 = tpu.concatenate %6, %9 in 0 : vector<1x4xf32>, vector<1x4xf32> -> vector<2x4xf32>
    %11 = vector.shape_cast %10 : vector<2x4xf32> to vector<1x2x4xf32>
    %c0_7 = arith.constant 0 : index
    %c0_8 = arith.constant 0 : index
    %c0_9 = arith.constant 0 : index
    %12 = vector.load %arg4[%c0_7, %c0_8, %c0_9] : memref<1x2x4xf32, #tpu.memory_space<vmem>>, vector<1x2x4xf32>
    tpu.vector_store %arg4[%c0_7, %c0_8, %c0_9], %11 {strides = array<i32>} : memref<1x2x4xf32, #tpu.memory_space<vmem>>, vector<1x2x4xf32>,
    return
  }
  func.func @transform_0(%arg0: i32) -> (i32, i32) {
    %c0_i32 = arith.constant 0 : i32
    %c0_i32_0 = arith.constant 0 : i32
    return %arg0, %c0_i32 : i32, i32
  }
  func.func @transform_1(%arg0: i32) -> (i32, i32) {
    %c0_i32 = arith.constant 0 : i32
    %c0_i32_0 = arith.constant 0 : i32
    %c0_i32_1 = arith.constant 0 : i32
    return %c0_i32, %c0_i32_0 : i32, i32
  }
  func.func @transform_2(%arg0: i32) -> (i32, i32) {
    %c0_i32 = arith.constant 0 : i32
    %c0_i32_0 = arith.constant 0 : i32
    return %arg0, %c0_i32 : i32, i32
  }
  func.func @transform_3(%arg0: i32) -> (i32, i32, i32) {
    %c0_i32 = arith.constant 0 : i32
    %c0_i32_0 = arith.constant 0 : i32
    %c0_i32_1 = arith.constant 0 : i32
    return %arg0, %c0_i32, %c0_i32_0 : i32, i32, i32
  }
}

module attributes {stable_mosaic.version = 11 : i64} {
  func.func @_conv3x3_stats_kernel(%arg0: i32, %arg1: memref<1x16x16x4xf32, #tpu.memory_space<vmem>>, %arg2: memref<1x4xf32, #tpu.memory_space<vmem>>, %arg3: memref<1x4xf32, #tpu.memory_space<vmem>>, %arg4: memref<9x4x4xbf16, #tpu.memory_space<vmem>>, %arg5: memref<1x256x4xf32, #tpu.memory_space<vmem>>, %arg6: memref<1x2x4xf32, #tpu.memory_space<vmem>>, %arg7: memref<18x18x4xf32, #tpu.memory_space<vmem>>, %arg8: memref<16x18x4xf32, #tpu.memory_space<vmem>>) attributes {dimension_semantics = [#tpu.dimension_semantics<parallel>], iteration_bounds = array<i64: 2>, scalar_prefetch = 0 : i64, scratch_operands = 2 : i64, tpu.core_type = #tpu.core_type<tc>, window_params = [{transform_indices = @transform_0, window_bounds = array<i64: 1, 16, 16, 4>}, {pipeline_mode = #tpu.pipeline_mode<synchronous>, transform_indices = @transform_1, window_bounds = array<i64: 1, 4>}, {pipeline_mode = #tpu.pipeline_mode<synchronous>, transform_indices = @transform_2, window_bounds = array<i64: 1, 4>}, {pipeline_mode = #tpu.pipeline_mode<synchronous>, transform_indices = @transform_3, window_bounds = array<i64: 9, 4, 4>}, {transform_indices = @transform_4, window_bounds = array<i64: 1, 256, 4>}, {transform_indices = @transform_5, window_bounds = array<i64: 1, 2, 4>}]} {
    %c0 = arith.constant 0 : index
    %c0_0 = arith.constant 0 : index
    %0 = vector.load %arg2[%c0, %c0_0] : memref<1x4xf32, #tpu.memory_space<vmem>>, vector<1x4xf32>
    %1 = vector.shape_cast %0 : vector<1x4xf32> to vector<1x1x4xf32>
    %c0_1 = arith.constant 0 : index
    %c0_2 = arith.constant 0 : index
    %2 = vector.load %arg3[%c0_1, %c0_2] : memref<1x4xf32, #tpu.memory_space<vmem>>, vector<1x4xf32>
    %3 = vector.shape_cast %2 : vector<1x4xf32> to vector<1x1x4xf32>
    %c0_3 = arith.constant 0 : index
    %c0_4 = arith.constant 0 : index
    %c0_5 = arith.constant 0 : index
    %c0_6 = arith.constant 0 : index
    %4 = vector.load %arg1[%c0_3, %c0_4, %c0_5, %c0_6] : memref<1x16x16x4xf32, #tpu.memory_space<vmem>>, vector<1x16x16x4xf32>
    %5 = vector.shape_cast %4 : vector<1x16x16x4xf32> to vector<16x16x4xf32>
    %6 = vector.broadcast %1 : vector<1x1x4xf32> to vector<16x16x4xf32>
    %7 = arith.mulf %5, %6 : vector<16x16x4xf32>
    %8 = vector.broadcast %3 : vector<1x1x4xf32> to vector<16x16x4xf32>
    %9 = arith.addf %7, %8 : vector<16x16x4xf32>
    %cst = arith.constant 0.000000e+00 : f32
    %10 = vector.broadcast %cst : f32 to vector<16x16x4xf32>
    %11 = arith.maximumf %9, %10 : vector<16x16x4xf32>
    %cst_7 = arith.constant 0.000000e+00 : f32
    %12 = vector.broadcast %cst_7 : f32 to vector<16x1x4xf32>
    %13 = tpu.concatenate %12, %11, %12 in 1 : vector<16x1x4xf32>, vector<16x16x4xf32>, vector<16x1x4xf32> -> vector<16x18x4xf32>
    %cst_8 = arith.constant 0.000000e+00 : f32
    %14 = vector.broadcast %cst_8 : f32 to vector<1x18x4xf32>
    %15 = tpu.concatenate %14, %13, %14 in 0 : vector<1x18x4xf32>, vector<16x18x4xf32>, vector<1x18x4xf32> -> vector<18x18x4xf32>
    %c0_9 = arith.constant 0 : index
    %c0_10 = arith.constant 0 : index
    %c0_11 = arith.constant 0 : index
    %16 = vector.load %arg7[%c0_9, %c0_10, %c0_11] : memref<18x18x4xf32, #tpu.memory_space<vmem>>, vector<18x18x4xf32>
    tpu.vector_store %arg7[%c0_9, %c0_10, %c0_11], %15 {strides = array<i32>} : memref<18x18x4xf32, #tpu.memory_space<vmem>>, vector<18x18x4xf32>,
    %cst_12 = arith.constant 0.000000e+00 : f32
    %17 = vector.broadcast %cst_12 : f32 to vector<256x4xf32>
    %c0_13 = arith.constant 0 : index
    %c0_14 = arith.constant 0 : index
    %c0_15 = arith.constant 0 : index
    %18 = vector.load %arg7[%c0_13, %c0_14, %c0_15] : memref<18x18x4xf32, #tpu.memory_space<vmem>>, vector<16x16x4xf32>
    %19 = vector.shape_cast %18 : vector<16x16x4xf32> to vector<256x4xf32>
    %20 = arith.truncf %19 : vector<256x4xf32> to vector<256x4xbf16>
    %c0_16 = arith.constant 0 : index
    %c0_17 = arith.constant 0 : index
    %c0_18 = arith.constant 0 : index
    %21 = vector.load %arg4[%c0_16, %c0_17, %c0_18] : memref<9x4x4xbf16, #tpu.memory_space<vmem>>, vector<1x4x4xbf16>
    %22 = vector.shape_cast %21 : vector<1x4x4xbf16> to vector<4x4xbf16>
    %cst_19 = arith.constant dense<0.000000e+00> : vector<256x4xf32>
    %23 = tpu.matmul %20, %22, %cst_19 {dimension_numbers = #tpu.dot_dimension_numbers<[1], [0], [0], [1], [0, 0, 1, 1], [], []>} : vector<256x4xbf16>, vector<4x4xbf16>, vector<256x4xf32> -> vector<256x4xf32>
    %24 = arith.addf %17, %23 : vector<256x4xf32>
    %c0_20 = arith.constant 0 : index
    %c1 = arith.constant 1 : index
    %c0_21 = arith.constant 0 : index
    %25 = vector.load %arg7[%c0_20, %c1, %c0_21] : memref<18x18x4xf32, #tpu.memory_space<vmem>>, vector<16x16x4xf32>
    %26 = vector.shape_cast %25 : vector<16x16x4xf32> to vector<256x4xf32>
    %27 = arith.truncf %26 : vector<256x4xf32> to vector<256x4xbf16>
    %c1_22 = arith.constant 1 : index
    %c0_23 = arith.constant 0 : index
    %c0_24 = arith.constant 0 : index
    %28 = vector.load %arg4[%c1_22, %c0_23, %c0_24] : memref<9x4x4xbf16, #tpu.memory_space<vmem>>, vector<1x4x4xbf16>
    %29 = vector.shape_cast %28 : vector<1x4x4xbf16> to vector<4x4xbf16>
    %cst_25 = arith.constant dense<0.000000e+00> : vector<256x4xf32>
    %30 = tpu.matmul %27, %29, %cst_25 {dimension_numbers = #tpu.dot_dimension_numbers<[1], [0], [0], [1], [0, 0, 1, 1], [], []>} : vector<256x4xbf16>, vector<4x4xbf16>, vector<256x4xf32> -> vector<256x4xf32>
    %31 = arith.addf %24, %30 : vector<256x4xf32>
    %c0_26 = arith.constant 0 : index
    %c2 = arith.constant 2 : index
    %c0_27 = arith.constant 0 : index
    %32 = vector.load %arg7[%c0_26, %c2, %c0_27] : memref<18x18x4xf32, #tpu.memory_space<vmem>>, vector<16x16x4xf32>
    %33 = vector.shape_cast %32 : vector<16x16x4xf32> to vector<256x4xf32>
    %34 = arith.truncf %33 : vector<256x4xf32> to vector<256x4xbf16>
    %c2_28 = arith.constant 2 : index
    %c0_29 = arith.constant 0 : index
    %c0_30 = arith.constant 0 : index
    %35 = vector.load %arg4[%c2_28, %c0_29, %c0_30] : memref<9x4x4xbf16, #tpu.memory_space<vmem>>, vector<1x4x4xbf16>
    %36 = vector.shape_cast %35 : vector<1x4x4xbf16> to vector<4x4xbf16>
    %cst_31 = arith.constant dense<0.000000e+00> : vector<256x4xf32>
    %37 = tpu.matmul %34, %36, %cst_31 {dimension_numbers = #tpu.dot_dimension_numbers<[1], [0], [0], [1], [0, 0, 1, 1], [], []>} : vector<256x4xbf16>, vector<4x4xbf16>, vector<256x4xf32> -> vector<256x4xf32>
    %38 = arith.addf %31, %37 : vector<256x4xf32>
    %c1_32 = arith.constant 1 : index
    %c0_33 = arith.constant 0 : index
    %c0_34 = arith.constant 0 : index
    %39 = vector.load %arg7[%c1_32, %c0_33, %c0_34] : memref<18x18x4xf32, #tpu.memory_space<vmem>>, vector<16x16x4xf32>
    %40 = vector.shape_cast %39 : vector<16x16x4xf32> to vector<256x4xf32>
    %41 = arith.truncf %40 : vector<256x4xf32> to vector<256x4xbf16>
    %c3 = arith.constant 3 : index
    %c0_35 = arith.constant 0 : index
    %c0_36 = arith.constant 0 : index
    %42 = vector.load %arg4[%c3, %c0_35, %c0_36] : memref<9x4x4xbf16, #tpu.memory_space<vmem>>, vector<1x4x4xbf16>
    %43 = vector.shape_cast %42 : vector<1x4x4xbf16> to vector<4x4xbf16>
    %cst_37 = arith.constant dense<0.000000e+00> : vector<256x4xf32>
    %44 = tpu.matmul %41, %43, %cst_37 {dimension_numbers = #tpu.dot_dimension_numbers<[1], [0], [0], [1], [0, 0, 1, 1], [], []>} : vector<256x4xbf16>, vector<4x4xbf16>, vector<256x4xf32> -> vector<256x4xf32>
    %45 = arith.addf %38, %44 : vector<256x4xf32>
    %c1_38 = arith.constant 1 : index
    %c1_39 = arith.constant 1 : index
    %c0_40 = arith.constant 0 : index
    %46 = vector.load %arg7[%c1_38, %c1_39, %c0_40] : memref<18x18x4xf32, #tpu.memory_space<vmem>>, vector<16x16x4xf32>
    %47 = vector.shape_cast %46 : vector<16x16x4xf32> to vector<256x4xf32>
    %48 = arith.truncf %47 : vector<256x4xf32> to vector<256x4xbf16>
    %c4 = arith.constant 4 : index
    %c0_41 = arith.constant 0 : index
    %c0_42 = arith.constant 0 : index
    %49 = vector.load %arg4[%c4, %c0_41, %c0_42] : memref<9x4x4xbf16, #tpu.memory_space<vmem>>, vector<1x4x4xbf16>
    %50 = vector.shape_cast %49 : vector<1x4x4xbf16> to vector<4x4xbf16>
    %cst_43 = arith.constant dense<0.000000e+00> : vector<256x4xf32>
    %51 = tpu.matmul %48, %50, %cst_43 {dimension_numbers = #tpu.dot_dimension_numbers<[1], [0], [0], [1], [0, 0, 1, 1], [], []>} : vector<256x4xbf16>, vector<4x4xbf16>, vector<256x4xf32> -> vector<256x4xf32>
    %52 = arith.addf %45, %51 : vector<256x4xf32>
    %c1_44 = arith.constant 1 : index
    %c2_45 = arith.constant 2 : index
    %c0_46 = arith.constant 0 : index
    %53 = vector.load %arg7[%c1_44, %c2_45, %c0_46] : memref<18x18x4xf32, #tpu.memory_space<vmem>>, vector<16x16x4xf32>
    %54 = vector.shape_cast %53 : vector<16x16x4xf32> to vector<256x4xf32>
    %55 = arith.truncf %54 : vector<256x4xf32> to vector<256x4xbf16>
    %c5 = arith.constant 5 : index
    %c0_47 = arith.constant 0 : index
    %c0_48 = arith.constant 0 : index
    %56 = vector.load %arg4[%c5, %c0_47, %c0_48] : memref<9x4x4xbf16, #tpu.memory_space<vmem>>, vector<1x4x4xbf16>
    %57 = vector.shape_cast %56 : vector<1x4x4xbf16> to vector<4x4xbf16>
    %cst_49 = arith.constant dense<0.000000e+00> : vector<256x4xf32>
    %58 = tpu.matmul %55, %57, %cst_49 {dimension_numbers = #tpu.dot_dimension_numbers<[1], [0], [0], [1], [0, 0, 1, 1], [], []>} : vector<256x4xbf16>, vector<4x4xbf16>, vector<256x4xf32> -> vector<256x4xf32>
    %59 = arith.addf %52, %58 : vector<256x4xf32>
    %c2_50 = arith.constant 2 : index
    %c0_51 = arith.constant 0 : index
    %c0_52 = arith.constant 0 : index
    %60 = vector.load %arg7[%c2_50, %c0_51, %c0_52] : memref<18x18x4xf32, #tpu.memory_space<vmem>>, vector<16x16x4xf32>
    %61 = vector.shape_cast %60 : vector<16x16x4xf32> to vector<256x4xf32>
    %62 = arith.truncf %61 : vector<256x4xf32> to vector<256x4xbf16>
    %c6 = arith.constant 6 : index
    %c0_53 = arith.constant 0 : index
    %c0_54 = arith.constant 0 : index
    %63 = vector.load %arg4[%c6, %c0_53, %c0_54] : memref<9x4x4xbf16, #tpu.memory_space<vmem>>, vector<1x4x4xbf16>
    %64 = vector.shape_cast %63 : vector<1x4x4xbf16> to vector<4x4xbf16>
    %cst_55 = arith.constant dense<0.000000e+00> : vector<256x4xf32>
    %65 = tpu.matmul %62, %64, %cst_55 {dimension_numbers = #tpu.dot_dimension_numbers<[1], [0], [0], [1], [0, 0, 1, 1], [], []>} : vector<256x4xbf16>, vector<4x4xbf16>, vector<256x4xf32> -> vector<256x4xf32>
    %66 = arith.addf %59, %65 : vector<256x4xf32>
    %c2_56 = arith.constant 2 : index
    %c1_57 = arith.constant 1 : index
    %c0_58 = arith.constant 0 : index
    %67 = vector.load %arg7[%c2_56, %c1_57, %c0_58] : memref<18x18x4xf32, #tpu.memory_space<vmem>>, vector<16x16x4xf32>
    %68 = vector.shape_cast %67 : vector<16x16x4xf32> to vector<256x4xf32>
    %69 = arith.truncf %68 : vector<256x4xf32> to vector<256x4xbf16>
    %c7 = arith.constant 7 : index
    %c0_59 = arith.constant 0 : index
    %c0_60 = arith.constant 0 : index
    %70 = vector.load %arg4[%c7, %c0_59, %c0_60] : memref<9x4x4xbf16, #tpu.memory_space<vmem>>, vector<1x4x4xbf16>
    %71 = vector.shape_cast %70 : vector<1x4x4xbf16> to vector<4x4xbf16>
    %cst_61 = arith.constant dense<0.000000e+00> : vector<256x4xf32>
    %72 = tpu.matmul %69, %71, %cst_61 {dimension_numbers = #tpu.dot_dimension_numbers<[1], [0], [0], [1], [0, 0, 1, 1], [], []>} : vector<256x4xbf16>, vector<4x4xbf16>, vector<256x4xf32> -> vector<256x4xf32>
    %73 = arith.addf %66, %72 : vector<256x4xf32>
    %c2_62 = arith.constant 2 : index
    %c2_63 = arith.constant 2 : index
    %c0_64 = arith.constant 0 : index
    %74 = vector.load %arg7[%c2_62, %c2_63, %c0_64] : memref<18x18x4xf32, #tpu.memory_space<vmem>>, vector<16x16x4xf32>
    %75 = vector.shape_cast %74 : vector<16x16x4xf32> to vector<256x4xf32>
    %76 = arith.truncf %75 : vector<256x4xf32> to vector<256x4xbf16>
    %c8 = arith.constant 8 : index
    %c0_65 = arith.constant 0 : index
    %c0_66 = arith.constant 0 : index
    %77 = vector.load %arg4[%c8, %c0_65, %c0_66] : memref<9x4x4xbf16, #tpu.memory_space<vmem>>, vector<1x4x4xbf16>
    %78 = vector.shape_cast %77 : vector<1x4x4xbf16> to vector<4x4xbf16>
    %cst_67 = arith.constant dense<0.000000e+00> : vector<256x4xf32>
    %79 = tpu.matmul %76, %78, %cst_67 {dimension_numbers = #tpu.dot_dimension_numbers<[1], [0], [0], [1], [0, 0, 1, 1], [], []>} : vector<256x4xbf16>, vector<4x4xbf16>, vector<256x4xf32> -> vector<256x4xf32>
    %80 = arith.addf %73, %79 : vector<256x4xf32>
    %81 = vector.shape_cast %80 : vector<256x4xf32> to vector<1x256x4xf32>
    %c0_68 = arith.constant 0 : index
    %c0_69 = arith.constant 0 : index
    %c0_70 = arith.constant 0 : index
    %82 = vector.load %arg5[%c0_68, %c0_69, %c0_70] : memref<1x256x4xf32, #tpu.memory_space<vmem>>, vector<1x256x4xf32>
    tpu.vector_store %arg5[%c0_68, %c0_69, %c0_70], %81 {strides = array<i32>} : memref<1x256x4xf32, #tpu.memory_space<vmem>>, vector<1x256x4xf32>,
    %cst_71 = arith.constant dense<0.000000e+00> : vector<4xf32>
    %83 = vector.multi_reduction <add>, %80, %cst_71 [0] : vector<256x4xf32> to vector<4xf32>
    %84 = vector.shape_cast %83 : vector<4xf32> to vector<1x4xf32>
    %85 = arith.mulf %80, %80 : vector<256x4xf32>
    %cst_72 = arith.constant dense<0.000000e+00> : vector<4xf32>
    %86 = vector.multi_reduction <add>, %85, %cst_72 [0] : vector<256x4xf32> to vector<4xf32>
    %87 = vector.shape_cast %86 : vector<4xf32> to vector<1x4xf32>
    %88 = tpu.concatenate %84, %87 in 0 : vector<1x4xf32>, vector<1x4xf32> -> vector<2x4xf32>
    %89 = vector.shape_cast %88 : vector<2x4xf32> to vector<1x2x4xf32>
    %c0_73 = arith.constant 0 : index
    %c0_74 = arith.constant 0 : index
    %c0_75 = arith.constant 0 : index
    %90 = vector.load %arg6[%c0_73, %c0_74, %c0_75] : memref<1x2x4xf32, #tpu.memory_space<vmem>>, vector<1x2x4xf32>
    tpu.vector_store %arg6[%c0_73, %c0_74, %c0_75], %89 {strides = array<i32>} : memref<1x2x4xf32, #tpu.memory_space<vmem>>, vector<1x2x4xf32>,
    return
  }
  func.func @transform_0(%arg0: i32) -> (i32, i32, i32, i32) {
    %c0_i32 = arith.constant 0 : i32
    %c0_i32_0 = arith.constant 0 : i32
    %c0_i32_1 = arith.constant 0 : i32
    %c0_i32_2 = arith.constant 0 : i32
    return %arg0, %c0_i32, %c0_i32_0, %c0_i32_1 : i32, i32, i32, i32
  }
  func.func @transform_1(%arg0: i32) -> (i32, i32) {
    %c0_i32 = arith.constant 0 : i32
    %c0_i32_0 = arith.constant 0 : i32
    %c0_i32_1 = arith.constant 0 : i32
    return %c0_i32, %c0_i32_0 : i32, i32
  }
  func.func @transform_2(%arg0: i32) -> (i32, i32) {
    %c0_i32 = arith.constant 0 : i32
    %c0_i32_0 = arith.constant 0 : i32
    %c0_i32_1 = arith.constant 0 : i32
    return %c0_i32, %c0_i32_0 : i32, i32
  }
  func.func @transform_3(%arg0: i32) -> (i32, i32, i32) {
    %c0_i32 = arith.constant 0 : i32
    %c0_i32_0 = arith.constant 0 : i32
    %c0_i32_1 = arith.constant 0 : i32
    %c0_i32_2 = arith.constant 0 : i32
    return %c0_i32, %c0_i32_0, %c0_i32_1 : i32, i32, i32
  }
  func.func @transform_4(%arg0: i32) -> (i32, i32, i32) {
    %c0_i32 = arith.constant 0 : i32
    %c0_i32_0 = arith.constant 0 : i32
    %c0_i32_1 = arith.constant 0 : i32
    return %arg0, %c0_i32, %c0_i32_0 : i32, i32, i32
  }
  func.func @transform_5(%arg0: i32) -> (i32, i32, i32) {
    %c0_i32 = arith.constant 0 : i32
    %c0_i32_0 = arith.constant 0 : i32
    %c0_i32_1 = arith.constant 0 : i32
    return %arg0, %c0_i32, %c0_i32_0 : i32, i32, i32
  }
}

module attributes {stable_mosaic.version = 11 : i64} {
  func.func @_mm_stats_kernel(%arg0: i32, %arg1: memref<512x4xf32, #tpu.memory_space<vmem>>, %arg2: memref<4x16xbf16, #tpu.memory_space<vmem>>, %arg3: memref<512x16xf32, #tpu.memory_space<vmem>>, %arg4: memref<1x2x16xf32, #tpu.memory_space<vmem>>) attributes {dimension_semantics = [#tpu.dimension_semantics<parallel>], iteration_bounds = array<i64: 1>, scalar_prefetch = 0 : i64, scratch_operands = 0 : i64, tpu.core_type = #tpu.core_type<tc>, window_params = [{transform_indices = @transform_0, window_bounds = array<i64: 512, 4>}, {pipeline_mode = #tpu.pipeline_mode<synchronous>, transform_indices = @transform_1, window_bounds = array<i64: 4, 16>}, {transform_indices = @transform_2, window_bounds = array<i64: 512, 16>}, {transform_indices = @transform_3, window_bounds = array<i64: 1, 2, 16>}]} {
    %c0 = arith.constant 0 : index
    %c0_0 = arith.constant 0 : index
    %0 = vector.load %arg1[%c0, %c0_0] : memref<512x4xf32, #tpu.memory_space<vmem>>, vector<512x4xf32>
    %1 = arith.truncf %0 : vector<512x4xf32> to vector<512x4xbf16>
    %c0_1 = arith.constant 0 : index
    %c0_2 = arith.constant 0 : index
    %2 = vector.load %arg2[%c0_1, %c0_2] : memref<4x16xbf16, #tpu.memory_space<vmem>>, vector<4x16xbf16>
    %cst = arith.constant dense<0.000000e+00> : vector<512x16xf32>
    %3 = tpu.matmul %1, %2, %cst {dimension_numbers = #tpu.dot_dimension_numbers<[1], [0], [0], [1], [0, 0, 1, 1], [], []>} : vector<512x4xbf16>, vector<4x16xbf16>, vector<512x16xf32> -> vector<512x16xf32>
    %c0_3 = arith.constant 0 : index
    %c0_4 = arith.constant 0 : index
    %4 = vector.load %arg3[%c0_3, %c0_4] : memref<512x16xf32, #tpu.memory_space<vmem>>, vector<512x16xf32>
    tpu.vector_store %arg3[%c0_3, %c0_4], %3 {strides = array<i32>} : memref<512x16xf32, #tpu.memory_space<vmem>>, vector<512x16xf32>,
    %cst_5 = arith.constant dense<0.000000e+00> : vector<16xf32>
    %5 = vector.multi_reduction <add>, %3, %cst_5 [0] : vector<512x16xf32> to vector<16xf32>
    %6 = vector.shape_cast %5 : vector<16xf32> to vector<1x16xf32>
    %7 = arith.mulf %3, %3 : vector<512x16xf32>
    %cst_6 = arith.constant dense<0.000000e+00> : vector<16xf32>
    %8 = vector.multi_reduction <add>, %7, %cst_6 [0] : vector<512x16xf32> to vector<16xf32>
    %9 = vector.shape_cast %8 : vector<16xf32> to vector<1x16xf32>
    %10 = tpu.concatenate %6, %9 in 0 : vector<1x16xf32>, vector<1x16xf32> -> vector<2x16xf32>
    %11 = vector.shape_cast %10 : vector<2x16xf32> to vector<1x2x16xf32>
    %c0_7 = arith.constant 0 : index
    %c0_8 = arith.constant 0 : index
    %c0_9 = arith.constant 0 : index
    %12 = vector.load %arg4[%c0_7, %c0_8, %c0_9] : memref<1x2x16xf32, #tpu.memory_space<vmem>>, vector<1x2x16xf32>
    tpu.vector_store %arg4[%c0_7, %c0_8, %c0_9], %11 {strides = array<i32>} : memref<1x2x16xf32, #tpu.memory_space<vmem>>, vector<1x2x16xf32>,
    return
  }
  func.func @transform_0(%arg0: i32) -> (i32, i32) {
    %c0_i32 = arith.constant 0 : i32
    %c0_i32_0 = arith.constant 0 : i32
    return %arg0, %c0_i32 : i32, i32
  }
  func.func @transform_1(%arg0: i32) -> (i32, i32) {
    %c0_i32 = arith.constant 0 : i32
    %c0_i32_0 = arith.constant 0 : i32
    %c0_i32_1 = arith.constant 0 : i32
    return %c0_i32, %c0_i32_0 : i32, i32
  }
  func.func @transform_2(%arg0: i32) -> (i32, i32) {
    %c0_i32 = arith.constant 0 : i32
    %c0_i32_0 = arith.constant 0 : i32
    return %arg0, %c0_i32 : i32, i32
  }
  func.func @transform_3(%arg0: i32) -> (i32, i32, i32) {
    %c0_i32 = arith.constant 0 : i32
    %c0_i32_0 = arith.constant 0 : i32
    %c0_i32_1 = arith.constant 0 : i32
    return %arg0, %c0_i32, %c0_i32_0 : i32, i32, i32
  }
}

module attributes {stable_mosaic.version = 11 : i64} {
  func.func @_bn_mm_stats_kernel(%arg0: i32, %arg1: memref<512x4xf32, #tpu.memory_space<vmem>>, %arg2: memref<1x4xf32, #tpu.memory_space<vmem>>, %arg3: memref<1x4xf32, #tpu.memory_space<vmem>>, %arg4: memref<4x16xbf16, #tpu.memory_space<vmem>>, %arg5: memref<512x16xf32, #tpu.memory_space<vmem>>, %arg6: memref<1x2x16xf32, #tpu.memory_space<vmem>>) attributes {dimension_semantics = [#tpu.dimension_semantics<parallel>], iteration_bounds = array<i64: 1>, scalar_prefetch = 0 : i64, scratch_operands = 0 : i64, tpu.core_type = #tpu.core_type<tc>, window_params = [{transform_indices = @transform_0, window_bounds = array<i64: 512, 4>}, {pipeline_mode = #tpu.pipeline_mode<synchronous>, transform_indices = @transform_1, window_bounds = array<i64: 1, 4>}, {pipeline_mode = #tpu.pipeline_mode<synchronous>, transform_indices = @transform_2, window_bounds = array<i64: 1, 4>}, {pipeline_mode = #tpu.pipeline_mode<synchronous>, transform_indices = @transform_3, window_bounds = array<i64: 4, 16>}, {transform_indices = @transform_4, window_bounds = array<i64: 512, 16>}, {transform_indices = @transform_5, window_bounds = array<i64: 1, 2, 16>}]} {
    %c0 = arith.constant 0 : index
    %c0_0 = arith.constant 0 : index
    %0 = vector.load %arg1[%c0, %c0_0] : memref<512x4xf32, #tpu.memory_space<vmem>>, vector<512x4xf32>
    %c0_1 = arith.constant 0 : index
    %c0_2 = arith.constant 0 : index
    %1 = vector.load %arg2[%c0_1, %c0_2] : memref<1x4xf32, #tpu.memory_space<vmem>>, vector<1x4xf32>
    %2 = vector.broadcast %1 : vector<1x4xf32> to vector<512x4xf32>
    %3 = arith.mulf %0, %2 : vector<512x4xf32>
    %c0_3 = arith.constant 0 : index
    %c0_4 = arith.constant 0 : index
    %4 = vector.load %arg3[%c0_3, %c0_4] : memref<1x4xf32, #tpu.memory_space<vmem>>, vector<1x4xf32>
    %5 = vector.broadcast %4 : vector<1x4xf32> to vector<512x4xf32>
    %6 = arith.addf %3, %5 : vector<512x4xf32>
    %cst = arith.constant 0.000000e+00 : f32
    %7 = vector.broadcast %cst : f32 to vector<512x4xf32>
    %8 = arith.maximumf %6, %7 : vector<512x4xf32>
    %9 = arith.truncf %8 : vector<512x4xf32> to vector<512x4xbf16>
    %c0_5 = arith.constant 0 : index
    %c0_6 = arith.constant 0 : index
    %10 = vector.load %arg4[%c0_5, %c0_6] : memref<4x16xbf16, #tpu.memory_space<vmem>>, vector<4x16xbf16>
    %cst_7 = arith.constant dense<0.000000e+00> : vector<512x16xf32>
    %11 = tpu.matmul %9, %10, %cst_7 {dimension_numbers = #tpu.dot_dimension_numbers<[1], [0], [0], [1], [0, 0, 1, 1], [], []>} : vector<512x4xbf16>, vector<4x16xbf16>, vector<512x16xf32> -> vector<512x16xf32>
    %c0_8 = arith.constant 0 : index
    %c0_9 = arith.constant 0 : index
    %12 = vector.load %arg5[%c0_8, %c0_9] : memref<512x16xf32, #tpu.memory_space<vmem>>, vector<512x16xf32>
    tpu.vector_store %arg5[%c0_8, %c0_9], %11 {strides = array<i32>} : memref<512x16xf32, #tpu.memory_space<vmem>>, vector<512x16xf32>,
    %cst_10 = arith.constant dense<0.000000e+00> : vector<16xf32>
    %13 = vector.multi_reduction <add>, %11, %cst_10 [0] : vector<512x16xf32> to vector<16xf32>
    %14 = vector.shape_cast %13 : vector<16xf32> to vector<1x16xf32>
    %15 = arith.mulf %11, %11 : vector<512x16xf32>
    %cst_11 = arith.constant dense<0.000000e+00> : vector<16xf32>
    %16 = vector.multi_reduction <add>, %15, %cst_11 [0] : vector<512x16xf32> to vector<16xf32>
    %17 = vector.shape_cast %16 : vector<16xf32> to vector<1x16xf32>
    %18 = tpu.concatenate %14, %17 in 0 : vector<1x16xf32>, vector<1x16xf32> -> vector<2x16xf32>
    %19 = vector.shape_cast %18 : vector<2x16xf32> to vector<1x2x16xf32>
    %c0_12 = arith.constant 0 : index
    %c0_13 = arith.constant 0 : index
    %c0_14 = arith.constant 0 : index
    %20 = vector.load %arg6[%c0_12, %c0_13, %c0_14] : memref<1x2x16xf32, #tpu.memory_space<vmem>>, vector<1x2x16xf32>
    tpu.vector_store %arg6[%c0_12, %c0_13, %c0_14], %19 {strides = array<i32>} : memref<1x2x16xf32, #tpu.memory_space<vmem>>, vector<1x2x16xf32>,
    return
  }
  func.func @transform_0(%arg0: i32) -> (i32, i32) {
    %c0_i32 = arith.constant 0 : i32
    %c0_i32_0 = arith.constant 0 : i32
    return %arg0, %c0_i32 : i32, i32
  }
  func.func @transform_1(%arg0: i32) -> (i32, i32) {
    %c0_i32 = arith.constant 0 : i32
    %c0_i32_0 = arith.constant 0 : i32
    %c0_i32_1 = arith.constant 0 : i32
    return %c0_i32, %c0_i32_0 : i32, i32
  }
  func.func @transform_2(%arg0: i32) -> (i32, i32) {
    %c0_i32 = arith.constant 0 : i32
    %c0_i32_0 = arith.constant 0 : i32
    %c0_i32_1 = arith.constant 0 : i32
    return %c0_i32, %c0_i32_0 : i32, i32
  }
  func.func @transform_3(%arg0: i32) -> (i32, i32) {
    %c0_i32 = arith.constant 0 : i32
    %c0_i32_0 = arith.constant 0 : i32
    %c0_i32_1 = arith.constant 0 : i32
    return %c0_i32, %c0_i32_0 : i32, i32
  }
  func.func @transform_4(%arg0: i32) -> (i32, i32) {
    %c0_i32 = arith.constant 0 : i32
    %c0_i32_0 = arith.constant 0 : i32
    return %arg0, %c0_i32 : i32, i32
  }
  func.func @transform_5(%arg0: i32) -> (i32, i32, i32) {
    %c0_i32 = arith.constant 0 : i32
    %c0_i32_0 = arith.constant 0 : i32
    %c0_i32_1 = arith.constant 0 : i32
    return %arg0, %c0_i32, %c0_i32_0 : i32, i32, i32
  }
}

module attributes {stable_mosaic.version = 11 : i64} {
  func.func @_bn_add_relu_kernel(%arg0: i32, %arg1: memref<512x16xf32, #tpu.memory_space<vmem>>, %arg2: memref<1x16xf32, #tpu.memory_space<vmem>>, %arg3: memref<1x16xf32, #tpu.memory_space<vmem>>, %arg4: memref<512x16xf32, #tpu.memory_space<vmem>>, %arg5: memref<1x16xf32, #tpu.memory_space<vmem>>, %arg6: memref<1x16xf32, #tpu.memory_space<vmem>>, %arg7: memref<512x16xf32, #tpu.memory_space<vmem>>) attributes {dimension_semantics = [#tpu.dimension_semantics<parallel>], iteration_bounds = array<i64: 1>, scalar_prefetch = 0 : i64, scratch_operands = 0 : i64, tpu.core_type = #tpu.core_type<tc>, window_params = [{transform_indices = @transform_0, window_bounds = array<i64: 512, 16>}, {pipeline_mode = #tpu.pipeline_mode<synchronous>, transform_indices = @transform_1, window_bounds = array<i64: 1, 16>}, {pipeline_mode = #tpu.pipeline_mode<synchronous>, transform_indices = @transform_2, window_bounds = array<i64: 1, 16>}, {transform_indices = @transform_3, window_bounds = array<i64: 512, 16>}, {pipeline_mode = #tpu.pipeline_mode<synchronous>, transform_indices = @transform_4, window_bounds = array<i64: 1, 16>}, {pipeline_mode = #tpu.pipeline_mode<synchronous>, transform_indices = @transform_5, window_bounds = array<i64: 1, 16>}, {transform_indices = @transform_6, window_bounds = array<i64: 512, 16>}]} {
    %c0 = arith.constant 0 : index
    %c0_0 = arith.constant 0 : index
    %0 = vector.load %arg1[%c0, %c0_0] : memref<512x16xf32, #tpu.memory_space<vmem>>, vector<512x16xf32>
    %c0_1 = arith.constant 0 : index
    %c0_2 = arith.constant 0 : index
    %1 = vector.load %arg2[%c0_1, %c0_2] : memref<1x16xf32, #tpu.memory_space<vmem>>, vector<1x16xf32>
    %2 = vector.broadcast %1 : vector<1x16xf32> to vector<512x16xf32>
    %3 = arith.mulf %0, %2 : vector<512x16xf32>
    %c0_3 = arith.constant 0 : index
    %c0_4 = arith.constant 0 : index
    %4 = vector.load %arg3[%c0_3, %c0_4] : memref<1x16xf32, #tpu.memory_space<vmem>>, vector<1x16xf32>
    %5 = vector.broadcast %4 : vector<1x16xf32> to vector<512x16xf32>
    %6 = arith.addf %3, %5 : vector<512x16xf32>
    %c0_5 = arith.constant 0 : index
    %c0_6 = arith.constant 0 : index
    %7 = vector.load %arg4[%c0_5, %c0_6] : memref<512x16xf32, #tpu.memory_space<vmem>>, vector<512x16xf32>
    %c0_7 = arith.constant 0 : index
    %c0_8 = arith.constant 0 : index
    %8 = vector.load %arg5[%c0_7, %c0_8] : memref<1x16xf32, #tpu.memory_space<vmem>>, vector<1x16xf32>
    %9 = vector.broadcast %8 : vector<1x16xf32> to vector<512x16xf32>
    %10 = arith.mulf %7, %9 : vector<512x16xf32>
    %c0_9 = arith.constant 0 : index
    %c0_10 = arith.constant 0 : index
    %11 = vector.load %arg6[%c0_9, %c0_10] : memref<1x16xf32, #tpu.memory_space<vmem>>, vector<1x16xf32>
    %12 = vector.broadcast %11 : vector<1x16xf32> to vector<512x16xf32>
    %13 = arith.addf %10, %12 : vector<512x16xf32>
    %14 = arith.addf %6, %13 : vector<512x16xf32>
    %cst = arith.constant 0.000000e+00 : f32
    %15 = vector.broadcast %cst : f32 to vector<512x16xf32>
    %16 = arith.maximumf %14, %15 : vector<512x16xf32>
    %c0_11 = arith.constant 0 : index
    %c0_12 = arith.constant 0 : index
    %17 = vector.load %arg7[%c0_11, %c0_12] : memref<512x16xf32, #tpu.memory_space<vmem>>, vector<512x16xf32>
    tpu.vector_store %arg7[%c0_11, %c0_12], %16 {strides = array<i32>} : memref<512x16xf32, #tpu.memory_space<vmem>>, vector<512x16xf32>,
    return
  }
  func.func @transform_0(%arg0: i32) -> (i32, i32) {
    %c0_i32 = arith.constant 0 : i32
    %c0_i32_0 = arith.constant 0 : i32
    return %arg0, %c0_i32 : i32, i32
  }
  func.func @transform_1(%arg0: i32) -> (i32, i32) {
    %c0_i32 = arith.constant 0 : i32
    %c0_i32_0 = arith.constant 0 : i32
    %c0_i32_1 = arith.constant 0 : i32
    return %c0_i32, %c0_i32_0 : i32, i32
  }
  func.func @transform_2(%arg0: i32) -> (i32, i32) {
    %c0_i32 = arith.constant 0 : i32
    %c0_i32_0 = arith.constant 0 : i32
    %c0_i32_1 = arith.constant 0 : i32
    return %c0_i32, %c0_i32_0 : i32, i32
  }
  func.func @transform_3(%arg0: i32) -> (i32, i32) {
    %c0_i32 = arith.constant 0 : i32
    %c0_i32_0 = arith.constant 0 : i32
    return %arg0, %c0_i32 : i32, i32
  }
  func.func @transform_4(%arg0: i32) -> (i32, i32) {
    %c0_i32 = arith.constant 0 : i32
    %c0_i32_0 = arith.constant 0 : i32
    %c0_i32_1 = arith.constant 0 : i32
    return %c0_i32, %c0_i32_0 : i32, i32
  }
  func.func @transform_5(%arg0: i32) -> (i32, i32) {
    %c0_i32 = arith.constant 0 : i32
    %c0_i32_0 = arith.constant 0 : i32
    %c0_i32_1 = arith.constant 0 : i32
    return %c0_i32, %c0_i32_0 : i32, i32
  }
  func.func @transform_6(%arg0: i32) -> (i32, i32) {
    %c0_i32 = arith.constant 0 : i32
    %c0_i32_0 = arith.constant 0 : i32
    return %arg0, %c0_i32 : i32, i32
  }
}

</mosaic_0001>

<llo_original>
// kernel: bottleneck_forward.8
$region0: #{bottleneck_forward.8}
  #allocation0 [shape = 'u32[]', space=smem, size = 0x4, offset = 0x4, fixed_abs, tag = 'smem constant byte address 0x4 - core index']
  #allocation1 [shape = 'u32[144,128]{1,0:T(1,128)}', space=vmem, size = 0x12000, scoped, tag = 'internal scratch']
  %s0 = inlined_call_operand.vmem [shape: f32[512,4], index: 0, kind: input, shape index: {}]
  %s1 = inlined_call_operand.vmem [shape: bf16[4,16], index: 1, kind: input, shape index: {}]
  %s2 = inlined_call_operand.vmem [shape: f32[512,16], index: 2, kind: output, shape index: {0}]
  %s3 = inlined_call_operand.vmem [shape: f32[1,2,16], index: 3, kind: output, shape index: {1}]
  %4 = xla_tuple %s2, %s3
  %s5 = sld [smem:[#allocation0]]
  $region26: #{bottleneck_forward.8} parent=0
    _
  %s7 = ssub.s32 1, %s5
  %s8 = scalar_select 0, %s7, %s5
  // Predicated region
  $region2: #{bottleneck_forward.8} parent=0 // pred_check
    _
  $region3: #{bottleneck_forward.8} parent=0 // pred_check_branch
    %10 = sbr.rel (0) target = $region5
  $region4: #{bottleneck_forward.8} parent=0 // pred_region
    _
  $region5: #{bottleneck_forward.8} parent=0 // pred_fallthru
    _
  // Predicated region
  $region6: #{bottleneck_forward.8} parent=0 // pred_check
    _
  $region7: #{bottleneck_forward.8} parent=0 // pred_check_branch
    %12 = sbr.rel (0) target = $region9
  $region8: #{bottleneck_forward.8} parent=0 // pred_region
    _
  $region9: #{bottleneck_forward.8} parent=0 // pred_fallthru
    _
  %v14 = vld [vmem:[%s0] sm:$0xff]
  %v15 = vld [vmem:[%s0 + $0x8] sm:$0xff]
  %v16 = vld [vmem:[%s0 + $0x10] sm:$0xff]
  %v17 = vld [vmem:[%s0 + $0x18] sm:$0xff]
  %v18 = vld [vmem:[%s0 + $0x20] sm:$0xff]
  %v19 = vld [vmem:[%s0 + $0x28] sm:$0xff]
  %v20 = vld [vmem:[%s0 + $0x30] sm:$0xff]
  %v21 = vld [vmem:[%s0 + $0x38] sm:$0xff]
  %v22 = vld [vmem:[%s0 + $0x40] sm:$0xff]
  %v23 = vld [vmem:[%s0 + $0x48] sm:$0xff]
  %v24 = vld [vmem:[%s0 + $0x50] sm:$0xff]
  %v25 = vld [vmem:[%s0 + $0x58] sm:$0xff]
  %v26 = vld [vmem:[%s0 + $0x60] sm:$0xff]
  %v27 = vld [vmem:[%s0 + $0x68] sm:$0xff]
  %v28 = vld [vmem:[%s0 + $0x70] sm:$0xff]
  %v29 = vld [vmem:[%s0 + $0x78] sm:$0xff]
  %v30 = vld [vmem:[%s0 + $0x80] sm:$0xff]
  %v31 = vld [vmem:[%s0 + $0x88] sm:$0xff]
  %v32 = vld [vmem:[%s0 + $0x90] sm:$0xff]
  %v33 = vld [vmem:[%s0 + $0x98] sm:$0xff]
  %v34 = vld [vmem:[%s0 + $0xa0] sm:$0xff]
  %v35 = vld [vmem:[%s0 + $0xa8] sm:$0xff]
  %v36 = vld [vmem:[%s0 + $0xb0] sm:$0xff]
  %v37 = vld [vmem:[%s0 + $0xb8] sm:$0xff]
  %v38 = vld [vmem:[%s0 + $0xc0] sm:$0xff]
  %v39 = vld [vmem:[%s0 + $0xc8] sm:$0xff]
  %v40 = vld [vmem:[%s0 + $0xd0] sm:$0xff]
  %v41 = vld [vmem:[%s0 + $0xd8] sm:$0xff]
  %v42 = vld [vmem:[%s0 + $0xe0] sm:$0xff]
  %v43 = vld [vmem:[%s0 + $0xe8] sm:$0xff]
  %v44 = vld [vmem:[%s0 + $0xf0] sm:$0xff]
  %v45 = vld [vmem:[%s0 + $0xf8] sm:$0xff]
  %v46 = vld [vmem:[%s0 + $0x100] sm:$0xff]
  %v47 = vld [vmem:[%s0 + $0x108] sm:$0xff]
  %v48 = vld [vmem:[%s0 + $0x110] sm:$0xff]
  %v49 = vld [vmem:[%s0 + $0x118] sm:$0xff]
  %v50 = vld [vmem:[%s0 + $0x120] sm:$0xff]
  %v51 = vld [vmem:[%s0 + $0x128] sm:$0xff]
  %v52 = vld [vmem:[%s0 + $0x130] sm:$0xff]
  %v53 = vld [vmem:[%s0 + $0x138] sm:$0xff]
  %v54 = vld [vmem:[%s0 + $0x140] sm:$0xff]
  %v55 = vld [vmem:[%s0 + $0x148] sm:$0xff]
  %v56 = vld [vmem:[%s0 + $0x150] sm:$0xff]
  %v57 = vld [vmem:[%s0 + $0x158] sm:$0xff]
  %v58 = vld [vmem:[%s0 + $0x160] sm:$0xff]
  %v59 = vld [vmem:[%s0 + $0x168] sm:$0xff]
  %v60 = vld [vmem:[%s0 + $0x170] sm:$0xff]
  %v61 = vld [vmem:[%s0 + $0x178] sm:$0xff]
  %v62 = vld [vmem:[%s0 + $0x180] sm:$0xff]
  %v63 = vld [vmem:[%s0 + $0x188] sm:$0xff]
  %v64 = vld [vmem:[%s0 + $0x190] sm:$0xff]
  %v65 = vld [vmem:[%s0 + $0x198] sm:$0xff]
  %v66 = vld [vmem:[%s0 + $0x1a0] sm:$0xff]
  %v67 = vld [vmem:[%s0 + $0x1a8] sm:$0xff]
  %v68 = vld [vmem:[%s0 + $0x1b0] sm:$0xff]
  %v69 = vld [vmem:[%s0 + $0x1b8] sm:$0xff]
  %v70 = vld [vmem:[%s0 + $0x1c0] sm:$0xff]
  %v71 = vld [vmem:[%s0 + $0x1c8] sm:$0xff]
  %v72 = vld [vmem:[%s0 + $0x1d0] sm:$0xff]
  %v73 = vld [vmem:[%s0 + $0x1d8] sm:$0xff]
  %v74 = vld [vmem:[%s0 + $0x1e0] sm:$0xff]
  %v75 = vld [vmem:[%s0 + $0x1e8] sm:$0xff]
  %v76 = vld [vmem:[%s0 + $0x1f0] sm:$0xff]
  %v77 = vld [vmem:[%s0 + $0x1f8] sm:$0xff]
  %v78 = vpack.c.bf16 %v15, %v14
  %v79 = vpack.c.bf16 %v17, %v16
  %v80 = vpack.c.bf16 %v19, %v18
  %v81 = vpack.c.bf16 %v21, %v20
  %v82 = vpack.c.bf16 %v23, %v22
  %v83 = vpack.c.bf16 %v25, %v24
  %v84 = vpack.c.bf16 %v27, %v26
  %v85 = vpack.c.bf16 %v29, %v28
  %v86 = vpack.c.bf16 %v31, %v30
  %v87 = vpack.c.bf16 %v33, %v32
  %v88 = vpack.c.bf16 %v35, %v34
  %v89 = vpack.c.bf16 %v37, %v36
  %v90 = vpack.c.bf16 %v39, %v38
  %v91 = vpack.c.bf16 %v41, %v40
  %v92 = vpack.c.bf16 %v43, %v42
  %v93 = vpack.c.bf16 %v45, %v44
  %v94 = vpack.c.bf16 %v47, %v46
  %v95 = vpack.c.bf16 %v49, %v48
  %v96 = vpack.c.bf16 %v51, %v50
  %v97 = vpack.c.bf16 %v53, %v52
  %v98 = vpack.c.bf16 %v55, %v54
  %v99 = vpack.c.bf16 %v57, %v56
  %v100 = vpack.c.bf16 %v59, %v58
  %v101 = vpack.c.bf16 %v61, %v60
  %v102 = vpack.c.bf16 %v63, %v62
  %v103 = vpack.c.bf16 %v65, %v64
  %v104 = vpack.c.bf16 %v67, %v66
  %v105 = vpack.c.bf16 %v69, %v68
  %v106 = vpack.c.bf16 %v71, %v70
  %v107 = vpack.c.bf16 %v73, %v72
  %v108 = vpack.c.bf16 %v75, %v74
  %v109 = vpack.c.bf16 %v77, %v76
  %v110 = vld [vmem:[%s1] sm:$0x3]
  %vm111 = vcmask 31744
  %v113 = vsel %vm111, %v78, 0
  %v116 = vsel %vm111, %v79, 0
  %v119 = vsel %vm111, %v80, 0
  %v122 = vsel %vm111, %v81, 0
  %v125 = vsel %vm111, %v82, 0
  %v128 = vsel %vm111, %v83, 0
  %v131 = vsel %vm111, %v84, 0
  %v134 = vsel %vm111, %v85, 0
  %v137 = vsel %vm111, %v86, 0
  %v140 = vsel %vm111, %v87, 0
  %v143 = vsel %vm111, %v88, 0
  %v146 = vsel %vm111, %v89, 0
  %v149 = vsel %vm111, %v90, 0
  %v152 = vsel %vm111, %v91, 0
  %v155 = vsel %vm111, %v92, 0
  %v158 = vsel %vm111, %v93, 0
  %v161 = vsel %vm111, %v94, 0
  %v164 = vsel %vm111, %v95, 0
  %v167 = vsel %vm111, %v96, 0
  %v170 = vsel %vm111, %v97, 0
  %v173 = vsel %vm111, %v98, 0
  %v176 = vsel %vm111, %v99, 0
  %v179 = vsel %vm111, %v100, 0
  %v182 = vsel %vm111, %v101, 0
  %v185 = vsel %vm111, %v102, 0
  %v188 = vsel %vm111, %v103, 0
  %v191 = vsel %vm111, %v104, 0
  %v194 = vsel %vm111, %v105, 0
  %v197 = vsel %vm111, %v106, 0
  %v200 = vsel %vm111, %v107, 0
  %v203 = vsel %vm111, %v108, 0
  %v206 = vsel %vm111, %v109, 0
  %vm208 = vcmask 1041408
  %v210 = vsel %vm208, %v110, 0
  %212 = vmatprep.subr.bf16.mxu0 0
  %213 = vmatpush1.bf16.msra.mxu0 0
  %214 = vmatprep.subr.bf16.mxu0 0
  %215 = vmatpush1.bf16.msra.mxu0 0
  %216 = vmatprep.subr.bf16.mxu0 0
  %217 = vmatpush1.bf16.msra.mxu0 0
  %218 = vmatprep.subr.bf16.mxu0 0
  %219 = vmatpush1.bf16.msra.mxu0 0
  %220 = vmatprep.subr.bf16.mxu0 0
  %221 = vmatpush1.bf16.msra.mxu0 0
  %222 = vmatprep.subr.bf16.mxu0 0
  %223 = vmatpush1.bf16.msra.mxu0 0
  %224 = vmatprep.subr.bf16.mxu0 0
  %225 = vmatpush1.bf16.msra.mxu0 0
  %226 = vmatprep.subr.bf16.mxu0 0
  %227 = vmatpush1.bf16.msra.mxu0 %v210
  %228 = vmatprep.subr.bf16.mxu0 0
  %229 = vmatpush2.bf16.msra.mxu0 0
  %230 = vmatprep.subr.bf16.mxu0 0
  %231 = vmatpush2.bf16.msra.mxu0 0
  %232 = vmatprep.subr.bf16.mxu0 0
  %233 = vmatpush2.bf16.msra.mxu0 0
  %234 = vmatprep.subr.bf16.mxu0 0
  %235 = vmatpush2.bf16.msra.mxu0 0
  %236 = vmatprep.subr.bf16.mxu0 0
  %237 = vmatpush2.bf16.msra.mxu0 0
  %238 = vmatprep.subr.bf16.mxu0 0
  %239 = vmatpush2.bf16.msra.mxu0 0
  %240 = vmatprep.subr.bf16.mxu0 0
  %241 = vmatpush2.bf16.msra.mxu0 0
  %242 = vmatprep.subr.bf16.mxu0 0
  %243 = vmatpush2.bf16.msra.mxu0 0
  %244 = vmatprep.mubr.bf16.mxu0 0
  %245 = vmatmul.mubr.bf16.gmra.mxu0 %v113
  %v246 = vpop.f32.mrf.mxu0
  %v247 = vadd.f32 0.0, %v246
  %v248 = vpop.f32.mrf.mxu0
  %v249 = vpop.f32.mrf.mxu0
  %v250 = vadd.f32 0.0, %v249
  %v251 = vpop.f32.mrf.mxu0
  %252 = vmatprep.mubr.bf16.mxu0 0
  %253 = vmatmul.mubr.bf16.gmra.mxu0 %v116
  %v254 = vpop.f32.mrf.mxu0
  %v255 = vadd.f32 0.0, %v254
  %v256 = vpop.f32.mrf.mxu0
  %v257 = vpop.f32.mrf.mxu0
  %v258 = vadd.f32 0.0, %v257
  %v259 = vpop.f32.mrf.mxu0
  %260 = vmatprep.mubr.bf16.mxu0 0
  %261 = vmatmul.mubr.bf16.gmra.mxu0 %v119
  %v262 = vpop.f32.mrf.mxu0
  %v263 = vadd.f32 0.0, %v262
  %v264 = vpop.f32.mrf.mxu0
  %v265 = vpop.f32.mrf.mxu0
  %v266 = vadd.f32 0.0, %v265
  %v267 = vpop.f32.mrf.mxu0
  %268 = vmatprep.mubr.bf16.mxu0 0
  %269 = vmatmul.mubr.bf16.gmra.mxu0 %v122
  %v270 = vpop.f32.mrf.mxu0
  %v271 = vadd.f32 0.0, %v270
  %v272 = vpop.f32.mrf.mxu0
  %v273 = vpop.f32.mrf.mxu0
  %v274 = vadd.f32 0.0, %v273
  %v275 = vpop.f32.mrf.mxu0
  %276 = vmatprep.mubr.bf16.mxu0 0
  %277 = vmatmul.mubr.bf16.gmra.mxu0 %v125
  %v278 = vpop.f32.mrf.mxu0
  %v279 = vadd.f32 0.0, %v278
  %v280 = vpop.f32.mrf.mxu0
  %v281 = vpop.f32.mrf.mxu0
  %v282 = vadd.f32 0.0, %v281
  %v283 = vpop.f32.mrf.mxu0
  %284 = vmatprep.mubr.bf16.mxu0 0
  %285 = vmatmul.mubr.bf16.gmra.mxu0 %v128
  %v286 = vpop.f32.mrf.mxu0
  %v287 = vadd.f32 0.0, %v286
  %v288 = vpop.f32.mrf.mxu0
  %v289 = vpop.f32.mrf.mxu0
  %v290 = vadd.f32 0.0, %v289
  %v291 = vpop.f32.mrf.mxu0
  %292 = vmatprep.mubr.bf16.mxu0 0
  %293 = vmatmul.mubr.bf16.gmra.mxu0 %v131
  %v294 = vpop.f32.mrf.mxu0
  %v295 = vadd.f32 0.0, %v294
  %v296 = vpop.f32.mrf.mxu0
  %v297 = vpop.f32.mrf.mxu0
  %v298 = vadd.f32 0.0, %v297
  %v299 = vpop.f32.mrf.mxu0
  %300 = vmatprep.mubr.bf16.mxu0 0
  %301 = vmatmul.mubr.bf16.gmra.mxu0 %v134
  %v302 = vpop.f32.mrf.mxu0
  %v303 = vadd.f32 0.0, %v302
  %v304 = vpop.f32.mrf.mxu0
  %v305 = vpop.f32.mrf.mxu0
  %v306 = vadd.f32 0.0, %v305
  %v307 = vpop.f32.mrf.mxu0
  %308 = vmatprep.mubr.bf16.mxu0 0
  %309 = vmatmul.mubr.bf16.gmra.mxu0 %v137
  %v310 = vpop.f32.mrf.mxu0
  %v311 = vadd.f32 0.0, %v310
  %v312 = vpop.f32.mrf.mxu0
  %v313 = vpop.f32.mrf.mxu0
  %v314 = vadd.f32 0.0, %v313
  %v315 = vpop.f32.mrf.mxu0
  %316 = vmatprep.mubr.bf16.mxu0 0
  %317 = vmatmul.mubr.bf16.gmra.mxu0 %v140
  %v318 = vpop.f32.mrf.mxu0
  %v319 = vadd.f32 0.0, %v318
  %v320 = vpop.f32.mrf.mxu0
  %v321 = vpop.f32.mrf.mxu0
  %v322 = vadd.f32 0.0, %v321
  %v323 = vpop.f32.mrf.mxu0
  %324 = vmatprep.mubr.bf16.mxu0 0
  %325 = vmatmul.mubr.bf16.gmra.mxu0 %v143
  %v326 = vpop.f32.mrf.mxu0
  %v327 = vadd.f32 0.0, %v326
  %v328 = vpop.f32.mrf.mxu0
  %v329 = vpop.f32.mrf.mxu0
  %v330 = vadd.f32 0.0, %v329
  %v331 = vpop.f32.mrf.mxu0
  %332 = vmatprep.mubr.bf16.mxu0 0
  %333 = vmatmul.mubr.bf16.gmra.mxu0 %v146
  %v334 = vpop.f32.mrf.mxu0
  %v335 = vadd.f32 0.0, %v334
  %v336 = vpop.f32.mrf.mxu0
  %v337 = vpop.f32.mrf.mxu0
  %v338 = vadd.f32 0.0, %v337
  %v339 = vpop.f32.mrf.mxu0
  %340 = vmatprep.mubr.bf16.mxu0 0
  %341 = vmatmul.mubr.bf16.gmra.mxu0 %v149
  %v342 = vpop.f32.mrf.mxu0
  %v343 = vadd.f32 0.0, %v342
  %v344 = vpop.f32.mrf.mxu0
  %v345 = vpop.f32.mrf.mxu0
  %v346 = vadd.f32 0.0, %v345
  %v347 = vpop.f32.mrf.mxu0
  %348 = vmatprep.mubr.bf16.mxu0 0
  %349 = vmatmul.mubr.bf16.gmra.mxu0 %v152
  %v350 = vpop.f32.mrf.mxu0
  %v351 = vadd.f32 0.0, %v350
  %v352 = vpop.f32.mrf.mxu0
  %v353 = vpop.f32.mrf.mxu0
  %v354 = vadd.f32 0.0, %v353
  %v355 = vpop.f32.mrf.mxu0
  %356 = vmatprep.mubr.bf16.mxu0 0
  %357 = vmatmul.mubr.bf16.gmra.mxu0 %v155
  %v358 = vpop.f32.mrf.mxu0
  %v359 = vadd.f32 0.0, %v358
  %v360 = vpop.f32.mrf.mxu0
  %v361 = vpop.f32.mrf.mxu0
  %v362 = vadd.f32 0.0, %v361
  %v363 = vpop.f32.mrf.mxu0
  %364 = vmatprep.mubr.bf16.mxu0 0
  %365 = vmatmul.mubr.bf16.gmra.mxu0 %v158
  %v366 = vpop.f32.mrf.mxu0
  %v367 = vadd.f32 0.0, %v366
  %v368 = vpop.f32.mrf.mxu0
  %v369 = vpop.f32.mrf.mxu0
  %v370 = vadd.f32 0.0, %v369
  %v371 = vpop.f32.mrf.mxu0
  %372 = vmatprep.mubr.bf16.mxu0 0
  %373 = vmatmul.mubr.bf16.gmra.mxu0 %v161
  %v374 = vpop.f32.mrf.mxu0
  %v375 = vadd.f32 0.0, %v374
  %v376 = vpop.f32.mrf.mxu0
  %v377 = vpop.f32.mrf.mxu0
  %v378 = vadd.f32 0.0, %v377
  %v379 = vpop.f32.mrf.mxu0
  %380 = vmatprep.mubr.bf16.mxu0 0
  %381 = vmatmul.mubr.bf16.gmra.mxu0 %v164
  %v382 = vpop.f32.mrf.mxu0
  %v383 = vadd.f32 0.0, %v382
  %v384 = vpop.f32.mrf.mxu0
  %v385 = vpop.f32.mrf.mxu0
  %v386 = vadd.f32 0.0, %v385
  %v387 = vpop.f32.mrf.mxu0
  %388 = vmatprep.mubr.bf16.mxu0 0
  %389 = vmatmul.mubr.bf16.gmra.mxu0 %v167
  %v390 = vpop.f32.mrf.mxu0
  %v391 = vadd.f32 0.0, %v390
  %v392 = vpop.f32.mrf.mxu0
  %v393 = vpop.f32.mrf.mxu0
  %v394 = vadd.f32 0.0, %v393
  %v395 = vpop.f32.mrf.mxu0
  %396 = vmatprep.mubr.bf16.mxu0 0
  %397 = vmatmul.mubr.bf16.gmra.mxu0 %v170
  %v398 = vpop.f32.mrf.mxu0
  %v399 = vadd.f32 0.0, %v398
  %v400 = vpop.f32.mrf.mxu0
  %v401 = vpop.f32.mrf.mxu0
  %v402 = vadd.f32 0.0, %v401
  %v403 = vpop.f32.mrf.mxu0
  %404 = vmatprep.mubr.bf16.mxu0 0
  %405 = vmatmul.mubr.bf16.gmra.mxu0 %v173
  %v406 = vpop.f32.mrf.mxu0
  %v407 = vadd.f32 0.0, %v406
  %v408 = vpop.f32.mrf.mxu0
  %v409 = vpop.f32.mrf.mxu0
  %v410 = vadd.f32 0.0, %v409
  %v411 = vpop.f32.mrf.mxu0
  %412 = vmatprep.mubr.bf16.mxu0 0
  %413 = vmatmul.mubr.bf16.gmra.mxu0 %v176
  %v414 = vpop.f32.mrf.mxu0
  %v415 = vadd.f32 0.0, %v414
  %v416 = vpop.f32.mrf.mxu0
  %v417 = vpop.f32.mrf.mxu0
  %v418 = vadd.f32 0.0, %v417
  %v419 = vpop.f32.mrf.mxu0
  %420 = vmatprep.mubr.bf16.mxu0 0
  %421 = vmatmul.mubr.bf16.gmra.mxu0 %v179
  %v422 = vpop.f32.mrf.mxu0
  %v423 = vadd.f32 0.0, %v422
  %v424 = vpop.f32.mrf.mxu0
  %v425 = vpop.f32.mrf.mxu0
  %v426 = vadd.f32 0.0, %v425
  %v427 = vpop.f32.mrf.mxu0
  %428 = vmatprep.mubr.bf16.mxu0 0
  %429 = vmatmul.mubr.bf16.gmra.mxu0 %v182
  %v430 = vpop.f32.mrf.mxu0
  %v431 = vadd.f32 0.0, %v430
  %v432 = vpop.f32.mrf.mxu0
  %v433 = vpop.f32.mrf.mxu0
  %v434 = vadd.f32 0.0, %v433
  %v435 = vpop.f32.mrf.mxu0
  %436 = vmatprep.mubr.bf16.mxu0 0
  %437 = vmatmul.mubr.bf16.gmra.mxu0 %v185
  %v438 = vpop.f32.mrf.mxu0
  %v439 = vadd.f32 0.0, %v438
  %v440 = vpop.f32.mrf.mxu0
  %v441 = vpop.f32.mrf.mxu0
  %v442 = vadd.f32 0.0, %v441
  %v443 = vpop.f32.mrf.mxu0
  %444 = vmatprep.mubr.bf16.mxu0 0
  %445 = vmatmul.mubr.bf16.gmra.mxu0 %v188
  %v446 = vpop.f32.mrf.mxu0
  %v447 = vadd.f32 0.0, %v446
  %v448 = vpop.f32.mrf.mxu0
  %v449 = vpop.f32.mrf.mxu0
  %v450 = vadd.f32 0.0, %v449
  %v451 = vpop.f32.mrf.mxu0
  %452 = vmatprep.mubr.bf16.mxu0 0
  %453 = vmatmul.mubr.bf16.gmra.mxu0 %v191
  %v454 = vpop.f32.mrf.mxu0
  %v455 = vadd.f32 0.0, %v454
  %v456 = vpop.f32.mrf.mxu0
  %v457 = vpop.f32.mrf.mxu0
  %v458 = vadd.f32 0.0, %v457
  %v459 = vpop.f32.mrf.mxu0
  %460 = vmatprep.mubr.bf16.mxu0 0
  %461 = vmatmul.mubr.bf16.gmra.mxu0 %v194
  %v462 = vpop.f32.mrf.mxu0
  %v463 = vadd.f32 0.0, %v462
  %v464 = vpop.f32.mrf.mxu0
  %v465 = vpop.f32.mrf.mxu0
  %v466 = vadd.f32 0.0, %v465
  %v467 = vpop.f32.mrf.mxu0
  %468 = vmatprep.mubr.bf16.mxu0 0
  %469 = vmatmul.mubr.bf16.gmra.mxu0 %v197
  %v470 = vpop.f32.mrf.mxu0
  %v471 = vadd.f32 0.0, %v470
  %v472 = vpop.f32.mrf.mxu0
  %v473 = vpop.f32.mrf.mxu0
  %v474 = vadd.f32 0.0, %v473
  %v475 = vpop.f32.mrf.mxu0
  %476 = vmatprep.mubr.bf16.mxu0 0
  %477 = vmatmul.mubr.bf16.gmra.mxu0 %v200
  %v478 = vpop.f32.mrf.mxu0
  %v479 = vadd.f32 0.0, %v478
  %v480 = vpop.f32.mrf.mxu0
  %v481 = vpop.f32.mrf.mxu0
  %v482 = vadd.f32 0.0, %v481
  %v483 = vpop.f32.mrf.mxu0
  %484 = vmatprep.mubr.bf16.mxu0 0
  %485 = vmatmul.mubr.bf16.gmra.mxu0 %v203
  %v486 = vpop.f32.mrf.mxu0
  %v487 = vadd.f32 0.0, %v486
  %v488 = vpop.f32.mrf.mxu0
  %v489 = vpop.f32.mrf.mxu0
  %v490 = vadd.f32 0.0, %v489
  %v491 = vpop.f32.mrf.mxu0
  %492 = vmatprep.mubr.bf16.mxu0 0
  %493 = vmatmul.mubr.bf16.gmra.mxu0 %v206
  %v494 = vpop.f32.mrf.mxu0
  %v495 = vadd.f32 0.0, %v494
  %v496 = vpop.f32.mrf.mxu0
  %v497 = vpop.f32.mrf.mxu0
  %v498 = vadd.f32 0.0, %v497
  %v499 = vpop.f32.mrf.mxu0
  %500 = vdwg.mxu0
  %vm501 = vcmask 130048
  %502 = vst.msk [vmem:[%s2] sm:$0xff] %vm501, %v247
  %503 = vst.msk [vmem:[%s2 + $0x8] sm:$0xff] %vm501, %v250
  %504 = vst.msk [vmem:[%s2 + $0x10] sm:$0xff] %vm501, %v255
  %505 = vst.msk [vmem:[%s2 + $0x18] sm:$0xff] %vm501, %v258
  %506 = vst.msk [vmem:[%s2 + $0x20] sm:$0xff] %vm501, %v263
  %507 = vst.msk [vmem:[%s2 + $0x28] sm:$0xff] %vm501, %v266
  %508 = vst.msk [vmem:[%s2 + $0x30] sm:$0xff] %vm501, %v271
  %509 = vst.msk [vmem:[%s2 + $0x38] sm:$0xff] %vm501, %v274
  %510 = vst.msk [vmem:[%s2 + $0x40] sm:$0xff] %vm501, %v279
  %511 = vst.msk [vmem:[%s2 + $0x48] sm:$0xff] %vm501, %v282
  %512 = vst.msk [vmem:[%s2 + $0x50] sm:$0xff] %vm501, %v287
  %513 = vst.msk [vmem:[%s2 + $0x58] sm:$0xff] %vm501, %v290
  %514 = vst.msk [vmem:[%s2 + $0x60] sm:$0xff] %vm501, %v295
  %515 = vst.msk [vmem:[%s2 + $0x68] sm:$0xff] %vm501, %v298
  %516 = vst.msk [vmem:[%s2 + $0x70] sm:$0xff] %vm501, %v303
  %517 = vst.msk [vmem:[%s2 + $0x78] sm:$0xff] %vm501, %v306
  %518 = vst.msk [vmem:[%s2 + $0x80] sm:$0xff] %vm501, %v311
  %519 = vst.msk [vmem:[%s2 + $0x88] sm:$0xff] %vm501, %v314
  %520 = vst.msk [vmem:[%s2 + $0x90] sm:$0xff] %vm501, %v319
  %521 = vst.msk [vmem:[%s2 + $0x98] sm:$0xff] %vm501, %v322
  %522 = vst.msk [vmem:[%s2 + $0xa0] sm:$0xff] %vm501, %v327
  %523 = vst.msk [vmem:[%s2 + $0xa8] sm:$0xff] %vm501, %v330
  %524 = vst.msk [vmem:[%s2 + $0xb0] sm:$0xff] %vm501, %v335
  %525 = vst.msk [vmem:[%s2 + $0xb8] sm:$0xff] %vm501, %v338
  %526 = vst.msk [vmem:[%s2 + $0xc0] sm:$0xff] %vm501, %v343
  %527 = vst.msk [vmem:[%s2 + $0xc8] sm:$0xff] %vm501, %v346
  %528 = vst.msk [vmem:[%s2 + $0xd0] sm:$0xff] %vm501, %v351
  %529 = vst.msk [vmem:[%s2 + $0xd8] sm:$0xff] %vm501, %v354
  %530 = vst.msk [vmem:[%s2 + $0xe0] sm:$0xff] %vm501, %v359
  %531 = vst.msk [vmem:[%s2 + $0xe8] sm:$0xff] %vm501, %v362
  %532 = vst.msk [vmem:[%s2 + $0xf0] sm:$0xff] %vm501, %v367
  %533 = vst.msk [vmem:[%s2 + $0xf8] sm:$0xff] %vm501, %v370
  %534 = vst.msk [vmem:[%s2 + $0x100] sm:$0xff] %vm501, %v375
  %535 = vst.msk [vmem:[%s2 + $0x108] sm:$0xff] %vm501, %v378
  %536 = vst.msk [vmem:[%s2 + $0x110] sm:$0xff] %vm501, %v383
  %537 = vst.msk [vmem:[%s2 + $0x118] sm:$0xff] %vm501, %v386
  %538 = vst.msk [vmem:[%s2 + $0x120] sm:$0xff] %vm501, %v391
  %539 = vst.msk [vmem:[%s2 + $0x128] sm:$0xff] %vm501, %v394
  %540 = vst.msk [vmem:[%s2 + $0x130] sm:$0xff] %vm501, %v399
  %541 = vst.msk [vmem:[%s2 + $0x138] sm:$0xff] %vm501, %v402
  %542 = vst.msk [vmem:[%s2 + $0x140] sm:$0xff] %vm501, %v407
  %543 = vst.msk [vmem:[%s2 + $0x148] sm:$0xff] %vm501, %v410
  %544 = vst.msk [vmem:[%s2 + $0x150] sm:$0xff] %vm501, %v415
  %545 = vst.msk [vmem:[%s2 + $0x158] sm:$0xff] %vm501, %v418
  %546 = vst.msk [vmem:[%s2 + $0x160] sm:$0xff] %vm501, %v423
  %547 = vst.msk [vmem:[%s2 + $0x168] sm:$0xff] %vm501, %v426
  %548 = vst.msk [vmem:[%s2 + $0x170] sm:$0xff] %vm501, %v431
  %549 = vst.msk [vmem:[%s2 + $0x178] sm:$0xff] %vm501, %v434
  %550 = vst.msk [vmem:[%s2 + $0x180] sm:$0xff] %vm501, %v439
  %551 = vst.msk [vmem:[%s2 + $0x188] sm:$0xff] %vm501, %v442
  %552 = vst.msk [vmem:[%s2 + $0x190] sm:$0xff] %vm501, %v447
  %553 = vst.msk [vmem:[%s2 + $0x198] sm:$0xff] %vm501, %v450
  %554 = vst.msk [vmem:[%s2 + $0x1a0] sm:$0xff] %vm501, %v455
  %555 = vst.msk [vmem:[%s2 + $0x1a8] sm:$0xff] %vm501, %v458
  %556 = vst.msk [vmem:[%s2 + $0x1b0] sm:$0xff] %vm501, %v463
  %557 = vst.msk [vmem:[%s2 + $0x1b8] sm:$0xff] %vm501, %v466
  %558 = vst.msk [vmem:[%s2 + $0x1c0] sm:$0xff] %vm501, %v471
  %559 = vst.msk [vmem:[%s2 + $0x1c8] sm:$0xff] %vm501, %v474
  %560 = vst.msk [vmem:[%s2 + $0x1d0] sm:$0xff] %vm501, %v479
  %561 = vst.msk [vmem:[%s2 + $0x1d8] sm:$0xff] %vm501, %v482
  %562 = vst.msk [vmem:[%s2 + $0x1e0] sm:$0xff] %vm501, %v487
  %563 = vst.msk [vmem:[%s2 + $0x1e8] sm:$0xff] %vm501, %v490
  %564 = vst.msk [vmem:[%s2 + $0x1f0] sm:$0xff] %vm501, %v495
  %565 = vst.msk [vmem:[%s2 + $0x1f8] sm:$0xff] %vm501, %v498
  %v566 = vsel %vm501, %v247, 0.0
  %v567 = vsel %vm501, %v250, 0.0
  %v568 = vadd.f32 %v566, %v567
  %v569 = vsel %vm501, %v255, 0.0
  %v570 = vadd.f32 %v568, %v569
  %v571 = vsel %vm501, %v258, 0.0
  %v572 = vadd.f32 %v570, %v571
  %v573 = vsel %vm501, %v263, 0.0
  %v574 = vadd.f32 %v572, %v573
  %v575 = vsel %vm501, %v266, 0.0
  %v576 = vadd.f32 %v574, %v575
  %v577 = vsel %vm501, %v271, 0.0
  %v578 = vadd.f32 %v576, %v577
  %v579 = vsel %vm501, %v274, 0.0
  %v580 = vadd.f32 %v578, %v579
  %v581 = vsel %vm501, %v279, 0.0
  %v582 = vadd.f32 %v580, %v581
  %v583 = vsel %vm501, %v282, 0.0
  %v584 = vadd.f32 %v582, %v583
  %v585 = vsel %vm501, %v287, 0.0
  %v586 = vadd.f32 %v584, %v585
  %v587 = vsel %vm501, %v290, 0.0
  %v588 = vadd.f32 %v586, %v587
  %v589 = vsel %vm501, %v295, 0.0
  %v590 = vadd.f32 %v588, %v589
  %v591 = vsel %vm501, %v298, 0.0
  %v592 = vadd.f32 %v590, %v591
  %v593 = vsel %vm501, %v303, 0.0
  %v594 = vadd.f32 %v592, %v593
  %v595 = vsel %vm501, %v306, 0.0
  %v596 = vadd.f32 %v594, %v595
  %v597 = vsel %vm501, %v311, 0.0
  %v598 = vadd.f32 %v596, %v597
  %v599 = vsel %vm501, %v314, 0.0
  %v600 = vadd.f32 %v598, %v599
  %v601 = vsel %vm501, %v319, 0.0
  %v602 = vadd.f32 %v600, %v601
  %v603 = vsel %vm501, %v322, 0.0
  %v604 = vadd.f32 %v602, %v603
  %v605 = vsel %vm501, %v327, 0.0
  %v606 = vadd.f32 %v604, %v605
  %v607 = vsel %vm501, %v330, 0.0
  %v608 = vadd.f32 %v606, %v607
  %v609 = vsel %vm501, %v335, 0.0
  %v610 = vadd.f32 %v608, %v609
  %v611 = vsel %vm501, %v338, 0.0
  %v612 = vadd.f32 %v610, %v611
  %v613 = vsel %vm501, %v343, 0.0
  %v614 = vadd.f32 %v612, %v613
  %v615 = vsel %vm501, %v346, 0.0
  %v616 = vadd.f32 %v614, %v615
  %v617 = vsel %vm501, %v351, 0.0
  %v618 = vadd.f32 %v616, %v617
  %v619 = vsel %vm501, %v354, 0.0
  %v620 = vadd.f32 %v618, %v619
  %v621 = vsel %vm501, %v359, 0.0
  %v622 = vadd.f32 %v620, %v621
  %v623 = vsel %vm501, %v362, 0.0
  %v624 = vadd.f32 %v622, %v623
  %v625 = vsel %vm501, %v367, 0.0
  %v626 = vadd.f32 %v624, %v625
  %v627 = vsel %vm501, %v370, 0.0
  %v628 = vadd.f32 %v626, %v627
  %v629 = vsel %vm501, %v375, 0.0
  %v630 = vadd.f32 %v628, %v629
  %v631 = vsel %vm501, %v378, 0.0
  %v632 = vadd.f32 %v630, %v631
  %v633 = vsel %vm501, %v383, 0.0
  %v634 = vadd.f32 %v632, %v633
  %v635 = vsel %vm501, %v386, 0.0
  %v636 = vadd.f32 %v634, %v635
  %v637 = vsel %vm501, %v391, 0.0
  %v638 = vadd.f32 %v636, %v637
  %v639 = vsel %vm501, %v394, 0.0
  %v640 = vadd.f32 %v638, %v639
  %v641 = vsel %vm501, %v399, 0.0
  %v642 = vadd.f32 %v640, %v641
  %v643 = vsel %vm501, %v402, 0.0
  %v644 = vadd.f32 %v642, %v643
  %v645 = vsel %vm501, %v407, 0.0
  %v646 = vadd.f32 %v644, %v645
  %v647 = vsel %vm501, %v410, 0.0
  %v648 = vadd.f32 %v646, %v647
  %v649 = vsel %vm501, %v415, 0.0
  %v650 = vadd.f32 %v648, %v649
  %v651 = vsel %vm501, %v418, 0.0
  %v652 = vadd.f32 %v650, %v651
  %v653 = vsel %vm501, %v423, 0.0
  %v654 = vadd.f32 %v652, %v653
  %v655 = vsel %vm501, %v426, 0.0
  %v656 = vadd.f32 %v654, %v655
  %v657 = vsel %vm501, %v431, 0.0
  %v658 = vadd.f32 %v656, %v657
  %v659 = vsel %vm501, %v434, 0.0
  %v660 = vadd.f32 %v658, %v659
  %v661 = vsel %vm501, %v439, 0.0
  %v662 = vadd.f32 %v660, %v661
  %v663 = vsel %vm501, %v442, 0.0
  %v664 = vadd.f32 %v662, %v663
  %v665 = vsel %vm501, %v447, 0.0
  %v666 = vadd.f32 %v664, %v665
  %v667 = vsel %vm501, %v450, 0.0
  %v668 = vadd.f32 %v666, %v667
  %v669 = vsel %vm501, %v455, 0.0
  %v670 = vadd.f32 %v668, %v669
  %v671 = vsel %vm501, %v458, 0.0
  %v672 = vadd.f32 %v670, %v671
  %v673 = vsel %vm501, %v463, 0.0
  %v674 = vadd.f32 %v672, %v673
  %v675 = vsel %vm501, %v466, 0.0
  %v676 = vadd.f32 %v674, %v675
  %v677 = vsel %vm501, %v471, 0.0
  %v678 = vadd.f32 %v676, %v677
  %v679 = vsel %vm501, %v474, 0.0
  %v680 = vadd.f32 %v678, %v679
  %v681 = vsel %vm501, %v479, 0.0
  %v682 = vadd.f32 %v680, %v681
  %v683 = vsel %vm501, %v482, 0.0
  %v684 = vadd.f32 %v682, %v683
  %v685 = vsel %vm501, %v487, 0.0
  %v686 = vadd.f32 %v684, %v685
  %v687 = vsel %vm501, %v490, 0.0
  %v688 = vadd.f32 %v686, %v687
  %v689 = vsel %vm501, %v495, 0.0
  %v690 = vadd.f32 %v688, %v689
  %v691 = vsel %vm501, %v498, 0.0
  %v692 = vadd.f32 %v690, %v691
  %v693 = vrot.slane %v692, 4
  %v694 = vadd.f32 %v692, %v693
  %v695 = vrot.slane %v694, 2
  %v696 = vadd.f32 %v694, %v695
  %v697 = vrot.slane %v696, 1
  %v698 = vadd.f32 %v696, %v697
  %v699 = vmul.f32 %v247, %v247
  %v700 = vmul.f32 %v250, %v250
  %v701 = vmul.f32 %v255, %v255
  %v702 = vmul.f32 %v258, %v258
  %v703 = vmul.f32 %v263, %v263
  %v704 = vmul.f32 %v266, %v266
  %v705 = vmul.f32 %v271, %v271
  %v706 = vmul.f32 %v274, %v274
  %v707 = vmul.f32 %v279, %v279
  %v708 = vmul.f32 %v282, %v282
  %v709 = vmul.f32 %v287, %v287
  %v710 = vmul.f32 %v290, %v290
  %v711 = vmul.f32 %v295, %v295
  %v712 = vmul.f32 %v298, %v298
  %v713 = vmul.f32 %v303, %v303
  %v714 = vmul.f32 %v306, %v306
  %v715 = vmul.f32 %v311, %v311
  %v716 = vmul.f32 %v314, %v314
  %v717 = vmul.f32 %v319, %v319
  %v718 = vmul.f32 %v322, %v322
  %v719 = vmul.f32 %v327, %v327
  %v720 = vmul.f32 %v330, %v330
  %v721 = vmul.f32 %v335, %v335
  %v722 = vmul.f32 %v338, %v338
  %v723 = vmul.f32 %v343, %v343
  %v724 = vmul.f32 %v346, %v346
  %v725 = vmul.f32 %v351, %v351
  %v726 = vmul.f32 %v354, %v354
  %v727 = vmul.f32 %v359, %v359
  %v728 = vmul.f32 %v362, %v362
  %v729 = vmul.f32 %v367, %v367
  %v730 = vmul.f32 %v370, %v370
  %v731 = vmul.f32 %v375, %v375
  %v732 = vmul.f32 %v378, %v378
  %v733 = vmul.f32 %v383, %v383
  %v734 = vmul.f32 %v386, %v386
  %v735 = vmul.f32 %v391, %v391
  %v736 = vmul.f32 %v394, %v394
  %v737 = vmul.f32 %v399, %v399
  %v738 = vmul.f32 %v402, %v402
  %v739 = vmul.f32 %v407, %v407
  %v740 = vmul.f32 %v410, %v410
  %v741 = vmul.f32 %v415, %v415
  %v742 = vmul.f32 %v418, %v418
  %v743 = vmul.f32 %v423, %v423
  %v744 = vmul.f32 %v426, %v426
  %v745 = vmul.f32 %v431, %v431
  %v746 = vmul.f32 %v434, %v434
  %v747 = vmul.f32 %v439, %v439
  %v748 = vmul.f32 %v442, %v442
  %v749 = vmul.f32 %v447, %v447
  %v750 = vmul.f32 %v450, %v450
  %v751 = vmul.f32 %v455, %v455
  %v752 = vmul.f32 %v458, %v458
  %v753 = vmul.f32 %v463, %v463
  %v754 = vmul.f32 %v466, %v466
  %v755 = vmul.f32 %v471, %v471
  %v756 = vmul.f32 %v474, %v474
  %v757 = vmul.f32 %v479, %v479
  %v758 = vmul.f32 %v482, %v482
  %v759 = vmul.f32 %v487, %v487
  %v760 = vmul.f32 %v490, %v490
  %v761 = vmul.f32 %v495, %v495
  %v762 = vmul.f32 %v498, %v498
  %v763 = vsel %vm501, %v699, 0.0
  %v764 = vsel %vm501, %v700, 0.0
  %v765 = vadd.f32 %v763, %v764
  %v766 = vsel %vm501, %v701, 0.0
  %v767 = vadd.f32 %v765, %v766
  %v768 = vsel %vm501, %v702, 0.0
  %v769 = vadd.f32 %v767, %v768
  %v770 = vsel %vm501, %v703, 0.0
  %v771 = vadd.f32 %v769, %v770
  %v772 = vsel %vm501, %v704, 0.0
  %v773 = vadd.f32 %v771, %v772
  %v774 = vsel %vm501, %v705, 0.0
  %v775 = vadd.f32 %v773, %v774
  %v776 = vsel %vm501, %v706, 0.0
  %v777 = vadd.f32 %v775, %v776
  %v778 = vsel %vm501, %v707, 0.0
  %v779 = vadd.f32 %v777, %v778
  %v780 = vsel %vm501, %v708, 0.0
  %v781 = vadd.f32 %v779, %v780
  %v782 = vsel %vm501, %v709, 0.0
  %v783 = vadd.f32 %v781, %v782
  %v784 = vsel %vm501, %v710, 0.0
  %v785 = vadd.f32 %v783, %v784
  %v786 = vsel %vm501, %v711, 0.0
  %v787 = vadd.f32 %v785, %v786
  %v788 = vsel %vm501, %v712, 0.0
  %v789 = vadd.f32 %v787, %v788
  %v790 = vsel %vm501, %v713, 0.0
  %v791 = vadd.f32 %v789, %v790
  %v792 = vsel %vm501, %v714, 0.0
  %v793 = vadd.f32 %v791, %v792
  %v794 = vsel %vm501, %v715, 0.0
  %v795 = vadd.f32 %v793, %v794
  %v796 = vsel %vm501, %v716, 0.0
  %v797 = vadd.f32 %v795, %v796
  %v798 = vsel %vm501, %v717, 0.0
  %v799 = vadd.f32 %v797, %v798
  %v800 = vsel %vm501, %v718, 0.0
  %v801 = vadd.f32 %v799, %v800
  %v802 = vsel %vm501, %v719, 0.0
  %v803 = vadd.f32 %v801, %v802
  %v804 = vsel %vm501, %v720, 0.0
  %v805 = vadd.f32 %v803, %v804
  %v806 = vsel %vm501, %v721, 0.0
  %v807 = vadd.f32 %v805, %v806
  %v808 = vsel %vm501, %v722, 0.0
  %v809 = vadd.f32 %v807, %v808
  %v810 = vsel %vm501, %v723, 0.0
  %v811 = vadd.f32 %v809, %v810
  %v812 = vsel %vm501, %v724, 0.0
  %v813 = vadd.f32 %v811, %v812
  %v814 = vsel %vm501, %v725, 0.0
  %v815 = vadd.f32 %v813, %v814
  %v816 = vsel %vm501, %v726, 0.0
  %v817 = vadd.f32 %v815, %v816
  %v818 = vsel %vm501, %v727, 0.0
  %v819 = vadd.f32 %v817, %v818
  %v820 = vsel %vm501, %v728, 0.0
  %v821 = vadd.f32 %v819, %v820
  %v822 = vsel %vm501, %v729, 0.0
  %v823 = vadd.f32 %v821, %v822
  %v824 = vsel %vm501, %v730, 0.0
  %v825 = vadd.f32 %v823, %v824
  %v826 = vsel %vm501, %v731, 0.0
  %v827 = vadd.f32 %v825, %v826
  %v828 = vsel %vm501, %v732, 0.0
  %v829 = vadd.f32 %v827, %v828
  %v830 = vsel %vm501, %v733, 0.0
  %v831 = vadd.f32 %v829, %v830
  %v832 = vsel %vm501, %v734, 0.0
  %v833 = vadd.f32 %v831, %v832
  %v834 = vsel %vm501, %v735, 0.0
  %v835 = vadd.f32 %v833, %v834
  %v836 = vsel %vm501, %v736, 0.0
  %v837 = vadd.f32 %v835, %v836
  %v838 = vsel %vm501, %v737, 0.0
  %v839 = vadd.f32 %v837, %v838
  %v840 = vsel %vm501, %v738, 0.0
  %v841 = vadd.f32 %v839, %v840
  %v842 = vsel %vm501, %v739, 0.0
  %v843 = vadd.f32 %v841, %v842
  %v844 = vsel %vm501, %v740, 0.0
  %v845 = vadd.f32 %v843, %v844
  %v846 = vsel %vm501, %v741, 0.0
  %v847 = vadd.f32 %v845, %v846
  %v848 = vsel %vm501, %v742, 0.0
  %v849 = vadd.f32 %v847, %v848
  %v850 = vsel %vm501, %v743, 0.0
  %v851 = vadd.f32 %v849, %v850
  %v852 = vsel %vm501, %v744, 0.0
  %v853 = vadd.f32 %v851, %v852
  %v854 = vsel %vm501, %v745, 0.0
  %v855 = vadd.f32 %v853, %v854
  %v856 = vsel %vm501, %v746, 0.0
  %v857 = vadd.f32 %v855, %v856
  %v858 = vsel %vm501, %v747, 0.0
  %v859 = vadd.f32 %v857, %v858
  %v860 = vsel %vm501, %v748, 0.0
  %v861 = vadd.f32 %v859, %v860
  %v862 = vsel %vm501, %v749, 0.0
  %v863 = vadd.f32 %v861, %v862
  %v864 = vsel %vm501, %v750, 0.0
  %v865 = vadd.f32 %v863, %v864
  %v866 = vsel %vm501, %v751, 0.0
  %v867 = vadd.f32 %v865, %v866
  %v868 = vsel %vm501, %v752, 0.0
  %v869 = vadd.f32 %v867, %v868
  %v870 = vsel %vm501, %v753, 0.0
  %v871 = vadd.f32 %v869, %v870
  %v872 = vsel %vm501, %v754, 0.0
  %v873 = vadd.f32 %v871, %v872
  %v874 = vsel %vm501, %v755, 0.0
  %v875 = vadd.f32 %v873, %v874
  %v876 = vsel %vm501, %v756, 0.0
  %v877 = vadd.f32 %v875, %v876
  %v878 = vsel %vm501, %v757, 0.0
  %v879 = vadd.f32 %v877, %v878
  %v880 = vsel %vm501, %v758, 0.0
  %v881 = vadd.f32 %v879, %v880
  %v882 = vsel %vm501, %v759, 0.0
  %v883 = vadd.f32 %v881, %v882
  %v884 = vsel %vm501, %v760, 0.0
  %v885 = vadd.f32 %v883, %v884
  %v886 = vsel %vm501, %v761, 0.0
  %v887 = vadd.f32 %v885, %v886
  %v888 = vsel %vm501, %v762, 0.0
  %v889 = vadd.f32 %v887, %v888
  %v890 = vrot.slane %v889, 4
  %v891 = vadd.f32 %v889, %v890
  %v892 = vrot.slane %v891, 2
  %v893 = vadd.f32 %v891, %v892
  %v894 = vrot.slane %v893, 1
  %v895 = vadd.f32 %v893, %v894
  %vm896 = vcmask 1040384
  %v897 = vsel %vm896, %v698, %v895
  %vm898 = vcmask 123904
  %899 = vst.msk [vmem:[%s3] sm:$0x3] %vm898, %v897
  // Predicated region
  $region10: #{bottleneck_forward.8} parent=0 // pred_check
    _
  $region11: #{bottleneck_forward.8} parent=0 // pred_check_branch
    %901 = sbr.rel (0) target = $region13
  $region12: #{bottleneck_forward.8} parent=0 // pred_region
    _
  $region13: #{bottleneck_forward.8} parent=0 // pred_fallthru
    _
  // Predicated region
  $region14: #{bottleneck_forward.8} parent=0 // pred_check
    _
  $region15: #{bottleneck_forward.8} parent=0 // pred_check_branch
    %903 = sbr.rel (0) target = $region17
  $region16: #{bottleneck_forward.8} parent=0 // pred_region
    _
  $region17: #{bottleneck_forward.8} parent=0 // pred_fallthru
    _
  // Predicated region
  $region18: #{bottleneck_forward.8} parent=0 // pred_check
    _
  $region19: #{bottleneck_forward.8} parent=0 // pred_check_branch
    %905 = sbr.rel (0) target = $region21
  $region20: #{bottleneck_forward.8} parent=0 // pred_region
    _
  $region21: #{bottleneck_forward.8} parent=0 // pred_fallthru
    _
  // Predicated region
  $region22: #{bottleneck_forward.8} parent=0 // pred_check
    _
  $region23: #{bottleneck_forward.8} parent=0 // pred_check_branch
    %907 = sbr.rel (0) target = $region25
  $region24: #{bottleneck_forward.8} parent=0 // pred_region
    _
  $region25: #{bottleneck_forward.8} parent=0 // pred_fallthru
    _

// kernel: bottleneck_forward.5
$region0: #{bottleneck_forward.5}
  #allocation0 [shape = 'u32[]', space=smem, size = 0x4, offset = 0x4, fixed_abs, tag = 'smem constant byte address 0x4 - core index']
  #allocation1 [shape = 'u32[144,128]{1,0:T(1,128)}', space=vmem, size = 0x12000, scoped, tag = 'internal scratch']
  %s0 = inlined_call_operand.vmem [shape: f32[512,4], index: 0, kind: input, shape index: {}]
  %s1 = inlined_call_operand.vmem [shape: bf16[4,4], index: 1, kind: input, shape index: {}]
  %s2 = inlined_call_operand.vmem [shape: f32[512,4], index: 2, kind: output, shape index: {0}]
  %s3 = inlined_call_operand.vmem [shape: f32[1,2,4], index: 3, kind: output, shape index: {1}]
  %4 = xla_tuple %s2, %s3
  %s5 = sld [smem:[#allocation0]]
  $region26: #{bottleneck_forward.5} parent=0
    _
  %s7 = ssub.s32 1, %s5
  %s8 = scalar_select 0, %s7, %s5
  // Predicated region
  $region2: #{bottleneck_forward.5} parent=0 // pred_check
    _
  $region3: #{bottleneck_forward.5} parent=0 // pred_check_branch
    %10 = sbr.rel (0) target = $region5
  $region4: #{bottleneck_forward.5} parent=0 // pred_region
    _
  $region5: #{bottleneck_forward.5} parent=0 // pred_fallthru
    _
  // Predicated region
  $region6: #{bottleneck_forward.5} parent=0 // pred_check
    _
  $region7: #{bottleneck_forward.5} parent=0 // pred_check_branch
    %12 = sbr.rel (0) target = $region9
  $region8: #{bottleneck_forward.5} parent=0 // pred_region
    _
  $region9: #{bottleneck_forward.5} parent=0 // pred_fallthru
    _
  %v14 = vld [vmem:[%s0] sm:$0xff]
  %v15 = vld [vmem:[%s0 + $0x8] sm:$0xff]
  %v16 = vld [vmem:[%s0 + $0x10] sm:$0xff]
  %v17 = vld [vmem:[%s0 + $0x18] sm:$0xff]
  %v18 = vld [vmem:[%s0 + $0x20] sm:$0xff]
  %v19 = vld [vmem:[%s0 + $0x28] sm:$0xff]
  %v20 = vld [vmem:[%s0 + $0x30] sm:$0xff]
  %v21 = vld [vmem:[%s0 + $0x38] sm:$0xff]
  %v22 = vld [vmem:[%s0 + $0x40] sm:$0xff]
  %v23 = vld [vmem:[%s0 + $0x48] sm:$0xff]
  %v24 = vld [vmem:[%s0 + $0x50] sm:$0xff]
  %v25 = vld [vmem:[%s0 + $0x58] sm:$0xff]
  %v26 = vld [vmem:[%s0 + $0x60] sm:$0xff]
  %v27 = vld [vmem:[%s0 + $0x68] sm:$0xff]
  %v28 = vld [vmem:[%s0 + $0x70] sm:$0xff]
  %v29 = vld [vmem:[%s0 + $0x78] sm:$0xff]
  %v30 = vld [vmem:[%s0 + $0x80] sm:$0xff]
  %v31 = vld [vmem:[%s0 + $0x88] sm:$0xff]
  %v32 = vld [vmem:[%s0 + $0x90] sm:$0xff]
  %v33 = vld [vmem:[%s0 + $0x98] sm:$0xff]
  %v34 = vld [vmem:[%s0 + $0xa0] sm:$0xff]
  %v35 = vld [vmem:[%s0 + $0xa8] sm:$0xff]
  %v36 = vld [vmem:[%s0 + $0xb0] sm:$0xff]
  %v37 = vld [vmem:[%s0 + $0xb8] sm:$0xff]
  %v38 = vld [vmem:[%s0 + $0xc0] sm:$0xff]
  %v39 = vld [vmem:[%s0 + $0xc8] sm:$0xff]
  %v40 = vld [vmem:[%s0 + $0xd0] sm:$0xff]
  %v41 = vld [vmem:[%s0 + $0xd8] sm:$0xff]
  %v42 = vld [vmem:[%s0 + $0xe0] sm:$0xff]
  %v43 = vld [vmem:[%s0 + $0xe8] sm:$0xff]
  %v44 = vld [vmem:[%s0 + $0xf0] sm:$0xff]
  %v45 = vld [vmem:[%s0 + $0xf8] sm:$0xff]
  %v46 = vld [vmem:[%s0 + $0x100] sm:$0xff]
  %v47 = vld [vmem:[%s0 + $0x108] sm:$0xff]
  %v48 = vld [vmem:[%s0 + $0x110] sm:$0xff]
  %v49 = vld [vmem:[%s0 + $0x118] sm:$0xff]
  %v50 = vld [vmem:[%s0 + $0x120] sm:$0xff]
  %v51 = vld [vmem:[%s0 + $0x128] sm:$0xff]
  %v52 = vld [vmem:[%s0 + $0x130] sm:$0xff]
  %v53 = vld [vmem:[%s0 + $0x138] sm:$0xff]
  %v54 = vld [vmem:[%s0 + $0x140] sm:$0xff]
  %v55 = vld [vmem:[%s0 + $0x148] sm:$0xff]
  %v56 = vld [vmem:[%s0 + $0x150] sm:$0xff]
  %v57 = vld [vmem:[%s0 + $0x158] sm:$0xff]
  %v58 = vld [vmem:[%s0 + $0x160] sm:$0xff]
  %v59 = vld [vmem:[%s0 + $0x168] sm:$0xff]
  %v60 = vld [vmem:[%s0 + $0x170] sm:$0xff]
  %v61 = vld [vmem:[%s0 + $0x178] sm:$0xff]
  %v62 = vld [vmem:[%s0 + $0x180] sm:$0xff]
  %v63 = vld [vmem:[%s0 + $0x188] sm:$0xff]
  %v64 = vld [vmem:[%s0 + $0x190] sm:$0xff]
  %v65 = vld [vmem:[%s0 + $0x198] sm:$0xff]
  %v66 = vld [vmem:[%s0 + $0x1a0] sm:$0xff]
  %v67 = vld [vmem:[%s0 + $0x1a8] sm:$0xff]
  %v68 = vld [vmem:[%s0 + $0x1b0] sm:$0xff]
  %v69 = vld [vmem:[%s0 + $0x1b8] sm:$0xff]
  %v70 = vld [vmem:[%s0 + $0x1c0] sm:$0xff]
  %v71 = vld [vmem:[%s0 + $0x1c8] sm:$0xff]
  %v72 = vld [vmem:[%s0 + $0x1d0] sm:$0xff]
  %v73 = vld [vmem:[%s0 + $0x1d8] sm:$0xff]
  %v74 = vld [vmem:[%s0 + $0x1e0] sm:$0xff]
  %v75 = vld [vmem:[%s0 + $0x1e8] sm:$0xff]
  %v76 = vld [vmem:[%s0 + $0x1f0] sm:$0xff]
  %v77 = vld [vmem:[%s0 + $0x1f8] sm:$0xff]
  %v78 = vpack.c.bf16 %v15, %v14
  %v79 = vpack.c.bf16 %v17, %v16
  %v80 = vpack.c.bf16 %v19, %v18
  %v81 = vpack.c.bf16 %v21, %v20
  %v82 = vpack.c.bf16 %v23, %v22
  %v83 = vpack.c.bf16 %v25, %v24
  %v84 = vpack.c.bf16 %v27, %v26
  %v85 = vpack.c.bf16 %v29, %v28
  %v86 = vpack.c.bf16 %v31, %v30
  %v87 = vpack.c.bf16 %v33, %v32
  %v88 = vpack.c.bf16 %v35, %v34
  %v89 = vpack.c.bf16 %v37, %v36
  %v90 = vpack.c.bf16 %v39, %v38
  %v91 = vpack.c.bf16 %v41, %v40
  %v92 = vpack.c.bf16 %v43, %v42
  %v93 = vpack.c.bf16 %v45, %v44
  %v94 = vpack.c.bf16 %v47, %v46
  %v95 = vpack.c.bf16 %v49, %v48
  %v96 = vpack.c.bf16 %v51, %v50
  %v97 = vpack.c.bf16 %v53, %v52
  %v98 = vpack.c.bf16 %v55, %v54
  %v99 = vpack.c.bf16 %v57, %v56
  %v100 = vpack.c.bf16 %v59, %v58
  %v101 = vpack.c.bf16 %v61, %v60
  %v102 = vpack.c.bf16 %v63, %v62
  %v103 = vpack.c.bf16 %v65, %v64
  %v104 = vpack.c.bf16 %v67, %v66
  %v105 = vpack.c.bf16 %v69, %v68
  %v106 = vpack.c.bf16 %v71, %v70
  %v107 = vpack.c.bf16 %v73, %v72
  %v108 = vpack.c.bf16 %v75, %v74
  %v109 = vpack.c.bf16 %v77, %v76
  %v110 = vld [vmem:[%s1] sm:$0x3]
  %vm111 = vcmask 31744
  %v113 = vsel %vm111, %v78, 0
  %v116 = vsel %vm111, %v79, 0
  %v119 = vsel %vm111, %v80, 0
  %v122 = vsel %vm111, %v81, 0
  %v125 = vsel %vm111, %v82, 0
  %v128 = vsel %vm111, %v83, 0
  %v131 = vsel %vm111, %v84, 0
  %v134 = vsel %vm111, %v85, 0
  %v137 = vsel %vm111, %v86, 0
  %v140 = vsel %vm111, %v87, 0
  %v143 = vsel %vm111, %v88, 0
  %v146 = vsel %vm111, %v89, 0
  %v149 = vsel %vm111, %v90, 0
  %v152 = vsel %vm111, %v91, 0
  %v155 = vsel %vm111, %v92, 0
  %v158 = vsel %vm111, %v93, 0
  %v161 = vsel %vm111, %v94, 0
  %v164 = vsel %vm111, %v95, 0
  %v167 = vsel %vm111, %v96, 0
  %v170 = vsel %vm111, %v97, 0
  %v173 = vsel %vm111, %v98, 0
  %v176 = vsel %vm111, %v99, 0
  %v179 = vsel %vm111, %v100, 0
  %v182 = vsel %vm111, %v101, 0
  %v185 = vsel %vm111, %v102, 0
  %v188 = vsel %vm111, %v103, 0
  %v191 = vsel %vm111, %v104, 0
  %v194 = vsel %vm111, %v105, 0
  %v197 = vsel %vm111, %v106, 0
  %v200 = vsel %vm111, %v107, 0
  %v203 = vsel %vm111, %v108, 0
  %v206 = vsel %vm111, %v109, 0
  %vm208 = vcmask 1041408
  %v210 = vsel %vm208, %v110, 0
  %212 = vmatprep.subr.bf16.mxu0 0
  %213 = vmatpush1.bf16.msra.mxu0 0
  %214 = vmatprep.subr.bf16.mxu0 0
  %215 = vmatpush1.bf16.msra.mxu0 0
  %216 = vmatprep.subr.bf16.mxu0 0
  %217 = vmatpush1.bf16.msra.mxu0 0
  %218 = vmatprep.subr.bf16.mxu0 0
  %219 = vmatpush1.bf16.msra.mxu0 0
  %220 = vmatprep.subr.bf16.mxu0 0
  %221 = vmatpush1.bf16.msra.mxu0 0
  %222 = vmatprep.subr.bf16.mxu0 0
  %223 = vmatpush1.bf16.msra.mxu0 0
  %224 = vmatprep.subr.bf16.mxu0 0
  %225 = vmatpush1.bf16.msra.mxu0 0
  %226 = vmatprep.subr.bf16.mxu0 0
  %227 = vmatpush1.bf16.msra.mxu0 %v210
  %228 = vmatprep.subr.bf16.mxu0 0
  %229 = vmatpush2.bf16.msra.mxu0 0
  %230 = vmatprep.subr.bf16.mxu0 0
  %231 = vmatpush2.bf16.msra.mxu0 0
  %232 = vmatprep.subr.bf16.mxu0 0
  %233 = vmatpush2.bf16.msra.mxu0 0
  %234 = vmatprep.subr.bf16.mxu0 0
  %235 = vmatpush2.bf16.msra.mxu0 0
  %236 = vmatprep.subr.bf16.mxu0 0
  %237 = vmatpush2.bf16.msra.mxu0 0
  %238 = vmatprep.subr.bf16.mxu0 0
  %239 = vmatpush2.bf16.msra.mxu0 0
  %240 = vmatprep.subr.bf16.mxu0 0
  %241 = vmatpush2.bf16.msra.mxu0 0
  %242 = vmatprep.subr.bf16.mxu0 0
  %243 = vmatpush2.bf16.msra.mxu0 0
  %244 = vmatprep.mubr.bf16.mxu0 0
  %245 = vmatmul.mubr.bf16.gmra.mxu0 %v113
  %v246 = vpop.f32.mrf.mxu0
  %v247 = vadd.f32 0.0, %v246
  %v248 = vpop.f32.mrf.mxu0
  %v249 = vpop.f32.mrf.mxu0
  %v250 = vadd.f32 0.0, %v249
  %v251 = vpop.f32.mrf.mxu0
  %252 = vmatprep.mubr.bf16.mxu0 0
  %253 = vmatmul.mubr.bf16.gmra.mxu0 %v116
  %v254 = vpop.f32.mrf.mxu0
  %v255 = vadd.f32 0.0, %v254
  %v256 = vpop.f32.mrf.mxu0
  %v257 = vpop.f32.mrf.mxu0
  %v258 = vadd.f32 0.0, %v257
  %v259 = vpop.f32.mrf.mxu0
  %260 = vmatprep.mubr.bf16.mxu0 0
  %261 = vmatmul.mubr.bf16.gmra.mxu0 %v119
  %v262 = vpop.f32.mrf.mxu0
  %v263 = vadd.f32 0.0, %v262
  %v264 = vpop.f32.mrf.mxu0
  %v265 = vpop.f32.mrf.mxu0
  %v266 = vadd.f32 0.0, %v265
  %v267 = vpop.f32.mrf.mxu0
  %268 = vmatprep.mubr.bf16.mxu0 0
  %269 = vmatmul.mubr.bf16.gmra.mxu0 %v122
  %v270 = vpop.f32.mrf.mxu0
  %v271 = vadd.f32 0.0, %v270
  %v272 = vpop.f32.mrf.mxu0
  %v273 = vpop.f32.mrf.mxu0
  %v274 = vadd.f32 0.0, %v273
  %v275 = vpop.f32.mrf.mxu0
  %276 = vmatprep.mubr.bf16.mxu0 0
  %277 = vmatmul.mubr.bf16.gmra.mxu0 %v125
  %v278 = vpop.f32.mrf.mxu0
  %v279 = vadd.f32 0.0, %v278
  %v280 = vpop.f32.mrf.mxu0
  %v281 = vpop.f32.mrf.mxu0
  %v282 = vadd.f32 0.0, %v281
  %v283 = vpop.f32.mrf.mxu0
  %284 = vmatprep.mubr.bf16.mxu0 0
  %285 = vmatmul.mubr.bf16.gmra.mxu0 %v128
  %v286 = vpop.f32.mrf.mxu0
  %v287 = vadd.f32 0.0, %v286
  %v288 = vpop.f32.mrf.mxu0
  %v289 = vpop.f32.mrf.mxu0
  %v290 = vadd.f32 0.0, %v289
  %v291 = vpop.f32.mrf.mxu0
  %292 = vmatprep.mubr.bf16.mxu0 0
  %293 = vmatmul.mubr.bf16.gmra.mxu0 %v131
  %v294 = vpop.f32.mrf.mxu0
  %v295 = vadd.f32 0.0, %v294
  %v296 = vpop.f32.mrf.mxu0
  %v297 = vpop.f32.mrf.mxu0
  %v298 = vadd.f32 0.0, %v297
  %v299 = vpop.f32.mrf.mxu0
  %300 = vmatprep.mubr.bf16.mxu0 0
  %301 = vmatmul.mubr.bf16.gmra.mxu0 %v134
  %v302 = vpop.f32.mrf.mxu0
  %v303 = vadd.f32 0.0, %v302
  %v304 = vpop.f32.mrf.mxu0
  %v305 = vpop.f32.mrf.mxu0
  %v306 = vadd.f32 0.0, %v305
  %v307 = vpop.f32.mrf.mxu0
  %308 = vmatprep.mubr.bf16.mxu0 0
  %309 = vmatmul.mubr.bf16.gmra.mxu0 %v137
  %v310 = vpop.f32.mrf.mxu0
  %v311 = vadd.f32 0.0, %v310
  %v312 = vpop.f32.mrf.mxu0
  %v313 = vpop.f32.mrf.mxu0
  %v314 = vadd.f32 0.0, %v313
  %v315 = vpop.f32.mrf.mxu0
  %316 = vmatprep.mubr.bf16.mxu0 0
  %317 = vmatmul.mubr.bf16.gmra.mxu0 %v140
  %v318 = vpop.f32.mrf.mxu0
  %v319 = vadd.f32 0.0, %v318
  %v320 = vpop.f32.mrf.mxu0
  %v321 = vpop.f32.mrf.mxu0
  %v322 = vadd.f32 0.0, %v321
  %v323 = vpop.f32.mrf.mxu0
  %324 = vmatprep.mubr.bf16.mxu0 0
  %325 = vmatmul.mubr.bf16.gmra.mxu0 %v143
  %v326 = vpop.f32.mrf.mxu0
  %v327 = vadd.f32 0.0, %v326
  %v328 = vpop.f32.mrf.mxu0
  %v329 = vpop.f32.mrf.mxu0
  %v330 = vadd.f32 0.0, %v329
  %v331 = vpop.f32.mrf.mxu0
  %332 = vmatprep.mubr.bf16.mxu0 0
  %333 = vmatmul.mubr.bf16.gmra.mxu0 %v146
  %v334 = vpop.f32.mrf.mxu0
  %v335 = vadd.f32 0.0, %v334
  %v336 = vpop.f32.mrf.mxu0
  %v337 = vpop.f32.mrf.mxu0
  %v338 = vadd.f32 0.0, %v337
  %v339 = vpop.f32.mrf.mxu0
  %340 = vmatprep.mubr.bf16.mxu0 0
  %341 = vmatmul.mubr.bf16.gmra.mxu0 %v149
  %v342 = vpop.f32.mrf.mxu0
  %v343 = vadd.f32 0.0, %v342
  %v344 = vpop.f32.mrf.mxu0
  %v345 = vpop.f32.mrf.mxu0
  %v346 = vadd.f32 0.0, %v345
  %v347 = vpop.f32.mrf.mxu0
  %348 = vmatprep.mubr.bf16.mxu0 0
  %349 = vmatmul.mubr.bf16.gmra.mxu0 %v152
  %v350 = vpop.f32.mrf.mxu0
  %v351 = vadd.f32 0.0, %v350
  %v352 = vpop.f32.mrf.mxu0
  %v353 = vpop.f32.mrf.mxu0
  %v354 = vadd.f32 0.0, %v353
  %v355 = vpop.f32.mrf.mxu0
  %356 = vmatprep.mubr.bf16.mxu0 0
  %357 = vmatmul.mubr.bf16.gmra.mxu0 %v155
  %v358 = vpop.f32.mrf.mxu0
  %v359 = vadd.f32 0.0, %v358
  %v360 = vpop.f32.mrf.mxu0
  %v361 = vpop.f32.mrf.mxu0
  %v362 = vadd.f32 0.0, %v361
  %v363 = vpop.f32.mrf.mxu0
  %364 = vmatprep.mubr.bf16.mxu0 0
  %365 = vmatmul.mubr.bf16.gmra.mxu0 %v158
  %v366 = vpop.f32.mrf.mxu0
  %v367 = vadd.f32 0.0, %v366
  %v368 = vpop.f32.mrf.mxu0
  %v369 = vpop.f32.mrf.mxu0
  %v370 = vadd.f32 0.0, %v369
  %v371 = vpop.f32.mrf.mxu0
  %372 = vmatprep.mubr.bf16.mxu0 0
  %373 = vmatmul.mubr.bf16.gmra.mxu0 %v161
  %v374 = vpop.f32.mrf.mxu0
  %v375 = vadd.f32 0.0, %v374
  %v376 = vpop.f32.mrf.mxu0
  %v377 = vpop.f32.mrf.mxu0
  %v378 = vadd.f32 0.0, %v377
  %v379 = vpop.f32.mrf.mxu0
  %380 = vmatprep.mubr.bf16.mxu0 0
  %381 = vmatmul.mubr.bf16.gmra.mxu0 %v164
  %v382 = vpop.f32.mrf.mxu0
  %v383 = vadd.f32 0.0, %v382
  %v384 = vpop.f32.mrf.mxu0
  %v385 = vpop.f32.mrf.mxu0
  %v386 = vadd.f32 0.0, %v385
  %v387 = vpop.f32.mrf.mxu0
  %388 = vmatprep.mubr.bf16.mxu0 0
  %389 = vmatmul.mubr.bf16.gmra.mxu0 %v167
  %v390 = vpop.f32.mrf.mxu0
  %v391 = vadd.f32 0.0, %v390
  %v392 = vpop.f32.mrf.mxu0
  %v393 = vpop.f32.mrf.mxu0
  %v394 = vadd.f32 0.0, %v393
  %v395 = vpop.f32.mrf.mxu0
  %396 = vmatprep.mubr.bf16.mxu0 0
  %397 = vmatmul.mubr.bf16.gmra.mxu0 %v170
  %v398 = vpop.f32.mrf.mxu0
  %v399 = vadd.f32 0.0, %v398
  %v400 = vpop.f32.mrf.mxu0
  %v401 = vpop.f32.mrf.mxu0
  %v402 = vadd.f32 0.0, %v401
  %v403 = vpop.f32.mrf.mxu0
  %404 = vmatprep.mubr.bf16.mxu0 0
  %405 = vmatmul.mubr.bf16.gmra.mxu0 %v173
  %v406 = vpop.f32.mrf.mxu0
  %v407 = vadd.f32 0.0, %v406
  %v408 = vpop.f32.mrf.mxu0
  %v409 = vpop.f32.mrf.mxu0
  %v410 = vadd.f32 0.0, %v409
  %v411 = vpop.f32.mrf.mxu0
  %412 = vmatprep.mubr.bf16.mxu0 0
  %413 = vmatmul.mubr.bf16.gmra.mxu0 %v176
  %v414 = vpop.f32.mrf.mxu0
  %v415 = vadd.f32 0.0, %v414
  %v416 = vpop.f32.mrf.mxu0
  %v417 = vpop.f32.mrf.mxu0
  %v418 = vadd.f32 0.0, %v417
  %v419 = vpop.f32.mrf.mxu0
  %420 = vmatprep.mubr.bf16.mxu0 0
  %421 = vmatmul.mubr.bf16.gmra.mxu0 %v179
  %v422 = vpop.f32.mrf.mxu0
  %v423 = vadd.f32 0.0, %v422
  %v424 = vpop.f32.mrf.mxu0
  %v425 = vpop.f32.mrf.mxu0
  %v426 = vadd.f32 0.0, %v425
  %v427 = vpop.f32.mrf.mxu0
  %428 = vmatprep.mubr.bf16.mxu0 0
  %429 = vmatmul.mubr.bf16.gmra.mxu0 %v182
  %v430 = vpop.f32.mrf.mxu0
  %v431 = vadd.f32 0.0, %v430
  %v432 = vpop.f32.mrf.mxu0
  %v433 = vpop.f32.mrf.mxu0
  %v434 = vadd.f32 0.0, %v433
  %v435 = vpop.f32.mrf.mxu0
  %436 = vmatprep.mubr.bf16.mxu0 0
  %437 = vmatmul.mubr.bf16.gmra.mxu0 %v185
  %v438 = vpop.f32.mrf.mxu0
  %v439 = vadd.f32 0.0, %v438
  %v440 = vpop.f32.mrf.mxu0
  %v441 = vpop.f32.mrf.mxu0
  %v442 = vadd.f32 0.0, %v441
  %v443 = vpop.f32.mrf.mxu0
  %444 = vmatprep.mubr.bf16.mxu0 0
  %445 = vmatmul.mubr.bf16.gmra.mxu0 %v188
  %v446 = vpop.f32.mrf.mxu0
  %v447 = vadd.f32 0.0, %v446
  %v448 = vpop.f32.mrf.mxu0
  %v449 = vpop.f32.mrf.mxu0
  %v450 = vadd.f32 0.0, %v449
  %v451 = vpop.f32.mrf.mxu0
  %452 = vmatprep.mubr.bf16.mxu0 0
  %453 = vmatmul.mubr.bf16.gmra.mxu0 %v191
  %v454 = vpop.f32.mrf.mxu0
  %v455 = vadd.f32 0.0, %v454
  %v456 = vpop.f32.mrf.mxu0
  %v457 = vpop.f32.mrf.mxu0
  %v458 = vadd.f32 0.0, %v457
  %v459 = vpop.f32.mrf.mxu0
  %460 = vmatprep.mubr.bf16.mxu0 0
  %461 = vmatmul.mubr.bf16.gmra.mxu0 %v194
  %v462 = vpop.f32.mrf.mxu0
  %v463 = vadd.f32 0.0, %v462
  %v464 = vpop.f32.mrf.mxu0
  %v465 = vpop.f32.mrf.mxu0
  %v466 = vadd.f32 0.0, %v465
  %v467 = vpop.f32.mrf.mxu0
  %468 = vmatprep.mubr.bf16.mxu0 0
  %469 = vmatmul.mubr.bf16.gmra.mxu0 %v197
  %v470 = vpop.f32.mrf.mxu0
  %v471 = vadd.f32 0.0, %v470
  %v472 = vpop.f32.mrf.mxu0
  %v473 = vpop.f32.mrf.mxu0
  %v474 = vadd.f32 0.0, %v473
  %v475 = vpop.f32.mrf.mxu0
  %476 = vmatprep.mubr.bf16.mxu0 0
  %477 = vmatmul.mubr.bf16.gmra.mxu0 %v200
  %v478 = vpop.f32.mrf.mxu0
  %v479 = vadd.f32 0.0, %v478
  %v480 = vpop.f32.mrf.mxu0
  %v481 = vpop.f32.mrf.mxu0
  %v482 = vadd.f32 0.0, %v481
  %v483 = vpop.f32.mrf.mxu0
  %484 = vmatprep.mubr.bf16.mxu0 0
  %485 = vmatmul.mubr.bf16.gmra.mxu0 %v203
  %v486 = vpop.f32.mrf.mxu0
  %v487 = vadd.f32 0.0, %v486
  %v488 = vpop.f32.mrf.mxu0
  %v489 = vpop.f32.mrf.mxu0
  %v490 = vadd.f32 0.0, %v489
  %v491 = vpop.f32.mrf.mxu0
  %492 = vmatprep.mubr.bf16.mxu0 0
  %493 = vmatmul.mubr.bf16.gmra.mxu0 %v206
  %v494 = vpop.f32.mrf.mxu0
  %v495 = vadd.f32 0.0, %v494
  %v496 = vpop.f32.mrf.mxu0
  %v497 = vpop.f32.mrf.mxu0
  %v498 = vadd.f32 0.0, %v497
  %v499 = vpop.f32.mrf.mxu0
  %500 = vdwg.mxu0
  %501 = vst.msk [vmem:[%s2] sm:$0xff] %vm111, %v247
  %502 = vst.msk [vmem:[%s2 + $0x8] sm:$0xff] %vm111, %v250
  %503 = vst.msk [vmem:[%s2 + $0x10] sm:$0xff] %vm111, %v255
  %504 = vst.msk [vmem:[%s2 + $0x18] sm:$0xff] %vm111, %v258
  %505 = vst.msk [vmem:[%s2 + $0x20] sm:$0xff] %vm111, %v263
  %506 = vst.msk [vmem:[%s2 + $0x28] sm:$0xff] %vm111, %v266
  %507 = vst.msk [vmem:[%s2 + $0x30] sm:$0xff] %vm111, %v271
  %508 = vst.msk [vmem:[%s2 + $0x38] sm:$0xff] %vm111, %v274
  %509 = vst.msk [vmem:[%s2 + $0x40] sm:$0xff] %vm111, %v279
  %510 = vst.msk [vmem:[%s2 + $0x48] sm:$0xff] %vm111, %v282
  %511 = vst.msk [vmem:[%s2 + $0x50] sm:$0xff] %vm111, %v287
  %512 = vst.msk [vmem:[%s2 + $0x58] sm:$0xff] %vm111, %v290
  %513 = vst.msk [vmem:[%s2 + $0x60] sm:$0xff] %vm111, %v295
  %514 = vst.msk [vmem:[%s2 + $0x68] sm:$0xff] %vm111, %v298
  %515 = vst.msk [vmem:[%s2 + $0x70] sm:$0xff] %vm111, %v303
  %516 = vst.msk [vmem:[%s2 + $0x78] sm:$0xff] %vm111, %v306
  %517 = vst.msk [vmem:[%s2 + $0x80] sm:$0xff] %vm111, %v311
  %518 = vst.msk [vmem:[%s2 + $0x88] sm:$0xff] %vm111, %v314
  %519 = vst.msk [vmem:[%s2 + $0x90] sm:$0xff] %vm111, %v319
  %520 = vst.msk [vmem:[%s2 + $0x98] sm:$0xff] %vm111, %v322
  %521 = vst.msk [vmem:[%s2 + $0xa0] sm:$0xff] %vm111, %v327
  %522 = vst.msk [vmem:[%s2 + $0xa8] sm:$0xff] %vm111, %v330
  %523 = vst.msk [vmem:[%s2 + $0xb0] sm:$0xff] %vm111, %v335
  %524 = vst.msk [vmem:[%s2 + $0xb8] sm:$0xff] %vm111, %v338
  %525 = vst.msk [vmem:[%s2 + $0xc0] sm:$0xff] %vm111, %v343
  %526 = vst.msk [vmem:[%s2 + $0xc8] sm:$0xff] %vm111, %v346
  %527 = vst.msk [vmem:[%s2 + $0xd0] sm:$0xff] %vm111, %v351
  %528 = vst.msk [vmem:[%s2 + $0xd8] sm:$0xff] %vm111, %v354
  %529 = vst.msk [vmem:[%s2 + $0xe0] sm:$0xff] %vm111, %v359
  %530 = vst.msk [vmem:[%s2 + $0xe8] sm:$0xff] %vm111, %v362
  %531 = vst.msk [vmem:[%s2 + $0xf0] sm:$0xff] %vm111, %v367
  %532 = vst.msk [vmem:[%s2 + $0xf8] sm:$0xff] %vm111, %v370
  %533 = vst.msk [vmem:[%s2 + $0x100] sm:$0xff] %vm111, %v375
  %534 = vst.msk [vmem:[%s2 + $0x108] sm:$0xff] %vm111, %v378
  %535 = vst.msk [vmem:[%s2 + $0x110] sm:$0xff] %vm111, %v383
  %536 = vst.msk [vmem:[%s2 + $0x118] sm:$0xff] %vm111, %v386
  %537 = vst.msk [vmem:[%s2 + $0x120] sm:$0xff] %vm111, %v391
  %538 = vst.msk [vmem:[%s2 + $0x128] sm:$0xff] %vm111, %v394
  %539 = vst.msk [vmem:[%s2 + $0x130] sm:$0xff] %vm111, %v399
  %540 = vst.msk [vmem:[%s2 + $0x138] sm:$0xff] %vm111, %v402
  %541 = vst.msk [vmem:[%s2 + $0x140] sm:$0xff] %vm111, %v407
  %542 = vst.msk [vmem:[%s2 + $0x148] sm:$0xff] %vm111, %v410
  %543 = vst.msk [vmem:[%s2 + $0x150] sm:$0xff] %vm111, %v415
  %544 = vst.msk [vmem:[%s2 + $0x158] sm:$0xff] %vm111, %v418
  %545 = vst.msk [vmem:[%s2 + $0x160] sm:$0xff] %vm111, %v423
  %546 = vst.msk [vmem:[%s2 + $0x168] sm:$0xff] %vm111, %v426
  %547 = vst.msk [vmem:[%s2 + $0x170] sm:$0xff] %vm111, %v431
  %548 = vst.msk [vmem:[%s2 + $0x178] sm:$0xff] %vm111, %v434
  %549 = vst.msk [vmem:[%s2 + $0x180] sm:$0xff] %vm111, %v439
  %550 = vst.msk [vmem:[%s2 + $0x188] sm:$0xff] %vm111, %v442
  %551 = vst.msk [vmem:[%s2 + $0x190] sm:$0xff] %vm111, %v447
  %552 = vst.msk [vmem:[%s2 + $0x198] sm:$0xff] %vm111, %v450
  %553 = vst.msk [vmem:[%s2 + $0x1a0] sm:$0xff] %vm111, %v455
  %554 = vst.msk [vmem:[%s2 + $0x1a8] sm:$0xff] %vm111, %v458
  %555 = vst.msk [vmem:[%s2 + $0x1b0] sm:$0xff] %vm111, %v463
  %556 = vst.msk [vmem:[%s2 + $0x1b8] sm:$0xff] %vm111, %v466
  %557 = vst.msk [vmem:[%s2 + $0x1c0] sm:$0xff] %vm111, %v471
  %558 = vst.msk [vmem:[%s2 + $0x1c8] sm:$0xff] %vm111, %v474
  %559 = vst.msk [vmem:[%s2 + $0x1d0] sm:$0xff] %vm111, %v479
  %560 = vst.msk [vmem:[%s2 + $0x1d8] sm:$0xff] %vm111, %v482
  %561 = vst.msk [vmem:[%s2 + $0x1e0] sm:$0xff] %vm111, %v487
  %562 = vst.msk [vmem:[%s2 + $0x1e8] sm:$0xff] %vm111, %v490
  %563 = vst.msk [vmem:[%s2 + $0x1f0] sm:$0xff] %vm111, %v495
  %564 = vst.msk [vmem:[%s2 + $0x1f8] sm:$0xff] %vm111, %v498
  %v565 = vsel %vm111, %v247, 0.0
  %v566 = vsel %vm111, %v250, 0.0
  %v567 = vadd.f32 %v565, %v566
  %v568 = vsel %vm111, %v255, 0.0
  %v569 = vadd.f32 %v567, %v568
  %v570 = vsel %vm111, %v258, 0.0
  %v571 = vadd.f32 %v569, %v570
  %v572 = vsel %vm111, %v263, 0.0
  %v573 = vadd.f32 %v571, %v572
  %v574 = vsel %vm111, %v266, 0.0
  %v575 = vadd.f32 %v573, %v574
  %v576 = vsel %vm111, %v271, 0.0
  %v577 = vadd.f32 %v575, %v576
  %v578 = vsel %vm111, %v274, 0.0
  %v579 = vadd.f32 %v577, %v578
  %v580 = vsel %vm111, %v279, 0.0
  %v581 = vadd.f32 %v579, %v580
  %v582 = vsel %vm111, %v282, 0.0
  %v583 = vadd.f32 %v581, %v582
  %v584 = vsel %vm111, %v287, 0.0
  %v585 = vadd.f32 %v583, %v584
  %v586 = vsel %vm111, %v290, 0.0
  %v587 = vadd.f32 %v585, %v586
  %v588 = vsel %vm111, %v295, 0.0
  %v589 = vadd.f32 %v587, %v588
  %v590 = vsel %vm111, %v298, 0.0
  %v591 = vadd.f32 %v589, %v590
  %v592 = vsel %vm111, %v303, 0.0
  %v593 = vadd.f32 %v591, %v592
  %v594 = vsel %vm111, %v306, 0.0
  %v595 = vadd.f32 %v593, %v594
  %v596 = vsel %vm111, %v311, 0.0
  %v597 = vadd.f32 %v595, %v596
  %v598 = vsel %vm111, %v314, 0.0
  %v599 = vadd.f32 %v597, %v598
  %v600 = vsel %vm111, %v319, 0.0
  %v601 = vadd.f32 %v599, %v600
  %v602 = vsel %vm111, %v322, 0.0
  %v603 = vadd.f32 %v601, %v602
  %v604 = vsel %vm111, %v327, 0.0
  %v605 = vadd.f32 %v603, %v604
  %v606 = vsel %vm111, %v330, 0.0
  %v607 = vadd.f32 %v605, %v606
  %v608 = vsel %vm111, %v335, 0.0
  %v609 = vadd.f32 %v607, %v608
  %v610 = vsel %vm111, %v338, 0.0
  %v611 = vadd.f32 %v609, %v610
  %v612 = vsel %vm111, %v343, 0.0
  %v613 = vadd.f32 %v611, %v612
  %v614 = vsel %vm111, %v346, 0.0
  %v615 = vadd.f32 %v613, %v614
  %v616 = vsel %vm111, %v351, 0.0
  %v617 = vadd.f32 %v615, %v616
  %v618 = vsel %vm111, %v354, 0.0
  %v619 = vadd.f32 %v617, %v618
  %v620 = vsel %vm111, %v359, 0.0
  %v621 = vadd.f32 %v619, %v620
  %v622 = vsel %vm111, %v362, 0.0
  %v623 = vadd.f32 %v621, %v622
  %v624 = vsel %vm111, %v367, 0.0
  %v625 = vadd.f32 %v623, %v624
  %v626 = vsel %vm111, %v370, 0.0
  %v627 = vadd.f32 %v625, %v626
  %v628 = vsel %vm111, %v375, 0.0
  %v629 = vadd.f32 %v627, %v628
  %v630 = vsel %vm111, %v378, 0.0
  %v631 = vadd.f32 %v629, %v630
  %v632 = vsel %vm111, %v383, 0.0
  %v633 = vadd.f32 %v631, %v632
  %v634 = vsel %vm111, %v386, 0.0
  %v635 = vadd.f32 %v633, %v634
  %v636 = vsel %vm111, %v391, 0.0
  %v637 = vadd.f32 %v635, %v636
  %v638 = vsel %vm111, %v394, 0.0
  %v639 = vadd.f32 %v637, %v638
  %v640 = vsel %vm111, %v399, 0.0
  %v641 = vadd.f32 %v639, %v640
  %v642 = vsel %vm111, %v402, 0.0
  %v643 = vadd.f32 %v641, %v642
  %v644 = vsel %vm111, %v407, 0.0
  %v645 = vadd.f32 %v643, %v644
  %v646 = vsel %vm111, %v410, 0.0
  %v647 = vadd.f32 %v645, %v646
  %v648 = vsel %vm111, %v415, 0.0
  %v649 = vadd.f32 %v647, %v648
  %v650 = vsel %vm111, %v418, 0.0
  %v651 = vadd.f32 %v649, %v650
  %v652 = vsel %vm111, %v423, 0.0
  %v653 = vadd.f32 %v651, %v652
  %v654 = vsel %vm111, %v426, 0.0
  %v655 = vadd.f32 %v653, %v654
  %v656 = vsel %vm111, %v431, 0.0
  %v657 = vadd.f32 %v655, %v656
  %v658 = vsel %vm111, %v434, 0.0
  %v659 = vadd.f32 %v657, %v658
  %v660 = vsel %vm111, %v439, 0.0
  %v661 = vadd.f32 %v659, %v660
  %v662 = vsel %vm111, %v442, 0.0
  %v663 = vadd.f32 %v661, %v662
  %v664 = vsel %vm111, %v447, 0.0
  %v665 = vadd.f32 %v663, %v664
  %v666 = vsel %vm111, %v450, 0.0
  %v667 = vadd.f32 %v665, %v666
  %v668 = vsel %vm111, %v455, 0.0
  %v669 = vadd.f32 %v667, %v668
  %v670 = vsel %vm111, %v458, 0.0
  %v671 = vadd.f32 %v669, %v670
  %v672 = vsel %vm111, %v463, 0.0
  %v673 = vadd.f32 %v671, %v672
  %v674 = vsel %vm111, %v466, 0.0
  %v675 = vadd.f32 %v673, %v674
  %v676 = vsel %vm111, %v471, 0.0
  %v677 = vadd.f32 %v675, %v676
  %v678 = vsel %vm111, %v474, 0.0
  %v679 = vadd.f32 %v677, %v678
  %v680 = vsel %vm111, %v479, 0.0
  %v681 = vadd.f32 %v679, %v680
  %v682 = vsel %vm111, %v482, 0.0
  %v683 = vadd.f32 %v681, %v682
  %v684 = vsel %vm111, %v487, 0.0
  %v685 = vadd.f32 %v683, %v684
  %v686 = vsel %vm111, %v490, 0.0
  %v687 = vadd.f32 %v685, %v686
  %v688 = vsel %vm111, %v495, 0.0
  %v689 = vadd.f32 %v687, %v688
  %v690 = vsel %vm111, %v498, 0.0
  %v691 = vadd.f32 %v689, %v690
  %v692 = vrot.slane %v691, 4
  %v693 = vadd.f32 %v691, %v692
  %v694 = vrot.slane %v693, 2
  %v695 = vadd.f32 %v693, %v694
  %v696 = vrot.slane %v695, 1
  %v697 = vadd.f32 %v695, %v696
  %v698 = vmul.f32 %v247, %v247
  %v699 = vmul.f32 %v250, %v250
  %v700 = vmul.f32 %v255, %v255
  %v701 = vmul.f32 %v258, %v258
  %v702 = vmul.f32 %v263, %v263
  %v703 = vmul.f32 %v266, %v266
  %v704 = vmul.f32 %v271, %v271
  %v705 = vmul.f32 %v274, %v274
  %v706 = vmul.f32 %v279, %v279
  %v707 = vmul.f32 %v282, %v282
  %v708 = vmul.f32 %v287, %v287
  %v709 = vmul.f32 %v290, %v290
  %v710 = vmul.f32 %v295, %v295
  %v711 = vmul.f32 %v298, %v298
  %v712 = vmul.f32 %v303, %v303
  %v713 = vmul.f32 %v306, %v306
  %v714 = vmul.f32 %v311, %v311
  %v715 = vmul.f32 %v314, %v314
  %v716 = vmul.f32 %v319, %v319
  %v717 = vmul.f32 %v322, %v322
  %v718 = vmul.f32 %v327, %v327
  %v719 = vmul.f32 %v330, %v330
  %v720 = vmul.f32 %v335, %v335
  %v721 = vmul.f32 %v338, %v338
  %v722 = vmul.f32 %v343, %v343
  %v723 = vmul.f32 %v346, %v346
  %v724 = vmul.f32 %v351, %v351
  %v725 = vmul.f32 %v354, %v354
  %v726 = vmul.f32 %v359, %v359
  %v727 = vmul.f32 %v362, %v362
  %v728 = vmul.f32 %v367, %v367
  %v729 = vmul.f32 %v370, %v370
  %v730 = vmul.f32 %v375, %v375
  %v731 = vmul.f32 %v378, %v378
  %v732 = vmul.f32 %v383, %v383
  %v733 = vmul.f32 %v386, %v386
  %v734 = vmul.f32 %v391, %v391
  %v735 = vmul.f32 %v394, %v394
  %v736 = vmul.f32 %v399, %v399
  %v737 = vmul.f32 %v402, %v402
  %v738 = vmul.f32 %v407, %v407
  %v739 = vmul.f32 %v410, %v410
  %v740 = vmul.f32 %v415, %v415
  %v741 = vmul.f32 %v418, %v418
  %v742 = vmul.f32 %v423, %v423
  %v743 = vmul.f32 %v426, %v426
  %v744 = vmul.f32 %v431, %v431
  %v745 = vmul.f32 %v434, %v434
  %v746 = vmul.f32 %v439, %v439
  %v747 = vmul.f32 %v442, %v442
  %v748 = vmul.f32 %v447, %v447
  %v749 = vmul.f32 %v450, %v450
  %v750 = vmul.f32 %v455, %v455
  %v751 = vmul.f32 %v458, %v458
  %v752 = vmul.f32 %v463, %v463
  %v753 = vmul.f32 %v466, %v466
  %v754 = vmul.f32 %v471, %v471
  %v755 = vmul.f32 %v474, %v474
  %v756 = vmul.f32 %v479, %v479
  %v757 = vmul.f32 %v482, %v482
  %v758 = vmul.f32 %v487, %v487
  %v759 = vmul.f32 %v490, %v490
  %v760 = vmul.f32 %v495, %v495
  %v761 = vmul.f32 %v498, %v498
  %v762 = vsel %vm111, %v698, 0.0
  %v763 = vsel %vm111, %v699, 0.0
  %v764 = vadd.f32 %v762, %v763
  %v765 = vsel %vm111, %v700, 0.0
  %v766 = vadd.f32 %v764, %v765
  %v767 = vsel %vm111, %v701, 0.0
  %v768 = vadd.f32 %v766, %v767
  %v769 = vsel %vm111, %v702, 0.0
  %v770 = vadd.f32 %v768, %v769
  %v771 = vsel %vm111, %v703, 0.0
  %v772 = vadd.f32 %v770, %v771
  %v773 = vsel %vm111, %v704, 0.0
  %v774 = vadd.f32 %v772, %v773
  %v775 = vsel %vm111, %v705, 0.0
  %v776 = vadd.f32 %v774, %v775
  %v777 = vsel %vm111, %v706, 0.0
  %v778 = vadd.f32 %v776, %v777
  %v779 = vsel %vm111, %v707, 0.0
  %v780 = vadd.f32 %v778, %v779
  %v781 = vsel %vm111, %v708, 0.0
  %v782 = vadd.f32 %v780, %v781
  %v783 = vsel %vm111, %v709, 0.0
  %v784 = vadd.f32 %v782, %v783
  %v785 = vsel %vm111, %v710, 0.0
  %v786 = vadd.f32 %v784, %v785
  %v787 = vsel %vm111, %v711, 0.0
  %v788 = vadd.f32 %v786, %v787
  %v789 = vsel %vm111, %v712, 0.0
  %v790 = vadd.f32 %v788, %v789
  %v791 = vsel %vm111, %v713, 0.0
  %v792 = vadd.f32 %v790, %v791
  %v793 = vsel %vm111, %v714, 0.0
  %v794 = vadd.f32 %v792, %v793
  %v795 = vsel %vm111, %v715, 0.0
  %v796 = vadd.f32 %v794, %v795
  %v797 = vsel %vm111, %v716, 0.0
  %v798 = vadd.f32 %v796, %v797
  %v799 = vsel %vm111, %v717, 0.0
  %v800 = vadd.f32 %v798, %v799
  %v801 = vsel %vm111, %v718, 0.0
  %v802 = vadd.f32 %v800, %v801
  %v803 = vsel %vm111, %v719, 0.0
  %v804 = vadd.f32 %v802, %v803
  %v805 = vsel %vm111, %v720, 0.0
  %v806 = vadd.f32 %v804, %v805
  %v807 = vsel %vm111, %v721, 0.0
  %v808 = vadd.f32 %v806, %v807
  %v809 = vsel %vm111, %v722, 0.0
  %v810 = vadd.f32 %v808, %v809
  %v811 = vsel %vm111, %v723, 0.0
  %v812 = vadd.f32 %v810, %v811
  %v813 = vsel %vm111, %v724, 0.0
  %v814 = vadd.f32 %v812, %v813
  %v815 = vsel %vm111, %v725, 0.0
  %v816 = vadd.f32 %v814, %v815
  %v817 = vsel %vm111, %v726, 0.0
  %v818 = vadd.f32 %v816, %v817
  %v819 = vsel %vm111, %v727, 0.0
  %v820 = vadd.f32 %v818, %v819
  %v821 = vsel %vm111, %v728, 0.0
  %v822 = vadd.f32 %v820, %v821
  %v823 = vsel %vm111, %v729, 0.0
  %v824 = vadd.f32 %v822, %v823
  %v825 = vsel %vm111, %v730, 0.0
  %v826 = vadd.f32 %v824, %v825
  %v827 = vsel %vm111, %v731, 0.0
  %v828 = vadd.f32 %v826, %v827
  %v829 = vsel %vm111, %v732, 0.0
  %v830 = vadd.f32 %v828, %v829
  %v831 = vsel %vm111, %v733, 0.0
  %v832 = vadd.f32 %v830, %v831
  %v833 = vsel %vm111, %v734, 0.0
  %v834 = vadd.f32 %v832, %v833
  %v835 = vsel %vm111, %v735, 0.0
  %v836 = vadd.f32 %v834, %v835
  %v837 = vsel %vm111, %v736, 0.0
  %v838 = vadd.f32 %v836, %v837
  %v839 = vsel %vm111, %v737, 0.0
  %v840 = vadd.f32 %v838, %v839
  %v841 = vsel %vm111, %v738, 0.0
  %v842 = vadd.f32 %v840, %v841
  %v843 = vsel %vm111, %v739, 0.0
  %v844 = vadd.f32 %v842, %v843
  %v845 = vsel %vm111, %v740, 0.0
  %v846 = vadd.f32 %v844, %v845
  %v847 = vsel %vm111, %v741, 0.0
  %v848 = vadd.f32 %v846, %v847
  %v849 = vsel %vm111, %v742, 0.0
  %v850 = vadd.f32 %v848, %v849
  %v851 = vsel %vm111, %v743, 0.0
  %v852 = vadd.f32 %v850, %v851
  %v853 = vsel %vm111, %v744, 0.0
  %v854 = vadd.f32 %v852, %v853
  %v855 = vsel %vm111, %v745, 0.0
  %v856 = vadd.f32 %v854, %v855
  %v857 = vsel %vm111, %v746, 0.0
  %v858 = vadd.f32 %v856, %v857
  %v859 = vsel %vm111, %v747, 0.0
  %v860 = vadd.f32 %v858, %v859
  %v861 = vsel %vm111, %v748, 0.0
  %v862 = vadd.f32 %v860, %v861
  %v863 = vsel %vm111, %v749, 0.0
  %v864 = vadd.f32 %v862, %v863
  %v865 = vsel %vm111, %v750, 0.0
  %v866 = vadd.f32 %v864, %v865
  %v867 = vsel %vm111, %v751, 0.0
  %v868 = vadd.f32 %v866, %v867
  %v869 = vsel %vm111, %v752, 0.0
  %v870 = vadd.f32 %v868, %v869
  %v871 = vsel %vm111, %v753, 0.0
  %v872 = vadd.f32 %v870, %v871
  %v873 = vsel %vm111, %v754, 0.0
  %v874 = vadd.f32 %v872, %v873
  %v875 = vsel %vm111, %v755, 0.0
  %v876 = vadd.f32 %v874, %v875
  %v877 = vsel %vm111, %v756, 0.0
  %v878 = vadd.f32 %v876, %v877
  %v879 = vsel %vm111, %v757, 0.0
  %v880 = vadd.f32 %v878, %v879
  %v881 = vsel %vm111, %v758, 0.0
  %v882 = vadd.f32 %v880, %v881
  %v883 = vsel %vm111, %v759, 0.0
  %v884 = vadd.f32 %v882, %v883
  %v885 = vsel %vm111, %v760, 0.0
  %v886 = vadd.f32 %v884, %v885
  %v887 = vsel %vm111, %v761, 0.0
  %v888 = vadd.f32 %v886, %v887
  %v889 = vrot.slane %v888, 4
  %v890 = vadd.f32 %v888, %v889
  %v891 = vrot.slane %v890, 2
  %v892 = vadd.f32 %v890, %v891
  %v893 = vrot.slane %v892, 1
  %v894 = vadd.f32 %v892, %v893
  %vm895 = vcmask 1040384
  %v896 = vsel %vm895, %v697, %v894
  %vm897 = vcmask 25600
  %898 = vst.msk [vmem:[%s3] sm:$0x3] %vm897, %v896
  // Predicated region
  $region10: #{bottleneck_forward.5} parent=0 // pred_check
    _
  $region11: #{bottleneck_forward.5} parent=0 // pred_check_branch
    %900 = sbr.rel (0) target = $region13
  $region12: #{bottleneck_forward.5} parent=0 // pred_region
    _
  $region13: #{bottleneck_forward.5} parent=0 // pred_fallthru
    _
  // Predicated region
  $region14: #{bottleneck_forward.5} parent=0 // pred_check
    _
  $region15: #{bottleneck_forward.5} parent=0 // pred_check_branch
    %902 = sbr.rel (0) target = $region17
  $region16: #{bottleneck_forward.5} parent=0 // pred_region
    _
  $region17: #{bottleneck_forward.5} parent=0 // pred_fallthru
    _
  // Predicated region
  $region18: #{bottleneck_forward.5} parent=0 // pred_check
    _
  $region19: #{bottleneck_forward.5} parent=0 // pred_check_branch
    %904 = sbr.rel (0) target = $region21
  $region20: #{bottleneck_forward.5} parent=0 // pred_region
    _
  $region21: #{bottleneck_forward.5} parent=0 // pred_fallthru
    _
  // Predicated region
  $region22: #{bottleneck_forward.5} parent=0 // pred_check
    _
  $region23: #{bottleneck_forward.5} parent=0 // pred_check_branch
    %906 = sbr.rel (0) target = $region25
  $region24: #{bottleneck_forward.5} parent=0 // pred_region
    _
  $region25: #{bottleneck_forward.5} parent=0 // pred_fallthru
    _

// kernel: bottleneck_forward.7
$region0: #{bottleneck_forward.7}
  #allocation0 [shape = 'u32[]', space=smem, size = 0x4, offset = 0x4, fixed_abs, tag = 'smem constant byte address 0x4 - core index']
  #allocation1 [shape = 'u32[144,128]{1,0:T(1,128)}', space=vmem, size = 0x12000, scoped, tag = 'internal scratch']
  %s0 = inlined_call_operand.vmem [shape: f32[512,4], index: 0, kind: input, shape index: {}]
  %s1 = inlined_call_operand.vmem [shape: f32[1,4], index: 1, kind: input, shape index: {}]
  %s2 = inlined_call_operand.vmem [shape: f32[1,4], index: 2, kind: input, shape index: {}]
  %s3 = inlined_call_operand.vmem [shape: bf16[4,16], index: 3, kind: input, shape index: {}]
  %s4 = inlined_call_operand.vmem [shape: f32[512,16], index: 4, kind: output, shape index: {0}]
  %s5 = inlined_call_operand.vmem [shape: f32[1,2,16], index: 5, kind: output, shape index: {1}]
  %6 = xla_tuple %s4, %s5
  %s7 = sld [smem:[#allocation0]]
  $region34: #{bottleneck_forward.7} parent=0
    _
  %s9 = ssub.s32 1, %s7
  %s10 = scalar_select 0, %s9, %s7
  // Predicated region
  $region2: #{bottleneck_forward.7} parent=0 // pred_check
    _
  $region3: #{bottleneck_forward.7} parent=0 // pred_check_branch
    %12 = sbr.rel (0) target = $region5
  $region4: #{bottleneck_forward.7} parent=0 // pred_region
    _
  $region5: #{bottleneck_forward.7} parent=0 // pred_fallthru
    _
  // Predicated region
  $region6: #{bottleneck_forward.7} parent=0 // pred_check
    _
  $region7: #{bottleneck_forward.7} parent=0 // pred_check_branch
    %14 = sbr.rel (0) target = $region9
  $region8: #{bottleneck_forward.7} parent=0 // pred_region
    _
  $region9: #{bottleneck_forward.7} parent=0 // pred_fallthru
    _
  // Predicated region
  $region10: #{bottleneck_forward.7} parent=0 // pred_check
    _
  $region11: #{bottleneck_forward.7} parent=0 // pred_check_branch
    %16 = sbr.rel (0) target = $region13
  $region12: #{bottleneck_forward.7} parent=0 // pred_region
    _
  $region13: #{bottleneck_forward.7} parent=0 // pred_fallthru
    _
  // Predicated region
  $region14: #{bottleneck_forward.7} parent=0 // pred_check
    _
  $region15: #{bottleneck_forward.7} parent=0 // pred_check_branch
    %18 = sbr.rel (0) target = $region17
  $region16: #{bottleneck_forward.7} parent=0 // pred_region
    _
  $region17: #{bottleneck_forward.7} parent=0 // pred_fallthru
    _
  %v20 = vld [vmem:[%s0] sm:$0xff]
  %v21 = vld [vmem:[%s0 + $0x8] sm:$0xff]
  %v22 = vld [vmem:[%s0 + $0x10] sm:$0xff]
  %v23 = vld [vmem:[%s0 + $0x18] sm:$0xff]
  %v24 = vld [vmem:[%s0 + $0x20] sm:$0xff]
  %v25 = vld [vmem:[%s0 + $0x28] sm:$0xff]
  %v26 = vld [vmem:[%s0 + $0x30] sm:$0xff]
  %v27 = vld [vmem:[%s0 + $0x38] sm:$0xff]
  %v28 = vld [vmem:[%s0 + $0x40] sm:$0xff]
  %v29 = vld [vmem:[%s0 + $0x48] sm:$0xff]
  %v30 = vld [vmem:[%s0 + $0x50] sm:$0xff]
  %v31 = vld [vmem:[%s0 + $0x58] sm:$0xff]
  %v32 = vld [vmem:[%s0 + $0x60] sm:$0xff]
  %v33 = vld [vmem:[%s0 + $0x68] sm:$0xff]
  %v34 = vld [vmem:[%s0 + $0x70] sm:$0xff]
  %v35 = vld [vmem:[%s0 + $0x78] sm:$0xff]
  %v36 = vld [vmem:[%s0 + $0x80] sm:$0xff]
  %v37 = vld [vmem:[%s0 + $0x88] sm:$0xff]
  %v38 = vld [vmem:[%s0 + $0x90] sm:$0xff]
  %v39 = vld [vmem:[%s0 + $0x98] sm:$0xff]
  %v40 = vld [vmem:[%s0 + $0xa0] sm:$0xff]
  %v41 = vld [vmem:[%s0 + $0xa8] sm:$0xff]
  %v42 = vld [vmem:[%s0 + $0xb0] sm:$0xff]
  %v43 = vld [vmem:[%s0 + $0xb8] sm:$0xff]
  %v44 = vld [vmem:[%s0 + $0xc0] sm:$0xff]
  %v45 = vld [vmem:[%s0 + $0xc8] sm:$0xff]
  %v46 = vld [vmem:[%s0 + $0xd0] sm:$0xff]
  %v47 = vld [vmem:[%s0 + $0xd8] sm:$0xff]
  %v48 = vld [vmem:[%s0 + $0xe0] sm:$0xff]
  %v49 = vld [vmem:[%s0 + $0xe8] sm:$0xff]
  %v50 = vld [vmem:[%s0 + $0xf0] sm:$0xff]
  %v51 = vld [vmem:[%s0 + $0xf8] sm:$0xff]
  %v52 = vld [vmem:[%s0 + $0x100] sm:$0xff]
  %v53 = vld [vmem:[%s0 + $0x108] sm:$0xff]
  %v54 = vld [vmem:[%s0 + $0x110] sm:$0xff]
  %v55 = vld [vmem:[%s0 + $0x118] sm:$0xff]
  %v56 = vld [vmem:[%s0 + $0x120] sm:$0xff]
  %v57 = vld [vmem:[%s0 + $0x128] sm:$0xff]
  %v58 = vld [vmem:[%s0 + $0x130] sm:$0xff]
  %v59 = vld [vmem:[%s0 + $0x138] sm:$0xff]
  %v60 = vld [vmem:[%s0 + $0x140] sm:$0xff]
  %v61 = vld [vmem:[%s0 + $0x148] sm:$0xff]
  %v62 = vld [vmem:[%s0 + $0x150] sm:$0xff]
  %v63 = vld [vmem:[%s0 + $0x158] sm:$0xff]
  %v64 = vld [vmem:[%s0 + $0x160] sm:$0xff]
  %v65 = vld [vmem:[%s0 + $0x168] sm:$0xff]
  %v66 = vld [vmem:[%s0 + $0x170] sm:$0xff]
  %v67 = vld [vmem:[%s0 + $0x178] sm:$0xff]
  %v68 = vld [vmem:[%s0 + $0x180] sm:$0xff]
  %v69 = vld [vmem:[%s0 + $0x188] sm:$0xff]
  %v70 = vld [vmem:[%s0 + $0x190] sm:$0xff]
  %v71 = vld [vmem:[%s0 + $0x198] sm:$0xff]
  %v72 = vld [vmem:[%s0 + $0x1a0] sm:$0xff]
  %v73 = vld [vmem:[%s0 + $0x1a8] sm:$0xff]
  %v74 = vld [vmem:[%s0 + $0x1b0] sm:$0xff]
  %v75 = vld [vmem:[%s0 + $0x1b8] sm:$0xff]
  %v76 = vld [vmem:[%s0 + $0x1c0] sm:$0xff]
  %v77 = vld [vmem:[%s0 + $0x1c8] sm:$0xff]
  %v78 = vld [vmem:[%s0 + $0x1d0] sm:$0xff]
  %v79 = vld [vmem:[%s0 + $0x1d8] sm:$0xff]
  %v80 = vld [vmem:[%s0 + $0x1e0] sm:$0xff]
  %v81 = vld [vmem:[%s0 + $0x1e8] sm:$0xff]
  %v82 = vld [vmem:[%s0 + $0x1f0] sm:$0xff]
  %v83 = vld [vmem:[%s0 + $0x1f8] sm:$0xff]
  %v84 = vld [vmem:[%s1] sm:$0x1]
  %v86 = vlaneseq
  %v87 = vshrl.u32 %v86, 7
  %v88 = vsub.s32 0, %v87
  %v89 = vrot.slane %v84, %v88
  %v91 = vmul.f32 %v20, %v89
  %v92 = vmul.f32 %v21, %v89
  %v93 = vmul.f32 %v22, %v89
  %v94 = vmul.f32 %v23, %v89
  %v95 = vmul.f32 %v24, %v89
  %v96 = vmul.f32 %v25, %v89
  %v97 = vmul.f32 %v26, %v89
  %v98 = vmul.f32 %v27, %v89
  %v99 = vmul.f32 %v28, %v89
  %v100 = vmul.f32 %v29, %v89
  %v101 = vmul.f32 %v30, %v89
  %v102 = vmul.f32 %v31, %v89
  %v103 = vmul.f32 %v32, %v89
  %v104 = vmul.f32 %v33, %v89
  %v105 = vmul.f32 %v34, %v89
  %v106 = vmul.f32 %v35, %v89
  %v107 = vmul.f32 %v36, %v89
  %v108 = vmul.f32 %v37, %v89
  %v109 = vmul.f32 %v38, %v89
  %v110 = vmul.f32 %v39, %v89
  %v111 = vmul.f32 %v40, %v89
  %v112 = vmul.f32 %v41, %v89
  %v113 = vmul.f32 %v42, %v89
  %v114 = vmul.f32 %v43, %v89
  %v115 = vmul.f32 %v44, %v89
  %v116 = vmul.f32 %v45, %v89
  %v117 = vmul.f32 %v46, %v89
  %v118 = vmul.f32 %v47, %v89
  %v119 = vmul.f32 %v48, %v89
  %v120 = vmul.f32 %v49, %v89
  %v121 = vmul.f32 %v50, %v89
  %v122 = vmul.f32 %v51, %v89
  %v123 = vmul.f32 %v52, %v89
  %v124 = vmul.f32 %v53, %v89
  %v125 = vmul.f32 %v54, %v89
  %v126 = vmul.f32 %v55, %v89
  %v127 = vmul.f32 %v56, %v89
  %v128 = vmul.f32 %v57, %v89
  %v129 = vmul.f32 %v58, %v89
  %v130 = vmul.f32 %v59, %v89
  %v131 = vmul.f32 %v60, %v89
  %v132 = vmul.f32 %v61, %v89
  %v133 = vmul.f32 %v62, %v89
  %v134 = vmul.f32 %v63, %v89
  %v135 = vmul.f32 %v64, %v89
  %v136 = vmul.f32 %v65, %v89
  %v137 = vmul.f32 %v66, %v89
  %v138 = vmul.f32 %v67, %v89
  %v139 = vmul.f32 %v68, %v89
  %v140 = vmul.f32 %v69, %v89
  %v141 = vmul.f32 %v70, %v89
  %v142 = vmul.f32 %v71, %v89
  %v143 = vmul.f32 %v72, %v89
  %v144 = vmul.f32 %v73, %v89
  %v145 = vmul.f32 %v74, %v89
  %v146 = vmul.f32 %v75, %v89
  %v147 = vmul.f32 %v76, %v89
  %v148 = vmul.f32 %v77, %v89
  %v149 = vmul.f32 %v78, %v89
  %v150 = vmul.f32 %v79, %v89
  %v151 = vmul.f32 %v80, %v89
  %v152 = vmul.f32 %v81, %v89
  %v153 = vmul.f32 %v82, %v89
  %v154 = vmul.f32 %v83, %v89
  %v155 = vld [vmem:[%s2] sm:$0x1]
  %v157 = vlaneseq
  %v158 = vshrl.u32 %v157, 7
  %v159 = vsub.s32 0, %v158
  %v160 = vrot.slane %v155, %v159
  %v162 = vadd.f32 %v91, %v160
  %v163 = vadd.f32 %v92, %v160
  %v164 = vadd.f32 %v93, %v160
  %v165 = vadd.f32 %v94, %v160
  %v166 = vadd.f32 %v95, %v160
  %v167 = vadd.f32 %v96, %v160
  %v168 = vadd.f32 %v97, %v160
  %v169 = vadd.f32 %v98, %v160
  %v170 = vadd.f32 %v99, %v160
  %v171 = vadd.f32 %v100, %v160
  %v172 = vadd.f32 %v101, %v160
  %v173 = vadd.f32 %v102, %v160
  %v174 = vadd.f32 %v103, %v160
  %v175 = vadd.f32 %v104, %v160
  %v176 = vadd.f32 %v105, %v160
  %v177 = vadd.f32 %v106, %v160
  %v178 = vadd.f32 %v107, %v160
  %v179 = vadd.f32 %v108, %v160
  %v180 = vadd.f32 %v109, %v160
  %v181 = vadd.f32 %v110, %v160
  %v182 = vadd.f32 %v111, %v160
  %v183 = vadd.f32 %v112, %v160
  %v184 = vadd.f32 %v113, %v160
  %v185 = vadd.f32 %v114, %v160
  %v186 = vadd.f32 %v115, %v160
  %v187 = vadd.f32 %v116, %v160
  %v188 = vadd.f32 %v117, %v160
  %v189 = vadd.f32 %v118, %v160
  %v190 = vadd.f32 %v119, %v160
  %v191 = vadd.f32 %v120, %v160
  %v192 = vadd.f32 %v121, %v160
  %v193 = vadd.f32 %v122, %v160
  %v194 = vadd.f32 %v123, %v160
  %v195 = vadd.f32 %v124, %v160
  %v196 = vadd.f32 %v125, %v160
  %v197 = vadd.f32 %v126, %v160
  %v198 = vadd.f32 %v127, %v160
  %v199 = vadd.f32 %v128, %v160
  %v200 = vadd.f32 %v129, %v160
  %v201 = vadd.f32 %v130, %v160
  %v202 = vadd.f32 %v131, %v160
  %v203 = vadd.f32 %v132, %v160
  %v204 = vadd.f32 %v133, %v160
  %v205 = vadd.f32 %v134, %v160
  %v206 = vadd.f32 %v135, %v160
  %v207 = vadd.f32 %v136, %v160
  %v208 = vadd.f32 %v137, %v160
  %v209 = vadd.f32 %v138, %v160
  %v210 = vadd.f32 %v139, %v160
  %v211 = vadd.f32 %v140, %v160
  %v212 = vadd.f32 %v141, %v160
  %v213 = vadd.f32 %v142, %v160
  %v214 = vadd.f32 %v143, %v160
  %v215 = vadd.f32 %v144, %v160
  %v216 = vadd.f32 %v145, %v160
  %v217 = vadd.f32 %v146, %v160
  %v218 = vadd.f32 %v147, %v160
  %v219 = vadd.f32 %v148, %v160
  %v220 = vadd.f32 %v149, %v160
  %v221 = vadd.f32 %v150, %v160
  %v222 = vadd.f32 %v151, %v160
  %v223 = vadd.f32 %v152, %v160
  %v224 = vadd.f32 %v153, %v160
  %v225 = vadd.f32 %v154, %v160
  %v226 = vmax.f32 %v162, 0.0
  %v227 = vmax.f32 %v163, 0.0
  %v228 = vmax.f32 %v164, 0.0
  %v229 = vmax.f32 %v165, 0.0
  %v230 = vmax.f32 %v166, 0.0
  %v231 = vmax.f32 %v167, 0.0
  %v232 = vmax.f32 %v168, 0.0
  %v233 = vmax.f32 %v169, 0.0
  %v234 = vmax.f32 %v170, 0.0
  %v235 = vmax.f32 %v171, 0.0
  %v236 = vmax.f32 %v172, 0.0
  %v237 = vmax.f32 %v173, 0.0
  %v238 = vmax.f32 %v174, 0.0
  %v239 = vmax.f32 %v175, 0.0
  %v240 = vmax.f32 %v176, 0.0
  %v241 = vmax.f32 %v177, 0.0
  %v242 = vmax.f32 %v178, 0.0
  %v243 = vmax.f32 %v179, 0.0
  %v244 = vmax.f32 %v180, 0.0
  %v245 = vmax.f32 %v181, 0.0
  %v246 = vmax.f32 %v182, 0.0
  %v247 = vmax.f32 %v183, 0.0
  %v248 = vmax.f32 %v184, 0.0
  %v249 = vmax.f32 %v185, 0.0
  %v250 = vmax.f32 %v186, 0.0
  %v251 = vmax.f32 %v187, 0.0
  %v252 = vmax.f32 %v188, 0.0
  %v253 = vmax.f32 %v189, 0.0
  %v254 = vmax.f32 %v190, 0.0
  %v255 = vmax.f32 %v191, 0.0
  %v256 = vmax.f32 %v192, 0.0
  %v257 = vmax.f32 %v193, 0.0
  %v258 = vmax.f32 %v194, 0.0
  %v259 = vmax.f32 %v195, 0.0
  %v260 = vmax.f32 %v196, 0.0
  %v261 = vmax.f32 %v197, 0.0
  %v262 = vmax.f32 %v198, 0.0
  %v263 = vmax.f32 %v199, 0.0
  %v264 = vmax.f32 %v200, 0.0
  %v265 = vmax.f32 %v201, 0.0
  %v266 = vmax.f32 %v202, 0.0
  %v267 = vmax.f32 %v203, 0.0
  %v268 = vmax.f32 %v204, 0.0
  %v269 = vmax.f32 %v205, 0.0
  %v270 = vmax.f32 %v206, 0.0
  %v271 = vmax.f32 %v207, 0.0
  %v272 = vmax.f32 %v208, 0.0
  %v273 = vmax.f32 %v209, 0.0
  %v274 = vmax.f32 %v210, 0.0
  %v275 = vmax.f32 %v211, 0.0
  %v276 = vmax.f32 %v212, 0.0
  %v277 = vmax.f32 %v213, 0.0
  %v278 = vmax.f32 %v214, 0.0
  %v279 = vmax.f32 %v215, 0.0
  %v280 = vmax.f32 %v216, 0.0
  %v281 = vmax.f32 %v217, 0.0
  %v282 = vmax.f32 %v218, 0.0
  %v283 = vmax.f32 %v219, 0.0
  %v284 = vmax.f32 %v220, 0.0
  %v285 = vmax.f32 %v221, 0.0
  %v286 = vmax.f32 %v222, 0.0
  %v287 = vmax.f32 %v223, 0.0
  %v288 = vmax.f32 %v224, 0.0
  %v289 = vmax.f32 %v225, 0.0
  %v290 = vpack.c.bf16 %v227, %v226
  %v291 = vpack.c.bf16 %v229, %v228
  %v292 = vpack.c.bf16 %v231, %v230
  %v293 = vpack.c.bf16 %v233, %v232
  %v294 = vpack.c.bf16 %v235, %v234
  %v295 = vpack.c.bf16 %v237, %v236
  %v296 = vpack.c.bf16 %v239, %v238
  %v297 = vpack.c.bf16 %v241, %v240
  %v298 = vpack.c.bf16 %v243, %v242
  %v299 = vpack.c.bf16 %v245, %v244
  %v300 = vpack.c.bf16 %v247, %v246
  %v301 = vpack.c.bf16 %v249, %v248
  %v302 = vpack.c.bf16 %v251, %v250
  %v303 = vpack.c.bf16 %v253, %v252
  %v304 = vpack.c.bf16 %v255, %v254
  %v305 = vpack.c.bf16 %v257, %v256
  %v306 = vpack.c.bf16 %v259, %v258
  %v307 = vpack.c.bf16 %v261, %v260
  %v308 = vpack.c.bf16 %v263, %v262
  %v309 = vpack.c.bf16 %v265, %v264
  %v310 = vpack.c.bf16 %v267, %v266
  %v311 = vpack.c.bf16 %v269, %v268
  %v312 = vpack.c.bf16 %v271, %v270
  %v313 = vpack.c.bf16 %v273, %v272
  %v314 = vpack.c.bf16 %v275, %v274
  %v315 = vpack.c.bf16 %v277, %v276
  %v316 = vpack.c.bf16 %v279, %v278
  %v317 = vpack.c.bf16 %v281, %v280
  %v318 = vpack.c.bf16 %v283, %v282
  %v319 = vpack.c.bf16 %v285, %v284
  %v320 = vpack.c.bf16 %v287, %v286
  %v321 = vpack.c.bf16 %v289, %v288
  %v322 = vld [vmem:[%s3] sm:$0x3]
  %vm323 = vcmask 31744
  %v325 = vsel %vm323, %v290, 0
  %v328 = vsel %vm323, %v291, 0
  %v331 = vsel %vm323, %v292, 0
  %v334 = vsel %vm323, %v293, 0
  %v337 = vsel %vm323, %v294, 0
  %v340 = vsel %vm323, %v295, 0
  %v343 = vsel %vm323, %v296, 0
  %v346 = vsel %vm323, %v297, 0
  %v349 = vsel %vm323, %v298, 0
  %v352 = vsel %vm323, %v299, 0
  %v355 = vsel %vm323, %v300, 0
  %v358 = vsel %vm323, %v301, 0
  %v361 = vsel %vm323, %v302, 0
  %v364 = vsel %vm323, %v303, 0
  %v367 = vsel %vm323, %v304, 0
  %v370 = vsel %vm323, %v305, 0
  %v373 = vsel %vm323, %v306, 0
  %v376 = vsel %vm323, %v307, 0
  %v379 = vsel %vm323, %v308, 0
  %v382 = vsel %vm323, %v309, 0
  %v385 = vsel %vm323, %v310, 0
  %v388 = vsel %vm323, %v311, 0
  %v391 = vsel %vm323, %v312, 0
  %v394 = vsel %vm323, %v313, 0
  %v397 = vsel %vm323, %v314, 0
  %v400 = vsel %vm323, %v315, 0
  %v403 = vsel %vm323, %v316, 0
  %v406 = vsel %vm323, %v317, 0
  %v409 = vsel %vm323, %v318, 0
  %v412 = vsel %vm323, %v319, 0
  %v415 = vsel %vm323, %v320, 0
  %v418 = vsel %vm323, %v321, 0
  %vm420 = vcmask 1041408
  %v422 = vsel %vm420, %v322, 0
  %424 = vmatprep.subr.bf16.mxu0 0
  %425 = vmatpush1.bf16.msra.mxu0 0
  %426 = vmatprep.subr.bf16.mxu0 0
  %427 = vmatpush1.bf16.msra.mxu0 0
  %428 = vmatprep.subr.bf16.mxu0 0
  %429 = vmatpush1.bf16.msra.mxu0 0
  %430 = vmatprep.subr.bf16.mxu0 0
  %431 = vmatpush1.bf16.msra.mxu0 0
  %432 = vmatprep.subr.bf16.mxu0 0
  %433 = vmatpush1.bf16.msra.mxu0 0
  %434 = vmatprep.subr.bf16.mxu0 0
  %435 = vmatpush1.bf16.msra.mxu0 0
  %436 = vmatprep.subr.bf16.mxu0 0
  %437 = vmatpush1.bf16.msra.mxu0 0
  %438 = vmatprep.subr.bf16.mxu0 0
  %439 = vmatpush1.bf16.msra.mxu0 %v422
  %440 = vmatprep.subr.bf16.mxu0 0
  %441 = vmatpush2.bf16.msra.mxu0 0
  %442 = vmatprep.subr.bf16.mxu0 0
  %443 = vmatpush2.bf16.msra.mxu0 0
  %444 = vmatprep.subr.bf16.mxu0 0
  %445 = vmatpush2.bf16.msra.mxu0 0
  %446 = vmatprep.subr.bf16.mxu0 0
  %447 = vmatpush2.bf16.msra.mxu0 0
  %448 = vmatprep.subr.bf16.mxu0 0
  %449 = vmatpush2.bf16.msra.mxu0 0
  %450 = vmatprep.subr.bf16.mxu0 0
  %451 = vmatpush2.bf16.msra.mxu0 0
  %452 = vmatprep.subr.bf16.mxu0 0
  %453 = vmatpush2.bf16.msra.mxu0 0
  %454 = vmatprep.subr.bf16.mxu0 0
  %455 = vmatpush2.bf16.msra.mxu0 0
  %456 = vmatprep.mubr.bf16.mxu0 0
  %457 = vmatmul.mubr.bf16.gmra.mxu0 %v325
  %v458 = vpop.f32.mrf.mxu0
  %v459 = vadd.f32 0.0, %v458
  %v460 = vpop.f32.mrf.mxu0
  %v461 = vpop.f32.mrf.mxu0
  %v462 = vadd.f32 0.0, %v461
  %v463 = vpop.f32.mrf.mxu0
  %464 = vmatprep.mubr.bf16.mxu0 0
  %465 = vmatmul.mubr.bf16.gmra.mxu0 %v328
  %v466 = vpop.f32.mrf.mxu0
  %v467 = vadd.f32 0.0, %v466
  %v468 = vpop.f32.mrf.mxu0
  %v469 = vpop.f32.mrf.mxu0
  %v470 = vadd.f32 0.0, %v469
  %v471 = vpop.f32.mrf.mxu0
  %472 = vmatprep.mubr.bf16.mxu0 0
  %473 = vmatmul.mubr.bf16.gmra.mxu0 %v331
  %v474 = vpop.f32.mrf.mxu0
  %v475 = vadd.f32 0.0, %v474
  %v476 = vpop.f32.mrf.mxu0
  %v477 = vpop.f32.mrf.mxu0
  %v478 = vadd.f32 0.0, %v477
  %v479 = vpop.f32.mrf.mxu0
  %480 = vmatprep.mubr.bf16.mxu0 0
  %481 = vmatmul.mubr.bf16.gmra.mxu0 %v334
  %v482 = vpop.f32.mrf.mxu0
  %v483 = vadd.f32 0.0, %v482
  %v484 = vpop.f32.mrf.mxu0
  %v485 = vpop.f32.mrf.mxu0
  %v486 = vadd.f32 0.0, %v485
  %v487 = vpop.f32.mrf.mxu0
  %488 = vmatprep.mubr.bf16.mxu0 0
  %489 = vmatmul.mubr.bf16.gmra.mxu0 %v337
  %v490 = vpop.f32.mrf.mxu0
  %v491 = vadd.f32 0.0, %v490
  %v492 = vpop.f32.mrf.mxu0
  %v493 = vpop.f32.mrf.mxu0
  %v494 = vadd.f32 0.0, %v493
  %v495 = vpop.f32.mrf.mxu0
  %496 = vmatprep.mubr.bf16.mxu0 0
  %497 = vmatmul.mubr.bf16.gmra.mxu0 %v340
  %v498 = vpop.f32.mrf.mxu0
  %v499 = vadd.f32 0.0, %v498
  %v500 = vpop.f32.mrf.mxu0
  %v501 = vpop.f32.mrf.mxu0
  %v502 = vadd.f32 0.0, %v501
  %v503 = vpop.f32.mrf.mxu0
  %504 = vmatprep.mubr.bf16.mxu0 0
  %505 = vmatmul.mubr.bf16.gmra.mxu0 %v343
  %v506 = vpop.f32.mrf.mxu0
  %v507 = vadd.f32 0.0, %v506
  %v508 = vpop.f32.mrf.mxu0
  %v509 = vpop.f32.mrf.mxu0
  %v510 = vadd.f32 0.0, %v509
  %v511 = vpop.f32.mrf.mxu0
  %512 = vmatprep.mubr.bf16.mxu0 0
  %513 = vmatmul.mubr.bf16.gmra.mxu0 %v346
  %v514 = vpop.f32.mrf.mxu0
  %v515 = vadd.f32 0.0, %v514
  %v516 = vpop.f32.mrf.mxu0
  %v517 = vpop.f32.mrf.mxu0
  %v518 = vadd.f32 0.0, %v517
  %v519 = vpop.f32.mrf.mxu0
  %520 = vmatprep.mubr.bf16.mxu0 0
  %521 = vmatmul.mubr.bf16.gmra.mxu0 %v349
  %v522 = vpop.f32.mrf.mxu0
  %v523 = vadd.f32 0.0, %v522
  %v524 = vpop.f32.mrf.mxu0
  %v525 = vpop.f32.mrf.mxu0
  %v526 = vadd.f32 0.0, %v525
  %v527 = vpop.f32.mrf.mxu0
  %528 = vmatprep.mubr.bf16.mxu0 0
  %529 = vmatmul.mubr.bf16.gmra.mxu0 %v352
  %v530 = vpop.f32.mrf.mxu0
  %v531 = vadd.f32 0.0, %v530
  %v532 = vpop.f32.mrf.mxu0
  %v533 = vpop.f32.mrf.mxu0
  %v534 = vadd.f32 0.0, %v533
  %v535 = vpop.f32.mrf.mxu0
  %536 = vmatprep.mubr.bf16.mxu0 0
  %537 = vmatmul.mubr.bf16.gmra.mxu0 %v355
  %v538 = vpop.f32.mrf.mxu0
  %v539 = vadd.f32 0.0, %v538
  %v540 = vpop.f32.mrf.mxu0
  %v541 = vpop.f32.mrf.mxu0
  %v542 = vadd.f32 0.0, %v541
  %v543 = vpop.f32.mrf.mxu0
  %544 = vmatprep.mubr.bf16.mxu0 0
  %545 = vmatmul.mubr.bf16.gmra.mxu0 %v358
  %v546 = vpop.f32.mrf.mxu0
  %v547 = vadd.f32 0.0, %v546
  %v548 = vpop.f32.mrf.mxu0
  %v549 = vpop.f32.mrf.mxu0
  %v550 = vadd.f32 0.0, %v549
  %v551 = vpop.f32.mrf.mxu0
  %552 = vmatprep.mubr.bf16.mxu0 0
  %553 = vmatmul.mubr.bf16.gmra.mxu0 %v361
  %v554 = vpop.f32.mrf.mxu0
  %v555 = vadd.f32 0.0, %v554
  %v556 = vpop.f32.mrf.mxu0
  %v557 = vpop.f32.mrf.mxu0
  %v558 = vadd.f32 0.0, %v557
  %v559 = vpop.f32.mrf.mxu0
  %560 = vmatprep.mubr.bf16.mxu0 0
  %561 = vmatmul.mubr.bf16.gmra.mxu0 %v364
  %v562 = vpop.f32.mrf.mxu0
  %v563 = vadd.f32 0.0, %v562
  %v564 = vpop.f32.mrf.mxu0
  %v565 = vpop.f32.mrf.mxu0
  %v566 = vadd.f32 0.0, %v565
  %v567 = vpop.f32.mrf.mxu0
  %568 = vmatprep.mubr.bf16.mxu0 0
  %569 = vmatmul.mubr.bf16.gmra.mxu0 %v367
  %v570 = vpop.f32.mrf.mxu0
  %v571 = vadd.f32 0.0, %v570
  %v572 = vpop.f32.mrf.mxu0
  %v573 = vpop.f32.mrf.mxu0
  %v574 = vadd.f32 0.0, %v573
  %v575 = vpop.f32.mrf.mxu0
  %576 = vmatprep.mubr.bf16.mxu0 0
  %577 = vmatmul.mubr.bf16.gmra.mxu0 %v370
  %v578 = vpop.f32.mrf.mxu0
  %v579 = vadd.f32 0.0, %v578
  %v580 = vpop.f32.mrf.mxu0
  %v581 = vpop.f32.mrf.mxu0
  %v582 = vadd.f32 0.0, %v581
  %v583 = vpop.f32.mrf.mxu0
  %584 = vmatprep.mubr.bf16.mxu0 0
  %585 = vmatmul.mubr.bf16.gmra.mxu0 %v373
  %v586 = vpop.f32.mrf.mxu0
  %v587 = vadd.f32 0.0, %v586
  %v588 = vpop.f32.mrf.mxu0
  %v589 = vpop.f32.mrf.mxu0
  %v590 = vadd.f32 0.0, %v589
  %v591 = vpop.f32.mrf.mxu0
  %592 = vmatprep.mubr.bf16.mxu0 0
  %593 = vmatmul.mubr.bf16.gmra.mxu0 %v376
  %v594 = vpop.f32.mrf.mxu0
  %v595 = vadd.f32 0.0, %v594
  %v596 = vpop.f32.mrf.mxu0
  %v597 = vpop.f32.mrf.mxu0
  %v598 = vadd.f32 0.0, %v597
  %v599 = vpop.f32.mrf.mxu0
  %600 = vmatprep.mubr.bf16.mxu0 0
  %601 = vmatmul.mubr.bf16.gmra.mxu0 %v379
  %v602 = vpop.f32.mrf.mxu0
  %v603 = vadd.f32 0.0, %v602
  %v604 = vpop.f32.mrf.mxu0
  %v605 = vpop.f32.mrf.mxu0
  %v606 = vadd.f32 0.0, %v605
  %v607 = vpop.f32.mrf.mxu0
  %608 = vmatprep.mubr.bf16.mxu0 0
  %609 = vmatmul.mubr.bf16.gmra.mxu0 %v382
  %v610 = vpop.f32.mrf.mxu0
  %v611 = vadd.f32 0.0, %v610
  %v612 = vpop.f32.mrf.mxu0
  %v613 = vpop.f32.mrf.mxu0
  %v614 = vadd.f32 0.0, %v613
  %v615 = vpop.f32.mrf.mxu0
  %616 = vmatprep.mubr.bf16.mxu0 0
  %617 = vmatmul.mubr.bf16.gmra.mxu0 %v385
  %v618 = vpop.f32.mrf.mxu0
  %v619 = vadd.f32 0.0, %v618
  %v620 = vpop.f32.mrf.mxu0
  %v621 = vpop.f32.mrf.mxu0
  %v622 = vadd.f32 0.0, %v621
  %v623 = vpop.f32.mrf.mxu0
  %624 = vmatprep.mubr.bf16.mxu0 0
  %625 = vmatmul.mubr.bf16.gmra.mxu0 %v388
  %v626 = vpop.f32.mrf.mxu0
  %v627 = vadd.f32 0.0, %v626
  %v628 = vpop.f32.mrf.mxu0
  %v629 = vpop.f32.mrf.mxu0
  %v630 = vadd.f32 0.0, %v629
  %v631 = vpop.f32.mrf.mxu0
  %632 = vmatprep.mubr.bf16.mxu0 0
  %633 = vmatmul.mubr.bf16.gmra.mxu0 %v391
  %v634 = vpop.f32.mrf.mxu0
  %v635 = vadd.f32 0.0, %v634
  %v636 = vpop.f32.mrf.mxu0
  %v637 = vpop.f32.mrf.mxu0
  %v638 = vadd.f32 0.0, %v637
  %v639 = vpop.f32.mrf.mxu0
  %640 = vmatprep.mubr.bf16.mxu0 0
  %641 = vmatmul.mubr.bf16.gmra.mxu0 %v394
  %v642 = vpop.f32.mrf.mxu0
  %v643 = vadd.f32 0.0, %v642
  %v644 = vpop.f32.mrf.mxu0
  %v645 = vpop.f32.mrf.mxu0
  %v646 = vadd.f32 0.0, %v645
  %v647 = vpop.f32.mrf.mxu0
  %648 = vmatprep.mubr.bf16.mxu0 0
  %649 = vmatmul.mubr.bf16.gmra.mxu0 %v397
  %v650 = vpop.f32.mrf.mxu0
  %v651 = vadd.f32 0.0, %v650
  %v652 = vpop.f32.mrf.mxu0
  %v653 = vpop.f32.mrf.mxu0
  %v654 = vadd.f32 0.0, %v653
  %v655 = vpop.f32.mrf.mxu0
  %656 = vmatprep.mubr.bf16.mxu0 0
  %657 = vmatmul.mubr.bf16.gmra.mxu0 %v400
  %v658 = vpop.f32.mrf.mxu0
  %v659 = vadd.f32 0.0, %v658
  %v660 = vpop.f32.mrf.mxu0
  %v661 = vpop.f32.mrf.mxu0
  %v662 = vadd.f32 0.0, %v661
  %v663 = vpop.f32.mrf.mxu0
  %664 = vmatprep.mubr.bf16.mxu0 0
  %665 = vmatmul.mubr.bf16.gmra.mxu0 %v403
  %v666 = vpop.f32.mrf.mxu0
  %v667 = vadd.f32 0.0, %v666
  %v668 = vpop.f32.mrf.mxu0
  %v669 = vpop.f32.mrf.mxu0
  %v670 = vadd.f32 0.0, %v669
  %v671 = vpop.f32.mrf.mxu0
  %672 = vmatprep.mubr.bf16.mxu0 0
  %673 = vmatmul.mubr.bf16.gmra.mxu0 %v406
  %v674 = vpop.f32.mrf.mxu0
  %v675 = vadd.f32 0.0, %v674
  %v676 = vpop.f32.mrf.mxu0
  %v677 = vpop.f32.mrf.mxu0
  %v678 = vadd.f32 0.0, %v677
  %v679 = vpop.f32.mrf.mxu0
  %680 = vmatprep.mubr.bf16.mxu0 0
  %681 = vmatmul.mubr.bf16.gmra.mxu0 %v409
  %v682 = vpop.f32.mrf.mxu0
  %v683 = vadd.f32 0.0, %v682
  %v684 = vpop.f32.mrf.mxu0
  %v685 = vpop.f32.mrf.mxu0
  %v686 = vadd.f32 0.0, %v685
  %v687 = vpop.f32.mrf.mxu0
  %688 = vmatprep.mubr.bf16.mxu0 0
  %689 = vmatmul.mubr.bf16.gmra.mxu0 %v412
  %v690 = vpop.f32.mrf.mxu0
  %v691 = vadd.f32 0.0, %v690
  %v692 = vpop.f32.mrf.mxu0
  %v693 = vpop.f32.mrf.mxu0
  %v694 = vadd.f32 0.0, %v693
  %v695 = vpop.f32.mrf.mxu0
  %696 = vmatprep.mubr.bf16.mxu0 0
  %697 = vmatmul.mubr.bf16.gmra.mxu0 %v415
  %v698 = vpop.f32.mrf.mxu0
  %v699 = vadd.f32 0.0, %v698
  %v700 = vpop.f32.mrf.mxu0
  %v701 = vpop.f32.mrf.mxu0
  %v702 = vadd.f32 0.0, %v701
  %v703 = vpop.f32.mrf.mxu0
  %704 = vmatprep.mubr.bf16.mxu0 0
  %705 = vmatmul.mubr.bf16.gmra.mxu0 %v418
  %v706 = vpop.f32.mrf.mxu0
  %v707 = vadd.f32 0.0, %v706
  %v708 = vpop.f32.mrf.mxu0
  %v709 = vpop.f32.mrf.mxu0
  %v710 = vadd.f32 0.0, %v709
  %v711 = vpop.f32.mrf.mxu0
  %712 = vdwg.mxu0
  %vm713 = vcmask 130048
  %714 = vst.msk [vmem:[%s4] sm:$0xff] %vm713, %v459
  %715 = vst.msk [vmem:[%s4 + $0x8] sm:$0xff] %vm713, %v462
  %716 = vst.msk [vmem:[%s4 + $0x10] sm:$0xff] %vm713, %v467
  %717 = vst.msk [vmem:[%s4 + $0x18] sm:$0xff] %vm713, %v470
  %718 = vst.msk [vmem:[%s4 + $0x20] sm:$0xff] %vm713, %v475
  %719 = vst.msk [vmem:[%s4 + $0x28] sm:$0xff] %vm713, %v478
  %720 = vst.msk [vmem:[%s4 + $0x30] sm:$0xff] %vm713, %v483
  %721 = vst.msk [vmem:[%s4 + $0x38] sm:$0xff] %vm713, %v486
  %722 = vst.msk [vmem:[%s4 + $0x40] sm:$0xff] %vm713, %v491
  %723 = vst.msk [vmem:[%s4 + $0x48] sm:$0xff] %vm713, %v494
  %724 = vst.msk [vmem:[%s4 + $0x50] sm:$0xff] %vm713, %v499
  %725 = vst.msk [vmem:[%s4 + $0x58] sm:$0xff] %vm713, %v502
  %726 = vst.msk [vmem:[%s4 + $0x60] sm:$0xff] %vm713, %v507
  %727 = vst.msk [vmem:[%s4 + $0x68] sm:$0xff] %vm713, %v510
  %728 = vst.msk [vmem:[%s4 + $0x70] sm:$0xff] %vm713, %v515
  %729 = vst.msk [vmem:[%s4 + $0x78] sm:$0xff] %vm713, %v518
  %730 = vst.msk [vmem:[%s4 + $0x80] sm:$0xff] %vm713, %v523
  %731 = vst.msk [vmem:[%s4 + $0x88] sm:$0xff] %vm713, %v526
  %732 = vst.msk [vmem:[%s4 + $0x90] sm:$0xff] %vm713, %v531
  %733 = vst.msk [vmem:[%s4 + $0x98] sm:$0xff] %vm713, %v534
  %734 = vst.msk [vmem:[%s4 + $0xa0] sm:$0xff] %vm713, %v539
  %735 = vst.msk [vmem:[%s4 + $0xa8] sm:$0xff] %vm713, %v542
  %736 = vst.msk [vmem:[%s4 + $0xb0] sm:$0xff] %vm713, %v547
  %737 = vst.msk [vmem:[%s4 + $0xb8] sm:$0xff] %vm713, %v550
  %738 = vst.msk [vmem:[%s4 + $0xc0] sm:$0xff] %vm713, %v555
  %739 = vst.msk [vmem:[%s4 + $0xc8] sm:$0xff] %vm713, %v558
  %740 = vst.msk [vmem:[%s4 + $0xd0] sm:$0xff] %vm713, %v563
  %741 = vst.msk [vmem:[%s4 + $0xd8] sm:$0xff] %vm713, %v566
  %742 = vst.msk [vmem:[%s4 + $0xe0] sm:$0xff] %vm713, %v571
  %743 = vst.msk [vmem:[%s4 + $0xe8] sm:$0xff] %vm713, %v574
  %744 = vst.msk [vmem:[%s4 + $0xf0] sm:$0xff] %vm713, %v579
  %745 = vst.msk [vmem:[%s4 + $0xf8] sm:$0xff] %vm713, %v582
  %746 = vst.msk [vmem:[%s4 + $0x100] sm:$0xff] %vm713, %v587
  %747 = vst.msk [vmem:[%s4 + $0x108] sm:$0xff] %vm713, %v590
  %748 = vst.msk [vmem:[%s4 + $0x110] sm:$0xff] %vm713, %v595
  %749 = vst.msk [vmem:[%s4 + $0x118] sm:$0xff] %vm713, %v598
  %750 = vst.msk [vmem:[%s4 + $0x120] sm:$0xff] %vm713, %v603
  %751 = vst.msk [vmem:[%s4 + $0x128] sm:$0xff] %vm713, %v606
  %752 = vst.msk [vmem:[%s4 + $0x130] sm:$0xff] %vm713, %v611
  %753 = vst.msk [vmem:[%s4 + $0x138] sm:$0xff] %vm713, %v614
  %754 = vst.msk [vmem:[%s4 + $0x140] sm:$0xff] %vm713, %v619
  %755 = vst.msk [vmem:[%s4 + $0x148] sm:$0xff] %vm713, %v622
  %756 = vst.msk [vmem:[%s4 + $0x150] sm:$0xff] %vm713, %v627
  %757 = vst.msk [vmem:[%s4 + $0x158] sm:$0xff] %vm713, %v630
  %758 = vst.msk [vmem:[%s4 + $0x160] sm:$0xff] %vm713, %v635
  %759 = vst.msk [vmem:[%s4 + $0x168] sm:$0xff] %vm713, %v638
  %760 = vst.msk [vmem:[%s4 + $0x170] sm:$0xff] %vm713, %v643
  %761 = vst.msk [vmem:[%s4 + $0x178] sm:$0xff] %vm713, %v646
  %762 = vst.msk [vmem:[%s4 + $0x180] sm:$0xff] %vm713, %v651
  %763 = vst.msk [vmem:[%s4 + $0x188] sm:$0xff] %vm713, %v654
  %764 = vst.msk [vmem:[%s4 + $0x190] sm:$0xff] %vm713, %v659
  %765 = vst.msk [vmem:[%s4 + $0x198] sm:$0xff] %vm713, %v662
  %766 = vst.msk [vmem:[%s4 + $0x1a0] sm:$0xff] %vm713, %v667
  %767 = vst.msk [vmem:[%s4 + $0x1a8] sm:$0xff] %vm713, %v670
  %768 = vst.msk [vmem:[%s4 + $0x1b0] sm:$0xff] %vm713, %v675
  %769 = vst.msk [vmem:[%s4 + $0x1b8] sm:$0xff] %vm713, %v678
  %770 = vst.msk [vmem:[%s4 + $0x1c0] sm:$0xff] %vm713, %v683
  %771 = vst.msk [vmem:[%s4 + $0x1c8] sm:$0xff] %vm713, %v686
  %772 = vst.msk [vmem:[%s4 + $0x1d0] sm:$0xff] %vm713, %v691
  %773 = vst.msk [vmem:[%s4 + $0x1d8] sm:$0xff] %vm713, %v694
  %774 = vst.msk [vmem:[%s4 + $0x1e0] sm:$0xff] %vm713, %v699
  %775 = vst.msk [vmem:[%s4 + $0x1e8] sm:$0xff] %vm713, %v702
  %776 = vst.msk [vmem:[%s4 + $0x1f0] sm:$0xff] %vm713, %v707
  %777 = vst.msk [vmem:[%s4 + $0x1f8] sm:$0xff] %vm713, %v710
  %v778 = vsel %vm713, %v459, 0.0
  %v779 = vsel %vm713, %v462, 0.0
  %v780 = vadd.f32 %v778, %v779
  %v781 = vsel %vm713, %v467, 0.0
  %v782 = vadd.f32 %v780, %v781
  %v783 = vsel %vm713, %v470, 0.0
  %v784 = vadd.f32 %v782, %v783
  %v785 = vsel %vm713, %v475, 0.0
  %v786 = vadd.f32 %v784, %v785
  %v787 = vsel %vm713, %v478, 0.0
  %v788 = vadd.f32 %v786, %v787
  %v789 = vsel %vm713, %v483, 0.0
  %v790 = vadd.f32 %v788, %v789
  %v791 = vsel %vm713, %v486, 0.0
  %v792 = vadd.f32 %v790, %v791
  %v793 = vsel %vm713, %v491, 0.0
  %v794 = vadd.f32 %v792, %v793
  %v795 = vsel %vm713, %v494, 0.0
  %v796 = vadd.f32 %v794, %v795
  %v797 = vsel %vm713, %v499, 0.0
  %v798 = vadd.f32 %v796, %v797
  %v799 = vsel %vm713, %v502, 0.0
  %v800 = vadd.f32 %v798, %v799
  %v801 = vsel %vm713, %v507, 0.0
  %v802 = vadd.f32 %v800, %v801
  %v803 = vsel %vm713, %v510, 0.0
  %v804 = vadd.f32 %v802, %v803
  %v805 = vsel %vm713, %v515, 0.0
  %v806 = vadd.f32 %v804, %v805
  %v807 = vsel %vm713, %v518, 0.0
  %v808 = vadd.f32 %v806, %v807
  %v809 = vsel %vm713, %v523, 0.0
  %v810 = vadd.f32 %v808, %v809
  %v811 = vsel %vm713, %v526, 0.0
  %v812 = vadd.f32 %v810, %v811
  %v813 = vsel %vm713, %v531, 0.0
  %v814 = vadd.f32 %v812, %v813
  %v815 = vsel %vm713, %v534, 0.0
  %v816 = vadd.f32 %v814, %v815
  %v817 = vsel %vm713, %v539, 0.0
  %v818 = vadd.f32 %v816, %v817
  %v819 = vsel %vm713, %v542, 0.0
  %v820 = vadd.f32 %v818, %v819
  %v821 = vsel %vm713, %v547, 0.0
  %v822 = vadd.f32 %v820, %v821
  %v823 = vsel %vm713, %v550, 0.0
  %v824 = vadd.f32 %v822, %v823
  %v825 = vsel %vm713, %v555, 0.0
  %v826 = vadd.f32 %v824, %v825
  %v827 = vsel %vm713, %v558, 0.0
  %v828 = vadd.f32 %v826, %v827
  %v829 = vsel %vm713, %v563, 0.0
  %v830 = vadd.f32 %v828, %v829
  %v831 = vsel %vm713, %v566, 0.0
  %v832 = vadd.f32 %v830, %v831
  %v833 = vsel %vm713, %v571, 0.0
  %v834 = vadd.f32 %v832, %v833
  %v835 = vsel %vm713, %v574, 0.0
  %v836 = vadd.f32 %v834, %v835
  %v837 = vsel %vm713, %v579, 0.0
  %v838 = vadd.f32 %v836, %v837
  %v839 = vsel %vm713, %v582, 0.0
  %v840 = vadd.f32 %v838, %v839
  %v841 = vsel %vm713, %v587, 0.0
  %v842 = vadd.f32 %v840, %v841
  %v843 = vsel %vm713, %v590, 0.0
  %v844 = vadd.f32 %v842, %v843
  %v845 = vsel %vm713, %v595, 0.0
  %v846 = vadd.f32 %v844, %v845
  %v847 = vsel %vm713, %v598, 0.0
  %v848 = vadd.f32 %v846, %v847
  %v849 = vsel %vm713, %v603, 0.0
  %v850 = vadd.f32 %v848, %v849
  %v851 = vsel %vm713, %v606, 0.0
  %v852 = vadd.f32 %v850, %v851
  %v853 = vsel %vm713, %v611, 0.0
  %v854 = vadd.f32 %v852, %v853
  %v855 = vsel %vm713, %v614, 0.0
  %v856 = vadd.f32 %v854, %v855
  %v857 = vsel %vm713, %v619, 0.0
  %v858 = vadd.f32 %v856, %v857
  %v859 = vsel %vm713, %v622, 0.0
  %v860 = vadd.f32 %v858, %v859
  %v861 = vsel %vm713, %v627, 0.0
  %v862 = vadd.f32 %v860, %v861
  %v863 = vsel %vm713, %v630, 0.0
  %v864 = vadd.f32 %v862, %v863
  %v865 = vsel %vm713, %v635, 0.0
  %v866 = vadd.f32 %v864, %v865
  %v867 = vsel %vm713, %v638, 0.0
  %v868 = vadd.f32 %v866, %v867
  %v869 = vsel %vm713, %v643, 0.0
  %v870 = vadd.f32 %v868, %v869
  %v871 = vsel %vm713, %v646, 0.0
  %v872 = vadd.f32 %v870, %v871
  %v873 = vsel %vm713, %v651, 0.0
  %v874 = vadd.f32 %v872, %v873
  %v875 = vsel %vm713, %v654, 0.0
  %v876 = vadd.f32 %v874, %v875
  %v877 = vsel %vm713, %v659, 0.0
  %v878 = vadd.f32 %v876, %v877
  %v879 = vsel %vm713, %v662, 0.0
  %v880 = vadd.f32 %v878, %v879
  %v881 = vsel %vm713, %v667, 0.0
  %v882 = vadd.f32 %v880, %v881
  %v883 = vsel %vm713, %v670, 0.0
  %v884 = vadd.f32 %v882, %v883
  %v885 = vsel %vm713, %v675, 0.0
  %v886 = vadd.f32 %v884, %v885
  %v887 = vsel %vm713, %v678, 0.0
  %v888 = vadd.f32 %v886, %v887
  %v889 = vsel %vm713, %v683, 0.0
  %v890 = vadd.f32 %v888, %v889
  %v891 = vsel %vm713, %v686, 0.0
  %v892 = vadd.f32 %v890, %v891
  %v893 = vsel %vm713, %v691, 0.0
  %v894 = vadd.f32 %v892, %v893
  %v895 = vsel %vm713, %v694, 0.0
  %v896 = vadd.f32 %v894, %v895
  %v897 = vsel %vm713, %v699, 0.0
  %v898 = vadd.f32 %v896, %v897
  %v899 = vsel %vm713, %v702, 0.0
  %v900 = vadd.f32 %v898, %v899
  %v901 = vsel %vm713, %v707, 0.0
  %v902 = vadd.f32 %v900, %v901
  %v903 = vsel %vm713, %v710, 0.0
  %v904 = vadd.f32 %v902, %v903
  %v905 = vrot.slane %v904, 4
  %v906 = vadd.f32 %v904, %v905
  %v907 = vrot.slane %v906, 2
  %v908 = vadd.f32 %v906, %v907
  %v909 = vrot.slane %v908, 1
  %v910 = vadd.f32 %v908, %v909
  %v911 = vmul.f32 %v459, %v459
  %v912 = vmul.f32 %v462, %v462
  %v913 = vmul.f32 %v467, %v467
  %v914 = vmul.f32 %v470, %v470
  %v915 = vmul.f32 %v475, %v475
  %v916 = vmul.f32 %v478, %v478
  %v917 = vmul.f32 %v483, %v483
  %v918 = vmul.f32 %v486, %v486
  %v919 = vmul.f32 %v491, %v491
  %v920 = vmul.f32 %v494, %v494
  %v921 = vmul.f32 %v499, %v499
  %v922 = vmul.f32 %v502, %v502
  %v923 = vmul.f32 %v507, %v507
  %v924 = vmul.f32 %v510, %v510
  %v925 = vmul.f32 %v515, %v515
  %v926 = vmul.f32 %v518, %v518
  %v927 = vmul.f32 %v523, %v523
  %v928 = vmul.f32 %v526, %v526
  %v929 = vmul.f32 %v531, %v531
  %v930 = vmul.f32 %v534, %v534
  %v931 = vmul.f32 %v539, %v539
  %v932 = vmul.f32 %v542, %v542
  %v933 = vmul.f32 %v547, %v547
  %v934 = vmul.f32 %v550, %v550
  %v935 = vmul.f32 %v555, %v555
  %v936 = vmul.f32 %v558, %v558
  %v937 = vmul.f32 %v563, %v563
  %v938 = vmul.f32 %v566, %v566
  %v939 = vmul.f32 %v571, %v571
  %v940 = vmul.f32 %v574, %v574
  %v941 = vmul.f32 %v579, %v579
  %v942 = vmul.f32 %v582, %v582
  %v943 = vmul.f32 %v587, %v587
  %v944 = vmul.f32 %v590, %v590
  %v945 = vmul.f32 %v595, %v595
  %v946 = vmul.f32 %v598, %v598
  %v947 = vmul.f32 %v603, %v603
  %v948 = vmul.f32 %v606, %v606
  %v949 = vmul.f32 %v611, %v611
  %v950 = vmul.f32 %v614, %v614
  %v951 = vmul.f32 %v619, %v619
  %v952 = vmul.f32 %v622, %v622
  %v953 = vmul.f32 %v627, %v627
  %v954 = vmul.f32 %v630, %v630
  %v955 = vmul.f32 %v635, %v635
  %v956 = vmul.f32 %v638, %v638
  %v957 = vmul.f32 %v643, %v643
  %v958 = vmul.f32 %v646, %v646
  %v959 = vmul.f32 %v651, %v651
  %v960 = vmul.f32 %v654, %v654
  %v961 = vmul.f32 %v659, %v659
  %v962 = vmul.f32 %v662, %v662
  %v963 = vmul.f32 %v667, %v667
  %v964 = vmul.f32 %v670, %v670
  %v965 = vmul.f32 %v675, %v675
  %v966 = vmul.f32 %v678, %v678
  %v967 = vmul.f32 %v683, %v683
  %v968 = vmul.f32 %v686, %v686
  %v969 = vmul.f32 %v691, %v691
  %v970 = vmul.f32 %v694, %v694
  %v971 = vmul.f32 %v699, %v699
  %v972 = vmul.f32 %v702, %v702
  %v973 = vmul.f32 %v707, %v707
  %v974 = vmul.f32 %v710, %v710
  %v975 = vsel %vm713, %v911, 0.0
  %v976 = vsel %vm713, %v912, 0.0
  %v977 = vadd.f32 %v975, %v976
  %v978 = vsel %vm713, %v913, 0.0
  %v979 = vadd.f32 %v977, %v978
  %v980 = vsel %vm713, %v914, 0.0
  %v981 = vadd.f32 %v979, %v980
  %v982 = vsel %vm713, %v915, 0.0
  %v983 = vadd.f32 %v981, %v982
  %v984 = vsel %vm713, %v916, 0.0
  %v985 = vadd.f32 %v983, %v984
  %v986 = vsel %vm713, %v917, 0.0
  %v987 = vadd.f32 %v985, %v986
  %v988 = vsel %vm713, %v918, 0.0
  %v989 = vadd.f32 %v987, %v988
  %v990 = vsel %vm713, %v919, 0.0
  %v991 = vadd.f32 %v989, %v990
  %v992 = vsel %vm713, %v920, 0.0
  %v993 = vadd.f32 %v991, %v992
  %v994 = vsel %vm713, %v921, 0.0
  %v995 = vadd.f32 %v993, %v994
  %v996 = vsel %vm713, %v922, 0.0
  %v997 = vadd.f32 %v995, %v996
  %v998 = vsel %vm713, %v923, 0.0
  %v999 = vadd.f32 %v997, %v998
  %v1000 = vsel %vm713, %v924, 0.0
  %v1001 = vadd.f32 %v999, %v1000
  %v1002 = vsel %vm713, %v925, 0.0
  %v1003 = vadd.f32 %v1001, %v1002
  %v1004 = vsel %vm713, %v926, 0.0
  %v1005 = vadd.f32 %v1003, %v1004
  %v1006 = vsel %vm713, %v927, 0.0
  %v1007 = vadd.f32 %v1005, %v1006
  %v1008 = vsel %vm713, %v928, 0.0
  %v1009 = vadd.f32 %v1007, %v1008
  %v1010 = vsel %vm713, %v929, 0.0
  %v1011 = vadd.f32 %v1009, %v1010
  %v1012 = vsel %vm713, %v930, 0.0
  %v1013 = vadd.f32 %v1011, %v1012
  %v1014 = vsel %vm713, %v931, 0.0
  %v1015 = vadd.f32 %v1013, %v1014
  %v1016 = vsel %vm713, %v932, 0.0
  %v1017 = vadd.f32 %v1015, %v1016
  %v1018 = vsel %vm713, %v933, 0.0
  %v1019 = vadd.f32 %v1017, %v1018
  %v1020 = vsel %vm713, %v934, 0.0
  %v1021 = vadd.f32 %v1019, %v1020
  %v1022 = vsel %vm713, %v935, 0.0
  %v1023 = vadd.f32 %v1021, %v1022
  %v1024 = vsel %vm713, %v936, 0.0
  %v1025 = vadd.f32 %v1023, %v1024
  %v1026 = vsel %vm713, %v937, 0.0
  %v1027 = vadd.f32 %v1025, %v1026
  %v1028 = vsel %vm713, %v938, 0.0
  %v1029 = vadd.f32 %v1027, %v1028
  %v1030 = vsel %vm713, %v939, 0.0
  %v1031 = vadd.f32 %v1029, %v1030
  %v1032 = vsel %vm713, %v940, 0.0
  %v1033 = vadd.f32 %v1031, %v1032
  %v1034 = vsel %vm713, %v941, 0.0
  %v1035 = vadd.f32 %v1033, %v1034
  %v1036 = vsel %vm713, %v942, 0.0
  %v1037 = vadd.f32 %v1035, %v1036
  %v1038 = vsel %vm713, %v943, 0.0
  %v1039 = vadd.f32 %v1037, %v1038
  %v1040 = vsel %vm713, %v944, 0.0
  %v1041 = vadd.f32 %v1039, %v1040
  %v1042 = vsel %vm713, %v945, 0.0
  %v1043 = vadd.f32 %v1041, %v1042
  %v1044 = vsel %vm713, %v946, 0.0
  %v1045 = vadd.f32 %v1043, %v1044
  %v1046 = vsel %vm713, %v947, 0.0
  %v1047 = vadd.f32 %v1045, %v1046
  %v1048 = vsel %vm713, %v948, 0.0
  %v1049 = vadd.f32 %v1047, %v1048
  %v1050 = vsel %vm713, %v949, 0.0
  %v1051 = vadd.f32 %v1049, %v1050
  %v1052 = vsel %vm713, %v950, 0.0
  %v1053 = vadd.f32 %v1051, %v1052
  %v1054 = vsel %vm713, %v951, 0.0
  %v1055 = vadd.f32 %v1053, %v1054
  %v1056 = vsel %vm713, %v952, 0.0
  %v1057 = vadd.f32 %v1055, %v1056
  %v1058 = vsel %vm713, %v953, 0.0
  %v1059 = vadd.f32 %v1057, %v1058
  %v1060 = vsel %vm713, %v954, 0.0
  %v1061 = vadd.f32 %v1059, %v1060
  %v1062 = vsel %vm713, %v955, 0.0
  %v1063 = vadd.f32 %v1061, %v1062
  %v1064 = vsel %vm713, %v956, 0.0
  %v1065 = vadd.f32 %v1063, %v1064
  %v1066 = vsel %vm713, %v957, 0.0
  %v1067 = vadd.f32 %v1065, %v1066
  %v1068 = vsel %vm713, %v958, 0.0
  %v1069 = vadd.f32 %v1067, %v1068
  %v1070 = vsel %vm713, %v959, 0.0
  %v1071 = vadd.f32 %v1069, %v1070
  %v1072 = vsel %vm713, %v960, 0.0
  %v1073 = vadd.f32 %v1071, %v1072
  %v1074 = vsel %vm713, %v961, 0.0
  %v1075 = vadd.f32 %v1073, %v1074
  %v1076 = vsel %vm713, %v962, 0.0
  %v1077 = vadd.f32 %v1075, %v1076
  %v1078 = vsel %vm713, %v963, 0.0
  %v1079 = vadd.f32 %v1077, %v1078
  %v1080 = vsel %vm713, %v964, 0.0
  %v1081 = vadd.f32 %v1079, %v1080
  %v1082 = vsel %vm713, %v965, 0.0
  %v1083 = vadd.f32 %v1081, %v1082
  %v1084 = vsel %vm713, %v966, 0.0
  %v1085 = vadd.f32 %v1083, %v1084
  %v1086 = vsel %vm713, %v967, 0.0
  %v1087 = vadd.f32 %v1085, %v1086
  %v1088 = vsel %vm713, %v968, 0.0
  %v1089 = vadd.f32 %v1087, %v1088
  %v1090 = vsel %vm713, %v969, 0.0
  %v1091 = vadd.f32 %v1089, %v1090
  %v1092 = vsel %vm713, %v970, 0.0
  %v1093 = vadd.f32 %v1091, %v1092
  %v1094 = vsel %vm713, %v971, 0.0
  %v1095 = vadd.f32 %v1093, %v1094
  %v1096 = vsel %vm713, %v972, 0.0
  %v1097 = vadd.f32 %v1095, %v1096
  %v1098 = vsel %vm713, %v973, 0.0
  %v1099 = vadd.f32 %v1097, %v1098
  %v1100 = vsel %vm713, %v974, 0.0
  %v1101 = vadd.f32 %v1099, %v1100
  %v1102 = vrot.slane %v1101, 4
  %v1103 = vadd.f32 %v1101, %v1102
  %v1104 = vrot.slane %v1103, 2
  %v1105 = vadd.f32 %v1103, %v1104
  %v1106 = vrot.slane %v1105, 1
  %v1107 = vadd.f32 %v1105, %v1106
  %vm1108 = vcmask 1040384
  %v1109 = vsel %vm1108, %v910, %v1107
  %vm1110 = vcmask 123904
  %1111 = vst.msk [vmem:[%s5] sm:$0x3] %vm1110, %v1109
  // Predicated region
  $region18: #{bottleneck_forward.7} parent=0 // pred_check
    _
  $region19: #{bottleneck_forward.7} parent=0 // pred_check_branch
    %1113 = sbr.rel (0) target = $region21
  $region20: #{bottleneck_forward.7} parent=0 // pred_region
    _
  $region21: #{bottleneck_forward.7} parent=0 // pred_fallthru
    _
  // Predicated region
  $region22: #{bottleneck_forward.7} parent=0 // pred_check
    _
  $region23: #{bottleneck_forward.7} parent=0 // pred_check_branch
    %1115 = sbr.rel (0) target = $region25
  $region24: #{bottleneck_forward.7} parent=0 // pred_region
    _
  $region25: #{bottleneck_forward.7} parent=0 // pred_fallthru
    _
  // Predicated region
  $region26: #{bottleneck_forward.7} parent=0 // pred_check
    _
  $region27: #{bottleneck_forward.7} parent=0 // pred_check_branch
    %1117 = sbr.rel (0) target = $region29
  $region28: #{bottleneck_forward.7} parent=0 // pred_region
    _
  $region29: #{bottleneck_forward.7} parent=0 // pred_fallthru
    _
  // Predicated region
  $region30: #{bottleneck_forward.7} parent=0 // pred_check
    _
  $region31: #{bottleneck_forward.7} parent=0 // pred_check_branch
    %1119 = sbr.rel (0) target = $region33
  $region32: #{bottleneck_forward.7} parent=0 // pred_region
    _
  $region33: #{bottleneck_forward.7} parent=0 // pred_fallthru
    _

// kernel: bottleneck_forward.6
$region0: #{bottleneck_forward.6}
  #allocation0 [shape = 'u32[]', space=smem, size = 0x4, offset = 0x4, fixed_abs, tag = 'smem constant byte address 0x4 - core index']
  #allocation1 [shape = 'u32[144,128]{1,0:T(1,128)}', space=vmem, size = 0x12000, scoped, tag = 'internal scratch']
  #allocation2 [shape = 'f32[18,18,4]{2,1,0:T(8,128)}', space=vmem, size = 0x36000, scoped, tag = 'scratch operand']
  #allocation3 [shape = 'f32[16,18,4]{2,1,0:T(8,128)}', space=vmem, size = 0x30000, scoped, tag = 'scratch operand']
  %s0 = inlined_call_operand.vmem [shape: f32[2,16,16,4], index: 0, kind: input, shape index: {}]
  %s1 = inlined_call_operand.vmem [shape: f32[1,4], index: 1, kind: input, shape index: {}]
  %s2 = inlined_call_operand.vmem [shape: f32[1,4], index: 2, kind: input, shape index: {}]
  %s3 = inlined_call_operand.vmem [shape: bf16[9,4,4], index: 3, kind: input, shape index: {}]
  %s4 = inlined_call_operand.vmem [shape: f32[2,256,4], index: 4, kind: output, shape index: {0}]
  %s5 = inlined_call_operand.vmem [shape: f32[2,2,4], index: 5, kind: output, shape index: {1}]
  %6 = xla_tuple %s4, %s5
  %s7 = sld [smem:[#allocation0]]
  $region57: #{bottleneck_forward.6} parent=0
    _
  %s9 = ssub.s32 1, %s7
  %s10 = scalar_select 0, %s9, %s7
  loop: start=0, step=1, limit=4
  $region2: #{bottleneck_forward.6} parent=0 // loop_pre_header
    _
  $region3: #{bottleneck_forward.6} parent=0 // loop_header
    %s12 = sphi 0, %s16
    %p13 = scmp.ge.s32.totalorder %s12, 4
    %s22 = sphi 0, %s24
    %s25 = sphi 0, %s22
    %s26 = sphi 0, %s25
    %s42 = sphi 0, %s26
    %s46 = sphi 0, %s46
    %s48 = sphi 0, %s46
    %s49 = sphi 0, %s48
    %s63 = sphi 0, %s49
    %s67 = sphi 0, %s67
    %s69 = sphi 0, %s67
    %s70 = sphi 0, %s69
    %s84 = sphi 0, %s70
    %s88 = sphi 0, %s88
    %s90 = sphi 0, %s88
    %s91 = sphi 0, %s90
    %s105 = sphi 0, %s91
    %s111 = sphi 0, %s113
    %s114 = sphi 0, %s111
    %s115 = sphi 0, %s114
    %s131 = sphi 0, %s115
    %s137 = sphi 0, %s139
    %s140 = sphi 0, %s137
    %s141 = sphi 0, %s140
    %s157 = sphi 0, %s141
  $region4: #{bottleneck_forward.6} parent=0 // loop_header_branch
    %15 = sbr.rel (%p13) target = $region8
  $region5: #{bottleneck_forward.6} parent=0 // loop_body
    %s17 = ssub.s32 %s12, 1
    %s18 = ssub.s32 %s12, 2
    %s19 = sadd.s32 %s12, 1
    %s20 = ssub.s32 %s12, %s19
    %p21 = scmp.eq.s32.totalorder %s20, 0
    %s23 = sadd.s32 %s22, 1
    %s24 = scalar_select %p21, %s22, %s23
    %p27 = pneg %p21
    %p28 = scmp.eq.s32.totalorder %s12, 1
    %p29 = por %p27, %p28
    %p30 = scmp.ne.s32.totalorder %s22, %s25
    %p31 = scmp.eq.s32.totalorder %s12, 0
    %p32 = por %p30, %p31
    %p33 = scmp.ne.s32.totalorder %s22, %s25
    %p34 = scmp.eq.s32.totalorder %s17, 1
    %p35 = por %p33, %p34
    %p36 = scmp.ne.s32.totalorder %s25, %s26
    %p37 = scmp.eq.s32.totalorder %s17, 0
    %p38 = por %p36, %p37
    %p39 = scmp.ne.s32.totalorder %s25, %s26
    %p40 = scmp.eq.s32.totalorder %s18, 1
    %p41 = por %p39, %p40
    %p43 = scmp.ne.s32.totalorder %s26, %s42
    %p44 = scmp.eq.s32.totalorder %s18, 0
    %p45 = por %p43, %p44
    %s47 = sadd.s32 %s46, 1
    %p50 = scmp.eq.s32.totalorder %s12, 1
    %p51 = scmp.ne.s32.totalorder %s46, %s48
    %p52 = scmp.eq.s32.totalorder %s12, 0
    %p53 = por %p51, %p52
    %p54 = scmp.ne.s32.totalorder %s46, %s48
    %p55 = scmp.eq.s32.totalorder %s17, 1
    %p56 = por %p54, %p55
    %p57 = scmp.ne.s32.totalorder %s48, %s49
    %p58 = scmp.eq.s32.totalorder %s17, 0
    %p59 = por %p57, %p58
    %p60 = scmp.ne.s32.totalorder %s48, %s49
    %p61 = scmp.eq.s32.totalorder %s18, 1
    %p62 = por %p60, %p61
    %p64 = scmp.ne.s32.totalorder %s49, %s63
    %p65 = scmp.eq.s32.totalorder %s18, 0
    %p66 = por %p64, %p65
    %s68 = sadd.s32 %s67, 1
    %p71 = scmp.eq.s32.totalorder %s12, 1
    %p72 = scmp.ne.s32.totalorder %s67, %s69
    %p73 = scmp.eq.s32.totalorder %s12, 0
    %p74 = por %p72, %p73
    %p75 = scmp.ne.s32.totalorder %s67, %s69
    %p76 = scmp.eq.s32.totalorder %s17, 1
    %p77 = por %p75, %p76
    %p78 = scmp.ne.s32.totalorder %s69, %s70
    %p79 = scmp.eq.s32.totalorder %s17, 0
    %p80 = por %p78, %p79
    %p81 = scmp.ne.s32.totalorder %s69, %s70
    %p82 = scmp.eq.s32.totalorder %s18, 1
    %p83 = por %p81, %p82
    %p85 = scmp.ne.s32.totalorder %s70, %s84
    %p86 = scmp.eq.s32.totalorder %s18, 0
    %p87 = por %p85, %p86
    %s89 = sadd.s32 %s88, 1
    %p92 = scmp.eq.s32.totalorder %s12, 1
    %p93 = scmp.ne.s32.totalorder %s88, %s90
    %p94 = scmp.eq.s32.totalorder %s12, 0
    %p95 = por %p93, %p94
    %p96 = scmp.ne.s32.totalorder %s88, %s90
    %p97 = scmp.eq.s32.totalorder %s17, 1
    %p98 = por %p96, %p97
    %p99 = scmp.ne.s32.totalorder %s90, %s91
    %p100 = scmp.eq.s32.totalorder %s17, 0
    %p101 = por %p99, %p100
    %p102 = scmp.ne.s32.totalorder %s90, %s91
    %p103 = scmp.eq.s32.totalorder %s18, 1
    %p104 = por %p102, %p103
    %p106 = scmp.ne.s32.totalorder %s91, %s105
    %p107 = scmp.eq.s32.totalorder %s18, 0
    %p108 = por %p106, %p107
    %s109 = ssub.s32 %s12, %s19
    %p110 = scmp.eq.s32.totalorder %s109, 0
    %s112 = sadd.s32 %s111, 1
    %s113 = scalar_select %p110, %s111, %s112
    %p116 = pneg %p110
    %p117 = scmp.eq.s32.totalorder %s12, 1
    %p118 = por %p116, %p117
    %p119 = scmp.ne.s32.totalorder %s111, %s114
    %p120 = scmp.eq.s32.totalorder %s12, 0
    %p121 = por %p119, %p120
    %p122 = scmp.ne.s32.totalorder %s111, %s114
    %p123 = scmp.eq.s32.totalorder %s17, 1
    %p124 = por %p122, %p123
    %p125 = scmp.ne.s32.totalorder %s114, %s115
    %p126 = scmp.eq.s32.totalorder %s17, 0
    %p127 = por %p125, %p126
    %p128 = scmp.ne.s32.totalorder %s114, %s115
    %p129 = scmp.eq.s32.totalorder %s18, 1
    %p130 = por %p128, %p129
    %p132 = scmp.ne.s32.totalorder %s115, %s131
    %p133 = scmp.eq.s32.totalorder %s18, 0
    %p134 = por %p132, %p133
    %s135 = ssub.s32 %s12, %s19
    %p136 = scmp.eq.s32.totalorder %s135, 0
    %s138 = sadd.s32 %s137, 1
    %s139 = scalar_select %p136, %s137, %s138
    %p142 = pneg %p136
    %p143 = scmp.eq.s32.totalorder %s12, 1
    %p144 = por %p142, %p143
    %p145 = scmp.ne.s32.totalorder %s137, %s140
    %p146 = scmp.eq.s32.totalorder %s12, 0
    %p147 = por %p145, %p146
    %p148 = scmp.ne.s32.totalorder %s137, %s140
    %p149 = scmp.eq.s32.totalorder %s17, 1
    %p150 = por %p148, %p149
    %p151 = scmp.ne.s32.totalorder %s140, %s141
    %p152 = scmp.eq.s32.totalorder %s17, 0
    %p153 = por %p151, %p152
    %p154 = scmp.ne.s32.totalorder %s140, %s141
    %p155 = scmp.eq.s32.totalorder %s18, 1
    %p156 = por %p154, %p155
    %p158 = scmp.ne.s32.totalorder %s141, %s157
    %p159 = scmp.eq.s32.totalorder %s18, 0
    %p160 = por %p158, %p159
    %p161 = scmp.le.s32.totalorder 1, %s12
    %p162 = scmp.lt.s32.totalorder %s12, 3
    %p163 = pnand %p161, %p162
    %p164 = pneg %p163
    // Predicated region
    $region9: #{bottleneck_forward.6} parent=5 // pred_check
      _
    $region10: #{bottleneck_forward.6} parent=5 // pred_check_branch
      %166 = sbr.rel (%p163) target = $region12
    $region11: #{bottleneck_forward.6} parent=5 // pred_region
      %s167 = ssub.s32 %s12, 1
      // Predicated region
      $region13: #{bottleneck_forward.6} parent=11 // pred_check
        %p168 = pneg %p59
      $region14: #{bottleneck_forward.6} parent=11 // pred_check_branch
        %170 = sbr.rel (%p168) target = $region16
      $region15: #{bottleneck_forward.6} parent=11 // pred_region
        _
      $region16: #{bottleneck_forward.6} parent=11 // pred_fallthru
        _
      // Predicated region
      $region17: #{bottleneck_forward.6} parent=11 // pred_check
        %p171 = pneg %p80
      $region18: #{bottleneck_forward.6} parent=11 // pred_check_branch
        %173 = sbr.rel (%p171) target = $region20
      $region19: #{bottleneck_forward.6} parent=11 // pred_region
        _
      $region20: #{bottleneck_forward.6} parent=11 // pred_fallthru
        _
      // Predicated region
      $region21: #{bottleneck_forward.6} parent=11 // pred_check
        %p174 = pneg %p101
      $region22: #{bottleneck_forward.6} parent=11 // pred_check_branch
        %176 = sbr.rel (%p174) target = $region24
      $region23: #{bottleneck_forward.6} parent=11 // pred_region
        _
      $region24: #{bottleneck_forward.6} parent=11 // pred_fallthru
        _
    $region12: #{bottleneck_forward.6} parent=5 // pred_fallthru
      _
    %p177 = scmp.lt.s32.totalorder %s12, 2
    // Predicated region
    $region25: #{bottleneck_forward.6} parent=5 // pred_check
      %p178 = pneg %p177
    $region26: #{bottleneck_forward.6} parent=5 // pred_check_branch
      %180 = sbr.rel (%p178) target = $region28
    $region27: #{bottleneck_forward.6} parent=5 // pred_region
      // Predicated region
      $region29: #{bottleneck_forward.6} parent=27 // pred_check
        %p181 = pneg %p32
      $region30: #{bottleneck_forward.6} parent=27 // pred_check_branch
        %183 = sbr.rel (%p181) target = $region32
      $region31: #{bottleneck_forward.6} parent=27 // pred_region
        %p184 = scmp.lt.s32.totalorder %s12, 1
        %s185 = scalar_select %p184, %s12, 1
        %s186 = smul.addr %s185, 32
        %s187 = smul.addr %s186, 8
        %s188 = scalar_lea.vmem %s0, %s187
      $region32: #{bottleneck_forward.6} parent=27 // pred_fallthru
        _
    $region28: #{bottleneck_forward.6} parent=5 // pred_fallthru
      _
    %p189 = scmp.le.s32.totalorder 1, %s12
    %p190 = scmp.lt.s32.totalorder %s12, 3
    %p191 = pnand %p189, %p190
    %p192 = pneg %p191
    // Predicated region
    $region33: #{bottleneck_forward.6} parent=5 // pred_check
      _
    $region34: #{bottleneck_forward.6} parent=5 // pred_check_branch
      %194 = sbr.rel (%p191) target = $region36
    $region35: #{bottleneck_forward.6} parent=5 // pred_region
      %s195 = ssub.s32 %s12, 1
      %p196 = scmp.lt.s32.totalorder %s17, 1
      %s197 = scalar_select %p196, %s17, 1
      %s198 = smul.addr %s197, 32
      %s199 = smul.addr %s198, 8
      %s200 = scalar_lea.vmem %s0, %s199
      %p201 = pneg %p38
      %p202 = pneg %p35
      %p203 = pneg %p59
      %p204 = pneg %p56
      %p205 = pneg %p80
      %p206 = pneg %p77
      %p207 = pneg %p101
      %p208 = pneg %p98
      %p209 = pneg %p127
      %p210 = pneg %p124
      %p211 = scmp.lt.s32.totalorder %s17, 1
      %s212 = scalar_select %p211, %s17, 1
      %s213 = smul.addr %s212, 32
      %s214 = smul.addr %s213, 8
      %s215 = scalar_lea.vmem %s4, %s214
      %p216 = pneg %p153
      %p217 = pneg %p150
      %p218 = scmp.lt.s32.totalorder %s17, 1
      %s219 = scalar_select %p218, %s17, 1
      %s220 = smul.addr %s219, 2
      %s221 = scalar_lea.vmem %s5, %s220
      %p222 = scmp.lt.s32.totalorder %s17, 1
      %s223 = scalar_select %p222, %s17, 1
      %s224 = smul.addr %s223, 32
      %s225 = smul.addr %s224, 8
      %s226 = scalar_lea.vmem %s0, %s225
      %p227 = scmp.lt.s32.totalorder %s17, 1
      %s228 = scalar_select %p227, %s17, 1
      %s229 = smul.addr %s228, 32
      %s230 = smul.addr %s229, 8
      %s231 = scalar_lea.vmem %s4, %s230
      %p232 = scmp.lt.s32.totalorder %s17, 1
      %s233 = scalar_select %p232, %s17, 1
      %s234 = smul.addr %s233, 2
      %s235 = scalar_lea.vmem %s5, %s234
      %v237 = vld [vmem:[%s1] sm:$0x1]
      %v238 = vld [vmem:[%s2] sm:$0x1]
      %v239 = vld [vmem:[%s226] sm:$0xff]
      %v240 = vld [vmem:[%s226 + $0x8] sm:$0xff]
      %v241 = vld [vmem:[%s226 + $0x10] sm:$0xff]
      %v242 = vld [vmem:[%s226 + $0x18] sm:$0xff]
      %v243 = vld [vmem:[%s226 + $0x20] sm:$0xff]
      %v244 = vld [vmem:[%s226 + $0x28] sm:$0xff]
      %v245 = vld [vmem:[%s226 + $0x30] sm:$0xff]
      %v246 = vld [vmem:[%s226 + $0x38] sm:$0xff]
      %v247 = vld [vmem:[%s226 + $0x40] sm:$0xff]
      %v248 = vld [vmem:[%s226 + $0x48] sm:$0xff]
      %v249 = vld [vmem:[%s226 + $0x50] sm:$0xff]
      %v250 = vld [vmem:[%s226 + $0x58] sm:$0xff]
      %v251 = vld [vmem:[%s226 + $0x60] sm:$0xff]
      %v252 = vld [vmem:[%s226 + $0x68] sm:$0xff]
      %v253 = vld [vmem:[%s226 + $0x70] sm:$0xff]
      %v254 = vld [vmem:[%s226 + $0x78] sm:$0xff]
      %v255 = vld [vmem:[%s226 + $0x80] sm:$0xff]
      %v256 = vld [vmem:[%s226 + $0x88] sm:$0xff]
      %v257 = vld [vmem:[%s226 + $0x90] sm:$0xff]
      %v258 = vld [vmem:[%s226 + $0x98] sm:$0xff]
      %v259 = vld [vmem:[%s226 + $0xa0] sm:$0xff]
      %v260 = vld [vmem:[%s226 + $0xa8] sm:$0xff]
      %v261 = vld [vmem:[%s226 + $0xb0] sm:$0xff]
      %v262 = vld [vmem:[%s226 + $0xb8] sm:$0xff]
      %v263 = vld [vmem:[%s226 + $0xc0] sm:$0xff]
      %v264 = vld [vmem:[%s226 + $0xc8] sm:$0xff]
      %v265 = vld [vmem:[%s226 + $0xd0] sm:$0xff]
      %v266 = vld [vmem:[%s226 + $0xd8] sm:$0xff]
      %v267 = vld [vmem:[%s226 + $0xe0] sm:$0xff]
      %v268 = vld [vmem:[%s226 + $0xe8] sm:$0xff]
      %v269 = vld [vmem:[%s226 + $0xf0] sm:$0xff]
      %v270 = vld [vmem:[%s226 + $0xf8] sm:$0xff]
      %v272 = vlaneseq
      %v273 = vshrl.u32 %v272, 7
      %v274 = vsub.s32 0, %v273
      %v275 = vrot.slane %v237, %v274
      %v277 = vmul.f32 %v239, %v275
      %v278 = vmul.f32 %v240, %v275
      %v279 = vmul.f32 %v241, %v275
      %v280 = vmul.f32 %v242, %v275
      %v281 = vmul.f32 %v243, %v275
      %v282 = vmul.f32 %v244, %v275
      %v283 = vmul.f32 %v245, %v275
      %v284 = vmul.f32 %v246, %v275
      %v285 = vmul.f32 %v247, %v275
      %v286 = vmul.f32 %v248, %v275
      %v287 = vmul.f32 %v249, %v275
      %v288 = vmul.f32 %v250, %v275
      %v289 = vmul.f32 %v251, %v275
      %v290 = vmul.f32 %v252, %v275
      %v291 = vmul.f32 %v253, %v275
      %v292 = vmul.f32 %v254, %v275
      %v293 = vmul.f32 %v255, %v275
      %v294 = vmul.f32 %v256, %v275
      %v295 = vmul.f32 %v257, %v275
      %v296 = vmul.f32 %v258, %v275
      %v297 = vmul.f32 %v259, %v275
      %v298 = vmul.f32 %v260, %v275
      %v299 = vmul.f32 %v261, %v275
      %v300 = vmul.f32 %v262, %v275
      %v301 = vmul.f32 %v263, %v275
      %v302 = vmul.f32 %v264, %v275
      %v303 = vmul.f32 %v265, %v275
      %v304 = vmul.f32 %v266, %v275
      %v305 = vmul.f32 %v267, %v275
      %v306 = vmul.f32 %v268, %v275
      %v307 = vmul.f32 %v269, %v275
      %v308 = vmul.f32 %v270, %v275
      %v310 = vlaneseq
      %v311 = vshrl.u32 %v310, 7
      %v312 = vsub.s32 0, %v311
      %v313 = vrot.slane %v238, %v312
      %v315 = vadd.f32 %v277, %v313
      %v316 = vadd.f32 %v278, %v313
      %v317 = vadd.f32 %v279, %v313
      %v318 = vadd.f32 %v280, %v313
      %v319 = vadd.f32 %v281, %v313
      %v320 = vadd.f32 %v282, %v313
      %v321 = vadd.f32 %v283, %v313
      %v322 = vadd.f32 %v284, %v313
      %v323 = vadd.f32 %v285, %v313
      %v324 = vadd.f32 %v286, %v313
      %v325 = vadd.f32 %v287, %v313
      %v326 = vadd.f32 %v288, %v313
      %v327 = vadd.f32 %v289, %v313
      %v328 = vadd.f32 %v290, %v313
      %v329 = vadd.f32 %v291, %v313
      %v330 = vadd.f32 %v292, %v313
      %v331 = vadd.f32 %v293, %v313
      %v332 = vadd.f32 %v294, %v313
      %v333 = vadd.f32 %v295, %v313
      %v334 = vadd.f32 %v296, %v313
      %v335 = vadd.f32 %v297, %v313
      %v336 = vadd.f32 %v298, %v313
      %v337 = vadd.f32 %v299, %v313
      %v338 = vadd.f32 %v300, %v313
      %v339 = vadd.f32 %v301, %v313
      %v340 = vadd.f32 %v302, %v313
      %v341 = vadd.f32 %v303, %v313
      %v342 = vadd.f32 %v304, %v313
      %v343 = vadd.f32 %v305, %v313
      %v344 = vadd.f32 %v306, %v313
      %v345 = vadd.f32 %v307, %v313
      %v346 = vadd.f32 %v308, %v313
      %v347 = vmax.f32 %v315, 0.0
      %v348 = vmax.f32 %v316, 0.0
      %v349 = vmax.f32 %v317, 0.0
      %v350 = vmax.f32 %v318, 0.0
      %v351 = vmax.f32 %v319, 0.0
      %v352 = vmax.f32 %v320, 0.0
      %v353 = vmax.f32 %v321, 0.0
      %v354 = vmax.f32 %v322, 0.0
      %v355 = vmax.f32 %v323, 0.0
      %v356 = vmax.f32 %v324, 0.0
      %v357 = vmax.f32 %v325, 0.0
      %v358 = vmax.f32 %v326, 0.0
      %v359 = vmax.f32 %v327, 0.0
      %v360 = vmax.f32 %v328, 0.0
      %v361 = vmax.f32 %v329, 0.0
      %v362 = vmax.f32 %v330, 0.0
      %v363 = vmax.f32 %v331, 0.0
      %v364 = vmax.f32 %v332, 0.0
      %v365 = vmax.f32 %v333, 0.0
      %v366 = vmax.f32 %v334, 0.0
      %v367 = vmax.f32 %v335, 0.0
      %v368 = vmax.f32 %v336, 0.0
      %v369 = vmax.f32 %v337, 0.0
      %v370 = vmax.f32 %v338, 0.0
      %v371 = vmax.f32 %v339, 0.0
      %v372 = vmax.f32 %v340, 0.0
      %v373 = vmax.f32 %v341, 0.0
      %v374 = vmax.f32 %v342, 0.0
      %v375 = vmax.f32 %v343, 0.0
      %v376 = vmax.f32 %v344, 0.0
      %v377 = vmax.f32 %v345, 0.0
      %v378 = vmax.f32 %v346, 0.0
      %vm411 = vcmask 1040384
      %v412 = vrot.slane %v347, 7
      %v413 = vrot.slane %v348, 7
      %v414 = vsel %vm411, %v412, %v413
      %v415 = vrot.slane %v349, 7
      %v416 = vrot.slane %v350, 7
      %v417 = vsel %vm411, %v415, %v416
      %v418 = vrot.slane %v351, 7
      %v419 = vrot.slane %v352, 7
      %v420 = vsel %vm411, %v418, %v419
      %v421 = vrot.slane %v353, 7
      %v422 = vrot.slane %v354, 7
      %v423 = vsel %vm411, %v421, %v422
      %v424 = vrot.slane %v355, 7
      %v425 = vrot.slane %v356, 7
      %v426 = vsel %vm411, %v424, %v425
      %v427 = vrot.slane %v357, 7
      %v428 = vrot.slane %v358, 7
      %v429 = vsel %vm411, %v427, %v428
      %v430 = vrot.slane %v359, 7
      %v431 = vrot.slane %v360, 7
      %v432 = vsel %vm411, %v430, %v431
      %v433 = vrot.slane %v361, 7
      %v434 = vrot.slane %v362, 7
      %v435 = vsel %vm411, %v433, %v434
      %v436 = vrot.slane %v363, 7
      %v437 = vrot.slane %v364, 7
      %v438 = vsel %vm411, %v436, %v437
      %v439 = vrot.slane %v365, 7
      %v440 = vrot.slane %v366, 7
      %v441 = vsel %vm411, %v439, %v440
      %v442 = vrot.slane %v367, 7
      %v443 = vrot.slane %v368, 7
      %v444 = vsel %vm411, %v442, %v443
      %v445 = vrot.slane %v369, 7
      %v446 = vrot.slane %v370, 7
      %v447 = vsel %vm411, %v445, %v446
      %v448 = vrot.slane %v371, 7
      %v449 = vrot.slane %v372, 7
      %v450 = vsel %vm411, %v448, %v449
      %v451 = vrot.slane %v373, 7
      %v452 = vrot.slane %v374, 7
      %v453 = vsel %vm411, %v451, %v452
      %v454 = vrot.slane %v375, 7
      %v455 = vrot.slane %v376, 7
      %v456 = vsel %vm411, %v454, %v455
      %v457 = vrot.slane %v377, 7
      %v458 = vrot.slane %v378, 7
      %v459 = vsel %vm411, %v457, %v458
      %v508 = vsel %vm411, 0.0, %v412
      %v509 = vsel %vm411, 0.0, %v415
      %v510 = vsel %vm411, 0.0, %v418
      %v511 = vsel %vm411, 0.0, %v421
      %v512 = vsel %vm411, 0.0, %v424
      %v513 = vsel %vm411, 0.0, %v427
      %v514 = vsel %vm411, 0.0, %v430
      %v515 = vsel %vm411, 0.0, %v433
      %v516 = vsel %vm411, 0.0, %v436
      %v517 = vsel %vm411, 0.0, %v439
      %v518 = vsel %vm411, 0.0, %v442
      %v519 = vsel %vm411, 0.0, %v445
      %v520 = vsel %vm411, 0.0, %v448
      %v521 = vsel %vm411, 0.0, %v451
      %v522 = vsel %vm411, 0.0, %v454
      %v523 = vsel %vm411, 0.0, %v457
      %v524 = vsel %vm411, %v413, 0.0
      %v525 = vsel %vm411, %v416, 0.0
      %v526 = vsel %vm411, %v419, 0.0
      %v527 = vsel %vm411, %v422, 0.0
      %v528 = vsel %vm411, %v425, 0.0
      %v529 = vsel %vm411, %v428, 0.0
      %v530 = vsel %vm411, %v431, 0.0
      %v531 = vsel %vm411, %v434, 0.0
      %v532 = vsel %vm411, %v437, 0.0
      %v533 = vsel %vm411, %v440, 0.0
      %v534 = vsel %vm411, %v443, 0.0
      %v535 = vsel %vm411, %v446, 0.0
      %v536 = vsel %vm411, %v449, 0.0
      %v537 = vsel %vm411, %v452, 0.0
      %v538 = vsel %vm411, %v455, 0.0
      %v539 = vsel %vm411, %v458, 0.0
      %vm540 = vcmask 31744
      %541 = vst.msk [vmem:[#allocation2] sm:$0xff] %vm540, 0.0
      %542 = vst.msk [vmem:[#allocation2 + $0x8] sm:$0xff] %vm540, 0.0
      %vm543 = vcmask 25600
      %544 = vst.msk [vmem:[#allocation2 + $0x10] sm:$0x3] %vm543, 0.0
      %545 = vst.msk [vmem:[#allocation2 + $0x18] sm:$0xff] %vm540, %v508
      %546 = vst.msk [vmem:[#allocation2 + $0x20] sm:$0xff] %vm540, %v414
      %547 = vst.msk [vmem:[#allocation2 + $0x28] sm:$0x3] %vm543, %v524
      %548 = vst.msk [vmem:[#allocation2 + $0x30] sm:$0xff] %vm540, %v509
      %549 = vst.msk [vmem:[#allocation2 + $0x38] sm:$0xff] %vm540, %v417
      %550 = vst.msk [vmem:[#allocation2 + $0x40] sm:$0x3] %vm543, %v525
      %551 = vst.msk [vmem:[#allocation2 + $0x48] sm:$0xff] %vm540, %v510
      %552 = vst.msk [vmem:[#allocation2 + $0x50] sm:$0xff] %vm540, %v420
      %553 = vst.msk [vmem:[#allocation2 + $0x58] sm:$0x3] %vm543, %v526
      %554 = vst.msk [vmem:[#allocation2 + $0x60] sm:$0xff] %vm540, %v511
      %555 = vst.msk [vmem:[#allocation2 + $0x68] sm:$0xff] %vm540, %v423
      %556 = vst.msk [vmem:[#allocation2 + $0x70] sm:$0x3] %vm543, %v527
      %557 = vst.msk [vmem:[#allocation2 + $0x78] sm:$0xff] %vm540, %v512
      %558 = vst.msk [vmem:[#allocation2 + $0x80] sm:$0xff] %vm540, %v426
      %559 = vst.msk [vmem:[#allocation2 + $0x88] sm:$0x3] %vm543, %v528
      %560 = vst.msk [vmem:[#allocation2 + $0x90] sm:$0xff] %vm540, %v513
      %561 = vst.msk [vmem:[#allocation2 + $0x98] sm:$0xff] %vm540, %v429
      %562 = vst.msk [vmem:[#allocation2 + $0xa0] sm:$0x3] %vm543, %v529
      %563 = vst.msk [vmem:[#allocation2 + $0xa8] sm:$0xff] %vm540, %v514
      %564 = vst.msk [vmem:[#allocation2 + $0xb0] sm:$0xff] %vm540, %v432
      %565 = vst.msk [vmem:[#allocation2 + $0xb8] sm:$0x3] %vm543, %v530
      %566 = vst.msk [vmem:[#allocation2 + $0xc0] sm:$0xff] %vm540, %v515
      %567 = vst.msk [vmem:[#allocation2 + $0xc8] sm:$0xff] %vm540, %v435
      %568 = vst.msk [vmem:[#allocation2 + $0xd0] sm:$0x3] %vm543, %v531
      %569 = vst.msk [vmem:[#allocation2 + $0xd8] sm:$0xff] %vm540, %v516
      %570 = vst.msk [vmem:[#allocation2 + $0xe0] sm:$0xff] %vm540, %v438
      %571 = vst.msk [vmem:[#allocation2 + $0xe8] sm:$0x3] %vm543, %v532
      %572 = vst.msk [vmem:[#allocation2 + $0xf0] sm:$0xff] %vm540, %v517
      %573 = vst.msk [vmem:[#allocation2 + $0xf8] sm:$0xff] %vm540, %v441
      %574 = vst.msk [vmem:[#allocation2 + $0x100] sm:$0x3] %vm543, %v533
      %575 = vst.msk [vmem:[#allocation2 + $0x108] sm:$0xff] %vm540, %v518
      %576 = vst.msk [vmem:[#allocation2 + $0x110] sm:$0xff] %vm540, %v444
      %577 = vst.msk [vmem:[#allocation2 + $0x118] sm:$0x3] %vm543, %v534
      %578 = vst.msk [vmem:[#allocation2 + $0x120] sm:$0xff] %vm540, %v519
      %579 = vst.msk [vmem:[#allocation2 + $0x128] sm:$0xff] %vm540, %v447
      %580 = vst.msk [vmem:[#allocation2 + $0x130] sm:$0x3] %vm543, %v535
      %581 = vst.msk [vmem:[#allocation2 + $0x138] sm:$0xff] %vm540, %v520
      %582 = vst.msk [vmem:[#allocation2 + $0x140] sm:$0xff] %vm540, %v450
      %583 = vst.msk [vmem:[#allocation2 + $0x148] sm:$0x3] %vm543, %v536
      %584 = vst.msk [vmem:[#allocation2 + $0x150] sm:$0xff] %vm540, %v521
      %585 = vst.msk [vmem:[#allocation2 + $0x158] sm:$0xff] %vm540, %v453
      %586 = vst.msk [vmem:[#allocation2 + $0x160] sm:$0x3] %vm543, %v537
      %587 = vst.msk [vmem:[#allocation2 + $0x168] sm:$0xff] %vm540, %v522
      %588 = vst.msk [vmem:[#allocation2 + $0x170] sm:$0xff] %vm540, %v456
      %589 = vst.msk [vmem:[#allocation2 + $0x178] sm:$0x3] %vm543, %v538
      %590 = vst.msk [vmem:[#allocation2 + $0x180] sm:$0xff] %vm540, %v523
      %591 = vst.msk [vmem:[#allocation2 + $0x188] sm:$0xff] %vm540, %v459
      %592 = vst.msk [vmem:[#allocation2 + $0x190] sm:$0x3] %vm543, %v539
      %593 = vst.msk [vmem:[#allocation2 + $0x198] sm:$0xff] %vm540, 0.0
      %594 = vst.msk [vmem:[#allocation2 + $0x1a0] sm:$0xff] %vm540, 0.0
      %595 = vst.msk [vmem:[#allocation2 + $0x1a8] sm:$0x3] %vm543, 0.0
      %v596 = vld [vmem:[#allocation2] sm:$0xff]
      %v597 = vld [vmem:[#allocation2 + $0x8] sm:$0xff]
      %v598 = vld [vmem:[#allocation2 + $0x18] sm:$0xff]
      %v599 = vld [vmem:[#allocation2 + $0x20] sm:$0xff]
      %v600 = vld [vmem:[#allocation2 + $0x30] sm:$0xff]
      %v601 = vld [vmem:[#allocation2 + $0x38] sm:$0xff]
      %v602 = vld [vmem:[#allocation2 + $0x48] sm:$0xff]
      %v603 = vld [vmem:[#allocation2 + $0x50] sm:$0xff]
      %v604 = vld [vmem:[#allocation2 + $0x60] sm:$0xff]
      %v605 = vld [vmem:[#allocation2 + $0x68] sm:$0xff]
      %v606 = vld [vmem:[#allocation2 + $0x78] sm:$0xff]
      %v607 = vld [vmem:[#allocation2 + $0x80] sm:$0xff]
      %v608 = vld [vmem:[#allocation2 + $0x90] sm:$0xff]
      %v609 = vld [vmem:[#allocation2 + $0x98] sm:$0xff]
      %v610 = vld [vmem:[#allocation2 + $0xa8] sm:$0xff]
      %v611 = vld [vmem:[#allocation2 + $0xb0] sm:$0xff]
      %v612 = vld [vmem:[#allocation2 + $0xc0] sm:$0xff]
      %v613 = vld [vmem:[#allocation2 + $0xc8] sm:$0xff]
      %v614 = vld [vmem:[#allocation2 + $0xd8] sm:$0xff]
      %v615 = vld [vmem:[#allocation2 + $0xe0] sm:$0xff]
      %v616 = vld [vmem:[#allocation2 + $0xf0] sm:$0xff]
      %v617 = vld [vmem:[#allocation2 + $0xf8] sm:$0xff]
      %v618 = vld [vmem:[#allocation2 + $0x108] sm:$0xff]
      %v619 = vld [vmem:[#allocation2 + $0x110] sm:$0xff]
      %v620 = vld [vmem:[#allocation2 + $0x120] sm:$0xff]
      %v621 = vld [vmem:[#allocation2 + $0x128] sm:$0xff]
      %v622 = vld [vmem:[#allocation2 + $0x138] sm:$0xff]
      %v623 = vld [vmem:[#allocation2 + $0x140] sm:$0xff]
      %v624 = vld [vmem:[#allocation2 + $0x150] sm:$0xff]
      %v625 = vld [vmem:[#allocation2 + $0x158] sm:$0xff]
      %v626 = vld [vmem:[#allocation2 + $0x168] sm:$0xff]
      %v627 = vld [vmem:[#allocation2 + $0x170] sm:$0xff]
      %v628 = vpack.c.bf16 %v597, %v596
      %v629 = vpack.c.bf16 %v599, %v598
      %v630 = vpack.c.bf16 %v601, %v600
      %v631 = vpack.c.bf16 %v603, %v602
      %v632 = vpack.c.bf16 %v605, %v604
      %v633 = vpack.c.bf16 %v607, %v606
      %v634 = vpack.c.bf16 %v609, %v608
      %v635 = vpack.c.bf16 %v611, %v610
      %v636 = vpack.c.bf16 %v613, %v612
      %v637 = vpack.c.bf16 %v615, %v614
      %v638 = vpack.c.bf16 %v617, %v616
      %v639 = vpack.c.bf16 %v619, %v618
      %v640 = vpack.c.bf16 %v621, %v620
      %v641 = vpack.c.bf16 %v623, %v622
      %v642 = vpack.c.bf16 %v625, %v624
      %v643 = vpack.c.bf16 %v627, %v626
      %v644 = vld [vmem:[%s3] sm:$0x3]
      %v645 = vld [vmem:[#allocation2 + $0x1] sm:$0xff]
      %v646 = vld [vmem:[#allocation2 + $0x9] sm:$0xff]
      %v647 = vld [vmem:[#allocation2 + $0x19] sm:$0xff]
      %v648 = vld [vmem:[#allocation2 + $0x21] sm:$0xff]
      %v649 = vld [vmem:[#allocation2 + $0x31] sm:$0xff]
      %v650 = vld [vmem:[#allocation2 + $0x39] sm:$0xff]
      %v651 = vld [vmem:[#allocation2 + $0x49] sm:$0xff]
      %v652 = vld [vmem:[#allocation2 + $0x51] sm:$0xff]
      %v653 = vld [vmem:[#allocation2 + $0x61] sm:$0xff]
      %v654 = vld [vmem:[#allocation2 + $0x69] sm:$0xff]
      %v655 = vld [vmem:[#allocation2 + $0x79] sm:$0xff]
      %v656 = vld [vmem:[#allocation2 + $0x81] sm:$0xff]
      %v657 = vld [vmem:[#allocation2 + $0x91] sm:$0xff]
      %v658 = vld [vmem:[#allocation2 + $0x99] sm:$0xff]
      %v659 = vld [vmem:[#allocation2 + $0xa9] sm:$0xff]
      %v660 = vld [vmem:[#allocation2 + $0xb1] sm:$0xff]
      %v661 = vld [vmem:[#allocation2 + $0xc1] sm:$0xff]
      %v662 = vld [vmem:[#allocation2 + $0xc9] sm:$0xff]
      %v663 = vld [vmem:[#allocation2 + $0xd9] sm:$0xff]
      %v664 = vld [vmem:[#allocation2 + $0xe1] sm:$0xff]
      %v665 = vld [vmem:[#allocation2 + $0xf1] sm:$0xff]
      %v666 = vld [vmem:[#allocation2 + $0xf9] sm:$0xff]
      %v667 = vld [vmem:[#allocation2 + $0x109] sm:$0xff]
      %v668 = vld [vmem:[#allocation2 + $0x111] sm:$0xff]
      %v669 = vld [vmem:[#allocation2 + $0x121] sm:$0xff]
      %v670 = vld [vmem:[#allocation2 + $0x129] sm:$0xff]
      %v671 = vld [vmem:[#allocation2 + $0x139] sm:$0xff]
      %v672 = vld [vmem:[#allocation2 + $0x141] sm:$0xff]
      %v673 = vld [vmem:[#allocation2 + $0x151] sm:$0xff]
      %v674 = vld [vmem:[#allocation2 + $0x159] sm:$0xff]
      %v675 = vld [vmem:[#allocation2 + $0x169] sm:$0xff]
      %v676 = vld [vmem:[#allocation2 + $0x171] sm:$0xff]
      %v677 = vpack.c.bf16 %v646, %v645
      %v678 = vpack.c.bf16 %v648, %v647
      %v679 = vpack.c.bf16 %v650, %v649
      %v680 = vpack.c.bf16 %v652, %v651
      %v681 = vpack.c.bf16 %v654, %v653
      %v682 = vpack.c.bf16 %v656, %v655
      %v683 = vpack.c.bf16 %v658, %v657
      %v684 = vpack.c.bf16 %v660, %v659
      %v685 = vpack.c.bf16 %v662, %v661
      %v686 = vpack.c.bf16 %v664, %v663
      %v687 = vpack.c.bf16 %v666, %v665
      %v688 = vpack.c.bf16 %v668, %v667
      %v689 = vpack.c.bf16 %v670, %v669
      %v690 = vpack.c.bf16 %v672, %v671
      %v691 = vpack.c.bf16 %v674, %v673
      %v692 = vpack.c.bf16 %v676, %v675
      %s693 = scalar_lea.vmem %s3, 2
      %v694 = vld [vmem:[%s693] sm:$0x3]
      %v696 = vsel %vm540, %v677, 0
      %v699 = vsel %vm540, %v678, 0
      %v702 = vsel %vm540, %v679, 0
      %v705 = vsel %vm540, %v680, 0
      %v708 = vsel %vm540, %v681, 0
      %v711 = vsel %vm540, %v682, 0
      %v714 = vsel %vm540, %v683, 0
      %v717 = vsel %vm540, %v684, 0
      %v720 = vsel %vm540, %v685, 0
      %v723 = vsel %vm540, %v686, 0
      %v726 = vsel %vm540, %v687, 0
      %v729 = vsel %vm540, %v688, 0
      %v732 = vsel %vm540, %v689, 0
      %v735 = vsel %vm540, %v690, 0
      %v738 = vsel %vm540, %v691, 0
      %v741 = vsel %vm540, %v692, 0
      %vm743 = vcmask 1041408
      %v745 = vsel %vm743, %v694, 0
      %747 = vmatprep.subr.bf16.mxu0 0
      %748 = vmatpush1.bf16.msra.mxu0 0
      %749 = vmatprep.subr.bf16.mxu0 0
      %750 = vmatpush1.bf16.msra.mxu0 0
      %751 = vmatprep.subr.bf16.mxu0 0
      %752 = vmatpush1.bf16.msra.mxu0 0
      %753 = vmatprep.subr.bf16.mxu0 0
      %754 = vmatpush1.bf16.msra.mxu0 0
      %755 = vmatprep.subr.bf16.mxu0 0
      %756 = vmatpush1.bf16.msra.mxu0 0
      %757 = vmatprep.subr.bf16.mxu0 0
      %758 = vmatpush1.bf16.msra.mxu0 0
      %759 = vmatprep.subr.bf16.mxu0 0
      %760 = vmatpush1.bf16.msra.mxu0 0
      %761 = vmatprep.subr.bf16.mxu0 0
      %762 = vmatpush1.bf16.msra.mxu0 %v745
      %763 = vmatprep.subr.bf16.mxu0 0
      %764 = vmatpush2.bf16.msra.mxu0 0
      %765 = vmatprep.subr.bf16.mxu0 0
      %766 = vmatpush2.bf16.msra.mxu0 0
      %767 = vmatprep.subr.bf16.mxu0 0
      %768 = vmatpush2.bf16.msra.mxu0 0
      %769 = vmatprep.subr.bf16.mxu0 0
      %770 = vmatpush2.bf16.msra.mxu0 0
      %771 = vmatprep.subr.bf16.mxu0 0
      %772 = vmatpush2.bf16.msra.mxu0 0
      %773 = vmatprep.subr.bf16.mxu0 0
      %774 = vmatpush2.bf16.msra.mxu0 0
      %775 = vmatprep.subr.bf16.mxu0 0
      %776 = vmatpush2.bf16.msra.mxu0 0
      %777 = vmatprep.subr.bf16.mxu0 0
      %778 = vmatpush2.bf16.msra.mxu0 0
      %779 = vmatprep.mubr.bf16.mxu0 0
      %780 = vmatmul.mubr.bf16.gmra.mxu0 %v696
      %v781 = vpop.f32.mrf.mxu0
      %v782 = vadd.f32 0.0, %v781
      %v783 = vpop.f32.mrf.mxu0
      %v784 = vpop.f32.mrf.mxu0
      %v785 = vadd.f32 0.0, %v784
      %v786 = vpop.f32.mrf.mxu0
      %787 = vmatprep.mubr.bf16.mxu0 0
      %788 = vmatmul.mubr.bf16.gmra.mxu0 %v699
      %v789 = vpop.f32.mrf.mxu0
      %v790 = vadd.f32 0.0, %v789
      %v791 = vpop.f32.mrf.mxu0
      %v792 = vpop.f32.mrf.mxu0
      %v793 = vadd.f32 0.0, %v792
      %v794 = vpop.f32.mrf.mxu0
      %795 = vmatprep.mubr.bf16.mxu0 0
      %796 = vmatmul.mubr.bf16.gmra.mxu0 %v702
      %v797 = vpop.f32.mrf.mxu0
      %v798 = vadd.f32 0.0, %v797
      %v799 = vpop.f32.mrf.mxu0
      %v800 = vpop.f32.mrf.mxu0
      %v801 = vadd.f32 0.0, %v800
      %v802 = vpop.f32.mrf.mxu0
      %803 = vmatprep.mubr.bf16.mxu0 0
      %804 = vmatmul.mubr.bf16.gmra.mxu0 %v705
      %v805 = vpop.f32.mrf.mxu0
      %v806 = vadd.f32 0.0, %v805
      %v807 = vpop.f32.mrf.mxu0
      %v808 = vpop.f32.mrf.mxu0
      %v809 = vadd.f32 0.0, %v808
      %v810 = vpop.f32.mrf.mxu0
      %811 = vmatprep.mubr.bf16.mxu0 0
      %812 = vmatmul.mubr.bf16.gmra.mxu0 %v708
      %v813 = vpop.f32.mrf.mxu0
      %v814 = vadd.f32 0.0, %v813
      %v815 = vpop.f32.mrf.mxu0
      %v816 = vpop.f32.mrf.mxu0
      %v817 = vadd.f32 0.0, %v816
      %v818 = vpop.f32.mrf.mxu0
      %819 = vmatprep.mubr.bf16.mxu0 0
      %820 = vmatmul.mubr.bf16.gmra.mxu0 %v711
      %v821 = vpop.f32.mrf.mxu0
      %v822 = vadd.f32 0.0, %v821
      %v823 = vpop.f32.mrf.mxu0
      %v824 = vpop.f32.mrf.mxu0
      %v825 = vadd.f32 0.0, %v824
      %v826 = vpop.f32.mrf.mxu0
      %827 = vmatprep.mubr.bf16.mxu0 0
      %828 = vmatmul.mubr.bf16.gmra.mxu0 %v714
      %v829 = vpop.f32.mrf.mxu0
      %v830 = vadd.f32 0.0, %v829
      %v831 = vpop.f32.mrf.mxu0
      %v832 = vpop.f32.mrf.mxu0
      %v833 = vadd.f32 0.0, %v832
      %v834 = vpop.f32.mrf.mxu0
      %835 = vmatprep.mubr.bf16.mxu0 0
      %836 = vmatmul.mubr.bf16.gmra.mxu0 %v717
      %v837 = vpop.f32.mrf.mxu0
      %v838 = vadd.f32 0.0, %v837
      %v839 = vpop.f32.mrf.mxu0
      %v840 = vpop.f32.mrf.mxu0
      %v841 = vadd.f32 0.0, %v840
      %v842 = vpop.f32.mrf.mxu0
      %843 = vmatprep.mubr.bf16.mxu0 0
      %844 = vmatmul.mubr.bf16.gmra.mxu0 %v720
      %v845 = vpop.f32.mrf.mxu0
      %v846 = vadd.f32 0.0, %v845
      %v847 = vpop.f32.mrf.mxu0
      %v848 = vpop.f32.mrf.mxu0
      %v849 = vadd.f32 0.0, %v848
      %v850 = vpop.f32.mrf.mxu0
      %851 = vmatprep.mubr.bf16.mxu0 0
      %852 = vmatmul.mubr.bf16.gmra.mxu0 %v723
      %v853 = vpop.f32.mrf.mxu0
      %v854 = vadd.f32 0.0, %v853
      %v855 = vpop.f32.mrf.mxu0
      %v856 = vpop.f32.mrf.mxu0
      %v857 = vadd.f32 0.0, %v856
      %v858 = vpop.f32.mrf.mxu0
      %859 = vmatprep.mubr.bf16.mxu0 0
      %860 = vmatmul.mubr.bf16.gmra.mxu0 %v726
      %v861 = vpop.f32.mrf.mxu0
      %v862 = vadd.f32 0.0, %v861
      %v863 = vpop.f32.mrf.mxu0
      %v864 = vpop.f32.mrf.mxu0
      %v865 = vadd.f32 0.0, %v864
      %v866 = vpop.f32.mrf.mxu0
      %867 = vmatprep.mubr.bf16.mxu0 0
      %868 = vmatmul.mubr.bf16.gmra.mxu0 %v729
      %v869 = vpop.f32.mrf.mxu0
      %v870 = vadd.f32 0.0, %v869
      %v871 = vpop.f32.mrf.mxu0
      %v872 = vpop.f32.mrf.mxu0
      %v873 = vadd.f32 0.0, %v872
      %v874 = vpop.f32.mrf.mxu0
      %875 = vmatprep.mubr.bf16.mxu0 0
      %876 = vmatmul.mubr.bf16.gmra.mxu0 %v732
      %v877 = vpop.f32.mrf.mxu0
      %v878 = vadd.f32 0.0, %v877
      %v879 = vpop.f32.mrf.mxu0
      %v880 = vpop.f32.mrf.mxu0
      %v881 = vadd.f32 0.0, %v880
      %v882 = vpop.f32.mrf.mxu0
      %883 = vmatprep.mubr.bf16.mxu0 0
      %884 = vmatmul.mubr.bf16.gmra.mxu0 %v735
      %v885 = vpop.f32.mrf.mxu0
      %v886 = vadd.f32 0.0, %v885
      %v887 = vpop.f32.mrf.mxu0
      %v888 = vpop.f32.mrf.mxu0
      %v889 = vadd.f32 0.0, %v888
      %v890 = vpop.f32.mrf.mxu0
      %891 = vmatprep.mubr.bf16.mxu0 0
      %892 = vmatmul.mubr.bf16.gmra.mxu0 %v738
      %v893 = vpop.f32.mrf.mxu0
      %v894 = vadd.f32 0.0, %v893
      %v895 = vpop.f32.mrf.mxu0
      %v896 = vpop.f32.mrf.mxu0
      %v897 = vadd.f32 0.0, %v896
      %v898 = vpop.f32.mrf.mxu0
      %899 = vmatprep.mubr.bf16.mxu0 0
      %900 = vmatmul.mubr.bf16.gmra.mxu0 %v741
      %v901 = vpop.f32.mrf.mxu0
      %v902 = vadd.f32 0.0, %v901
      %v903 = vpop.f32.mrf.mxu0
      %v904 = vpop.f32.mrf.mxu0
      %v905 = vadd.f32 0.0, %v904
      %v906 = vpop.f32.mrf.mxu0
      %907 = vdwg.mxu0
      %v909 = vsel %vm540, %v628, 0
      %v912 = vsel %vm540, %v629, 0
      %v915 = vsel %vm540, %v630, 0
      %v918 = vsel %vm540, %v631, 0
      %v921 = vsel %vm540, %v632, 0
      %v924 = vsel %vm540, %v633, 0
      %v927 = vsel %vm540, %v634, 0
      %v930 = vsel %vm540, %v635, 0
      %v933 = vsel %vm540, %v636, 0
      %v936 = vsel %vm540, %v637, 0
      %v939 = vsel %vm540, %v638, 0
      %v942 = vsel %vm540, %v639, 0
      %v945 = vsel %vm540, %v640, 0
      %v948 = vsel %vm540, %v641, 0
      %v951 = vsel %vm540, %v642, 0
      %v954 = vsel %vm540, %v643, 0
      %v957 = vsel %vm743, %v644, 0
      %959 = vmatprep.subr.bf16.mxu0 0
      %960 = vmatpush1.bf16.msra.mxu0 0
      %961 = vmatprep.subr.bf16.mxu0 0
      %962 = vmatpush1.bf16.msra.mxu0 0
      %963 = vmatprep.subr.bf16.mxu0 0
      %964 = vmatpush1.bf16.msra.mxu0 0
      %965 = vmatprep.subr.bf16.mxu0 0
      %966 = vmatpush1.bf16.msra.mxu0 0
      %967 = vmatprep.subr.bf16.mxu0 0
      %968 = vmatpush1.bf16.msra.mxu0 0
      %969 = vmatprep.subr.bf16.mxu0 0
      %970 = vmatpush1.bf16.msra.mxu0 0
      %971 = vmatprep.subr.bf16.mxu0 0
      %972 = vmatpush1.bf16.msra.mxu0 0
      %973 = vmatprep.subr.bf16.mxu0 0
      %974 = vmatpush1.bf16.msra.mxu0 %v957
      %975 = vmatprep.subr.bf16.mxu0 0
      %976 = vmatpush2.bf16.msra.mxu0 0
      %977 = vmatprep.subr.bf16.mxu0 0
      %978 = vmatpush2.bf16.msra.mxu0 0
      %979 = vmatprep.subr.bf16.mxu0 0
      %980 = vmatpush2.bf16.msra.mxu0 0
      %981 = vmatprep.subr.bf16.mxu0 0
      %982 = vmatpush2.bf16.msra.mxu0 0
      %983 = vmatprep.subr.bf16.mxu0 0
      %984 = vmatpush2.bf16.msra.mxu0 0
      %985 = vmatprep.subr.bf16.mxu0 0
      %986 = vmatpush2.bf16.msra.mxu0 0
      %987 = vmatprep.subr.bf16.mxu0 0
      %988 = vmatpush2.bf16.msra.mxu0 0
      %989 = vmatprep.subr.bf16.mxu0 0
      %990 = vmatpush2.bf16.msra.mxu0 0
      %991 = vmatprep.mubr.bf16.mxu0 0
      %992 = vmatmul.mubr.bf16.gmra.mxu0 %v909
      %v993 = vpop.f32.mrf.mxu0
      %v994 = vadd.f32 %v782, %v993
      %v995 = vpop.f32.mrf.mxu0
      %v996 = vpop.f32.mrf.mxu0
      %v997 = vadd.f32 %v785, %v996
      %v998 = vpop.f32.mrf.mxu0
      %999 = vmatprep.mubr.bf16.mxu0 0
      %1000 = vmatmul.mubr.bf16.gmra.mxu0 %v912
      %v1001 = vpop.f32.mrf.mxu0
      %v1002 = vadd.f32 %v790, %v1001
      %v1003 = vpop.f32.mrf.mxu0
      %v1004 = vpop.f32.mrf.mxu0
      %v1005 = vadd.f32 %v793, %v1004
      %v1006 = vpop.f32.mrf.mxu0
      %1007 = vmatprep.mubr.bf16.mxu0 0
      %1008 = vmatmul.mubr.bf16.gmra.mxu0 %v915
      %v1009 = vpop.f32.mrf.mxu0
      %v1010 = vadd.f32 %v798, %v1009
      %v1011 = vpop.f32.mrf.mxu0
      %v1012 = vpop.f32.mrf.mxu0
      %v1013 = vadd.f32 %v801, %v1012
      %v1014 = vpop.f32.mrf.mxu0
      %1015 = vmatprep.mubr.bf16.mxu0 0
      %1016 = vmatmul.mubr.bf16.gmra.mxu0 %v918
      %v1017 = vpop.f32.mrf.mxu0
      %v1018 = vadd.f32 %v806, %v1017
      %v1019 = vpop.f32.mrf.mxu0
      %v1020 = vpop.f32.mrf.mxu0
      %v1021 = vadd.f32 %v809, %v1020
      %v1022 = vpop.f32.mrf.mxu0
      %1023 = vmatprep.mubr.bf16.mxu0 0
      %1024 = vmatmul.mubr.bf16.gmra.mxu0 %v921
      %v1025 = vpop.f32.mrf.mxu0
      %v1026 = vadd.f32 %v814, %v1025
      %v1027 = vpop.f32.mrf.mxu0
      %v1028 = vpop.f32.mrf.mxu0
      %v1029 = vadd.f32 %v817, %v1028
      %v1030 = vpop.f32.mrf.mxu0
      %1031 = vmatprep.mubr.bf16.mxu0 0
      %1032 = vmatmul.mubr.bf16.gmra.mxu0 %v924
      %v1033 = vpop.f32.mrf.mxu0
      %v1034 = vadd.f32 %v822, %v1033
      %v1035 = vpop.f32.mrf.mxu0
      %v1036 = vpop.f32.mrf.mxu0
      %v1037 = vadd.f32 %v825, %v1036
      %v1038 = vpop.f32.mrf.mxu0
      %1039 = vmatprep.mubr.bf16.mxu0 0
      %1040 = vmatmul.mubr.bf16.gmra.mxu0 %v927
      %v1041 = vpop.f32.mrf.mxu0
      %v1042 = vadd.f32 %v830, %v1041
      %v1043 = vpop.f32.mrf.mxu0
      %v1044 = vpop.f32.mrf.mxu0
      %v1045 = vadd.f32 %v833, %v1044
      %v1046 = vpop.f32.mrf.mxu0
      %1047 = vmatprep.mubr.bf16.mxu0 0
      %1048 = vmatmul.mubr.bf16.gmra.mxu0 %v930
      %v1049 = vpop.f32.mrf.mxu0
      %v1050 = vadd.f32 %v838, %v1049
      %v1051 = vpop.f32.mrf.mxu0
      %v1052 = vpop.f32.mrf.mxu0
      %v1053 = vadd.f32 %v841, %v1052
      %v1054 = vpop.f32.mrf.mxu0
      %1055 = vmatprep.mubr.bf16.mxu0 0
      %1056 = vmatmul.mubr.bf16.gmra.mxu0 %v933
      %v1057 = vpop.f32.mrf.mxu0
      %v1058 = vadd.f32 %v846, %v1057
      %v1059 = vpop.f32.mrf.mxu0
      %v1060 = vpop.f32.mrf.mxu0
      %v1061 = vadd.f32 %v849, %v1060
      %v1062 = vpop.f32.mrf.mxu0
      %1063 = vmatprep.mubr.bf16.mxu0 0
      %1064 = vmatmul.mubr.bf16.gmra.mxu0 %v936
      %v1065 = vpop.f32.mrf.mxu0
      %v1066 = vadd.f32 %v854, %v1065
      %v1067 = vpop.f32.mrf.mxu0
      %v1068 = vpop.f32.mrf.mxu0
      %v1069 = vadd.f32 %v857, %v1068
      %v1070 = vpop.f32.mrf.mxu0
      %1071 = vmatprep.mubr.bf16.mxu0 0
      %1072 = vmatmul.mubr.bf16.gmra.mxu0 %v939
      %v1073 = vpop.f32.mrf.mxu0
      %v1074 = vadd.f32 %v862, %v1073
      %v1075 = vpop.f32.mrf.mxu0
      %v1076 = vpop.f32.mrf.mxu0
      %v1077 = vadd.f32 %v865, %v1076
      %v1078 = vpop.f32.mrf.mxu0
      %1079 = vmatprep.mubr.bf16.mxu0 0
      %1080 = vmatmul.mubr.bf16.gmra.mxu0 %v942
      %v1081 = vpop.f32.mrf.mxu0
      %v1082 = vadd.f32 %v870, %v1081
      %v1083 = vpop.f32.mrf.mxu0
      %v1084 = vpop.f32.mrf.mxu0
      %v1085 = vadd.f32 %v873, %v1084
      %v1086 = vpop.f32.mrf.mxu0
      %1087 = vmatprep.mubr.bf16.mxu0 0
      %1088 = vmatmul.mubr.bf16.gmra.mxu0 %v945
      %v1089 = vpop.f32.mrf.mxu0
      %v1090 = vadd.f32 %v878, %v1089
      %v1091 = vpop.f32.mrf.mxu0
      %v1092 = vpop.f32.mrf.mxu0
      %v1093 = vadd.f32 %v881, %v1092
      %v1094 = vpop.f32.mrf.mxu0
      %1095 = vmatprep.mubr.bf16.mxu0 0
      %1096 = vmatmul.mubr.bf16.gmra.mxu0 %v948
      %v1097 = vpop.f32.mrf.mxu0
      %v1098 = vadd.f32 %v886, %v1097
      %v1099 = vpop.f32.mrf.mxu0
      %v1100 = vpop.f32.mrf.mxu0
      %v1101 = vadd.f32 %v889, %v1100
      %v1102 = vpop.f32.mrf.mxu0
      %1103 = vmatprep.mubr.bf16.mxu0 0
      %1104 = vmatmul.mubr.bf16.gmra.mxu0 %v951
      %v1105 = vpop.f32.mrf.mxu0
      %v1106 = vadd.f32 %v894, %v1105
      %v1107 = vpop.f32.mrf.mxu0
      %v1108 = vpop.f32.mrf.mxu0
      %v1109 = vadd.f32 %v897, %v1108
      %v1110 = vpop.f32.mrf.mxu0
      %1111 = vmatprep.mubr.bf16.mxu0 0
      %1112 = vmatmul.mubr.bf16.gmra.mxu0 %v954
      %v1113 = vpop.f32.mrf.mxu0
      %v1114 = vadd.f32 %v902, %v1113
      %v1115 = vpop.f32.mrf.mxu0
      %v1116 = vpop.f32.mrf.mxu0
      %v1117 = vadd.f32 %v905, %v1116
      %v1118 = vpop.f32.mrf.mxu0
      %1119 = vdwg.mxu0
      %v1120 = vld [vmem:[#allocation2 + $0x2] sm:$0xff]
      %v1121 = vld [vmem:[#allocation2 + $0xa] sm:$0xff]
      %v1122 = vld [vmem:[#allocation2 + $0x1a] sm:$0xff]
      %v1123 = vld [vmem:[#allocation2 + $0x22] sm:$0xff]
      %v1124 = vld [vmem:[#allocation2 + $0x32] sm:$0xff]
      %v1125 = vld [vmem:[#allocation2 + $0x3a] sm:$0xff]
      %v1126 = vld [vmem:[#allocation2 + $0x4a] sm:$0xff]
      %v1127 = vld [vmem:[#allocation2 + $0x52] sm:$0xff]
      %v1128 = vld [vmem:[#allocation2 + $0x62] sm:$0xff]
      %v1129 = vld [vmem:[#allocation2 + $0x6a] sm:$0xff]
      %v1130 = vld [vmem:[#allocation2 + $0x7a] sm:$0xff]
      %v1131 = vld [vmem:[#allocation2 + $0x82] sm:$0xff]
      %v1132 = vld [vmem:[#allocation2 + $0x92] sm:$0xff]
      %v1133 = vld [vmem:[#allocation2 + $0x9a] sm:$0xff]
      %v1134 = vld [vmem:[#allocation2 + $0xaa] sm:$0xff]
      %v1135 = vld [vmem:[#allocation2 + $0xb2] sm:$0xff]
      %v1136 = vld [vmem:[#allocation2 + $0xc2] sm:$0xff]
      %v1137 = vld [vmem:[#allocation2 + $0xca] sm:$0xff]
      %v1138 = vld [vmem:[#allocation2 + $0xda] sm:$0xff]
      %v1139 = vld [vmem:[#allocation2 + $0xe2] sm:$0xff]
      %v1140 = vld [vmem:[#allocation2 + $0xf2] sm:$0xff]
      %v1141 = vld [vmem:[#allocation2 + $0xfa] sm:$0xff]
      %v1142 = vld [vmem:[#allocation2 + $0x10a] sm:$0xff]
      %v1143 = vld [vmem:[#allocation2 + $0x112] sm:$0xff]
      %v1144 = vld [vmem:[#allocation2 + $0x122] sm:$0xff]
      %v1145 = vld [vmem:[#allocation2 + $0x12a] sm:$0xff]
      %v1146 = vld [vmem:[#allocation2 + $0x13a] sm:$0xff]
      %v1147 = vld [vmem:[#allocation2 + $0x142] sm:$0xff]
      %v1148 = vld [vmem:[#allocation2 + $0x152] sm:$0xff]
      %v1149 = vld [vmem:[#allocation2 + $0x15a] sm:$0xff]
      %v1150 = vld [vmem:[#allocation2 + $0x16a] sm:$0xff]
      %v1151 = vld [vmem:[#allocation2 + $0x172] sm:$0xff]
      %v1152 = vpack.c.bf16 %v1121, %v1120
      %v1153 = vpack.c.bf16 %v1123, %v1122
      %v1154 = vpack.c.bf16 %v1125, %v1124
      %v1155 = vpack.c.bf16 %v1127, %v1126
      %v1156 = vpack.c.bf16 %v1129, %v1128
      %v1157 = vpack.c.bf16 %v1131, %v1130
      %v1158 = vpack.c.bf16 %v1133, %v1132
      %v1159 = vpack.c.bf16 %v1135, %v1134
      %v1160 = vpack.c.bf16 %v1137, %v1136
      %v1161 = vpack.c.bf16 %v1139, %v1138
      %v1162 = vpack.c.bf16 %v1141, %v1140
      %v1163 = vpack.c.bf16 %v1143, %v1142
      %v1164 = vpack.c.bf16 %v1145, %v1144
      %v1165 = vpack.c.bf16 %v1147, %v1146
      %v1166 = vpack.c.bf16 %v1149, %v1148
      %v1167 = vpack.c.bf16 %v1151, %v1150
      %s1168 = scalar_lea.vmem %s3, 4
      %v1169 = vld [vmem:[%s1168] sm:$0x3]
      %v1171 = vsel %vm540, %v1152, 0
      %v1174 = vsel %vm540, %v1153, 0
      %v1177 = vsel %vm540, %v1154, 0
      %v1180 = vsel %vm540, %v1155, 0
      %v1183 = vsel %vm540, %v1156, 0
      %v1186 = vsel %vm540, %v1157, 0
      %v1189 = vsel %vm540, %v1158, 0
      %v1192 = vsel %vm540, %v1159, 0
      %v1195 = vsel %vm540, %v1160, 0
      %v1198 = vsel %vm540, %v1161, 0
      %v1201 = vsel %vm540, %v1162, 0
      %v1204 = vsel %vm540, %v1163, 0
      %v1207 = vsel %vm540, %v1164, 0
      %v1210 = vsel %vm540, %v1165, 0
      %v1213 = vsel %vm540, %v1166, 0
      %v1216 = vsel %vm540, %v1167, 0
      %v1219 = vsel %vm743, %v1169, 0
      %1221 = vmatprep.subr.bf16.mxu0 0
      %1222 = vmatpush1.bf16.msra.mxu0 0
      %1223 = vmatprep.subr.bf16.mxu0 0
      %1224 = vmatpush1.bf16.msra.mxu0 0
      %1225 = vmatprep.subr.bf16.mxu0 0
      %1226 = vmatpush1.bf16.msra.mxu0 0
      %1227 = vmatprep.subr.bf16.mxu0 0
      %1228 = vmatpush1.bf16.msra.mxu0 0
      %1229 = vmatprep.subr.bf16.mxu0 0
      %1230 = vmatpush1.bf16.msra.mxu0 0
      %1231 = vmatprep.subr.bf16.mxu0 0
      %1232 = vmatpush1.bf16.msra.mxu0 0
      %1233 = vmatprep.subr.bf16.mxu0 0
      %1234 = vmatpush1.bf16.msra.mxu0 0
      %1235 = vmatprep.subr.bf16.mxu0 0
      %1236 = vmatpush1.bf16.msra.mxu0 %v1219
      %1237 = vmatprep.subr.bf16.mxu0 0
      %1238 = vmatpush2.bf16.msra.mxu0 0
      %1239 = vmatprep.subr.bf16.mxu0 0
      %1240 = vmatpush2.bf16.msra.mxu0 0
      %1241 = vmatprep.subr.bf16.mxu0 0
      %1242 = vmatpush2.bf16.msra.mxu0 0
      %1243 = vmatprep.subr.bf16.mxu0 0
      %1244 = vmatpush2.bf16.msra.mxu0 0
      %1245 = vmatprep.subr.bf16.mxu0 0
      %1246 = vmatpush2.bf16.msra.mxu0 0
      %1247 = vmatprep.subr.bf16.mxu0 0
      %1248 = vmatpush2.bf16.msra.mxu0 0
      %1249 = vmatprep.subr.bf16.mxu0 0
      %1250 = vmatpush2.bf16.msra.mxu0 0
      %1251 = vmatprep.subr.bf16.mxu0 0
      %1252 = vmatpush2.bf16.msra.mxu0 0
      %1253 = vmatprep.mubr.bf16.mxu0 0
      %1254 = vmatmul.mubr.bf16.gmra.mxu0 %v1171
      %v1255 = vpop.f32.mrf.mxu0
      %v1256 = vadd.f32 0.0, %v1255
      %v1257 = vpop.f32.mrf.mxu0
      %v1258 = vpop.f32.mrf.mxu0
      %v1259 = vadd.f32 0.0, %v1258
      %v1260 = vpop.f32.mrf.mxu0
      %1261 = vmatprep.mubr.bf16.mxu0 0
      %1262 = vmatmul.mubr.bf16.gmra.mxu0 %v1174
      %v1263 = vpop.f32.mrf.mxu0
      %v1264 = vadd.f32 0.0, %v1263
      %v1265 = vpop.f32.mrf.mxu0
      %v1266 = vpop.f32.mrf.mxu0
      %v1267 = vadd.f32 0.0, %v1266
      %v1268 = vpop.f32.mrf.mxu0
      %1269 = vmatprep.mubr.bf16.mxu0 0
      %1270 = vmatmul.mubr.bf16.gmra.mxu0 %v1177
      %v1271 = vpop.f32.mrf.mxu0
      %v1272 = vadd.f32 0.0, %v1271
      %v1273 = vpop.f32.mrf.mxu0
      %v1274 = vpop.f32.mrf.mxu0
      %v1275 = vadd.f32 0.0, %v1274
      %v1276 = vpop.f32.mrf.mxu0
      %1277 = vmatprep.mubr.bf16.mxu0 0
      %1278 = vmatmul.mubr.bf16.gmra.mxu0 %v1180
      %v1279 = vpop.f32.mrf.mxu0
      %v1280 = vadd.f32 0.0, %v1279
      %v1281 = vpop.f32.mrf.mxu0
      %v1282 = vpop.f32.mrf.mxu0
      %v1283 = vadd.f32 0.0, %v1282
      %v1284 = vpop.f32.mrf.mxu0
      %1285 = vmatprep.mubr.bf16.mxu0 0
      %1286 = vmatmul.mubr.bf16.gmra.mxu0 %v1183
      %v1287 = vpop.f32.mrf.mxu0
      %v1288 = vadd.f32 0.0, %v1287
      %v1289 = vpop.f32.mrf.mxu0
      %v1290 = vpop.f32.mrf.mxu0
      %v1291 = vadd.f32 0.0, %v1290
      %v1292 = vpop.f32.mrf.mxu0
      %1293 = vmatprep.mubr.bf16.mxu0 0
      %1294 = vmatmul.mubr.bf16.gmra.mxu0 %v1186
      %v1295 = vpop.f32.mrf.mxu0
      %v1296 = vadd.f32 0.0, %v1295
      %v1297 = vpop.f32.mrf.mxu0
      %v1298 = vpop.f32.mrf.mxu0
      %v1299 = vadd.f32 0.0, %v1298
      %v1300 = vpop.f32.mrf.mxu0
      %1301 = vmatprep.mubr.bf16.mxu0 0
      %1302 = vmatmul.mubr.bf16.gmra.mxu0 %v1189
      %v1303 = vpop.f32.mrf.mxu0
      %v1304 = vadd.f32 0.0, %v1303
      %v1305 = vpop.f32.mrf.mxu0
      %v1306 = vpop.f32.mrf.mxu0
      %v1307 = vadd.f32 0.0, %v1306
      %v1308 = vpop.f32.mrf.mxu0
      %1309 = vmatprep.mubr.bf16.mxu0 0
      %1310 = vmatmul.mubr.bf16.gmra.mxu0 %v1192
      %v1311 = vpop.f32.mrf.mxu0
      %v1312 = vadd.f32 0.0, %v1311
      %v1313 = vpop.f32.mrf.mxu0
      %v1314 = vpop.f32.mrf.mxu0
      %v1315 = vadd.f32 0.0, %v1314
      %v1316 = vpop.f32.mrf.mxu0
      %1317 = vmatprep.mubr.bf16.mxu0 0
      %1318 = vmatmul.mubr.bf16.gmra.mxu0 %v1195
      %v1319 = vpop.f32.mrf.mxu0
      %v1320 = vadd.f32 0.0, %v1319
      %v1321 = vpop.f32.mrf.mxu0
      %v1322 = vpop.f32.mrf.mxu0
      %v1323 = vadd.f32 0.0, %v1322
      %v1324 = vpop.f32.mrf.mxu0
      %1325 = vmatprep.mubr.bf16.mxu0 0
      %1326 = vmatmul.mubr.bf16.gmra.mxu0 %v1198
      %v1327 = vpop.f32.mrf.mxu0
      %v1328 = vadd.f32 0.0, %v1327
      %v1329 = vpop.f32.mrf.mxu0
      %v1330 = vpop.f32.mrf.mxu0
      %v1331 = vadd.f32 0.0, %v1330
      %v1332 = vpop.f32.mrf.mxu0
      %1333 = vmatprep.mubr.bf16.mxu0 0
      %1334 = vmatmul.mubr.bf16.gmra.mxu0 %v1201
      %v1335 = vpop.f32.mrf.mxu0
      %v1336 = vadd.f32 0.0, %v1335
      %v1337 = vpop.f32.mrf.mxu0
      %v1338 = vpop.f32.mrf.mxu0
      %v1339 = vadd.f32 0.0, %v1338
      %v1340 = vpop.f32.mrf.mxu0
      %1341 = vmatprep.mubr.bf16.mxu0 0
      %1342 = vmatmul.mubr.bf16.gmra.mxu0 %v1204
      %v1343 = vpop.f32.mrf.mxu0
      %v1344 = vadd.f32 0.0, %v1343
      %v1345 = vpop.f32.mrf.mxu0
      %v1346 = vpop.f32.mrf.mxu0
      %v1347 = vadd.f32 0.0, %v1346
      %v1348 = vpop.f32.mrf.mxu0
      %1349 = vmatprep.mubr.bf16.mxu0 0
      %1350 = vmatmul.mubr.bf16.gmra.mxu0 %v1207
      %v1351 = vpop.f32.mrf.mxu0
      %v1352 = vadd.f32 0.0, %v1351
      %v1353 = vpop.f32.mrf.mxu0
      %v1354 = vpop.f32.mrf.mxu0
      %v1355 = vadd.f32 0.0, %v1354
      %v1356 = vpop.f32.mrf.mxu0
      %1357 = vmatprep.mubr.bf16.mxu0 0
      %1358 = vmatmul.mubr.bf16.gmra.mxu0 %v1210
      %v1359 = vpop.f32.mrf.mxu0
      %v1360 = vadd.f32 0.0, %v1359
      %v1361 = vpop.f32.mrf.mxu0
      %v1362 = vpop.f32.mrf.mxu0
      %v1363 = vadd.f32 0.0, %v1362
      %v1364 = vpop.f32.mrf.mxu0
      %1365 = vmatprep.mubr.bf16.mxu0 0
      %1366 = vmatmul.mubr.bf16.gmra.mxu0 %v1213
      %v1367 = vpop.f32.mrf.mxu0
      %v1368 = vadd.f32 0.0, %v1367
      %v1369 = vpop.f32.mrf.mxu0
      %v1370 = vpop.f32.mrf.mxu0
      %v1371 = vadd.f32 0.0, %v1370
      %v1372 = vpop.f32.mrf.mxu0
      %1373 = vmatprep.mubr.bf16.mxu0 0
      %1374 = vmatmul.mubr.bf16.gmra.mxu0 %v1216
      %v1375 = vpop.f32.mrf.mxu0
      %v1376 = vadd.f32 0.0, %v1375
      %v1377 = vpop.f32.mrf.mxu0
      %v1378 = vpop.f32.mrf.mxu0
      %v1379 = vadd.f32 0.0, %v1378
      %v1380 = vpop.f32.mrf.mxu0
      %1381 = vdwg.mxu0
      %v1382 = vadd.f32 %v994, %v1256
      %v1383 = vadd.f32 %v997, %v1259
      %v1384 = vadd.f32 %v1002, %v1264
      %v1385 = vadd.f32 %v1005, %v1267
      %v1386 = vadd.f32 %v1010, %v1272
      %v1387 = vadd.f32 %v1013, %v1275
      %v1388 = vadd.f32 %v1018, %v1280
      %v1389 = vadd.f32 %v1021, %v1283
      %v1390 = vadd.f32 %v1026, %v1288
      %v1391 = vadd.f32 %v1029, %v1291
      %v1392 = vadd.f32 %v1034, %v1296
      %v1393 = vadd.f32 %v1037, %v1299
      %v1394 = vadd.f32 %v1042, %v1304
      %v1395 = vadd.f32 %v1045, %v1307
      %v1396 = vadd.f32 %v1050, %v1312
      %v1397 = vadd.f32 %v1053, %v1315
      %v1398 = vadd.f32 %v1058, %v1320
      %v1399 = vadd.f32 %v1061, %v1323
      %v1400 = vadd.f32 %v1066, %v1328
      %v1401 = vadd.f32 %v1069, %v1331
      %v1402 = vadd.f32 %v1074, %v1336
      %v1403 = vadd.f32 %v1077, %v1339
      %v1404 = vadd.f32 %v1082, %v1344
      %v1405 = vadd.f32 %v1085, %v1347
      %v1406 = vadd.f32 %v1090, %v1352
      %v1407 = vadd.f32 %v1093, %v1355
      %v1408 = vadd.f32 %v1098, %v1360
      %v1409 = vadd.f32 %v1101, %v1363
      %v1410 = vadd.f32 %v1106, %v1368
      %v1411 = vadd.f32 %v1109, %v1371
      %v1412 = vadd.f32 %v1114, %v1376
      %v1413 = vadd.f32 %v1117, %v1379
      %s1414 = scalar_lea.vmem [#allocation2], 24
      %v1415 = vld [vmem:[%s1414] sm:$0xff]
      %v1416 = vld [vmem:[%s1414 + $0x8] sm:$0xff]
      %v1417 = vld [vmem:[%s1414 + $0x18] sm:$0xff]
      %v1418 = vld [vmem:[%s1414 + $0x20] sm:$0xff]
      %v1419 = vld [vmem:[%s1414 + $0x30] sm:$0xff]
      %v1420 = vld [vmem:[%s1414 + $0x38] sm:$0xff]
      %v1421 = vld [vmem:[%s1414 + $0x48] sm:$0xff]
      %v1422 = vld [vmem:[%s1414 + $0x50] sm:$0xff]
      %v1423 = vld [vmem:[%s1414 + $0x60] sm:$0xff]
      %v1424 = vld [vmem:[%s1414 + $0x68] sm:$0xff]
      %v1425 = vld [vmem:[%s1414 + $0x78] sm:$0xff]
      %v1426 = vld [vmem:[%s1414 + $0x80] sm:$0xff]
      %v1427 = vld [vmem:[%s1414 + $0x90] sm:$0xff]
      %v1428 = vld [vmem:[%s1414 + $0x98] sm:$0xff]
      %v1429 = vld [vmem:[%s1414 + $0xa8] sm:$0xff]
      %v1430 = vld [vmem:[%s1414 + $0xb0] sm:$0xff]
      %v1431 = vld [vmem:[%s1414 + $0xc0] sm:$0xff]
      %v1432 = vld [vmem:[%s1414 + $0xc8] sm:$0xff]
      %v1433 = vld [vmem:[%s1414 + $0xd8] sm:$0xff]
      %v1434 = vld [vmem:[%s1414 + $0xe0] sm:$0xff]
      %v1435 = vld [vmem:[%s1414 + $0xf0] sm:$0xff]
      %v1436 = vld [vmem:[%s1414 + $0xf8] sm:$0xff]
      %v1437 = vld [vmem:[%s1414 + $0x108] sm:$0xff]
      %v1438 = vld [vmem:[%s1414 + $0x110] sm:$0xff]
      %v1439 = vld [vmem:[%s1414 + $0x120] sm:$0xff]
      %v1440 = vld [vmem:[%s1414 + $0x128] sm:$0xff]
      %v1441 = vld [vmem:[%s1414 + $0x138] sm:$0xff]
      %v1442 = vld [vmem:[%s1414 + $0x140] sm:$0xff]
      %v1443 = vld [vmem:[%s1414 + $0x150] sm:$0xff]
      %v1444 = vld [vmem:[%s1414 + $0x158] sm:$0xff]
      %v1445 = vld [vmem:[%s1414 + $0x168] sm:$0xff]
      %v1446 = vld [vmem:[%s1414 + $0x170] sm:$0xff]
      %v1447 = vpack.c.bf16 %v1416, %v1415
      %v1448 = vpack.c.bf16 %v1418, %v1417
      %v1449 = vpack.c.bf16 %v1420, %v1419
      %v1450 = vpack.c.bf16 %v1422, %v1421
      %v1451 = vpack.c.bf16 %v1424, %v1423
      %v1452 = vpack.c.bf16 %v1426, %v1425
      %v1453 = vpack.c.bf16 %v1428, %v1427
      %v1454 = vpack.c.bf16 %v1430, %v1429
      %v1455 = vpack.c.bf16 %v1432, %v1431
      %v1456 = vpack.c.bf16 %v1434, %v1433
      %v1457 = vpack.c.bf16 %v1436, %v1435
      %v1458 = vpack.c.bf16 %v1438, %v1437
      %v1459 = vpack.c.bf16 %v1440, %v1439
      %v1460 = vpack.c.bf16 %v1442, %v1441
      %v1461 = vpack.c.bf16 %v1444, %v1443
      %v1462 = vpack.c.bf16 %v1446, %v1445
      %s1463 = scalar_lea.vmem %s3, 6
      %v1464 = vld [vmem:[%s1463] sm:$0x3]
      %v1466 = vsel %vm540, %v1447, 0
      %v1469 = vsel %vm540, %v1448, 0
      %v1472 = vsel %vm540, %v1449, 0
      %v1475 = vsel %vm540, %v1450, 0
      %v1478 = vsel %vm540, %v1451, 0
      %v1481 = vsel %vm540, %v1452, 0
      %v1484 = vsel %vm540, %v1453, 0
      %v1487 = vsel %vm540, %v1454, 0
      %v1490 = vsel %vm540, %v1455, 0
      %v1493 = vsel %vm540, %v1456, 0
      %v1496 = vsel %vm540, %v1457, 0
      %v1499 = vsel %vm540, %v1458, 0
      %v1502 = vsel %vm540, %v1459, 0
      %v1505 = vsel %vm540, %v1460, 0
      %v1508 = vsel %vm540, %v1461, 0
      %v1511 = vsel %vm540, %v1462, 0
      %v1514 = vsel %vm743, %v1464, 0
      %1516 = vmatprep.subr.bf16.mxu0 0
      %1517 = vmatpush1.bf16.msra.mxu0 0
      %1518 = vmatprep.subr.bf16.mxu0 0
      %1519 = vmatpush1.bf16.msra.mxu0 0
      %1520 = vmatprep.subr.bf16.mxu0 0
      %1521 = vmatpush1.bf16.msra.mxu0 0
      %1522 = vmatprep.subr.bf16.mxu0 0
      %1523 = vmatpush1.bf16.msra.mxu0 0
      %1524 = vmatprep.subr.bf16.mxu0 0
      %1525 = vmatpush1.bf16.msra.mxu0 0
      %1526 = vmatprep.subr.bf16.mxu0 0
      %1527 = vmatpush1.bf16.msra.mxu0 0
      %1528 = vmatprep.subr.bf16.mxu0 0
      %1529 = vmatpush1.bf16.msra.mxu0 0
      %1530 = vmatprep.subr.bf16.mxu0 0
      %1531 = vmatpush1.bf16.msra.mxu0 %v1514
      %1532 = vmatprep.subr.bf16.mxu0 0
      %1533 = vmatpush2.bf16.msra.mxu0 0
      %1534 = vmatprep.subr.bf16.mxu0 0
      %1535 = vmatpush2.bf16.msra.mxu0 0
      %1536 = vmatprep.subr.bf16.mxu0 0
      %1537 = vmatpush2.bf16.msra.mxu0 0
      %1538 = vmatprep.subr.bf16.mxu0 0
      %1539 = vmatpush2.bf16.msra.mxu0 0
      %1540 = vmatprep.subr.bf16.mxu0 0
      %1541 = vmatpush2.bf16.msra.mxu0 0
      %1542 = vmatprep.subr.bf16.mxu0 0
      %1543 = vmatpush2.bf16.msra.mxu0 0
      %1544 = vmatprep.subr.bf16.mxu0 0
      %1545 = vmatpush2.bf16.msra.mxu0 0
      %1546 = vmatprep.subr.bf16.mxu0 0
      %1547 = vmatpush2.bf16.msra.mxu0 0
      %1548 = vmatprep.mubr.bf16.mxu0 0
      %1549 = vmatmul.mubr.bf16.gmra.mxu0 %v1466
      %v1550 = vpop.f32.mrf.mxu0
      %v1551 = vadd.f32 0.0, %v1550
      %v1552 = vpop.f32.mrf.mxu0
      %v1553 = vpop.f32.mrf.mxu0
      %v1554 = vadd.f32 0.0, %v1553
      %v1555 = vpop.f32.mrf.mxu0
      %1556 = vmatprep.mubr.bf16.mxu0 0
      %1557 = vmatmul.mubr.bf16.gmra.mxu0 %v1469
      %v1558 = vpop.f32.mrf.mxu0
      %v1559 = vadd.f32 0.0, %v1558
      %v1560 = vpop.f32.mrf.mxu0
      %v1561 = vpop.f32.mrf.mxu0
      %v1562 = vadd.f32 0.0, %v1561
      %v1563 = vpop.f32.mrf.mxu0
      %1564 = vmatprep.mubr.bf16.mxu0 0
      %1565 = vmatmul.mubr.bf16.gmra.mxu0 %v1472
      %v1566 = vpop.f32.mrf.mxu0
      %v1567 = vadd.f32 0.0, %v1566
      %v1568 = vpop.f32.mrf.mxu0
      %v1569 = vpop.f32.mrf.mxu0
      %v1570 = vadd.f32 0.0, %v1569
      %v1571 = vpop.f32.mrf.mxu0
      %1572 = vmatprep.mubr.bf16.mxu0 0
      %1573 = vmatmul.mubr.bf16.gmra.mxu0 %v1475
      %v1574 = vpop.f32.mrf.mxu0
      %v1575 = vadd.f32 0.0, %v1574
      %v1576 = vpop.f32.mrf.mxu0
      %v1577 = vpop.f32.mrf.mxu0
      %v1578 = vadd.f32 0.0, %v1577
      %v1579 = vpop.f32.mrf.mxu0
      %1580 = vmatprep.mubr.bf16.mxu0 0
      %1581 = vmatmul.mubr.bf16.gmra.mxu0 %v1478
      %v1582 = vpop.f32.mrf.mxu0
      %v1583 = vadd.f32 0.0, %v1582
      %v1584 = vpop.f32.mrf.mxu0
      %v1585 = vpop.f32.mrf.mxu0
      %v1586 = vadd.f32 0.0, %v1585
      %v1587 = vpop.f32.mrf.mxu0
      %1588 = vmatprep.mubr.bf16.mxu0 0
      %1589 = vmatmul.mubr.bf16.gmra.mxu0 %v1481
      %v1590 = vpop.f32.mrf.mxu0
      %v1591 = vadd.f32 0.0, %v1590
      %v1592 = vpop.f32.mrf.mxu0
      %v1593 = vpop.f32.mrf.mxu0
      %v1594 = vadd.f32 0.0, %v1593
      %v1595 = vpop.f32.mrf.mxu0
      %1596 = vmatprep.mubr.bf16.mxu0 0
      %1597 = vmatmul.mubr.bf16.gmra.mxu0 %v1484
      %v1598 = vpop.f32.mrf.mxu0
      %v1599 = vadd.f32 0.0, %v1598
      %v1600 = vpop.f32.mrf.mxu0
      %v1601 = vpop.f32.mrf.mxu0
      %v1602 = vadd.f32 0.0, %v1601
      %v1603 = vpop.f32.mrf.mxu0
      %1604 = vmatprep.mubr.bf16.mxu0 0
      %1605 = vmatmul.mubr.bf16.gmra.mxu0 %v1487
      %v1606 = vpop.f32.mrf.mxu0
      %v1607 = vadd.f32 0.0, %v1606
      %v1608 = vpop.f32.mrf.mxu0
      %v1609 = vpop.f32.mrf.mxu0
      %v1610 = vadd.f32 0.0, %v1609
      %v1611 = vpop.f32.mrf.mxu0
      %1612 = vmatprep.mubr.bf16.mxu0 0
      %1613 = vmatmul.mubr.bf16.gmra.mxu0 %v1490
      %v1614 = vpop.f32.mrf.mxu0
      %v1615 = vadd.f32 0.0, %v1614
      %v1616 = vpop.f32.mrf.mxu0
      %v1617 = vpop.f32.mrf.mxu0
      %v1618 = vadd.f32 0.0, %v1617
      %v1619 = vpop.f32.mrf.mxu0
      %1620 = vmatprep.mubr.bf16.mxu0 0
      %1621 = vmatmul.mubr.bf16.gmra.mxu0 %v1493
      %v1622 = vpop.f32.mrf.mxu0
      %v1623 = vadd.f32 0.0, %v1622
      %v1624 = vpop.f32.mrf.mxu0
      %v1625 = vpop.f32.mrf.mxu0
      %v1626 = vadd.f32 0.0, %v1625
      %v1627 = vpop.f32.mrf.mxu0
      %1628 = vmatprep.mubr.bf16.mxu0 0
      %1629 = vmatmul.mubr.bf16.gmra.mxu0 %v1496
      %v1630 = vpop.f32.mrf.mxu0
      %v1631 = vadd.f32 0.0, %v1630
      %v1632 = vpop.f32.mrf.mxu0
      %v1633 = vpop.f32.mrf.mxu0
      %v1634 = vadd.f32 0.0, %v1633
      %v1635 = vpop.f32.mrf.mxu0
      %1636 = vmatprep.mubr.bf16.mxu0 0
      %1637 = vmatmul.mubr.bf16.gmra.mxu0 %v1499
      %v1638 = vpop.f32.mrf.mxu0
      %v1639 = vadd.f32 0.0, %v1638
      %v1640 = vpop.f32.mrf.mxu0
      %v1641 = vpop.f32.mrf.mxu0
      %v1642 = vadd.f32 0.0, %v1641
      %v1643 = vpop.f32.mrf.mxu0
      %1644 = vmatprep.mubr.bf16.mxu0 0
      %1645 = vmatmul.mubr.bf16.gmra.mxu0 %v1502
      %v1646 = vpop.f32.mrf.mxu0
      %v1647 = vadd.f32 0.0, %v1646
      %v1648 = vpop.f32.mrf.mxu0
      %v1649 = vpop.f32.mrf.mxu0
      %v1650 = vadd.f32 0.0, %v1649
      %v1651 = vpop.f32.mrf.mxu0
      %1652 = vmatprep.mubr.bf16.mxu0 0
      %1653 = vmatmul.mubr.bf16.gmra.mxu0 %v1505
      %v1654 = vpop.f32.mrf.mxu0
      %v1655 = vadd.f32 0.0, %v1654
      %v1656 = vpop.f32.mrf.mxu0
      %v1657 = vpop.f32.mrf.mxu0
      %v1658 = vadd.f32 0.0, %v1657
      %v1659 = vpop.f32.mrf.mxu0
      %1660 = vmatprep.mubr.bf16.mxu0 0
      %1661 = vmatmul.mubr.bf16.gmra.mxu0 %v1508
      %v1662 = vpop.f32.mrf.mxu0
      %v1663 = vadd.f32 0.0, %v1662
      %v1664 = vpop.f32.mrf.mxu0
      %v1665 = vpop.f32.mrf.mxu0
      %v1666 = vadd.f32 0.0, %v1665
      %v1667 = vpop.f32.mrf.mxu0
      %1668 = vmatprep.mubr.bf16.mxu0 0
      %1669 = vmatmul.mubr.bf16.gmra.mxu0 %v1511
      %v1670 = vpop.f32.mrf.mxu0
      %v1671 = vadd.f32 0.0, %v1670
      %v1672 = vpop.f32.mrf.mxu0
      %v1673 = vpop.f32.mrf.mxu0
      %v1674 = vadd.f32 0.0, %v1673
      %v1675 = vpop.f32.mrf.mxu0
      %1676 = vdwg.mxu0
      %v1677 = vadd.f32 %v1382, %v1551
      %v1678 = vadd.f32 %v1383, %v1554
      %v1679 = vadd.f32 %v1384, %v1559
      %v1680 = vadd.f32 %v1385, %v1562
      %v1681 = vadd.f32 %v1386, %v1567
      %v1682 = vadd.f32 %v1387, %v1570
      %v1683 = vadd.f32 %v1388, %v1575
      %v1684 = vadd.f32 %v1389, %v1578
      %v1685 = vadd.f32 %v1390, %v1583
      %v1686 = vadd.f32 %v1391, %v1586
      %v1687 = vadd.f32 %v1392, %v1591
      %v1688 = vadd.f32 %v1393, %v1594
      %v1689 = vadd.f32 %v1394, %v1599
      %v1690 = vadd.f32 %v1395, %v1602
      %v1691 = vadd.f32 %v1396, %v1607
      %v1692 = vadd.f32 %v1397, %v1610
      %v1693 = vadd.f32 %v1398, %v1615
      %v1694 = vadd.f32 %v1399, %v1618
      %v1695 = vadd.f32 %v1400, %v1623
      %v1696 = vadd.f32 %v1401, %v1626
      %v1697 = vadd.f32 %v1402, %v1631
      %v1698 = vadd.f32 %v1403, %v1634
      %v1699 = vadd.f32 %v1404, %v1639
      %v1700 = vadd.f32 %v1405, %v1642
      %v1701 = vadd.f32 %v1406, %v1647
      %v1702 = vadd.f32 %v1407, %v1650
      %v1703 = vadd.f32 %v1408, %v1655
      %v1704 = vadd.f32 %v1409, %v1658
      %v1705 = vadd.f32 %v1410, %v1663
      %v1706 = vadd.f32 %v1411, %v1666
      %v1707 = vadd.f32 %v1412, %v1671
      %v1708 = vadd.f32 %v1413, %v1674
      %v1709 = vld [vmem:[%s1414 + $0x1] sm:$0xff]
      %v1710 = vld [vmem:[%s1414 + $0x9] sm:$0xff]
      %v1711 = vld [vmem:[%s1414 + $0x19] sm:$0xff]
      %v1712 = vld [vmem:[%s1414 + $0x21] sm:$0xff]
      %v1713 = vld [vmem:[%s1414 + $0x31] sm:$0xff]
      %v1714 = vld [vmem:[%s1414 + $0x39] sm:$0xff]
      %v1715 = vld [vmem:[%s1414 + $0x49] sm:$0xff]
      %v1716 = vld [vmem:[%s1414 + $0x51] sm:$0xff]
      %v1717 = vld [vmem:[%s1414 + $0x61] sm:$0xff]
      %v1718 = vld [vmem:[%s1414 + $0x69] sm:$0xff]
      %v1719 = vld [vmem:[%s1414 + $0x79] sm:$0xff]
      %v1720 = vld [vmem:[%s1414 + $0x81] sm:$0xff]
      %v1721 = vld [vmem:[%s1414 + $0x91] sm:$0xff]
      %v1722 = vld [vmem:[%s1414 + $0x99] sm:$0xff]
      %v1723 = vld [vmem:[%s1414 + $0xa9] sm:$0xff]
      %v1724 = vld [vmem:[%s1414 + $0xb1] sm:$0xff]
      %v1725 = vld [vmem:[%s1414 + $0xc1] sm:$0xff]
      %v1726 = vld [vmem:[%s1414 + $0xc9] sm:$0xff]
      %v1727 = vld [vmem:[%s1414 + $0xd9] sm:$0xff]
      %v1728 = vld [vmem:[%s1414 + $0xe1] sm:$0xff]
      %v1729 = vld [vmem:[%s1414 + $0xf1] sm:$0xff]
      %v1730 = vld [vmem:[%s1414 + $0xf9] sm:$0xff]
      %v1731 = vld [vmem:[%s1414 + $0x109] sm:$0xff]
      %v1732 = vld [vmem:[%s1414 + $0x111] sm:$0xff]
      %v1733 = vld [vmem:[%s1414 + $0x121] sm:$0xff]
      %v1734 = vld [vmem:[%s1414 + $0x129] sm:$0xff]
      %v1735 = vld [vmem:[%s1414 + $0x139] sm:$0xff]
      %v1736 = vld [vmem:[%s1414 + $0x141] sm:$0xff]
      %v1737 = vld [vmem:[%s1414 + $0x151] sm:$0xff]
      %v1738 = vld [vmem:[%s1414 + $0x159] sm:$0xff]
      %v1739 = vld [vmem:[%s1414 + $0x169] sm:$0xff]
      %v1740 = vld [vmem:[%s1414 + $0x171] sm:$0xff]
      %v1741 = vpack.c.bf16 %v1710, %v1709
      %v1742 = vpack.c.bf16 %v1712, %v1711
      %v1743 = vpack.c.bf16 %v1714, %v1713
      %v1744 = vpack.c.bf16 %v1716, %v1715
      %v1745 = vpack.c.bf16 %v1718, %v1717
      %v1746 = vpack.c.bf16 %v1720, %v1719
      %v1747 = vpack.c.bf16 %v1722, %v1721
      %v1748 = vpack.c.bf16 %v1724, %v1723
      %v1749 = vpack.c.bf16 %v1726, %v1725
      %v1750 = vpack.c.bf16 %v1728, %v1727
      %v1751 = vpack.c.bf16 %v1730, %v1729
      %v1752 = vpack.c.bf16 %v1732, %v1731
      %v1753 = vpack.c.bf16 %v1734, %v1733
      %v1754 = vpack.c.bf16 %v1736, %v1735
      %v1755 = vpack.c.bf16 %v1738, %v1737
      %v1756 = vpack.c.bf16 %v1740, %v1739
      %s1757 = scalar_lea.vmem %s3, 8
      %v1758 = vld [vmem:[%s1757] sm:$0x3]
      %v1760 = vsel %vm540, %v1741, 0
      %v1763 = vsel %vm540, %v1742, 0
      %v1766 = vsel %vm540, %v1743, 0
      %v1769 = vsel %vm540, %v1744, 0
      %v1772 = vsel %vm540, %v1745, 0
      %v1775 = vsel %vm540, %v1746, 0
      %v1778 = vsel %vm540, %v1747, 0
      %v1781 = vsel %vm540, %v1748, 0
      %v1784 = vsel %vm540, %v1749, 0
      %v1787 = vsel %vm540, %v1750, 0
      %v1790 = vsel %vm540, %v1751, 0
      %v1793 = vsel %vm540, %v1752, 0
      %v1796 = vsel %vm540, %v1753, 0
      %v1799 = vsel %vm540, %v1754, 0
      %v1802 = vsel %vm540, %v1755, 0
      %v1805 = vsel %vm540, %v1756, 0
      %v1808 = vsel %vm743, %v1758, 0
      %1810 = vmatprep.subr.bf16.mxu0 0
      %1811 = vmatpush1.bf16.msra.mxu0 0
      %1812 = vmatprep.subr.bf16.mxu0 0
      %1813 = vmatpush1.bf16.msra.mxu0 0
      %1814 = vmatprep.subr.bf16.mxu0 0
      %1815 = vmatpush1.bf16.msra.mxu0 0
      %1816 = vmatprep.subr.bf16.mxu0 0
      %1817 = vmatpush1.bf16.msra.mxu0 0
      %1818 = vmatprep.subr.bf16.mxu0 0
      %1819 = vmatpush1.bf16.msra.mxu0 0
      %1820 = vmatprep.subr.bf16.mxu0 0
      %1821 = vmatpush1.bf16.msra.mxu0 0
      %1822 = vmatprep.subr.bf16.mxu0 0
      %1823 = vmatpush1.bf16.msra.mxu0 0
      %1824 = vmatprep.subr.bf16.mxu0 0
      %1825 = vmatpush1.bf16.msra.mxu0 %v1808
      %1826 = vmatprep.subr.bf16.mxu0 0
      %1827 = vmatpush2.bf16.msra.mxu0 0
      %1828 = vmatprep.subr.bf16.mxu0 0
      %1829 = vmatpush2.bf16.msra.mxu0 0
      %1830 = vmatprep.subr.bf16.mxu0 0
      %1831 = vmatpush2.bf16.msra.mxu0 0
      %1832 = vmatprep.subr.bf16.mxu0 0
      %1833 = vmatpush2.bf16.msra.mxu0 0
      %1834 = vmatprep.subr.bf16.mxu0 0
      %1835 = vmatpush2.bf16.msra.mxu0 0
      %1836 = vmatprep.subr.bf16.mxu0 0
      %1837 = vmatpush2.bf16.msra.mxu0 0
      %1838 = vmatprep.subr.bf16.mxu0 0
      %1839 = vmatpush2.bf16.msra.mxu0 0
      %1840 = vmatprep.subr.bf16.mxu0 0
      %1841 = vmatpush2.bf16.msra.mxu0 0
      %1842 = vmatprep.mubr.bf16.mxu0 0
      %1843 = vmatmul.mubr.bf16.gmra.mxu0 %v1760
      %v1844 = vpop.f32.mrf.mxu0
      %v1845 = vadd.f32 0.0, %v1844
      %v1846 = vpop.f32.mrf.mxu0
      %v1847 = vpop.f32.mrf.mxu0
      %v1848 = vadd.f32 0.0, %v1847
      %v1849 = vpop.f32.mrf.mxu0
      %1850 = vmatprep.mubr.bf16.mxu0 0
      %1851 = vmatmul.mubr.bf16.gmra.mxu0 %v1763
      %v1852 = vpop.f32.mrf.mxu0
      %v1853 = vadd.f32 0.0, %v1852
      %v1854 = vpop.f32.mrf.mxu0
      %v1855 = vpop.f32.mrf.mxu0
      %v1856 = vadd.f32 0.0, %v1855
      %v1857 = vpop.f32.mrf.mxu0
      %1858 = vmatprep.mubr.bf16.mxu0 0
      %1859 = vmatmul.mubr.bf16.gmra.mxu0 %v1766
      %v1860 = vpop.f32.mrf.mxu0
      %v1861 = vadd.f32 0.0, %v1860
      %v1862 = vpop.f32.mrf.mxu0
      %v1863 = vpop.f32.mrf.mxu0
      %v1864 = vadd.f32 0.0, %v1863
      %v1865 = vpop.f32.mrf.mxu0
      %1866 = vmatprep.mubr.bf16.mxu0 0
      %1867 = vmatmul.mubr.bf16.gmra.mxu0 %v1769
      %v1868 = vpop.f32.mrf.mxu0
      %v1869 = vadd.f32 0.0, %v1868
      %v1870 = vpop.f32.mrf.mxu0
      %v1871 = vpop.f32.mrf.mxu0
      %v1872 = vadd.f32 0.0, %v1871
      %v1873 = vpop.f32.mrf.mxu0
      %1874 = vmatprep.mubr.bf16.mxu0 0
      %1875 = vmatmul.mubr.bf16.gmra.mxu0 %v1772
      %v1876 = vpop.f32.mrf.mxu0
      %v1877 = vadd.f32 0.0, %v1876
      %v1878 = vpop.f32.mrf.mxu0
      %v1879 = vpop.f32.mrf.mxu0
      %v1880 = vadd.f32 0.0, %v1879
      %v1881 = vpop.f32.mrf.mxu0
      %1882 = vmatprep.mubr.bf16.mxu0 0
      %1883 = vmatmul.mubr.bf16.gmra.mxu0 %v1775
      %v1884 = vpop.f32.mrf.mxu0
      %v1885 = vadd.f32 0.0, %v1884
      %v1886 = vpop.f32.mrf.mxu0
      %v1887 = vpop.f32.mrf.mxu0
      %v1888 = vadd.f32 0.0, %v1887
      %v1889 = vpop.f32.mrf.mxu0
      %1890 = vmatprep.mubr.bf16.mxu0 0
      %1891 = vmatmul.mubr.bf16.gmra.mxu0 %v1778
      %v1892 = vpop.f32.mrf.mxu0
      %v1893 = vadd.f32 0.0, %v1892
      %v1894 = vpop.f32.mrf.mxu0
      %v1895 = vpop.f32.mrf.mxu0
      %v1896 = vadd.f32 0.0, %v1895
      %v1897 = vpop.f32.mrf.mxu0
      %1898 = vmatprep.mubr.bf16.mxu0 0
      %1899 = vmatmul.mubr.bf16.gmra.mxu0 %v1781
      %v1900 = vpop.f32.mrf.mxu0
      %v1901 = vadd.f32 0.0, %v1900
      %v1902 = vpop.f32.mrf.mxu0
      %v1903 = vpop.f32.mrf.mxu0
      %v1904 = vadd.f32 0.0, %v1903
      %v1905 = vpop.f32.mrf.mxu0
      %1906 = vmatprep.mubr.bf16.mxu0 0
      %1907 = vmatmul.mubr.bf16.gmra.mxu0 %v1784
      %v1908 = vpop.f32.mrf.mxu0
      %v1909 = vadd.f32 0.0, %v1908
      %v1910 = vpop.f32.mrf.mxu0
      %v1911 = vpop.f32.mrf.mxu0
      %v1912 = vadd.f32 0.0, %v1911
      %v1913 = vpop.f32.mrf.mxu0
      %1914 = vmatprep.mubr.bf16.mxu0 0
      %1915 = vmatmul.mubr.bf16.gmra.mxu0 %v1787
      %v1916 = vpop.f32.mrf.mxu0
      %v1917 = vadd.f32 0.0, %v1916
      %v1918 = vpop.f32.mrf.mxu0
      %v1919 = vpop.f32.mrf.mxu0
      %v1920 = vadd.f32 0.0, %v1919
      %v1921 = vpop.f32.mrf.mxu0
      %1922 = vmatprep.mubr.bf16.mxu0 0
      %1923 = vmatmul.mubr.bf16.gmra.mxu0 %v1790
      %v1924 = vpop.f32.mrf.mxu0
      %v1925 = vadd.f32 0.0, %v1924
      %v1926 = vpop.f32.mrf.mxu0
      %v1927 = vpop.f32.mrf.mxu0
      %v1928 = vadd.f32 0.0, %v1927
      %v1929 = vpop.f32.mrf.mxu0
      %1930 = vmatprep.mubr.bf16.mxu0 0
      %1931 = vmatmul.mubr.bf16.gmra.mxu0 %v1793
      %v1932 = vpop.f32.mrf.mxu0
      %v1933 = vadd.f32 0.0, %v1932
      %v1934 = vpop.f32.mrf.mxu0
      %v1935 = vpop.f32.mrf.mxu0
      %v1936 = vadd.f32 0.0, %v1935
      %v1937 = vpop.f32.mrf.mxu0
      %1938 = vmatprep.mubr.bf16.mxu0 0
      %1939 = vmatmul.mubr.bf16.gmra.mxu0 %v1796
      %v1940 = vpop.f32.mrf.mxu0
      %v1941 = vadd.f32 0.0, %v1940
      %v1942 = vpop.f32.mrf.mxu0
      %v1943 = vpop.f32.mrf.mxu0
      %v1944 = vadd.f32 0.0, %v1943
      %v1945 = vpop.f32.mrf.mxu0
      %1946 = vmatprep.mubr.bf16.mxu0 0
      %1947 = vmatmul.mubr.bf16.gmra.mxu0 %v1799
      %v1948 = vpop.f32.mrf.mxu0
      %v1949 = vadd.f32 0.0, %v1948
      %v1950 = vpop.f32.mrf.mxu0
      %v1951 = vpop.f32.mrf.mxu0
      %v1952 = vadd.f32 0.0, %v1951
      %v1953 = vpop.f32.mrf.mxu0
      %1954 = vmatprep.mubr.bf16.mxu0 0
      %1955 = vmatmul.mubr.bf16.gmra.mxu0 %v1802
      %v1956 = vpop.f32.mrf.mxu0
      %v1957 = vadd.f32 0.0, %v1956
      %v1958 = vpop.f32.mrf.mxu0
      %v1959 = vpop.f32.mrf.mxu0
      %v1960 = vadd.f32 0.0, %v1959
      %v1961 = vpop.f32.mrf.mxu0
      %1962 = vmatprep.mubr.bf16.mxu0 0
      %1963 = vmatmul.mubr.bf16.gmra.mxu0 %v1805
      %v1964 = vpop.f32.mrf.mxu0
      %v1965 = vadd.f32 0.0, %v1964
      %v1966 = vpop.f32.mrf.mxu0
      %v1967 = vpop.f32.mrf.mxu0
      %v1968 = vadd.f32 0.0, %v1967
      %v1969 = vpop.f32.mrf.mxu0
      %1970 = vdwg.mxu0
      %v1971 = vadd.f32 %v1677, %v1845
      %v1972 = vadd.f32 %v1678, %v1848
      %v1973 = vadd.f32 %v1679, %v1853
      %v1974 = vadd.f32 %v1680, %v1856
      %v1975 = vadd.f32 %v1681, %v1861
      %v1976 = vadd.f32 %v1682, %v1864
      %v1977 = vadd.f32 %v1683, %v1869
      %v1978 = vadd.f32 %v1684, %v1872
      %v1979 = vadd.f32 %v1685, %v1877
      %v1980 = vadd.f32 %v1686, %v1880
      %v1981 = vadd.f32 %v1687, %v1885
      %v1982 = vadd.f32 %v1688, %v1888
      %v1983 = vadd.f32 %v1689, %v1893
      %v1984 = vadd.f32 %v1690, %v1896
      %v1985 = vadd.f32 %v1691, %v1901
      %v1986 = vadd.f32 %v1692, %v1904
      %v1987 = vadd.f32 %v1693, %v1909
      %v1988 = vadd.f32 %v1694, %v1912
      %v1989 = vadd.f32 %v1695, %v1917
      %v1990 = vadd.f32 %v1696, %v1920
      %v1991 = vadd.f32 %v1697, %v1925
      %v1992 = vadd.f32 %v1698, %v1928
      %v1993 = vadd.f32 %v1699, %v1933
      %v1994 = vadd.f32 %v1700, %v1936
      %v1995 = vadd.f32 %v1701, %v1941
      %v1996 = vadd.f32 %v1702, %v1944
      %v1997 = vadd.f32 %v1703, %v1949
      %v1998 = vadd.f32 %v1704, %v1952
      %v1999 = vadd.f32 %v1705, %v1957
      %v2000 = vadd.f32 %v1706, %v1960
      %v2001 = vadd.f32 %v1707, %v1965
      %v2002 = vadd.f32 %v1708, %v1968
      %v2003 = vld [vmem:[%s1414 + $0x2] sm:$0xff]
      %v2004 = vld [vmem:[%s1414 + $0xa] sm:$0xff]
      %v2005 = vld [vmem:[%s1414 + $0x1a] sm:$0xff]
      %v2006 = vld [vmem:[%s1414 + $0x22] sm:$0xff]
      %v2007 = vld [vmem:[%s1414 + $0x32] sm:$0xff]
      %v2008 = vld [vmem:[%s1414 + $0x3a] sm:$0xff]
      %v2009 = vld [vmem:[%s1414 + $0x4a] sm:$0xff]
      %v2010 = vld [vmem:[%s1414 + $0x52] sm:$0xff]
      %v2011 = vld [vmem:[%s1414 + $0x62] sm:$0xff]
      %v2012 = vld [vmem:[%s1414 + $0x6a] sm:$0xff]
      %v2013 = vld [vmem:[%s1414 + $0x7a] sm:$0xff]
      %v2014 = vld [vmem:[%s1414 + $0x82] sm:$0xff]
      %v2015 = vld [vmem:[%s1414 + $0x92] sm:$0xff]
      %v2016 = vld [vmem:[%s1414 + $0x9a] sm:$0xff]
      %v2017 = vld [vmem:[%s1414 + $0xaa] sm:$0xff]
      %v2018 = vld [vmem:[%s1414 + $0xb2] sm:$0xff]
      %v2019 = vld [vmem:[%s1414 + $0xc2] sm:$0xff]
      %v2020 = vld [vmem:[%s1414 + $0xca] sm:$0xff]
      %v2021 = vld [vmem:[%s1414 + $0xda] sm:$0xff]
      %v2022 = vld [vmem:[%s1414 + $0xe2] sm:$0xff]
      %v2023 = vld [vmem:[%s1414 + $0xf2] sm:$0xff]
      %v2024 = vld [vmem:[%s1414 + $0xfa] sm:$0xff]
      %v2025 = vld [vmem:[%s1414 + $0x10a] sm:$0xff]
      %v2026 = vld [vmem:[%s1414 + $0x112] sm:$0xff]
      %v2027 = vld [vmem:[%s1414 + $0x122] sm:$0xff]
      %v2028 = vld [vmem:[%s1414 + $0x12a] sm:$0xff]
      %v2029 = vld [vmem:[%s1414 + $0x13a] sm:$0xff]
      %v2030 = vld [vmem:[%s1414 + $0x142] sm:$0xff]
      %v2031 = vld [vmem:[%s1414 + $0x152] sm:$0xff]
      %v2032 = vld [vmem:[%s1414 + $0x15a] sm:$0xff]
      %v2033 = vld [vmem:[%s1414 + $0x16a] sm:$0xff]
      %v2034 = vld [vmem:[%s1414 + $0x172] sm:$0xff]
      %v2035 = vpack.c.bf16 %v2004, %v2003
      %v2036 = vpack.c.bf16 %v2006, %v2005
      %v2037 = vpack.c.bf16 %v2008, %v2007
      %v2038 = vpack.c.bf16 %v2010, %v2009
      %v2039 = vpack.c.bf16 %v2012, %v2011
      %v2040 = vpack.c.bf16 %v2014, %v2013
      %v2041 = vpack.c.bf16 %v2016, %v2015
      %v2042 = vpack.c.bf16 %v2018, %v2017
      %v2043 = vpack.c.bf16 %v2020, %v2019
      %v2044 = vpack.c.bf16 %v2022, %v2021
      %v2045 = vpack.c.bf16 %v2024, %v2023
      %v2046 = vpack.c.bf16 %v2026, %v2025
      %v2047 = vpack.c.bf16 %v2028, %v2027
      %v2048 = vpack.c.bf16 %v2030, %v2029
      %v2049 = vpack.c.bf16 %v2032, %v2031
      %v2050 = vpack.c.bf16 %v2034, %v2033
      %s2051 = scalar_lea.vmem %s3, 10
      %v2052 = vld [vmem:[%s2051] sm:$0x3]
      %v2054 = vsel %vm540, %v2035, 0
      %v2057 = vsel %vm540, %v2036, 0
      %v2060 = vsel %vm540, %v2037, 0
      %v2063 = vsel %vm540, %v2038, 0
      %v2066 = vsel %vm540, %v2039, 0
      %v2069 = vsel %vm540, %v2040, 0
      %v2072 = vsel %vm540, %v2041, 0
      %v2075 = vsel %vm540, %v2042, 0
      %v2078 = vsel %vm540, %v2043, 0
      %v2081 = vsel %vm540, %v2044, 0
      %v2084 = vsel %vm540, %v2045, 0
      %v2087 = vsel %vm540, %v2046, 0
      %v2090 = vsel %vm540, %v2047, 0
      %v2093 = vsel %vm540, %v2048, 0
      %v2096 = vsel %vm540, %v2049, 0
      %v2099 = vsel %vm540, %v2050, 0
      %v2102 = vsel %vm743, %v2052, 0
      %2104 = vmatprep.subr.bf16.mxu0 0
      %2105 = vmatpush1.bf16.msra.mxu0 0
      %2106 = vmatprep.subr.bf16.mxu0 0
      %2107 = vmatpush1.bf16.msra.mxu0 0
      %2108 = vmatprep.subr.bf16.mxu0 0
      %2109 = vmatpush1.bf16.msra.mxu0 0
      %2110 = vmatprep.subr.bf16.mxu0 0
      %2111 = vmatpush1.bf16.msra.mxu0 0
      %2112 = vmatprep.subr.bf16.mxu0 0
      %2113 = vmatpush1.bf16.msra.mxu0 0
      %2114 = vmatprep.subr.bf16.mxu0 0
      %2115 = vmatpush1.bf16.msra.mxu0 0
      %2116 = vmatprep.subr.bf16.mxu0 0
      %2117 = vmatpush1.bf16.msra.mxu0 0
      %2118 = vmatprep.subr.bf16.mxu0 0
      %2119 = vmatpush1.bf16.msra.mxu0 %v2102
      %2120 = vmatprep.subr.bf16.mxu0 0
      %2121 = vmatpush2.bf16.msra.mxu0 0
      %2122 = vmatprep.subr.bf16.mxu0 0
      %2123 = vmatpush2.bf16.msra.mxu0 0
      %2124 = vmatprep.subr.bf16.mxu0 0
      %2125 = vmatpush2.bf16.msra.mxu0 0
      %2126 = vmatprep.subr.bf16.mxu0 0
      %2127 = vmatpush2.bf16.msra.mxu0 0
      %2128 = vmatprep.subr.bf16.mxu0 0
      %2129 = vmatpush2.bf16.msra.mxu0 0
      %2130 = vmatprep.subr.bf16.mxu0 0
      %2131 = vmatpush2.bf16.msra.mxu0 0
      %2132 = vmatprep.subr.bf16.mxu0 0
      %2133 = vmatpush2.bf16.msra.mxu0 0
      %2134 = vmatprep.subr.bf16.mxu0 0
      %2135 = vmatpush2.bf16.msra.mxu0 0
      %2136 = vmatprep.mubr.bf16.mxu0 0
      %2137 = vmatmul.mubr.bf16.gmra.mxu0 %v2054
      %v2138 = vpop.f32.mrf.mxu0
      %v2139 = vadd.f32 0.0, %v2138
      %v2140 = vpop.f32.mrf.mxu0
      %v2141 = vpop.f32.mrf.mxu0
      %v2142 = vadd.f32 0.0, %v2141
      %v2143 = vpop.f32.mrf.mxu0
      %2144 = vmatprep.mubr.bf16.mxu0 0
      %2145 = vmatmul.mubr.bf16.gmra.mxu0 %v2057
      %v2146 = vpop.f32.mrf.mxu0
      %v2147 = vadd.f32 0.0, %v2146
      %v2148 = vpop.f32.mrf.mxu0
      %v2149 = vpop.f32.mrf.mxu0
      %v2150 = vadd.f32 0.0, %v2149
      %v2151 = vpop.f32.mrf.mxu0
      %2152 = vmatprep.mubr.bf16.mxu0 0
      %2153 = vmatmul.mubr.bf16.gmra.mxu0 %v2060
      %v2154 = vpop.f32.mrf.mxu0
      %v2155 = vadd.f32 0.0, %v2154
      %v2156 = vpop.f32.mrf.mxu0
      %v2157 = vpop.f32.mrf.mxu0
      %v2158 = vadd.f32 0.0, %v2157
      %v2159 = vpop.f32.mrf.mxu0
      %2160 = vmatprep.mubr.bf16.mxu0 0
      %2161 = vmatmul.mubr.bf16.gmra.mxu0 %v2063
      %v2162 = vpop.f32.mrf.mxu0
      %v2163 = vadd.f32 0.0, %v2162
      %v2164 = vpop.f32.mrf.mxu0
      %v2165 = vpop.f32.mrf.mxu0
      %v2166 = vadd.f32 0.0, %v2165
      %v2167 = vpop.f32.mrf.mxu0
      %2168 = vmatprep.mubr.bf16.mxu0 0
      %2169 = vmatmul.mubr.bf16.gmra.mxu0 %v2066
      %v2170 = vpop.f32.mrf.mxu0
      %v2171 = vadd.f32 0.0, %v2170
      %v2172 = vpop.f32.mrf.mxu0
      %v2173 = vpop.f32.mrf.mxu0
      %v2174 = vadd.f32 0.0, %v2173
      %v2175 = vpop.f32.mrf.mxu0
      %2176 = vmatprep.mubr.bf16.mxu0 0
      %2177 = vmatmul.mubr.bf16.gmra.mxu0 %v2069
      %v2178 = vpop.f32.mrf.mxu0
      %v2179 = vadd.f32 0.0, %v2178
      %v2180 = vpop.f32.mrf.mxu0
      %v2181 = vpop.f32.mrf.mxu0
      %v2182 = vadd.f32 0.0, %v2181
      %v2183 = vpop.f32.mrf.mxu0
      %2184 = vmatprep.mubr.bf16.mxu0 0
      %2185 = vmatmul.mubr.bf16.gmra.mxu0 %v2072
      %v2186 = vpop.f32.mrf.mxu0
      %v2187 = vadd.f32 0.0, %v2186
      %v2188 = vpop.f32.mrf.mxu0
      %v2189 = vpop.f32.mrf.mxu0
      %v2190 = vadd.f32 0.0, %v2189
      %v2191 = vpop.f32.mrf.mxu0
      %2192 = vmatprep.mubr.bf16.mxu0 0
      %2193 = vmatmul.mubr.bf16.gmra.mxu0 %v2075
      %v2194 = vpop.f32.mrf.mxu0
      %v2195 = vadd.f32 0.0, %v2194
      %v2196 = vpop.f32.mrf.mxu0
      %v2197 = vpop.f32.mrf.mxu0
      %v2198 = vadd.f32 0.0, %v2197
      %v2199 = vpop.f32.mrf.mxu0
      %2200 = vmatprep.mubr.bf16.mxu0 0
      %2201 = vmatmul.mubr.bf16.gmra.mxu0 %v2078
      %v2202 = vpop.f32.mrf.mxu0
      %v2203 = vadd.f32 0.0, %v2202
      %v2204 = vpop.f32.mrf.mxu0
      %v2205 = vpop.f32.mrf.mxu0
      %v2206 = vadd.f32 0.0, %v2205
      %v2207 = vpop.f32.mrf.mxu0
      %2208 = vmatprep.mubr.bf16.mxu0 0
      %2209 = vmatmul.mubr.bf16.gmra.mxu0 %v2081
      %v2210 = vpop.f32.mrf.mxu0
      %v2211 = vadd.f32 0.0, %v2210
      %v2212 = vpop.f32.mrf.mxu0
      %v2213 = vpop.f32.mrf.mxu0
      %v2214 = vadd.f32 0.0, %v2213
      %v2215 = vpop.f32.mrf.mxu0
      %2216 = vmatprep.mubr.bf16.mxu0 0
      %2217 = vmatmul.mubr.bf16.gmra.mxu0 %v2084
      %v2218 = vpop.f32.mrf.mxu0
      %v2219 = vadd.f32 0.0, %v2218
      %v2220 = vpop.f32.mrf.mxu0
      %v2221 = vpop.f32.mrf.mxu0
      %v2222 = vadd.f32 0.0, %v2221
      %v2223 = vpop.f32.mrf.mxu0
      %2224 = vmatprep.mubr.bf16.mxu0 0
      %2225 = vmatmul.mubr.bf16.gmra.mxu0 %v2087
      %v2226 = vpop.f32.mrf.mxu0
      %v2227 = vadd.f32 0.0, %v2226
      %v2228 = vpop.f32.mrf.mxu0
      %v2229 = vpop.f32.mrf.mxu0
      %v2230 = vadd.f32 0.0, %v2229
      %v2231 = vpop.f32.mrf.mxu0
      %2232 = vmatprep.mubr.bf16.mxu0 0
      %2233 = vmatmul.mubr.bf16.gmra.mxu0 %v2090
      %v2234 = vpop.f32.mrf.mxu0
      %v2235 = vadd.f32 0.0, %v2234
      %v2236 = vpop.f32.mrf.mxu0
      %v2237 = vpop.f32.mrf.mxu0
      %v2238 = vadd.f32 0.0, %v2237
      %v2239 = vpop.f32.mrf.mxu0
      %2240 = vmatprep.mubr.bf16.mxu0 0
      %2241 = vmatmul.mubr.bf16.gmra.mxu0 %v2093
      %v2242 = vpop.f32.mrf.mxu0
      %v2243 = vadd.f32 0.0, %v2242
      %v2244 = vpop.f32.mrf.mxu0
      %v2245 = vpop.f32.mrf.mxu0
      %v2246 = vadd.f32 0.0, %v2245
      %v2247 = vpop.f32.mrf.mxu0
      %2248 = vmatprep.mubr.bf16.mxu0 0
      %2249 = vmatmul.mubr.bf16.gmra.mxu0 %v2096
      %v2250 = vpop.f32.mrf.mxu0
      %v2251 = vadd.f32 0.0, %v2250
      %v2252 = vpop.f32.mrf.mxu0
      %v2253 = vpop.f32.mrf.mxu0
      %v2254 = vadd.f32 0.0, %v2253
      %v2255 = vpop.f32.mrf.mxu0
      %2256 = vmatprep.mubr.bf16.mxu0 0
      %2257 = vmatmul.mubr.bf16.gmra.mxu0 %v2099
      %v2258 = vpop.f32.mrf.mxu0
      %v2259 = vadd.f32 0.0, %v2258
      %v2260 = vpop.f32.mrf.mxu0
      %v2261 = vpop.f32.mrf.mxu0
      %v2262 = vadd.f32 0.0, %v2261
      %v2263 = vpop.f32.mrf.mxu0
      %2264 = vdwg.mxu0
      %v2265 = vadd.f32 %v1971, %v2139
      %v2266 = vadd.f32 %v1972, %v2142
      %v2267 = vadd.f32 %v1973, %v2147
      %v2268 = vadd.f32 %v1974, %v2150
      %v2269 = vadd.f32 %v1975, %v2155
      %v2270 = vadd.f32 %v1976, %v2158
      %v2271 = vadd.f32 %v1977, %v2163
      %v2272 = vadd.f32 %v1978, %v2166
      %v2273 = vadd.f32 %v1979, %v2171
      %v2274 = vadd.f32 %v1980, %v2174
      %v2275 = vadd.f32 %v1981, %v2179
      %v2276 = vadd.f32 %v1982, %v2182
      %v2277 = vadd.f32 %v1983, %v2187
      %v2278 = vadd.f32 %v1984, %v2190
      %v2279 = vadd.f32 %v1985, %v2195
      %v2280 = vadd.f32 %v1986, %v2198
      %v2281 = vadd.f32 %v1987, %v2203
      %v2282 = vadd.f32 %v1988, %v2206
      %v2283 = vadd.f32 %v1989, %v2211
      %v2284 = vadd.f32 %v1990, %v2214
      %v2285 = vadd.f32 %v1991, %v2219
      %v2286 = vadd.f32 %v1992, %v2222
      %v2287 = vadd.f32 %v1993, %v2227
      %v2288 = vadd.f32 %v1994, %v2230
      %v2289 = vadd.f32 %v1995, %v2235
      %v2290 = vadd.f32 %v1996, %v2238
      %v2291 = vadd.f32 %v1997, %v2243
      %v2292 = vadd.f32 %v1998, %v2246
      %v2293 = vadd.f32 %v1999, %v2251
      %v2294 = vadd.f32 %v2000, %v2254
      %v2295 = vadd.f32 %v2001, %v2259
      %v2296 = vadd.f32 %v2002, %v2262
      %s2297 = scalar_lea.vmem [#allocation2], 48
      %v2298 = vld [vmem:[%s2297] sm:$0xff]
      %v2299 = vld [vmem:[%s2297 + $0x8] sm:$0xff]
      %v2300 = vld [vmem:[%s2297 + $0x18] sm:$0xff]
      %v2301 = vld [vmem:[%s2297 + $0x20] sm:$0xff]
      %v2302 = vld [vmem:[%s2297 + $0x30] sm:$0xff]
      %v2303 = vld [vmem:[%s2297 + $0x38] sm:$0xff]
      %v2304 = vld [vmem:[%s2297 + $0x48] sm:$0xff]
      %v2305 = vld [vmem:[%s2297 + $0x50] sm:$0xff]
      %v2306 = vld [vmem:[%s2297 + $0x60] sm:$0xff]
      %v2307 = vld [vmem:[%s2297 + $0x68] sm:$0xff]
      %v2308 = vld [vmem:[%s2297 + $0x78] sm:$0xff]
      %v2309 = vld [vmem:[%s2297 + $0x80] sm:$0xff]
      %v2310 = vld [vmem:[%s2297 + $0x90] sm:$0xff]
      %v2311 = vld [vmem:[%s2297 + $0x98] sm:$0xff]
      %v2312 = vld [vmem:[%s2297 + $0xa8] sm:$0xff]
      %v2313 = vld [vmem:[%s2297 + $0xb0] sm:$0xff]
      %v2314 = vld [vmem:[%s2297 + $0xc0] sm:$0xff]
      %v2315 = vld [vmem:[%s2297 + $0xc8] sm:$0xff]
      %v2316 = vld [vmem:[%s2297 + $0xd8] sm:$0xff]
      %v2317 = vld [vmem:[%s2297 + $0xe0] sm:$0xff]
      %v2318 = vld [vmem:[%s2297 + $0xf0] sm:$0xff]
      %v2319 = vld [vmem:[%s2297 + $0xf8] sm:$0xff]
      %v2320 = vld [vmem:[%s2297 + $0x108] sm:$0xff]
      %v2321 = vld [vmem:[%s2297 + $0x110] sm:$0xff]
      %v2322 = vld [vmem:[%s2297 + $0x120] sm:$0xff]
      %v2323 = vld [vmem:[%s2297 + $0x128] sm:$0xff]
      %v2324 = vld [vmem:[%s2297 + $0x138] sm:$0xff]
      %v2325 = vld [vmem:[%s2297 + $0x140] sm:$0xff]
      %v2326 = vld [vmem:[%s2297 + $0x150] sm:$0xff]
      %v2327 = vld [vmem:[%s2297 + $0x158] sm:$0xff]
      %v2328 = vld [vmem:[%s2297 + $0x168] sm:$0xff]
      %v2329 = vld [vmem:[%s2297 + $0x170] sm:$0xff]
      %v2330 = vpack.c.bf16 %v2299, %v2298
      %v2331 = vpack.c.bf16 %v2301, %v2300
      %v2332 = vpack.c.bf16 %v2303, %v2302
      %v2333 = vpack.c.bf16 %v2305, %v2304
      %v2334 = vpack.c.bf16 %v2307, %v2306
      %v2335 = vpack.c.bf16 %v2309, %v2308
      %v2336 = vpack.c.bf16 %v2311, %v2310
      %v2337 = vpack.c.bf16 %v2313, %v2312
      %v2338 = vpack.c.bf16 %v2315, %v2314
      %v2339 = vpack.c.bf16 %v2317, %v2316
      %v2340 = vpack.c.bf16 %v2319, %v2318
      %v2341 = vpack.c.bf16 %v2321, %v2320
      %v2342 = vpack.c.bf16 %v2323, %v2322
      %v2343 = vpack.c.bf16 %v2325, %v2324
      %v2344 = vpack.c.bf16 %v2327, %v2326
      %v2345 = vpack.c.bf16 %v2329, %v2328
      %s2346 = scalar_lea.vmem %s3, 12
      %v2347 = vld [vmem:[%s2346] sm:$0x3]
      %v2349 = vsel %vm540, %v2330, 0
      %v2352 = vsel %vm540, %v2331, 0
      %v2355 = vsel %vm540, %v2332, 0
      %v2358 = vsel %vm540, %v2333, 0
      %v2361 = vsel %vm540, %v2334, 0
      %v2364 = vsel %vm540, %v2335, 0
      %v2367 = vsel %vm540, %v2336, 0
      %v2370 = vsel %vm540, %v2337, 0
      %v2373 = vsel %vm540, %v2338, 0
      %v2376 = vsel %vm540, %v2339, 0
      %v2379 = vsel %vm540, %v2340, 0
      %v2382 = vsel %vm540, %v2341, 0
      %v2385 = vsel %vm540, %v2342, 0
      %v2388 = vsel %vm540, %v2343, 0
      %v2391 = vsel %vm540, %v2344, 0
      %v2394 = vsel %vm540, %v2345, 0
      %v2397 = vsel %vm743, %v2347, 0
      %2399 = vmatprep.subr.bf16.mxu0 0
      %2400 = vmatpush1.bf16.msra.mxu0 0
      %2401 = vmatprep.subr.bf16.mxu0 0
      %2402 = vmatpush1.bf16.msra.mxu0 0
      %2403 = vmatprep.subr.bf16.mxu0 0
      %2404 = vmatpush1.bf16.msra.mxu0 0
      %2405 = vmatprep.subr.bf16.mxu0 0
      %2406 = vmatpush1.bf16.msra.mxu0 0
      %2407 = vmatprep.subr.bf16.mxu0 0
      %2408 = vmatpush1.bf16.msra.mxu0 0
      %2409 = vmatprep.subr.bf16.mxu0 0
      %2410 = vmatpush1.bf16.msra.mxu0 0
      %2411 = vmatprep.subr.bf16.mxu0 0
      %2412 = vmatpush1.bf16.msra.mxu0 0
      %2413 = vmatprep.subr.bf16.mxu0 0
      %2414 = vmatpush1.bf16.msra.mxu0 %v2397
      %2415 = vmatprep.subr.bf16.mxu0 0
      %2416 = vmatpush2.bf16.msra.mxu0 0
      %2417 = vmatprep.subr.bf16.mxu0 0
      %2418 = vmatpush2.bf16.msra.mxu0 0
      %2419 = vmatprep.subr.bf16.mxu0 0
      %2420 = vmatpush2.bf16.msra.mxu0 0
      %2421 = vmatprep.subr.bf16.mxu0 0
      %2422 = vmatpush2.bf16.msra.mxu0 0
      %2423 = vmatprep.subr.bf16.mxu0 0
      %2424 = vmatpush2.bf16.msra.mxu0 0
      %2425 = vmatprep.subr.bf16.mxu0 0
      %2426 = vmatpush2.bf16.msra.mxu0 0
      %2427 = vmatprep.subr.bf16.mxu0 0
      %2428 = vmatpush2.bf16.msra.mxu0 0
      %2429 = vmatprep.subr.bf16.mxu0 0
      %2430 = vmatpush2.bf16.msra.mxu0 0
      %2431 = vmatprep.mubr.bf16.mxu0 0
      %2432 = vmatmul.mubr.bf16.gmra.mxu0 %v2349
      %v2433 = vpop.f32.mrf.mxu0
      %v2434 = vadd.f32 0.0, %v2433
      %v2435 = vpop.f32.mrf.mxu0
      %v2436 = vpop.f32.mrf.mxu0
      %v2437 = vadd.f32 0.0, %v2436
      %v2438 = vpop.f32.mrf.mxu0
      %2439 = vmatprep.mubr.bf16.mxu0 0
      %2440 = vmatmul.mubr.bf16.gmra.mxu0 %v2352
      %v2441 = vpop.f32.mrf.mxu0
      %v2442 = vadd.f32 0.0, %v2441
      %v2443 = vpop.f32.mrf.mxu0
      %v2444 = vpop.f32.mrf.mxu0
      %v2445 = vadd.f32 0.0, %v2444
      %v2446 = vpop.f32.mrf.mxu0
      %2447 = vmatprep.mubr.bf16.mxu0 0
      %2448 = vmatmul.mubr.bf16.gmra.mxu0 %v2355
      %v2449 = vpop.f32.mrf.mxu0
      %v2450 = vadd.f32 0.0, %v2449
      %v2451 = vpop.f32.mrf.mxu0
      %v2452 = vpop.f32.mrf.mxu0
      %v2453 = vadd.f32 0.0, %v2452
      %v2454 = vpop.f32.mrf.mxu0
      %2455 = vmatprep.mubr.bf16.mxu0 0
      %2456 = vmatmul.mubr.bf16.gmra.mxu0 %v2358
      %v2457 = vpop.f32.mrf.mxu0
      %v2458 = vadd.f32 0.0, %v2457
      %v2459 = vpop.f32.mrf.mxu0
      %v2460 = vpop.f32.mrf.mxu0
      %v2461 = vadd.f32 0.0, %v2460
      %v2462 = vpop.f32.mrf.mxu0
      %2463 = vmatprep.mubr.bf16.mxu0 0
      %2464 = vmatmul.mubr.bf16.gmra.mxu0 %v2361
      %v2465 = vpop.f32.mrf.mxu0
      %v2466 = vadd.f32 0.0, %v2465
      %v2467 = vpop.f32.mrf.mxu0
      %v2468 = vpop.f32.mrf.mxu0
      %v2469 = vadd.f32 0.0, %v2468
      %v2470 = vpop.f32.mrf.mxu0
      %2471 = vmatprep.mubr.bf16.mxu0 0
      %2472 = vmatmul.mubr.bf16.gmra.mxu0 %v2364
      %v2473 = vpop.f32.mrf.mxu0
      %v2474 = vadd.f32 0.0, %v2473
      %v2475 = vpop.f32.mrf.mxu0
      %v2476 = vpop.f32.mrf.mxu0
      %v2477 = vadd.f32 0.0, %v2476
      %v2478 = vpop.f32.mrf.mxu0
      %2479 = vmatprep.mubr.bf16.mxu0 0
      %2480 = vmatmul.mubr.bf16.gmra.mxu0 %v2367
      %v2481 = vpop.f32.mrf.mxu0
      %v2482 = vadd.f32 0.0, %v2481
      %v2483 = vpop.f32.mrf.mxu0
      %v2484 = vpop.f32.mrf.mxu0
      %v2485 = vadd.f32 0.0, %v2484
      %v2486 = vpop.f32.mrf.mxu0
      %2487 = vmatprep.mubr.bf16.mxu0 0
      %2488 = vmatmul.mubr.bf16.gmra.mxu0 %v2370
      %v2489 = vpop.f32.mrf.mxu0
      %v2490 = vadd.f32 0.0, %v2489
      %v2491 = vpop.f32.mrf.mxu0
      %v2492 = vpop.f32.mrf.mxu0
      %v2493 = vadd.f32 0.0, %v2492
      %v2494 = vpop.f32.mrf.mxu0
      %2495 = vmatprep.mubr.bf16.mxu0 0
      %2496 = vmatmul.mubr.bf16.gmra.mxu0 %v2373
      %v2497 = vpop.f32.mrf.mxu0
      %v2498 = vadd.f32 0.0, %v2497
      %v2499 = vpop.f32.mrf.mxu0
      %v2500 = vpop.f32.mrf.mxu0
      %v2501 = vadd.f32 0.0, %v2500
      %v2502 = vpop.f32.mrf.mxu0
      %2503 = vmatprep.mubr.bf16.mxu0 0
      %2504 = vmatmul.mubr.bf16.gmra.mxu0 %v2376
      %v2505 = vpop.f32.mrf.mxu0
      %v2506 = vadd.f32 0.0, %v2505
      %v2507 = vpop.f32.mrf.mxu0
      %v2508 = vpop.f32.mrf.mxu0
      %v2509 = vadd.f32 0.0, %v2508
      %v2510 = vpop.f32.mrf.mxu0
      %2511 = vmatprep.mubr.bf16.mxu0 0
      %2512 = vmatmul.mubr.bf16.gmra.mxu0 %v2379
      %v2513 = vpop.f32.mrf.mxu0
      %v2514 = vadd.f32 0.0, %v2513
      %v2515 = vpop.f32.mrf.mxu0
      %v2516 = vpop.f32.mrf.mxu0
      %v2517 = vadd.f32 0.0, %v2516
      %v2518 = vpop.f32.mrf.mxu0
      %2519 = vmatprep.mubr.bf16.mxu0 0
      %2520 = vmatmul.mubr.bf16.gmra.mxu0 %v2382
      %v2521 = vpop.f32.mrf.mxu0
      %v2522 = vadd.f32 0.0, %v2521
      %v2523 = vpop.f32.mrf.mxu0
      %v2524 = vpop.f32.mrf.mxu0
      %v2525 = vadd.f32 0.0, %v2524
      %v2526 = vpop.f32.mrf.mxu0
      %2527 = vmatprep.mubr.bf16.mxu0 0
      %2528 = vmatmul.mubr.bf16.gmra.mxu0 %v2385
      %v2529 = vpop.f32.mrf.mxu0
      %v2530 = vadd.f32 0.0, %v2529
      %v2531 = vpop.f32.mrf.mxu0
      %v2532 = vpop.f32.mrf.mxu0
      %v2533 = vadd.f32 0.0, %v2532
      %v2534 = vpop.f32.mrf.mxu0
      %2535 = vmatprep.mubr.bf16.mxu0 0
      %2536 = vmatmul.mubr.bf16.gmra.mxu0 %v2388
      %v2537 = vpop.f32.mrf.mxu0
      %v2538 = vadd.f32 0.0, %v2537
      %v2539 = vpop.f32.mrf.mxu0
      %v2540 = vpop.f32.mrf.mxu0
      %v2541 = vadd.f32 0.0, %v2540
      %v2542 = vpop.f32.mrf.mxu0
      %2543 = vmatprep.mubr.bf16.mxu0 0
      %2544 = vmatmul.mubr.bf16.gmra.mxu0 %v2391
      %v2545 = vpop.f32.mrf.mxu0
      %v2546 = vadd.f32 0.0, %v2545
      %v2547 = vpop.f32.mrf.mxu0
      %v2548 = vpop.f32.mrf.mxu0
      %v2549 = vadd.f32 0.0, %v2548
      %v2550 = vpop.f32.mrf.mxu0
      %2551 = vmatprep.mubr.bf16.mxu0 0
      %2552 = vmatmul.mubr.bf16.gmra.mxu0 %v2394
      %v2553 = vpop.f32.mrf.mxu0
      %v2554 = vadd.f32 0.0, %v2553
      %v2555 = vpop.f32.mrf.mxu0
      %v2556 = vpop.f32.mrf.mxu0
      %v2557 = vadd.f32 0.0, %v2556
      %v2558 = vpop.f32.mrf.mxu0
      %2559 = vdwg.mxu0
      %v2560 = vadd.f32 %v2265, %v2434
      %v2561 = vadd.f32 %v2266, %v2437
      %v2562 = vadd.f32 %v2267, %v2442
      %v2563 = vadd.f32 %v2268, %v2445
      %v2564 = vadd.f32 %v2269, %v2450
      %v2565 = vadd.f32 %v2270, %v2453
      %v2566 = vadd.f32 %v2271, %v2458
      %v2567 = vadd.f32 %v2272, %v2461
      %v2568 = vadd.f32 %v2273, %v2466
      %v2569 = vadd.f32 %v2274, %v2469
      %v2570 = vadd.f32 %v2275, %v2474
      %v2571 = vadd.f32 %v2276, %v2477
      %v2572 = vadd.f32 %v2277, %v2482
      %v2573 = vadd.f32 %v2278, %v2485
      %v2574 = vadd.f32 %v2279, %v2490
      %v2575 = vadd.f32 %v2280, %v2493
      %v2576 = vadd.f32 %v2281, %v2498
      %v2577 = vadd.f32 %v2282, %v2501
      %v2578 = vadd.f32 %v2283, %v2506
      %v2579 = vadd.f32 %v2284, %v2509
      %v2580 = vadd.f32 %v2285, %v2514
      %v2581 = vadd.f32 %v2286, %v2517
      %v2582 = vadd.f32 %v2287, %v2522
      %v2583 = vadd.f32 %v2288, %v2525
      %v2584 = vadd.f32 %v2289, %v2530
      %v2585 = vadd.f32 %v2290, %v2533
      %v2586 = vadd.f32 %v2291, %v2538
      %v2587 = vadd.f32 %v2292, %v2541
      %v2588 = vadd.f32 %v2293, %v2546
      %v2589 = vadd.f32 %v2294, %v2549
      %v2590 = vadd.f32 %v2295, %v2554
      %v2591 = vadd.f32 %v2296, %v2557
      %v2592 = vld [vmem:[%s2297 + $0x1] sm:$0xff]
      %v2593 = vld [vmem:[%s2297 + $0x9] sm:$0xff]
      %v2594 = vld [vmem:[%s2297 + $0x19] sm:$0xff]
      %v2595 = vld [vmem:[%s2297 + $0x21] sm:$0xff]
      %v2596 = vld [vmem:[%s2297 + $0x31] sm:$0xff]
      %v2597 = vld [vmem:[%s2297 + $0x39] sm:$0xff]
      %v2598 = vld [vmem:[%s2297 + $0x49] sm:$0xff]
      %v2599 = vld [vmem:[%s2297 + $0x51] sm:$0xff]
      %v2600 = vld [vmem:[%s2297 + $0x61] sm:$0xff]
      %v2601 = vld [vmem:[%s2297 + $0x69] sm:$0xff]
      %v2602 = vld [vmem:[%s2297 + $0x79] sm:$0xff]
      %v2603 = vld [vmem:[%s2297 + $0x81] sm:$0xff]
      %v2604 = vld [vmem:[%s2297 + $0x91] sm:$0xff]
      %v2605 = vld [vmem:[%s2297 + $0x99] sm:$0xff]
      %v2606 = vld [vmem:[%s2297 + $0xa9] sm:$0xff]
      %v2607 = vld [vmem:[%s2297 + $0xb1] sm:$0xff]
      %v2608 = vld [vmem:[%s2297 + $0xc1] sm:$0xff]
      %v2609 = vld [vmem:[%s2297 + $0xc9] sm:$0xff]
      %v2610 = vld [vmem:[%s2297 + $0xd9] sm:$0xff]
      %v2611 = vld [vmem:[%s2297 + $0xe1] sm:$0xff]
      %v2612 = vld [vmem:[%s2297 + $0xf1] sm:$0xff]
      %v2613 = vld [vmem:[%s2297 + $0xf9] sm:$0xff]
      %v2614 = vld [vmem:[%s2297 + $0x109] sm:$0xff]
      %v2615 = vld [vmem:[%s2297 + $0x111] sm:$0xff]
      %v2616 = vld [vmem:[%s2297 + $0x121] sm:$0xff]
      %v2617 = vld [vmem:[%s2297 + $0x129] sm:$0xff]
      %v2618 = vld [vmem:[%s2297 + $0x139] sm:$0xff]
      %v2619 = vld [vmem:[%s2297 + $0x141] sm:$0xff]
      %v2620 = vld [vmem:[%s2297 + $0x151] sm:$0xff]
      %v2621 = vld [vmem:[%s2297 + $0x159] sm:$0xff]
      %v2622 = vld [vmem:[%s2297 + $0x169] sm:$0xff]
      %v2623 = vld [vmem:[%s2297 + $0x171] sm:$0xff]
      %v2624 = vpack.c.bf16 %v2593, %v2592
      %v2625 = vpack.c.bf16 %v2595, %v2594
      %v2626 = vpack.c.bf16 %v2597, %v2596
      %v2627 = vpack.c.bf16 %v2599, %v2598
      %v2628 = vpack.c.bf16 %v2601, %v2600
      %v2629 = vpack.c.bf16 %v2603, %v2602
      %v2630 = vpack.c.bf16 %v2605, %v2604
      %v2631 = vpack.c.bf16 %v2607, %v2606
      %v2632 = vpack.c.bf16 %v2609, %v2608
      %v2633 = vpack.c.bf16 %v2611, %v2610
      %v2634 = vpack.c.bf16 %v2613, %v2612
      %v2635 = vpack.c.bf16 %v2615, %v2614
      %v2636 = vpack.c.bf16 %v2617, %v2616
      %v2637 = vpack.c.bf16 %v2619, %v2618
      %v2638 = vpack.c.bf16 %v2621, %v2620
      %v2639 = vpack.c.bf16 %v2623, %v2622
      %s2640 = scalar_lea.vmem %s3, 14
      %v2641 = vld [vmem:[%s2640] sm:$0x3]
      %v2643 = vsel %vm540, %v2624, 0
      %v2646 = vsel %vm540, %v2625, 0
      %v2649 = vsel %vm540, %v2626, 0
      %v2652 = vsel %vm540, %v2627, 0
      %v2655 = vsel %vm540, %v2628, 0
      %v2658 = vsel %vm540, %v2629, 0
      %v2661 = vsel %vm540, %v2630, 0
      %v2664 = vsel %vm540, %v2631, 0
      %v2667 = vsel %vm540, %v2632, 0
      %v2670 = vsel %vm540, %v2633, 0
      %v2673 = vsel %vm540, %v2634, 0
      %v2676 = vsel %vm540, %v2635, 0
      %v2679 = vsel %vm540, %v2636, 0
      %v2682 = vsel %vm540, %v2637, 0
      %v2685 = vsel %vm540, %v2638, 0
      %v2688 = vsel %vm540, %v2639, 0
      %v2691 = vsel %vm743, %v2641, 0
      %2693 = vmatprep.subr.bf16.mxu0 0
      %2694 = vmatpush1.bf16.msra.mxu0 0
      %2695 = vmatprep.subr.bf16.mxu0 0
      %2696 = vmatpush1.bf16.msra.mxu0 0
      %2697 = vmatprep.subr.bf16.mxu0 0
      %2698 = vmatpush1.bf16.msra.mxu0 0
      %2699 = vmatprep.subr.bf16.mxu0 0
      %2700 = vmatpush1.bf16.msra.mxu0 0
      %2701 = vmatprep.subr.bf16.mxu0 0
      %2702 = vmatpush1.bf16.msra.mxu0 0
      %2703 = vmatprep.subr.bf16.mxu0 0
      %2704 = vmatpush1.bf16.msra.mxu0 0
      %2705 = vmatprep.subr.bf16.mxu0 0
      %2706 = vmatpush1.bf16.msra.mxu0 0
      %2707 = vmatprep.subr.bf16.mxu0 0
      %2708 = vmatpush1.bf16.msra.mxu0 %v2691
      %2709 = vmatprep.subr.bf16.mxu0 0
      %2710 = vmatpush2.bf16.msra.mxu0 0
      %2711 = vmatprep.subr.bf16.mxu0 0
      %2712 = vmatpush2.bf16.msra.mxu0 0
      %2713 = vmatprep.subr.bf16.mxu0 0
      %2714 = vmatpush2.bf16.msra.mxu0 0
      %2715 = vmatprep.subr.bf16.mxu0 0
      %2716 = vmatpush2.bf16.msra.mxu0 0
      %2717 = vmatprep.subr.bf16.mxu0 0
      %2718 = vmatpush2.bf16.msra.mxu0 0
      %2719 = vmatprep.subr.bf16.mxu0 0
      %2720 = vmatpush2.bf16.msra.mxu0 0
      %2721 = vmatprep.subr.bf16.mxu0 0
      %2722 = vmatpush2.bf16.msra.mxu0 0
      %2723 = vmatprep.subr.bf16.mxu0 0
      %2724 = vmatpush2.bf16.msra.mxu0 0
      %2725 = vmatprep.mubr.bf16.mxu0 0
      %2726 = vmatmul.mubr.bf16.gmra.mxu0 %v2643
      %v2727 = vpop.f32.mrf.mxu0
      %v2728 = vadd.f32 0.0, %v2727
      %v2729 = vpop.f32.mrf.mxu0
      %v2730 = vpop.f32.mrf.mxu0
      %v2731 = vadd.f32 0.0, %v2730
      %v2732 = vpop.f32.mrf.mxu0
      %2733 = vmatprep.mubr.bf16.mxu0 0
      %2734 = vmatmul.mubr.bf16.gmra.mxu0 %v2646
      %v2735 = vpop.f32.mrf.mxu0
      %v2736 = vadd.f32 0.0, %v2735
      %v2737 = vpop.f32.mrf.mxu0
      %v2738 = vpop.f32.mrf.mxu0
      %v2739 = vadd.f32 0.0, %v2738
      %v2740 = vpop.f32.mrf.mxu0
      %2741 = vmatprep.mubr.bf16.mxu0 0
      %2742 = vmatmul.mubr.bf16.gmra.mxu0 %v2649
      %v2743 = vpop.f32.mrf.mxu0
      %v2744 = vadd.f32 0.0, %v2743
      %v2745 = vpop.f32.mrf.mxu0
      %v2746 = vpop.f32.mrf.mxu0
      %v2747 = vadd.f32 0.0, %v2746
      %v2748 = vpop.f32.mrf.mxu0
      %2749 = vmatprep.mubr.bf16.mxu0 0
      %2750 = vmatmul.mubr.bf16.gmra.mxu0 %v2652
      %v2751 = vpop.f32.mrf.mxu0
      %v2752 = vadd.f32 0.0, %v2751
      %v2753 = vpop.f32.mrf.mxu0
      %v2754 = vpop.f32.mrf.mxu0
      %v2755 = vadd.f32 0.0, %v2754
      %v2756 = vpop.f32.mrf.mxu0
      %2757 = vmatprep.mubr.bf16.mxu0 0
      %2758 = vmatmul.mubr.bf16.gmra.mxu0 %v2655
      %v2759 = vpop.f32.mrf.mxu0
      %v2760 = vadd.f32 0.0, %v2759
      %v2761 = vpop.f32.mrf.mxu0
      %v2762 = vpop.f32.mrf.mxu0
      %v2763 = vadd.f32 0.0, %v2762
      %v2764 = vpop.f32.mrf.mxu0
      %2765 = vmatprep.mubr.bf16.mxu0 0
      %2766 = vmatmul.mubr.bf16.gmra.mxu0 %v2658
      %v2767 = vpop.f32.mrf.mxu0
      %v2768 = vadd.f32 0.0, %v2767
      %v2769 = vpop.f32.mrf.mxu0
      %v2770 = vpop.f32.mrf.mxu0
      %v2771 = vadd.f32 0.0, %v2770
      %v2772 = vpop.f32.mrf.mxu0
      %2773 = vmatprep.mubr.bf16.mxu0 0
      %2774 = vmatmul.mubr.bf16.gmra.mxu0 %v2661
      %v2775 = vpop.f32.mrf.mxu0
      %v2776 = vadd.f32 0.0, %v2775
      %v2777 = vpop.f32.mrf.mxu0
      %v2778 = vpop.f32.mrf.mxu0
      %v2779 = vadd.f32 0.0, %v2778
      %v2780 = vpop.f32.mrf.mxu0
      %2781 = vmatprep.mubr.bf16.mxu0 0
      %2782 = vmatmul.mubr.bf16.gmra.mxu0 %v2664
      %v2783 = vpop.f32.mrf.mxu0
      %v2784 = vadd.f32 0.0, %v2783
      %v2785 = vpop.f32.mrf.mxu0
      %v2786 = vpop.f32.mrf.mxu0
      %v2787 = vadd.f32 0.0, %v2786
      %v2788 = vpop.f32.mrf.mxu0
      %2789 = vmatprep.mubr.bf16.mxu0 0
      %2790 = vmatmul.mubr.bf16.gmra.mxu0 %v2667
      %v2791 = vpop.f32.mrf.mxu0
      %v2792 = vadd.f32 0.0, %v2791
      %v2793 = vpop.f32.mrf.mxu0
      %v2794 = vpop.f32.mrf.mxu0
      %v2795 = vadd.f32 0.0, %v2794
      %v2796 = vpop.f32.mrf.mxu0
      %2797 = vmatprep.mubr.bf16.mxu0 0
      %2798 = vmatmul.mubr.bf16.gmra.mxu0 %v2670
      %v2799 = vpop.f32.mrf.mxu0
      %v2800 = vadd.f32 0.0, %v2799
      %v2801 = vpop.f32.mrf.mxu0
      %v2802 = vpop.f32.mrf.mxu0
      %v2803 = vadd.f32 0.0, %v2802
      %v2804 = vpop.f32.mrf.mxu0
      %2805 = vmatprep.mubr.bf16.mxu0 0
      %2806 = vmatmul.mubr.bf16.gmra.mxu0 %v2673
      %v2807 = vpop.f32.mrf.mxu0
      %v2808 = vadd.f32 0.0, %v2807
      %v2809 = vpop.f32.mrf.mxu0
      %v2810 = vpop.f32.mrf.mxu0
      %v2811 = vadd.f32 0.0, %v2810
      %v2812 = vpop.f32.mrf.mxu0
      %2813 = vmatprep.mubr.bf16.mxu0 0
      %2814 = vmatmul.mubr.bf16.gmra.mxu0 %v2676
      %v2815 = vpop.f32.mrf.mxu0
      %v2816 = vadd.f32 0.0, %v2815
      %v2817 = vpop.f32.mrf.mxu0
      %v2818 = vpop.f32.mrf.mxu0
      %v2819 = vadd.f32 0.0, %v2818
      %v2820 = vpop.f32.mrf.mxu0
      %2821 = vmatprep.mubr.bf16.mxu0 0
      %2822 = vmatmul.mubr.bf16.gmra.mxu0 %v2679
      %v2823 = vpop.f32.mrf.mxu0
      %v2824 = vadd.f32 0.0, %v2823
      %v2825 = vpop.f32.mrf.mxu0
      %v2826 = vpop.f32.mrf.mxu0
      %v2827 = vadd.f32 0.0, %v2826
      %v2828 = vpop.f32.mrf.mxu0
      %2829 = vmatprep.mubr.bf16.mxu0 0
      %2830 = vmatmul.mubr.bf16.gmra.mxu0 %v2682
      %v2831 = vpop.f32.mrf.mxu0
      %v2832 = vadd.f32 0.0, %v2831
      %v2833 = vpop.f32.mrf.mxu0
      %v2834 = vpop.f32.mrf.mxu0
      %v2835 = vadd.f32 0.0, %v2834
      %v2836 = vpop.f32.mrf.mxu0
      %2837 = vmatprep.mubr.bf16.mxu0 0
      %2838 = vmatmul.mubr.bf16.gmra.mxu0 %v2685
      %v2839 = vpop.f32.mrf.mxu0
      %v2840 = vadd.f32 0.0, %v2839
      %v2841 = vpop.f32.mrf.mxu0
      %v2842 = vpop.f32.mrf.mxu0
      %v2843 = vadd.f32 0.0, %v2842
      %v2844 = vpop.f32.mrf.mxu0
      %2845 = vmatprep.mubr.bf16.mxu0 0
      %2846 = vmatmul.mubr.bf16.gmra.mxu0 %v2688
      %v2847 = vpop.f32.mrf.mxu0
      %v2848 = vadd.f32 0.0, %v2847
      %v2849 = vpop.f32.mrf.mxu0
      %v2850 = vpop.f32.mrf.mxu0
      %v2851 = vadd.f32 0.0, %v2850
      %v2852 = vpop.f32.mrf.mxu0
      %2853 = vdwg.mxu0
      %v2854 = vadd.f32 %v2560, %v2728
      %v2855 = vadd.f32 %v2561, %v2731
      %v2856 = vadd.f32 %v2562, %v2736
      %v2857 = vadd.f32 %v2563, %v2739
      %v2858 = vadd.f32 %v2564, %v2744
      %v2859 = vadd.f32 %v2565, %v2747
      %v2860 = vadd.f32 %v2566, %v2752
      %v2861 = vadd.f32 %v2567, %v2755
      %v2862 = vadd.f32 %v2568, %v2760
      %v2863 = vadd.f32 %v2569, %v2763
      %v2864 = vadd.f32 %v2570, %v2768
      %v2865 = vadd.f32 %v2571, %v2771
      %v2866 = vadd.f32 %v2572, %v2776
      %v2867 = vadd.f32 %v2573, %v2779
      %v2868 = vadd.f32 %v2574, %v2784
      %v2869 = vadd.f32 %v2575, %v2787
      %v2870 = vadd.f32 %v2576, %v2792
      %v2871 = vadd.f32 %v2577, %v2795
      %v2872 = vadd.f32 %v2578, %v2800
      %v2873 = vadd.f32 %v2579, %v2803
      %v2874 = vadd.f32 %v2580, %v2808
      %v2875 = vadd.f32 %v2581, %v2811
      %v2876 = vadd.f32 %v2582, %v2816
      %v2877 = vadd.f32 %v2583, %v2819
      %v2878 = vadd.f32 %v2584, %v2824
      %v2879 = vadd.f32 %v2585, %v2827
      %v2880 = vadd.f32 %v2586, %v2832
      %v2881 = vadd.f32 %v2587, %v2835
      %v2882 = vadd.f32 %v2588, %v2840
      %v2883 = vadd.f32 %v2589, %v2843
      %v2884 = vadd.f32 %v2590, %v2848
      %v2885 = vadd.f32 %v2591, %v2851
      %v2886 = vld [vmem:[%s2297 + $0x2] sm:$0xff]
      %v2887 = vld [vmem:[%s2297 + $0xa] sm:$0xff]
      %v2888 = vld [vmem:[%s2297 + $0x1a] sm:$0xff]
      %v2889 = vld [vmem:[%s2297 + $0x22] sm:$0xff]
      %v2890 = vld [vmem:[%s2297 + $0x32] sm:$0xff]
      %v2891 = vld [vmem:[%s2297 + $0x3a] sm:$0xff]
      %v2892 = vld [vmem:[%s2297 + $0x4a] sm:$0xff]
      %v2893 = vld [vmem:[%s2297 + $0x52] sm:$0xff]
      %v2894 = vld [vmem:[%s2297 + $0x62] sm:$0xff]
      %v2895 = vld [vmem:[%s2297 + $0x6a] sm:$0xff]
      %v2896 = vld [vmem:[%s2297 + $0x7a] sm:$0xff]
      %v2897 = vld [vmem:[%s2297 + $0x82] sm:$0xff]
      %v2898 = vld [vmem:[%s2297 + $0x92] sm:$0xff]
      %v2899 = vld [vmem:[%s2297 + $0x9a] sm:$0xff]
      %v2900 = vld [vmem:[%s2297 + $0xaa] sm:$0xff]
      %v2901 = vld [vmem:[%s2297 + $0xb2] sm:$0xff]
      %v2902 = vld [vmem:[%s2297 + $0xc2] sm:$0xff]
      %v2903 = vld [vmem:[%s2297 + $0xca] sm:$0xff]
      %v2904 = vld [vmem:[%s2297 + $0xda] sm:$0xff]
      %v2905 = vld [vmem:[%s2297 + $0xe2] sm:$0xff]
      %v2906 = vld [vmem:[%s2297 + $0xf2] sm:$0xff]
      %v2907 = vld [vmem:[%s2297 + $0xfa] sm:$0xff]
      %v2908 = vld [vmem:[%s2297 + $0x10a] sm:$0xff]
      %v2909 = vld [vmem:[%s2297 + $0x112] sm:$0xff]
      %v2910 = vld [vmem:[%s2297 + $0x122] sm:$0xff]
      %v2911 = vld [vmem:[%s2297 + $0x12a] sm:$0xff]
      %v2912 = vld [vmem:[%s2297 + $0x13a] sm:$0xff]
      %v2913 = vld [vmem:[%s2297 + $0x142] sm:$0xff]
      %v2914 = vld [vmem:[%s2297 + $0x152] sm:$0xff]
      %v2915 = vld [vmem:[%s2297 + $0x15a] sm:$0xff]
      %v2916 = vld [vmem:[%s2297 + $0x16a] sm:$0xff]
      %v2917 = vld [vmem:[%s2297 + $0x172] sm:$0xff]
      %v2918 = vpack.c.bf16 %v2887, %v2886
      %v2919 = vpack.c.bf16 %v2889, %v2888
      %v2920 = vpack.c.bf16 %v2891, %v2890
      %v2921 = vpack.c.bf16 %v2893, %v2892
      %v2922 = vpack.c.bf16 %v2895, %v2894
      %v2923 = vpack.c.bf16 %v2897, %v2896
      %v2924 = vpack.c.bf16 %v2899, %v2898
      %v2925 = vpack.c.bf16 %v2901, %v2900
      %v2926 = vpack.c.bf16 %v2903, %v2902
      %v2927 = vpack.c.bf16 %v2905, %v2904
      %v2928 = vpack.c.bf16 %v2907, %v2906
      %v2929 = vpack.c.bf16 %v2909, %v2908
      %v2930 = vpack.c.bf16 %v2911, %v2910
      %v2931 = vpack.c.bf16 %v2913, %v2912
      %v2932 = vpack.c.bf16 %v2915, %v2914
      %v2933 = vpack.c.bf16 %v2917, %v2916
      %s2934 = scalar_lea.vmem %s3, 16
      %v2935 = vld [vmem:[%s2934] sm:$0x3]
      %v2937 = vsel %vm540, %v2918, 0
      %v2940 = vsel %vm540, %v2919, 0
      %v2943 = vsel %vm540, %v2920, 0
      %v2946 = vsel %vm540, %v2921, 0
      %v2949 = vsel %vm540, %v2922, 0
      %v2952 = vsel %vm540, %v2923, 0
      %v2955 = vsel %vm540, %v2924, 0
      %v2958 = vsel %vm540, %v2925, 0
      %v2961 = vsel %vm540, %v2926, 0
      %v2964 = vsel %vm540, %v2927, 0
      %v2967 = vsel %vm540, %v2928, 0
      %v2970 = vsel %vm540, %v2929, 0
      %v2973 = vsel %vm540, %v2930, 0
      %v2976 = vsel %vm540, %v2931, 0
      %v2979 = vsel %vm540, %v2932, 0
      %v2982 = vsel %vm540, %v2933, 0
      %v2985 = vsel %vm743, %v2935, 0
      %2987 = vmatprep.subr.bf16.mxu0 0
      %2988 = vmatpush1.bf16.msra.mxu0 0
      %2989 = vmatprep.subr.bf16.mxu0 0
      %2990 = vmatpush1.bf16.msra.mxu0 0
      %2991 = vmatprep.subr.bf16.mxu0 0
      %2992 = vmatpush1.bf16.msra.mxu0 0
      %2993 = vmatprep.subr.bf16.mxu0 0
      %2994 = vmatpush1.bf16.msra.mxu0 0
      %2995 = vmatprep.subr.bf16.mxu0 0
      %2996 = vmatpush1.bf16.msra.mxu0 0
      %2997 = vmatprep.subr.bf16.mxu0 0
      %2998 = vmatpush1.bf16.msra.mxu0 0
      %2999 = vmatprep.subr.bf16.mxu0 0
      %3000 = vmatpush1.bf16.msra.mxu0 0
      %3001 = vmatprep.subr.bf16.mxu0 0
      %3002 = vmatpush1.bf16.msra.mxu0 %v2985
      %3003 = vmatprep.subr.bf16.mxu0 0
      %3004 = vmatpush2.bf16.msra.mxu0 0
      %3005 = vmatprep.subr.bf16.mxu0 0
      %3006 = vmatpush2.bf16.msra.mxu0 0
      %3007 = vmatprep.subr.bf16.mxu0 0
      %3008 = vmatpush2.bf16.msra.mxu0 0
      %3009 = vmatprep.subr.bf16.mxu0 0
      %3010 = vmatpush2.bf16.msra.mxu0 0
      %3011 = vmatprep.subr.bf16.mxu0 0
      %3012 = vmatpush2.bf16.msra.mxu0 0
      %3013 = vmatprep.subr.bf16.mxu0 0
      %3014 = vmatpush2.bf16.msra.mxu0 0
      %3015 = vmatprep.subr.bf16.mxu0 0
      %3016 = vmatpush2.bf16.msra.mxu0 0
      %3017 = vmatprep.subr.bf16.mxu0 0
      %3018 = vmatpush2.bf16.msra.mxu0 0
      %3019 = vmatprep.mubr.bf16.mxu0 0
      %3020 = vmatmul.mubr.bf16.gmra.mxu0 %v2937
      %v3021 = vpop.f32.mrf.mxu0
      %v3022 = vadd.f32 0.0, %v3021
      %v3023 = vpop.f32.mrf.mxu0
      %v3024 = vpop.f32.mrf.mxu0
      %v3025 = vadd.f32 0.0, %v3024
      %v3026 = vpop.f32.mrf.mxu0
      %3027 = vmatprep.mubr.bf16.mxu0 0
      %3028 = vmatmul.mubr.bf16.gmra.mxu0 %v2940
      %v3029 = vpop.f32.mrf.mxu0
      %v3030 = vadd.f32 0.0, %v3029
      %v3031 = vpop.f32.mrf.mxu0
      %v3032 = vpop.f32.mrf.mxu0
      %v3033 = vadd.f32 0.0, %v3032
      %v3034 = vpop.f32.mrf.mxu0
      %3035 = vmatprep.mubr.bf16.mxu0 0
      %3036 = vmatmul.mubr.bf16.gmra.mxu0 %v2943
      %v3037 = vpop.f32.mrf.mxu0
      %v3038 = vadd.f32 0.0, %v3037
      %v3039 = vpop.f32.mrf.mxu0
      %v3040 = vpop.f32.mrf.mxu0
      %v3041 = vadd.f32 0.0, %v3040
      %v3042 = vpop.f32.mrf.mxu0
      %3043 = vmatprep.mubr.bf16.mxu0 0
      %3044 = vmatmul.mubr.bf16.gmra.mxu0 %v2946
      %v3045 = vpop.f32.mrf.mxu0
      %v3046 = vadd.f32 0.0, %v3045
      %v3047 = vpop.f32.mrf.mxu0
      %v3048 = vpop.f32.mrf.mxu0
      %v3049 = vadd.f32 0.0, %v3048
      %v3050 = vpop.f32.mrf.mxu0
      %3051 = vmatprep.mubr.bf16.mxu0 0
      %3052 = vmatmul.mubr.bf16.gmra.mxu0 %v2949
      %v3053 = vpop.f32.mrf.mxu0
      %v3054 = vadd.f32 0.0, %v3053
      %v3055 = vpop.f32.mrf.mxu0
      %v3056 = vpop.f32.mrf.mxu0
      %v3057 = vadd.f32 0.0, %v3056
      %v3058 = vpop.f32.mrf.mxu0
      %3059 = vmatprep.mubr.bf16.mxu0 0
      %3060 = vmatmul.mubr.bf16.gmra.mxu0 %v2952
      %v3061 = vpop.f32.mrf.mxu0
      %v3062 = vadd.f32 0.0, %v3061
      %v3063 = vpop.f32.mrf.mxu0
      %v3064 = vpop.f32.mrf.mxu0
      %v3065 = vadd.f32 0.0, %v3064
      %v3066 = vpop.f32.mrf.mxu0
      %3067 = vmatprep.mubr.bf16.mxu0 0
      %3068 = vmatmul.mubr.bf16.gmra.mxu0 %v2955
      %v3069 = vpop.f32.mrf.mxu0
      %v3070 = vadd.f32 0.0, %v3069
      %v3071 = vpop.f32.mrf.mxu0
      %v3072 = vpop.f32.mrf.mxu0
      %v3073 = vadd.f32 0.0, %v3072
      %v3074 = vpop.f32.mrf.mxu0
      %3075 = vmatprep.mubr.bf16.mxu0 0
      %3076 = vmatmul.mubr.bf16.gmra.mxu0 %v2958
      %v3077 = vpop.f32.mrf.mxu0
      %v3078 = vadd.f32 0.0, %v3077
      %v3079 = vpop.f32.mrf.mxu0
      %v3080 = vpop.f32.mrf.mxu0
      %v3081 = vadd.f32 0.0, %v3080
      %v3082 = vpop.f32.mrf.mxu0
      %3083 = vmatprep.mubr.bf16.mxu0 0
      %3084 = vmatmul.mubr.bf16.gmra.mxu0 %v2961
      %v3085 = vpop.f32.mrf.mxu0
      %v3086 = vadd.f32 0.0, %v3085
      %v3087 = vpop.f32.mrf.mxu0
      %v3088 = vpop.f32.mrf.mxu0
      %v3089 = vadd.f32 0.0, %v3088
      %v3090 = vpop.f32.mrf.mxu0
      %3091 = vmatprep.mubr.bf16.mxu0 0
      %3092 = vmatmul.mubr.bf16.gmra.mxu0 %v2964
      %v3093 = vpop.f32.mrf.mxu0
      %v3094 = vadd.f32 0.0, %v3093
      %v3095 = vpop.f32.mrf.mxu0
      %v3096 = vpop.f32.mrf.mxu0
      %v3097 = vadd.f32 0.0, %v3096
      %v3098 = vpop.f32.mrf.mxu0
      %3099 = vmatprep.mubr.bf16.mxu0 0
      %3100 = vmatmul.mubr.bf16.gmra.mxu0 %v2967
      %v3101 = vpop.f32.mrf.mxu0
      %v3102 = vadd.f32 0.0, %v3101
      %v3103 = vpop.f32.mrf.mxu0
      %v3104 = vpop.f32.mrf.mxu0
      %v3105 = vadd.f32 0.0, %v3104
      %v3106 = vpop.f32.mrf.mxu0
      %3107 = vmatprep.mubr.bf16.mxu0 0
      %3108 = vmatmul.mubr.bf16.gmra.mxu0 %v2970
      %v3109 = vpop.f32.mrf.mxu0
      %v3110 = vadd.f32 0.0, %v3109
      %v3111 = vpop.f32.mrf.mxu0
      %v3112 = vpop.f32.mrf.mxu0
      %v3113 = vadd.f32 0.0, %v3112
      %v3114 = vpop.f32.mrf.mxu0
      %3115 = vmatprep.mubr.bf16.mxu0 0
      %3116 = vmatmul.mubr.bf16.gmra.mxu0 %v2973
      %v3117 = vpop.f32.mrf.mxu0
      %v3118 = vadd.f32 0.0, %v3117
      %v3119 = vpop.f32.mrf.mxu0
      %v3120 = vpop.f32.mrf.mxu0
      %v3121 = vadd.f32 0.0, %v3120
      %v3122 = vpop.f32.mrf.mxu0
      %3123 = vmatprep.mubr.bf16.mxu0 0
      %3124 = vmatmul.mubr.bf16.gmra.mxu0 %v2976
      %v3125 = vpop.f32.mrf.mxu0
      %v3126 = vadd.f32 0.0, %v3125
      %v3127 = vpop.f32.mrf.mxu0
      %v3128 = vpop.f32.mrf.mxu0
      %v3129 = vadd.f32 0.0, %v3128
      %v3130 = vpop.f32.mrf.mxu0
      %3131 = vmatprep.mubr.bf16.mxu0 0
      %3132 = vmatmul.mubr.bf16.gmra.mxu0 %v2979
      %v3133 = vpop.f32.mrf.mxu0
      %v3134 = vadd.f32 0.0, %v3133
      %v3135 = vpop.f32.mrf.mxu0
      %v3136 = vpop.f32.mrf.mxu0
      %v3137 = vadd.f32 0.0, %v3136
      %v3138 = vpop.f32.mrf.mxu0
      %3139 = vmatprep.mubr.bf16.mxu0 0
      %3140 = vmatmul.mubr.bf16.gmra.mxu0 %v2982
      %v3141 = vpop.f32.mrf.mxu0
      %v3142 = vadd.f32 0.0, %v3141
      %v3143 = vpop.f32.mrf.mxu0
      %v3144 = vpop.f32.mrf.mxu0
      %v3145 = vadd.f32 0.0, %v3144
      %v3146 = vpop.f32.mrf.mxu0
      %3147 = vdwg.mxu0
      %v3148 = vadd.f32 %v2854, %v3022
      %v3149 = vadd.f32 %v2855, %v3025
      %v3150 = vadd.f32 %v2856, %v3030
      %v3151 = vadd.f32 %v2857, %v3033
      %v3152 = vadd.f32 %v2858, %v3038
      %v3153 = vadd.f32 %v2859, %v3041
      %v3154 = vadd.f32 %v2860, %v3046
      %v3155 = vadd.f32 %v2861, %v3049
      %v3156 = vadd.f32 %v2862, %v3054
      %v3157 = vadd.f32 %v2863, %v3057
      %v3158 = vadd.f32 %v2864, %v3062
      %v3159 = vadd.f32 %v2865, %v3065
      %v3160 = vadd.f32 %v2866, %v3070
      %v3161 = vadd.f32 %v2867, %v3073
      %v3162 = vadd.f32 %v2868, %v3078
      %v3163 = vadd.f32 %v2869, %v3081
      %v3164 = vadd.f32 %v2870, %v3086
      %v3165 = vadd.f32 %v2871, %v3089
      %v3166 = vadd.f32 %v2872, %v3094
      %v3167 = vadd.f32 %v2873, %v3097
      %v3168 = vadd.f32 %v2874, %v3102
      %v3169 = vadd.f32 %v2875, %v3105
      %v3170 = vadd.f32 %v2876, %v3110
      %v3171 = vadd.f32 %v2877, %v3113
      %v3172 = vadd.f32 %v2878, %v3118
      %v3173 = vadd.f32 %v2879, %v3121
      %v3174 = vadd.f32 %v2880, %v3126
      %v3175 = vadd.f32 %v2881, %v3129
      %v3176 = vadd.f32 %v2882, %v3134
      %v3177 = vadd.f32 %v2883, %v3137
      %v3178 = vadd.f32 %v2884, %v3142
      %v3179 = vadd.f32 %v2885, %v3145
      %3180 = vst.msk [vmem:[%s231] sm:$0xff] %vm540, %v3148
      %3181 = vst.msk [vmem:[%s231 + $0x8] sm:$0xff] %vm540, %v3149
      %3182 = vst.msk [vmem:[%s231 + $0x10] sm:$0xff] %vm540, %v3150
      %3183 = vst.msk [vmem:[%s231 + $0x18] sm:$0xff] %vm540, %v3151
      %3184 = vst.msk [vmem:[%s231 + $0x20] sm:$0xff] %vm540, %v3152
      %3185 = vst.msk [vmem:[%s231 + $0x28] sm:$0xff] %vm540, %v3153
      %3186 = vst.msk [vmem:[%s231 + $0x30] sm:$0xff] %vm540, %v3154
      %3187 = vst.msk [vmem:[%s231 + $0x38] sm:$0xff] %vm540, %v3155
      %3188 = vst.msk [vmem:[%s231 + $0x40] sm:$0xff] %vm540, %v3156
      %3189 = vst.msk [vmem:[%s231 + $0x48] sm:$0xff] %vm540, %v3157
      %3190 = vst.msk [vmem:[%s231 + $0x50] sm:$0xff] %vm540, %v3158
      %3191 = vst.msk [vmem:[%s231 + $0x58] sm:$0xff] %vm540, %v3159
      %3192 = vst.msk [vmem:[%s231 + $0x60] sm:$0xff] %vm540, %v3160
      %3193 = vst.msk [vmem:[%s231 + $0x68] sm:$0xff] %vm540, %v3161
      %3194 = vst.msk [vmem:[%s231 + $0x70] sm:$0xff] %vm540, %v3162
      %3195 = vst.msk [vmem:[%s231 + $0x78] sm:$0xff] %vm540, %v3163
      %3196 = vst.msk [vmem:[%s231 + $0x80] sm:$0xff] %vm540, %v3164
      %3197 = vst.msk [vmem:[%s231 + $0x88] sm:$0xff] %vm540, %v3165
      %3198 = vst.msk [vmem:[%s231 + $0x90] sm:$0xff] %vm540, %v3166
      %3199 = vst.msk [vmem:[%s231 + $0x98] sm:$0xff] %vm540, %v3167
      %3200 = vst.msk [vmem:[%s231 + $0xa0] sm:$0xff] %vm540, %v3168
      %3201 = vst.msk [vmem:[%s231 + $0xa8] sm:$0xff] %vm540, %v3169
      %3202 = vst.msk [vmem:[%s231 + $0xb0] sm:$0xff] %vm540, %v3170
      %3203 = vst.msk [vmem:[%s231 + $0xb8] sm:$0xff] %vm540, %v3171
      %3204 = vst.msk [vmem:[%s231 + $0xc0] sm:$0xff] %vm540, %v3172
      %3205 = vst.msk [vmem:[%s231 + $0xc8] sm:$0xff] %vm540, %v3173
      %3206 = vst.msk [vmem:[%s231 + $0xd0] sm:$0xff] %vm540, %v3174
      %3207 = vst.msk [vmem:[%s231 + $0xd8] sm:$0xff] %vm540, %v3175
      %3208 = vst.msk [vmem:[%s231 + $0xe0] sm:$0xff] %vm540, %v3176
      %3209 = vst.msk [vmem:[%s231 + $0xe8] sm:$0xff] %vm540, %v3177
      %3210 = vst.msk [vmem:[%s231 + $0xf0] sm:$0xff] %vm540, %v3178
      %3211 = vst.msk [vmem:[%s231 + $0xf8] sm:$0xff] %vm540, %v3179
      %v3212 = vsel %vm540, %v3148, 0.0
      %v3213 = vsel %vm540, %v3149, 0.0
      %v3214 = vadd.f32 %v3212, %v3213
      %v3215 = vsel %vm540, %v3150, 0.0
      %v3216 = vadd.f32 %v3214, %v3215
      %v3217 = vsel %vm540, %v3151, 0.0
      %v3218 = vadd.f32 %v3216, %v3217
      %v3219 = vsel %vm540, %v3152, 0.0
      %v3220 = vadd.f32 %v3218, %v3219
      %v3221 = vsel %vm540, %v3153, 0.0
      %v3222 = vadd.f32 %v3220, %v3221
      %v3223 = vsel %vm540, %v3154, 0.0
      %v3224 = vadd.f32 %v3222, %v3223
      %v3225 = vsel %vm540, %v3155, 0.0
      %v3226 = vadd.f32 %v3224, %v3225
      %v3227 = vsel %vm540, %v3156, 0.0
      %v3228 = vadd.f32 %v3226, %v3227
      %v3229 = vsel %vm540, %v3157, 0.0
      %v3230 = vadd.f32 %v3228, %v3229
      %v3231 = vsel %vm540, %v3158, 0.0
      %v3232 = vadd.f32 %v3230, %v3231
      %v3233 = vsel %vm540, %v3159, 0.0
      %v3234 = vadd.f32 %v3232, %v3233
      %v3235 = vsel %vm540, %v3160, 0.0
      %v3236 = vadd.f32 %v3234, %v3235
      %v3237 = vsel %vm540, %v3161, 0.0
      %v3238 = vadd.f32 %v3236, %v3237
      %v3239 = vsel %vm540, %v3162, 0.0
      %v3240 = vadd.f32 %v3238, %v3239
      %v3241 = vsel %vm540, %v3163, 0.0
      %v3242 = vadd.f32 %v3240, %v3241
      %v3243 = vsel %vm540, %v3164, 0.0
      %v3244 = vadd.f32 %v3242, %v3243
      %v3245 = vsel %vm540, %v3165, 0.0
      %v3246 = vadd.f32 %v3244, %v3245
      %v3247 = vsel %vm540, %v3166, 0.0
      %v3248 = vadd.f32 %v3246, %v3247
      %v3249 = vsel %vm540, %v3167, 0.0
      %v3250 = vadd.f32 %v3248, %v3249
      %v3251 = vsel %vm540, %v3168, 0.0
      %v3252 = vadd.f32 %v3250, %v3251
      %v3253 = vsel %vm540, %v3169, 0.0
      %v3254 = vadd.f32 %v3252, %v3253
      %v3255 = vsel %vm540, %v3170, 0.0
      %v3256 = vadd.f32 %v3254, %v3255
      %v3257 = vsel %vm540, %v3171, 0.0
      %v3258 = vadd.f32 %v3256, %v3257
      %v3259 = vsel %vm540, %v3172, 0.0
      %v3260 = vadd.f32 %v3258, %v3259
      %v3261 = vsel %vm540, %v3173, 0.0
      %v3262 = vadd.f32 %v3260, %v3261
      %v3263 = vsel %vm540, %v3174, 0.0
      %v3264 = vadd.f32 %v3262, %v3263
      %v3265 = vsel %vm540, %v3175, 0.0
      %v3266 = vadd.f32 %v3264, %v3265
      %v3267 = vsel %vm540, %v3176, 0.0
      %v3268 = vadd.f32 %v3266, %v3267
      %v3269 = vsel %vm540, %v3177, 0.0
      %v3270 = vadd.f32 %v3268, %v3269
      %v3271 = vsel %vm540, %v3178, 0.0
      %v3272 = vadd.f32 %v3270, %v3271
      %v3273 = vsel %vm540, %v3179, 0.0
      %v3274 = vadd.f32 %v3272, %v3273
      %v3275 = vrot.slane %v3274, 4
      %v3276 = vadd.f32 %v3274, %v3275
      %v3277 = vrot.slane %v3276, 2
      %v3278 = vadd.f32 %v3276, %v3277
      %v3279 = vrot.slane %v3278, 1
      %v3280 = vadd.f32 %v3278, %v3279
      %v3281 = vmul.f32 %v3148, %v3148
      %v3282 = vmul.f32 %v3149, %v3149
      %v3283 = vmul.f32 %v3150, %v3150
      %v3284 = vmul.f32 %v3151, %v3151
      %v3285 = vmul.f32 %v3152, %v3152
      %v3286 = vmul.f32 %v3153, %v3153
      %v3287 = vmul.f32 %v3154, %v3154
      %v3288 = vmul.f32 %v3155, %v3155
      %v3289 = vmul.f32 %v3156, %v3156
      %v3290 = vmul.f32 %v3157, %v3157
      %v3291 = vmul.f32 %v3158, %v3158
      %v3292 = vmul.f32 %v3159, %v3159
      %v3293 = vmul.f32 %v3160, %v3160
      %v3294 = vmul.f32 %v3161, %v3161
      %v3295 = vmul.f32 %v3162, %v3162
      %v3296 = vmul.f32 %v3163, %v3163
      %v3297 = vmul.f32 %v3164, %v3164
      %v3298 = vmul.f32 %v3165, %v3165
      %v3299 = vmul.f32 %v3166, %v3166
      %v3300 = vmul.f32 %v3167, %v3167
      %v3301 = vmul.f32 %v3168, %v3168
      %v3302 = vmul.f32 %v3169, %v3169
      %v3303 = vmul.f32 %v3170, %v3170
      %v3304 = vmul.f32 %v3171, %v3171
      %v3305 = vmul.f32 %v3172, %v3172
      %v3306 = vmul.f32 %v3173, %v3173
      %v3307 = vmul.f32 %v3174, %v3174
      %v3308 = vmul.f32 %v3175, %v3175
      %v3309 = vmul.f32 %v3176, %v3176
      %v3310 = vmul.f32 %v3177, %v3177
      %v3311 = vmul.f32 %v3178, %v3178
      %v3312 = vmul.f32 %v3179, %v3179
      %v3313 = vsel %vm540, %v3281, 0.0
      %v3314 = vsel %vm540, %v3282, 0.0
      %v3315 = vadd.f32 %v3313, %v3314
      %v3316 = vsel %vm540, %v3283, 0.0
      %v3317 = vadd.f32 %v3315, %v3316
      %v3318 = vsel %vm540, %v3284, 0.0
      %v3319 = vadd.f32 %v3317, %v3318
      %v3320 = vsel %vm540, %v3285, 0.0
      %v3321 = vadd.f32 %v3319, %v3320
      %v3322 = vsel %vm540, %v3286, 0.0
      %v3323 = vadd.f32 %v3321, %v3322
      %v3324 = vsel %vm540, %v3287, 0.0
      %v3325 = vadd.f32 %v3323, %v3324
      %v3326 = vsel %vm540, %v3288, 0.0
      %v3327 = vadd.f32 %v3325, %v3326
      %v3328 = vsel %vm540, %v3289, 0.0
      %v3329 = vadd.f32 %v3327, %v3328
      %v3330 = vsel %vm540, %v3290, 0.0
      %v3331 = vadd.f32 %v3329, %v3330
      %v3332 = vsel %vm540, %v3291, 0.0
      %v3333 = vadd.f32 %v3331, %v3332
      %v3334 = vsel %vm540, %v3292, 0.0
      %v3335 = vadd.f32 %v3333, %v3334
      %v3336 = vsel %vm540, %v3293, 0.0
      %v3337 = vadd.f32 %v3335, %v3336
      %v3338 = vsel %vm540, %v3294, 0.0
      %v3339 = vadd.f32 %v3337, %v3338
      %v3340 = vsel %vm540, %v3295, 0.0
      %v3341 = vadd.f32 %v3339, %v3340
      %v3342 = vsel %vm540, %v3296, 0.0
      %v3343 = vadd.f32 %v3341, %v3342
      %v3344 = vsel %vm540, %v3297, 0.0
      %v3345 = vadd.f32 %v3343, %v3344
      %v3346 = vsel %vm540, %v3298, 0.0
      %v3347 = vadd.f32 %v3345, %v3346
      %v3348 = vsel %vm540, %v3299, 0.0
      %v3349 = vadd.f32 %v3347, %v3348
      %v3350 = vsel %vm540, %v3300, 0.0
      %v3351 = vadd.f32 %v3349, %v3350
      %v3352 = vsel %vm540, %v3301, 0.0
      %v3353 = vadd.f32 %v3351, %v3352
      %v3354 = vsel %vm540, %v3302, 0.0
      %v3355 = vadd.f32 %v3353, %v3354
      %v3356 = vsel %vm540, %v3303, 0.0
      %v3357 = vadd.f32 %v3355, %v3356
      %v3358 = vsel %vm540, %v3304, 0.0
      %v3359 = vadd.f32 %v3357, %v3358
      %v3360 = vsel %vm540, %v3305, 0.0
      %v3361 = vadd.f32 %v3359, %v3360
      %v3362 = vsel %vm540, %v3306, 0.0
      %v3363 = vadd.f32 %v3361, %v3362
      %v3364 = vsel %vm540, %v3307, 0.0
      %v3365 = vadd.f32 %v3363, %v3364
      %v3366 = vsel %vm540, %v3308, 0.0
      %v3367 = vadd.f32 %v3365, %v3366
      %v3368 = vsel %vm540, %v3309, 0.0
      %v3369 = vadd.f32 %v3367, %v3368
      %v3370 = vsel %vm540, %v3310, 0.0
      %v3371 = vadd.f32 %v3369, %v3370
      %v3372 = vsel %vm540, %v3311, 0.0
      %v3373 = vadd.f32 %v3371, %v3372
      %v3374 = vsel %vm540, %v3312, 0.0
      %v3375 = vadd.f32 %v3373, %v3374
      %v3376 = vrot.slane %v3375, 4
      %v3377 = vadd.f32 %v3375, %v3376
      %v3378 = vrot.slane %v3377, 2
      %v3379 = vadd.f32 %v3377, %v3378
      %v3380 = vrot.slane %v3379, 1
      %v3381 = vadd.f32 %v3379, %v3380
      %v3382 = vsel %vm411, %v3280, %v3381
      %3383 = vst.msk [vmem:[%s235] sm:$0x3] %vm543, %v3382
      %p3384 = scmp.lt.s32.totalorder %s17, 1
      %s3385 = scalar_select %p3384, %s17, 1
      %s3386 = smul.addr %s3385, 32
      %s3387 = smul.addr %s3386, 8
      %s3388 = scalar_lea.vmem %s4, %s3387
      %p3389 = scmp.lt.s32.totalorder %s17, 1
      %s3390 = scalar_select %p3389, %s17, 1
      %s3391 = smul.addr %s3390, 2
      %s3392 = scalar_lea.vmem %s5, %s3391
      // Predicated region
      $region37: #{bottleneck_forward.6} parent=35 // pred_check
        %p3393 = pneg %p124
      $region38: #{bottleneck_forward.6} parent=35 // pred_check_branch
        %3395 = sbr.rel (%p3393) target = $region40
      $region39: #{bottleneck_forward.6} parent=35 // pred_region
        _
      $region40: #{bottleneck_forward.6} parent=35 // pred_fallthru
        _
      // Predicated region
      $region41: #{bottleneck_forward.6} parent=35 // pred_check
        %p3396 = pneg %p150
      $region42: #{bottleneck_forward.6} parent=35 // pred_check_branch
        %3398 = sbr.rel (%p3396) target = $region44
      $region43: #{bottleneck_forward.6} parent=35 // pred_region
        _
      $region44: #{bottleneck_forward.6} parent=35 // pred_fallthru
        _
    $region36: #{bottleneck_forward.6} parent=5 // pred_fallthru
      _
    %p3399 = scmp.le.s32.totalorder 2, %s12
    // Predicated region
    $region45: #{bottleneck_forward.6} parent=5 // pred_check
      %p3400 = pneg %p3399
    $region46: #{bottleneck_forward.6} parent=5 // pred_check_branch
      %3402 = sbr.rel (%p3400) target = $region48
    $region47: #{bottleneck_forward.6} parent=5 // pred_region
      %s3403 = ssub.s32 %s12, 2
      // Predicated region
      $region49: #{bottleneck_forward.6} parent=47 // pred_check
        %p3404 = pneg %p130
      $region50: #{bottleneck_forward.6} parent=47 // pred_check_branch
        %3406 = sbr.rel (%p3404) target = $region52
      $region51: #{bottleneck_forward.6} parent=47 // pred_region
        %p3407 = scmp.lt.s32.totalorder %s18, 1
        %s3408 = scalar_select %p3407, %s18, 1
        %s3409 = smul.addr %s3408, 32
        %s3410 = smul.addr %s3409, 8
        %s3411 = scalar_lea.vmem %s4, %s3410
      $region52: #{bottleneck_forward.6} parent=47 // pred_fallthru
        _
      // Predicated region
      $region53: #{bottleneck_forward.6} parent=47 // pred_check
        %p3412 = pneg %p156
      $region54: #{bottleneck_forward.6} parent=47 // pred_check_branch
        %3414 = sbr.rel (%p3412) target = $region56
      $region55: #{bottleneck_forward.6} parent=47 // pred_region
        %p3415 = scmp.lt.s32.totalorder %s18, 1
        %s3416 = scalar_select %p3415, %s18, 1
        %s3417 = smul.addr %s3416, 2
        %s3418 = scalar_lea.vmem %s5, %s3417
      $region56: #{bottleneck_forward.6} parent=47 // pred_fallthru
        _
    $region48: #{bottleneck_forward.6} parent=5 // pred_fallthru
      _
  $region6: #{bottleneck_forward.6} parent=0 // loop_footer
    %s16 = sadd.s32 1, %s12
  $region7: #{bottleneck_forward.6} parent=0 // loop_footer_branch
    %11 = sbr.rel target = $region3
  $region8: #{bottleneck_forward.6} parent=0 // loop_exit
    _

// kernel: bottleneck_forward.9
$region0: #{bottleneck_forward.9}
  #allocation0 [shape = 'u32[]', space=smem, size = 0x4, offset = 0x4, fixed_abs, tag = 'smem constant byte address 0x4 - core index']
  #allocation1 [shape = 'u32[144,128]{1,0:T(1,128)}', space=vmem, size = 0x12000, scoped, tag = 'internal scratch']
  %s0 = inlined_call_operand.vmem [shape: f32[512,16], index: 0, kind: input, shape index: {}]
  %s1 = inlined_call_operand.vmem [shape: f32[1,16], index: 1, kind: input, shape index: {}]
  %s2 = inlined_call_operand.vmem [shape: f32[1,16], index: 2, kind: input, shape index: {}]
  %s3 = inlined_call_operand.vmem [shape: f32[512,16], index: 3, kind: input, shape index: {}]
  %s4 = inlined_call_operand.vmem [shape: f32[1,16], index: 4, kind: input, shape index: {}]
  %s5 = inlined_call_operand.vmem [shape: f32[1,16], index: 5, kind: input, shape index: {}]
  %s6 = inlined_call_operand.vmem [shape: f32[512,16], index: 6, kind: output, shape index: {}]
  %s7 = sld [smem:[#allocation0]]
  $region34: #{bottleneck_forward.9} parent=0
    _
  %s9 = ssub.s32 1, %s7
  %s10 = scalar_select 0, %s9, %s7
  // Predicated region
  $region2: #{bottleneck_forward.9} parent=0 // pred_check
    _
  $region3: #{bottleneck_forward.9} parent=0 // pred_check_branch
    %12 = sbr.rel (0) target = $region5
  $region4: #{bottleneck_forward.9} parent=0 // pred_region
    _
  $region5: #{bottleneck_forward.9} parent=0 // pred_fallthru
    _
  // Predicated region
  $region6: #{bottleneck_forward.9} parent=0 // pred_check
    _
  $region7: #{bottleneck_forward.9} parent=0 // pred_check_branch
    %14 = sbr.rel (0) target = $region9
  $region8: #{bottleneck_forward.9} parent=0 // pred_region
    _
  $region9: #{bottleneck_forward.9} parent=0 // pred_fallthru
    _
  // Predicated region
  $region10: #{bottleneck_forward.9} parent=0 // pred_check
    _
  $region11: #{bottleneck_forward.9} parent=0 // pred_check_branch
    %16 = sbr.rel (0) target = $region13
  $region12: #{bottleneck_forward.9} parent=0 // pred_region
    _
  $region13: #{bottleneck_forward.9} parent=0 // pred_fallthru
    _
  // Predicated region
  $region14: #{bottleneck_forward.9} parent=0 // pred_check
    _
  $region15: #{bottleneck_forward.9} parent=0 // pred_check_branch
    %18 = sbr.rel (0) target = $region17
  $region16: #{bottleneck_forward.9} parent=0 // pred_region
    _
  $region17: #{bottleneck_forward.9} parent=0 // pred_fallthru
    _
  // Predicated region
  $region18: #{bottleneck_forward.9} parent=0 // pred_check
    _
  $region19: #{bottleneck_forward.9} parent=0 // pred_check_branch
    %20 = sbr.rel (0) target = $region21
  $region20: #{bottleneck_forward.9} parent=0 // pred_region
    _
  $region21: #{bottleneck_forward.9} parent=0 // pred_fallthru
    _
  // Predicated region
  $region22: #{bottleneck_forward.9} parent=0 // pred_check
    _
  $region23: #{bottleneck_forward.9} parent=0 // pred_check_branch
    %22 = sbr.rel (0) target = $region25
  $region24: #{bottleneck_forward.9} parent=0 // pred_region
    _
  $region25: #{bottleneck_forward.9} parent=0 // pred_fallthru
    _
  %v23 = vld [vmem:[%s0] sm:$0xff]
  %v24 = vld [vmem:[%s0 + $0x8] sm:$0xff]
  %v25 = vld [vmem:[%s0 + $0x10] sm:$0xff]
  %v26 = vld [vmem:[%s0 + $0x18] sm:$0xff]
  %v27 = vld [vmem:[%s0 + $0x20] sm:$0xff]
  %v28 = vld [vmem:[%s0 + $0x28] sm:$0xff]
  %v29 = vld [vmem:[%s0 + $0x30] sm:$0xff]
  %v30 = vld [vmem:[%s0 + $0x38] sm:$0xff]
  %v31 = vld [vmem:[%s0 + $0x40] sm:$0xff]
  %v32 = vld [vmem:[%s0 + $0x48] sm:$0xff]
  %v33 = vld [vmem:[%s0 + $0x50] sm:$0xff]
  %v34 = vld [vmem:[%s0 + $0x58] sm:$0xff]
  %v35 = vld [vmem:[%s0 + $0x60] sm:$0xff]
  %v36 = vld [vmem:[%s0 + $0x68] sm:$0xff]
  %v37 = vld [vmem:[%s0 + $0x70] sm:$0xff]
  %v38 = vld [vmem:[%s0 + $0x78] sm:$0xff]
  %v39 = vld [vmem:[%s0 + $0x80] sm:$0xff]
  %v40 = vld [vmem:[%s0 + $0x88] sm:$0xff]
  %v41 = vld [vmem:[%s0 + $0x90] sm:$0xff]
  %v42 = vld [vmem:[%s0 + $0x98] sm:$0xff]
  %v43 = vld [vmem:[%s0 + $0xa0] sm:$0xff]
  %v44 = vld [vmem:[%s0 + $0xa8] sm:$0xff]
  %v45 = vld [vmem:[%s0 + $0xb0] sm:$0xff]
  %v46 = vld [vmem:[%s0 + $0xb8] sm:$0xff]
  %v47 = vld [vmem:[%s0 + $0xc0] sm:$0xff]
  %v48 = vld [vmem:[%s0 + $0xc8] sm:$0xff]
  %v49 = vld [vmem:[%s0 + $0xd0] sm:$0xff]
  %v50 = vld [vmem:[%s0 + $0xd8] sm:$0xff]
  %v51 = vld [vmem:[%s0 + $0xe0] sm:$0xff]
  %v52 = vld [vmem:[%s0 + $0xe8] sm:$0xff]
  %v53 = vld [vmem:[%s0 + $0xf0] sm:$0xff]
  %v54 = vld [vmem:[%s0 + $0xf8] sm:$0xff]
  %v55 = vld [vmem:[%s0 + $0x100] sm:$0xff]
  %v56 = vld [vmem:[%s0 + $0x108] sm:$0xff]
  %v57 = vld [vmem:[%s0 + $0x110] sm:$0xff]
  %v58 = vld [vmem:[%s0 + $0x118] sm:$0xff]
  %v59 = vld [vmem:[%s0 + $0x120] sm:$0xff]
  %v60 = vld [vmem:[%s0 + $0x128] sm:$0xff]
  %v61 = vld [vmem:[%s0 + $0x130] sm:$0xff]
  %v62 = vld [vmem:[%s0 + $0x138] sm:$0xff]
  %v63 = vld [vmem:[%s0 + $0x140] sm:$0xff]
  %v64 = vld [vmem:[%s0 + $0x148] sm:$0xff]
  %v65 = vld [vmem:[%s0 + $0x150] sm:$0xff]
  %v66 = vld [vmem:[%s0 + $0x158] sm:$0xff]
  %v67 = vld [vmem:[%s0 + $0x160] sm:$0xff]
  %v68 = vld [vmem:[%s0 + $0x168] sm:$0xff]
  %v69 = vld [vmem:[%s0 + $0x170] sm:$0xff]
  %v70 = vld [vmem:[%s0 + $0x178] sm:$0xff]
  %v71 = vld [vmem:[%s0 + $0x180] sm:$0xff]
  %v72 = vld [vmem:[%s0 + $0x188] sm:$0xff]
  %v73 = vld [vmem:[%s0 + $0x190] sm:$0xff]
  %v74 = vld [vmem:[%s0 + $0x198] sm:$0xff]
  %v75 = vld [vmem:[%s0 + $0x1a0] sm:$0xff]
  %v76 = vld [vmem:[%s0 + $0x1a8] sm:$0xff]
  %v77 = vld [vmem:[%s0 + $0x1b0] sm:$0xff]
  %v78 = vld [vmem:[%s0 + $0x1b8] sm:$0xff]
  %v79 = vld [vmem:[%s0 + $0x1c0] sm:$0xff]
  %v80 = vld [vmem:[%s0 + $0x1c8] sm:$0xff]
  %v81 = vld [vmem:[%s0 + $0x1d0] sm:$0xff]
  %v82 = vld [vmem:[%s0 + $0x1d8] sm:$0xff]
  %v83 = vld [vmem:[%s0 + $0x1e0] sm:$0xff]
  %v84 = vld [vmem:[%s0 + $0x1e8] sm:$0xff]
  %v85 = vld [vmem:[%s0 + $0x1f0] sm:$0xff]
  %v86 = vld [vmem:[%s0 + $0x1f8] sm:$0xff]
  %v87 = vld [vmem:[%s1] sm:$0x1]
  %v89 = vlaneseq
  %v90 = vshrl.u32 %v89, 7
  %v91 = vsub.s32 0, %v90
  %v92 = vrot.slane %v87, %v91
  %v94 = vmul.f32 %v23, %v92
  %v95 = vmul.f32 %v24, %v92
  %v96 = vmul.f32 %v25, %v92
  %v97 = vmul.f32 %v26, %v92
  %v98 = vmul.f32 %v27, %v92
  %v99 = vmul.f32 %v28, %v92
  %v100 = vmul.f32 %v29, %v92
  %v101 = vmul.f32 %v30, %v92
  %v102 = vmul.f32 %v31, %v92
  %v103 = vmul.f32 %v32, %v92
  %v104 = vmul.f32 %v33, %v92
  %v105 = vmul.f32 %v34, %v92
  %v106 = vmul.f32 %v35, %v92
  %v107 = vmul.f32 %v36, %v92
  %v108 = vmul.f32 %v37, %v92
  %v109 = vmul.f32 %v38, %v92
  %v110 = vmul.f32 %v39, %v92
  %v111 = vmul.f32 %v40, %v92
  %v112 = vmul.f32 %v41, %v92
  %v113 = vmul.f32 %v42, %v92
  %v114 = vmul.f32 %v43, %v92
  %v115 = vmul.f32 %v44, %v92
  %v116 = vmul.f32 %v45, %v92
  %v117 = vmul.f32 %v46, %v92
  %v118 = vmul.f32 %v47, %v92
  %v119 = vmul.f32 %v48, %v92
  %v120 = vmul.f32 %v49, %v92
  %v121 = vmul.f32 %v50, %v92
  %v122 = vmul.f32 %v51, %v92
  %v123 = vmul.f32 %v52, %v92
  %v124 = vmul.f32 %v53, %v92
  %v125 = vmul.f32 %v54, %v92
  %v126 = vmul.f32 %v55, %v92
  %v127 = vmul.f32 %v56, %v92
  %v128 = vmul.f32 %v57, %v92
  %v129 = vmul.f32 %v58, %v92
  %v130 = vmul.f32 %v59, %v92
  %v131 = vmul.f32 %v60, %v92
  %v132 = vmul.f32 %v61, %v92
  %v133 = vmul.f32 %v62, %v92
  %v134 = vmul.f32 %v63, %v92
  %v135 = vmul.f32 %v64, %v92
  %v136 = vmul.f32 %v65, %v92
  %v137 = vmul.f32 %v66, %v92
  %v138 = vmul.f32 %v67, %v92
  %v139 = vmul.f32 %v68, %v92
  %v140 = vmul.f32 %v69, %v92
  %v141 = vmul.f32 %v70, %v92
  %v142 = vmul.f32 %v71, %v92
  %v143 = vmul.f32 %v72, %v92
  %v144 = vmul.f32 %v73, %v92
  %v145 = vmul.f32 %v74, %v92
  %v146 = vmul.f32 %v75, %v92
  %v147 = vmul.f32 %v76, %v92
  %v148 = vmul.f32 %v77, %v92
  %v149 = vmul.f32 %v78, %v92
  %v150 = vmul.f32 %v79, %v92
  %v151 = vmul.f32 %v80, %v92
  %v152 = vmul.f32 %v81, %v92
  %v153 = vmul.f32 %v82, %v92
  %v154 = vmul.f32 %v83, %v92
  %v155 = vmul.f32 %v84, %v92
  %v156 = vmul.f32 %v85, %v92
  %v157 = vmul.f32 %v86, %v92
  %v158 = vld [vmem:[%s2] sm:$0x1]
  %v160 = vlaneseq
  %v161 = vshrl.u32 %v160, 7
  %v162 = vsub.s32 0, %v161
  %v163 = vrot.slane %v158, %v162
  %v165 = vadd.f32 %v94, %v163
  %v166 = vadd.f32 %v95, %v163
  %v167 = vadd.f32 %v96, %v163
  %v168 = vadd.f32 %v97, %v163
  %v169 = vadd.f32 %v98, %v163
  %v170 = vadd.f32 %v99, %v163
  %v171 = vadd.f32 %v100, %v163
  %v172 = vadd.f32 %v101, %v163
  %v173 = vadd.f32 %v102, %v163
  %v174 = vadd.f32 %v103, %v163
  %v175 = vadd.f32 %v104, %v163
  %v176 = vadd.f32 %v105, %v163
  %v177 = vadd.f32 %v106, %v163
  %v178 = vadd.f32 %v107, %v163
  %v179 = vadd.f32 %v108, %v163
  %v180 = vadd.f32 %v109, %v163
  %v181 = vadd.f32 %v110, %v163
  %v182 = vadd.f32 %v111, %v163
  %v183 = vadd.f32 %v112, %v163
  %v184 = vadd.f32 %v113, %v163
  %v185 = vadd.f32 %v114, %v163
  %v186 = vadd.f32 %v115, %v163
  %v187 = vadd.f32 %v116, %v163
  %v188 = vadd.f32 %v117, %v163
  %v189 = vadd.f32 %v118, %v163
  %v190 = vadd.f32 %v119, %v163
  %v191 = vadd.f32 %v120, %v163
  %v192 = vadd.f32 %v121, %v163
  %v193 = vadd.f32 %v122, %v163
  %v194 = vadd.f32 %v123, %v163
  %v195 = vadd.f32 %v124, %v163
  %v196 = vadd.f32 %v125, %v163
  %v197 = vadd.f32 %v126, %v163
  %v198 = vadd.f32 %v127, %v163
  %v199 = vadd.f32 %v128, %v163
  %v200 = vadd.f32 %v129, %v163
  %v201 = vadd.f32 %v130, %v163
  %v202 = vadd.f32 %v131, %v163
  %v203 = vadd.f32 %v132, %v163
  %v204 = vadd.f32 %v133, %v163
  %v205 = vadd.f32 %v134, %v163
  %v206 = vadd.f32 %v135, %v163
  %v207 = vadd.f32 %v136, %v163
  %v208 = vadd.f32 %v137, %v163
  %v209 = vadd.f32 %v138, %v163
  %v210 = vadd.f32 %v139, %v163
  %v211 = vadd.f32 %v140, %v163
  %v212 = vadd.f32 %v141, %v163
  %v213 = vadd.f32 %v142, %v163
  %v214 = vadd.f32 %v143, %v163
  %v215 = vadd.f32 %v144, %v163
  %v216 = vadd.f32 %v145, %v163
  %v217 = vadd.f32 %v146, %v163
  %v218 = vadd.f32 %v147, %v163
  %v219 = vadd.f32 %v148, %v163
  %v220 = vadd.f32 %v149, %v163
  %v221 = vadd.f32 %v150, %v163
  %v222 = vadd.f32 %v151, %v163
  %v223 = vadd.f32 %v152, %v163
  %v224 = vadd.f32 %v153, %v163
  %v225 = vadd.f32 %v154, %v163
  %v226 = vadd.f32 %v155, %v163
  %v227 = vadd.f32 %v156, %v163
  %v228 = vadd.f32 %v157, %v163
  %v229 = vld [vmem:[%s3] sm:$0xff]
  %v230 = vld [vmem:[%s3 + $0x8] sm:$0xff]
  %v231 = vld [vmem:[%s3 + $0x10] sm:$0xff]
  %v232 = vld [vmem:[%s3 + $0x18] sm:$0xff]
  %v233 = vld [vmem:[%s3 + $0x20] sm:$0xff]
  %v234 = vld [vmem:[%s3 + $0x28] sm:$0xff]
  %v235 = vld [vmem:[%s3 + $0x30] sm:$0xff]
  %v236 = vld [vmem:[%s3 + $0x38] sm:$0xff]
  %v237 = vld [vmem:[%s3 + $0x40] sm:$0xff]
  %v238 = vld [vmem:[%s3 + $0x48] sm:$0xff]
  %v239 = vld [vmem:[%s3 + $0x50] sm:$0xff]
  %v240 = vld [vmem:[%s3 + $0x58] sm:$0xff]
  %v241 = vld [vmem:[%s3 + $0x60] sm:$0xff]
  %v242 = vld [vmem:[%s3 + $0x68] sm:$0xff]
  %v243 = vld [vmem:[%s3 + $0x70] sm:$0xff]
  %v244 = vld [vmem:[%s3 + $0x78] sm:$0xff]
  %v245 = vld [vmem:[%s3 + $0x80] sm:$0xff]
  %v246 = vld [vmem:[%s3 + $0x88] sm:$0xff]
  %v247 = vld [vmem:[%s3 + $0x90] sm:$0xff]
  %v248 = vld [vmem:[%s3 + $0x98] sm:$0xff]
  %v249 = vld [vmem:[%s3 + $0xa0] sm:$0xff]
  %v250 = vld [vmem:[%s3 + $0xa8] sm:$0xff]
  %v251 = vld [vmem:[%s3 + $0xb0] sm:$0xff]
  %v252 = vld [vmem:[%s3 + $0xb8] sm:$0xff]
  %v253 = vld [vmem:[%s3 + $0xc0] sm:$0xff]
  %v254 = vld [vmem:[%s3 + $0xc8] sm:$0xff]
  %v255 = vld [vmem:[%s3 + $0xd0] sm:$0xff]
  %v256 = vld [vmem:[%s3 + $0xd8] sm:$0xff]
  %v257 = vld [vmem:[%s3 + $0xe0] sm:$0xff]
  %v258 = vld [vmem:[%s3 + $0xe8] sm:$0xff]
  %v259 = vld [vmem:[%s3 + $0xf0] sm:$0xff]
  %v260 = vld [vmem:[%s3 + $0xf8] sm:$0xff]
  %v261 = vld [vmem:[%s3 + $0x100] sm:$0xff]
  %v262 = vld [vmem:[%s3 + $0x108] sm:$0xff]
  %v263 = vld [vmem:[%s3 + $0x110] sm:$0xff]
  %v264 = vld [vmem:[%s3 + $0x118] sm:$0xff]
  %v265 = vld [vmem:[%s3 + $0x120] sm:$0xff]
  %v266 = vld [vmem:[%s3 + $0x128] sm:$0xff]
  %v267 = vld [vmem:[%s3 + $0x130] sm:$0xff]
  %v268 = vld [vmem:[%s3 + $0x138] sm:$0xff]
  %v269 = vld [vmem:[%s3 + $0x140] sm:$0xff]
  %v270 = vld [vmem:[%s3 + $0x148] sm:$0xff]
  %v271 = vld [vmem:[%s3 + $0x150] sm:$0xff]
  %v272 = vld [vmem:[%s3 + $0x158] sm:$0xff]
  %v273 = vld [vmem:[%s3 + $0x160] sm:$0xff]
  %v274 = vld [vmem:[%s3 + $0x168] sm:$0xff]
  %v275 = vld [vmem:[%s3 + $0x170] sm:$0xff]
  %v276 = vld [vmem:[%s3 + $0x178] sm:$0xff]
  %v277 = vld [vmem:[%s3 + $0x180] sm:$0xff]
  %v278 = vld [vmem:[%s3 + $0x188] sm:$0xff]
  %v279 = vld [vmem:[%s3 + $0x190] sm:$0xff]
  %v280 = vld [vmem:[%s3 + $0x198] sm:$0xff]
  %v281 = vld [vmem:[%s3 + $0x1a0] sm:$0xff]
  %v282 = vld [vmem:[%s3 + $0x1a8] sm:$0xff]
  %v283 = vld [vmem:[%s3 + $0x1b0] sm:$0xff]
  %v284 = vld [vmem:[%s3 + $0x1b8] sm:$0xff]
  %v285 = vld [vmem:[%s3 + $0x1c0] sm:$0xff]
  %v286 = vld [vmem:[%s3 + $0x1c8] sm:$0xff]
  %v287 = vld [vmem:[%s3 + $0x1d0] sm:$0xff]
  %v288 = vld [vmem:[%s3 + $0x1d8] sm:$0xff]
  %v289 = vld [vmem:[%s3 + $0x1e0] sm:$0xff]
  %v290 = vld [vmem:[%s3 + $0x1e8] sm:$0xff]
  %v291 = vld [vmem:[%s3 + $0x1f0] sm:$0xff]
  %v292 = vld [vmem:[%s3 + $0x1f8] sm:$0xff]
  %v293 = vld [vmem:[%s4] sm:$0x1]
  %v295 = vlaneseq
  %v296 = vshrl.u32 %v295, 7
  %v297 = vsub.s32 0, %v296
  %v298 = vrot.slane %v293, %v297
  %v300 = vmul.f32 %v229, %v298
  %v301 = vmul.f32 %v230, %v298
  %v302 = vmul.f32 %v231, %v298
  %v303 = vmul.f32 %v232, %v298
  %v304 = vmul.f32 %v233, %v298
  %v305 = vmul.f32 %v234, %v298
  %v306 = vmul.f32 %v235, %v298
  %v307 = vmul.f32 %v236, %v298
  %v308 = vmul.f32 %v237, %v298
  %v309 = vmul.f32 %v238, %v298
  %v310 = vmul.f32 %v239, %v298
  %v311 = vmul.f32 %v240, %v298
  %v312 = vmul.f32 %v241, %v298
  %v313 = vmul.f32 %v242, %v298
  %v314 = vmul.f32 %v243, %v298
  %v315 = vmul.f32 %v244, %v298
  %v316 = vmul.f32 %v245, %v298
  %v317 = vmul.f32 %v246, %v298
  %v318 = vmul.f32 %v247, %v298
  %v319 = vmul.f32 %v248, %v298
  %v320 = vmul.f32 %v249, %v298
  %v321 = vmul.f32 %v250, %v298
  %v322 = vmul.f32 %v251, %v298
  %v323 = vmul.f32 %v252, %v298
  %v324 = vmul.f32 %v253, %v298
  %v325 = vmul.f32 %v254, %v298
  %v326 = vmul.f32 %v255, %v298
  %v327 = vmul.f32 %v256, %v298
  %v328 = vmul.f32 %v257, %v298
  %v329 = vmul.f32 %v258, %v298
  %v330 = vmul.f32 %v259, %v298
  %v331 = vmul.f32 %v260, %v298
  %v332 = vmul.f32 %v261, %v298
  %v333 = vmul.f32 %v262, %v298
  %v334 = vmul.f32 %v263, %v298
  %v335 = vmul.f32 %v264, %v298
  %v336 = vmul.f32 %v265, %v298
  %v337 = vmul.f32 %v266, %v298
  %v338 = vmul.f32 %v267, %v298
  %v339 = vmul.f32 %v268, %v298
  %v340 = vmul.f32 %v269, %v298
  %v341 = vmul.f32 %v270, %v298
  %v342 = vmul.f32 %v271, %v298
  %v343 = vmul.f32 %v272, %v298
  %v344 = vmul.f32 %v273, %v298
  %v345 = vmul.f32 %v274, %v298
  %v346 = vmul.f32 %v275, %v298
  %v347 = vmul.f32 %v276, %v298
  %v348 = vmul.f32 %v277, %v298
  %v349 = vmul.f32 %v278, %v298
  %v350 = vmul.f32 %v279, %v298
  %v351 = vmul.f32 %v280, %v298
  %v352 = vmul.f32 %v281, %v298
  %v353 = vmul.f32 %v282, %v298
  %v354 = vmul.f32 %v283, %v298
  %v355 = vmul.f32 %v284, %v298
  %v356 = vmul.f32 %v285, %v298
  %v357 = vmul.f32 %v286, %v298
  %v358 = vmul.f32 %v287, %v298
  %v359 = vmul.f32 %v288, %v298
  %v360 = vmul.f32 %v289, %v298
  %v361 = vmul.f32 %v290, %v298
  %v362 = vmul.f32 %v291, %v298
  %v363 = vmul.f32 %v292, %v298
  %v364 = vld [vmem:[%s5] sm:$0x1]
  %v366 = vlaneseq
  %v367 = vshrl.u32 %v366, 7
  %v368 = vsub.s32 0, %v367
  %v369 = vrot.slane %v364, %v368
  %v371 = vadd.f32 %v300, %v369
  %v372 = vadd.f32 %v301, %v369
  %v373 = vadd.f32 %v302, %v369
  %v374 = vadd.f32 %v303, %v369
  %v375 = vadd.f32 %v304, %v369
  %v376 = vadd.f32 %v305, %v369
  %v377 = vadd.f32 %v306, %v369
  %v378 = vadd.f32 %v307, %v369
  %v379 = vadd.f32 %v308, %v369
  %v380 = vadd.f32 %v309, %v369
  %v381 = vadd.f32 %v310, %v369
  %v382 = vadd.f32 %v311, %v369
  %v383 = vadd.f32 %v312, %v369
  %v384 = vadd.f32 %v313, %v369
  %v385 = vadd.f32 %v314, %v369
  %v386 = vadd.f32 %v315, %v369
  %v387 = vadd.f32 %v316, %v369
  %v388 = vadd.f32 %v317, %v369
  %v389 = vadd.f32 %v318, %v369
  %v390 = vadd.f32 %v319, %v369
  %v391 = vadd.f32 %v320, %v369
  %v392 = vadd.f32 %v321, %v369
  %v393 = vadd.f32 %v322, %v369
  %v394 = vadd.f32 %v323, %v369
  %v395 = vadd.f32 %v324, %v369
  %v396 = vadd.f32 %v325, %v369
  %v397 = vadd.f32 %v326, %v369
  %v398 = vadd.f32 %v327, %v369
  %v399 = vadd.f32 %v328, %v369
  %v400 = vadd.f32 %v329, %v369
  %v401 = vadd.f32 %v330, %v369
  %v402 = vadd.f32 %v331, %v369
  %v403 = vadd.f32 %v332, %v369
  %v404 = vadd.f32 %v333, %v369
  %v405 = vadd.f32 %v334, %v369
  %v406 = vadd.f32 %v335, %v369
  %v407 = vadd.f32 %v336, %v369
  %v408 = vadd.f32 %v337, %v369
  %v409 = vadd.f32 %v338, %v369
  %v410 = vadd.f32 %v339, %v369
  %v411 = vadd.f32 %v340, %v369
  %v412 = vadd.f32 %v341, %v369
  %v413 = vadd.f32 %v342, %v369
  %v414 = vadd.f32 %v343, %v369
  %v415 = vadd.f32 %v344, %v369
  %v416 = vadd.f32 %v345, %v369
  %v417 = vadd.f32 %v346, %v369
  %v418 = vadd.f32 %v347, %v369
  %v419 = vadd.f32 %v348, %v369
  %v420 = vadd.f32 %v349, %v369
  %v421 = vadd.f32 %v350, %v369
  %v422 = vadd.f32 %v351, %v369
  %v423 = vadd.f32 %v352, %v369
  %v424 = vadd.f32 %v353, %v369
  %v425 = vadd.f32 %v354, %v369
  %v426 = vadd.f32 %v355, %v369
  %v427 = vadd.f32 %v356, %v369
  %v428 = vadd.f32 %v357, %v369
  %v429 = vadd.f32 %v358, %v369
  %v430 = vadd.f32 %v359, %v369
  %v431 = vadd.f32 %v360, %v369
  %v432 = vadd.f32 %v361, %v369
  %v433 = vadd.f32 %v362, %v369
  %v434 = vadd.f32 %v363, %v369
  %v435 = vadd.f32 %v165, %v371
  %v436 = vadd.f32 %v166, %v372
  %v437 = vadd.f32 %v167, %v373
  %v438 = vadd.f32 %v168, %v374
  %v439 = vadd.f32 %v169, %v375
  %v440 = vadd.f32 %v170, %v376
  %v441 = vadd.f32 %v171, %v377
  %v442 = vadd.f32 %v172, %v378
  %v443 = vadd.f32 %v173, %v379
  %v444 = vadd.f32 %v174, %v380
  %v445 = vadd.f32 %v175, %v381
  %v446 = vadd.f32 %v176, %v382
  %v447 = vadd.f32 %v177, %v383
  %v448 = vadd.f32 %v178, %v384
  %v449 = vadd.f32 %v179, %v385
  %v450 = vadd.f32 %v180, %v386
  %v451 = vadd.f32 %v181, %v387
  %v452 = vadd.f32 %v182, %v388
  %v453 = vadd.f32 %v183, %v389
  %v454 = vadd.f32 %v184, %v390
  %v455 = vadd.f32 %v185, %v391
  %v456 = vadd.f32 %v186, %v392
  %v457 = vadd.f32 %v187, %v393
  %v458 = vadd.f32 %v188, %v394
  %v459 = vadd.f32 %v189, %v395
  %v460 = vadd.f32 %v190, %v396
  %v461 = vadd.f32 %v191, %v397
  %v462 = vadd.f32 %v192, %v398
  %v463 = vadd.f32 %v193, %v399
  %v464 = vadd.f32 %v194, %v400
  %v465 = vadd.f32 %v195, %v401
  %v466 = vadd.f32 %v196, %v402
  %v467 = vadd.f32 %v197, %v403
  %v468 = vadd.f32 %v198, %v404
  %v469 = vadd.f32 %v199, %v405
  %v470 = vadd.f32 %v200, %v406
  %v471 = vadd.f32 %v201, %v407
  %v472 = vadd.f32 %v202, %v408
  %v473 = vadd.f32 %v203, %v409
  %v474 = vadd.f32 %v204, %v410
  %v475 = vadd.f32 %v205, %v411
  %v476 = vadd.f32 %v206, %v412
  %v477 = vadd.f32 %v207, %v413
  %v478 = vadd.f32 %v208, %v414
  %v479 = vadd.f32 %v209, %v415
  %v480 = vadd.f32 %v210, %v416
  %v481 = vadd.f32 %v211, %v417
  %v482 = vadd.f32 %v212, %v418
  %v483 = vadd.f32 %v213, %v419
  %v484 = vadd.f32 %v214, %v420
  %v485 = vadd.f32 %v215, %v421
  %v486 = vadd.f32 %v216, %v422
  %v487 = vadd.f32 %v217, %v423
  %v488 = vadd.f32 %v218, %v424
  %v489 = vadd.f32 %v219, %v425
  %v490 = vadd.f32 %v220, %v426
  %v491 = vadd.f32 %v221, %v427
  %v492 = vadd.f32 %v222, %v428
  %v493 = vadd.f32 %v223, %v429
  %v494 = vadd.f32 %v224, %v430
  %v495 = vadd.f32 %v225, %v431
  %v496 = vadd.f32 %v226, %v432
  %v497 = vadd.f32 %v227, %v433
  %v498 = vadd.f32 %v228, %v434
  %v499 = vmax.f32 %v435, 0.0
  %v500 = vmax.f32 %v436, 0.0
  %v501 = vmax.f32 %v437, 0.0
  %v502 = vmax.f32 %v438, 0.0
  %v503 = vmax.f32 %v439, 0.0
  %v504 = vmax.f32 %v440, 0.0
  %v505 = vmax.f32 %v441, 0.0
  %v506 = vmax.f32 %v442, 0.0
  %v507 = vmax.f32 %v443, 0.0
  %v508 = vmax.f32 %v444, 0.0
  %v509 = vmax.f32 %v445, 0.0
  %v510 = vmax.f32 %v446, 0.0
  %v511 = vmax.f32 %v447, 0.0
  %v512 = vmax.f32 %v448, 0.0
  %v513 = vmax.f32 %v449, 0.0
  %v514 = vmax.f32 %v450, 0.0
  %v515 = vmax.f32 %v451, 0.0
  %v516 = vmax.f32 %v452, 0.0
  %v517 = vmax.f32 %v453, 0.0
  %v518 = vmax.f32 %v454, 0.0
  %v519 = vmax.f32 %v455, 0.0
  %v520 = vmax.f32 %v456, 0.0
  %v521 = vmax.f32 %v457, 0.0
  %v522 = vmax.f32 %v458, 0.0
  %v523 = vmax.f32 %v459, 0.0
  %v524 = vmax.f32 %v460, 0.0
  %v525 = vmax.f32 %v461, 0.0
  %v526 = vmax.f32 %v462, 0.0
  %v527 = vmax.f32 %v463, 0.0
  %v528 = vmax.f32 %v464, 0.0
  %v529 = vmax.f32 %v465, 0.0
  %v530 = vmax.f32 %v466, 0.0
  %v531 = vmax.f32 %v467, 0.0
  %v532 = vmax.f32 %v468, 0.0
  %v533 = vmax.f32 %v469, 0.0
  %v534 = vmax.f32 %v470, 0.0
  %v535 = vmax.f32 %v471, 0.0
  %v536 = vmax.f32 %v472, 0.0
  %v537 = vmax.f32 %v473, 0.0
  %v538 = vmax.f32 %v474, 0.0
  %v539 = vmax.f32 %v475, 0.0
  %v540 = vmax.f32 %v476, 0.0
  %v541 = vmax.f32 %v477, 0.0
  %v542 = vmax.f32 %v478, 0.0
  %v543 = vmax.f32 %v479, 0.0
  %v544 = vmax.f32 %v480, 0.0
  %v545 = vmax.f32 %v481, 0.0
  %v546 = vmax.f32 %v482, 0.0
  %v547 = vmax.f32 %v483, 0.0
  %v548 = vmax.f32 %v484, 0.0
  %v549 = vmax.f32 %v485, 0.0
  %v550 = vmax.f32 %v486, 0.0
  %v551 = vmax.f32 %v487, 0.0
  %v552 = vmax.f32 %v488, 0.0
  %v553 = vmax.f32 %v489, 0.0
  %v554 = vmax.f32 %v490, 0.0
  %v555 = vmax.f32 %v491, 0.0
  %v556 = vmax.f32 %v492, 0.0
  %v557 = vmax.f32 %v493, 0.0
  %v558 = vmax.f32 %v494, 0.0
  %v559 = vmax.f32 %v495, 0.0
  %v560 = vmax.f32 %v496, 0.0
  %v561 = vmax.f32 %v497, 0.0
  %v562 = vmax.f32 %v498, 0.0
  %vm563 = vcmask 130048
  %564 = vst.msk [vmem:[%s6] sm:$0xff] %vm563, %v499
  %565 = vst.msk [vmem:[%s6 + $0x8] sm:$0xff] %vm563, %v500
  %566 = vst.msk [vmem:[%s6 + $0x10] sm:$0xff] %vm563, %v501
  %567 = vst.msk [vmem:[%s6 + $0x18] sm:$0xff] %vm563, %v502
  %568 = vst.msk [vmem:[%s6 + $0x20] sm:$0xff] %vm563, %v503
  %569 = vst.msk [vmem:[%s6 + $0x28] sm:$0xff] %vm563, %v504
  %570 = vst.msk [vmem:[%s6 + $0x30] sm:$0xff] %vm563, %v505
  %571 = vst.msk [vmem:[%s6 + $0x38] sm:$0xff] %vm563, %v506
  %572 = vst.msk [vmem:[%s6 + $0x40] sm:$0xff] %vm563, %v507
  %573 = vst.msk [vmem:[%s6 + $0x48] sm:$0xff] %vm563, %v508
  %574 = vst.msk [vmem:[%s6 + $0x50] sm:$0xff] %vm563, %v509
  %575 = vst.msk [vmem:[%s6 + $0x58] sm:$0xff] %vm563, %v510
  %576 = vst.msk [vmem:[%s6 + $0x60] sm:$0xff] %vm563, %v511
  %577 = vst.msk [vmem:[%s6 + $0x68] sm:$0xff] %vm563, %v512
  %578 = vst.msk [vmem:[%s6 + $0x70] sm:$0xff] %vm563, %v513
  %579 = vst.msk [vmem:[%s6 + $0x78] sm:$0xff] %vm563, %v514
  %580 = vst.msk [vmem:[%s6 + $0x80] sm:$0xff] %vm563, %v515
  %581 = vst.msk [vmem:[%s6 + $0x88] sm:$0xff] %vm563, %v516
  %582 = vst.msk [vmem:[%s6 + $0x90] sm:$0xff] %vm563, %v517
  %583 = vst.msk [vmem:[%s6 + $0x98] sm:$0xff] %vm563, %v518
  %584 = vst.msk [vmem:[%s6 + $0xa0] sm:$0xff] %vm563, %v519
  %585 = vst.msk [vmem:[%s6 + $0xa8] sm:$0xff] %vm563, %v520
  %586 = vst.msk [vmem:[%s6 + $0xb0] sm:$0xff] %vm563, %v521
  %587 = vst.msk [vmem:[%s6 + $0xb8] sm:$0xff] %vm563, %v522
  %588 = vst.msk [vmem:[%s6 + $0xc0] sm:$0xff] %vm563, %v523
  %589 = vst.msk [vmem:[%s6 + $0xc8] sm:$0xff] %vm563, %v524
  %590 = vst.msk [vmem:[%s6 + $0xd0] sm:$0xff] %vm563, %v525
  %591 = vst.msk [vmem:[%s6 + $0xd8] sm:$0xff] %vm563, %v526
  %592 = vst.msk [vmem:[%s6 + $0xe0] sm:$0xff] %vm563, %v527
  %593 = vst.msk [vmem:[%s6 + $0xe8] sm:$0xff] %vm563, %v528
  %594 = vst.msk [vmem:[%s6 + $0xf0] sm:$0xff] %vm563, %v529
  %595 = vst.msk [vmem:[%s6 + $0xf8] sm:$0xff] %vm563, %v530
  %596 = vst.msk [vmem:[%s6 + $0x100] sm:$0xff] %vm563, %v531
  %597 = vst.msk [vmem:[%s6 + $0x108] sm:$0xff] %vm563, %v532
  %598 = vst.msk [vmem:[%s6 + $0x110] sm:$0xff] %vm563, %v533
  %599 = vst.msk [vmem:[%s6 + $0x118] sm:$0xff] %vm563, %v534
  %600 = vst.msk [vmem:[%s6 + $0x120] sm:$0xff] %vm563, %v535
  %601 = vst.msk [vmem:[%s6 + $0x128] sm:$0xff] %vm563, %v536
  %602 = vst.msk [vmem:[%s6 + $0x130] sm:$0xff] %vm563, %v537
  %603 = vst.msk [vmem:[%s6 + $0x138] sm:$0xff] %vm563, %v538
  %604 = vst.msk [vmem:[%s6 + $0x140] sm:$0xff] %vm563, %v539
  %605 = vst.msk [vmem:[%s6 + $0x148] sm:$0xff] %vm563, %v540
  %606 = vst.msk [vmem:[%s6 + $0x150] sm:$0xff] %vm563, %v541
  %607 = vst.msk [vmem:[%s6 + $0x158] sm:$0xff] %vm563, %v542
  %608 = vst.msk [vmem:[%s6 + $0x160] sm:$0xff] %vm563, %v543
  %609 = vst.msk [vmem:[%s6 + $0x168] sm:$0xff] %vm563, %v544
  %610 = vst.msk [vmem:[%s6 + $0x170] sm:$0xff] %vm563, %v545
  %611 = vst.msk [vmem:[%s6 + $0x178] sm:$0xff] %vm563, %v546
  %612 = vst.msk [vmem:[%s6 + $0x180] sm:$0xff] %vm563, %v547
  %613 = vst.msk [vmem:[%s6 + $0x188] sm:$0xff] %vm563, %v548
  %614 = vst.msk [vmem:[%s6 + $0x190] sm:$0xff] %vm563, %v549
  %615 = vst.msk [vmem:[%s6 + $0x198] sm:$0xff] %vm563, %v550
  %616 = vst.msk [vmem:[%s6 + $0x1a0] sm:$0xff] %vm563, %v551
  %617 = vst.msk [vmem:[%s6 + $0x1a8] sm:$0xff] %vm563, %v552
  %618 = vst.msk [vmem:[%s6 + $0x1b0] sm:$0xff] %vm563, %v553
  %619 = vst.msk [vmem:[%s6 + $0x1b8] sm:$0xff] %vm563, %v554
  %620 = vst.msk [vmem:[%s6 + $0x1c0] sm:$0xff] %vm563, %v555
  %621 = vst.msk [vmem:[%s6 + $0x1c8] sm:$0xff] %vm563, %v556
  %622 = vst.msk [vmem:[%s6 + $0x1d0] sm:$0xff] %vm563, %v557
  %623 = vst.msk [vmem:[%s6 + $0x1d8] sm:$0xff] %vm563, %v558
  %624 = vst.msk [vmem:[%s6 + $0x1e0] sm:$0xff] %vm563, %v559
  %625 = vst.msk [vmem:[%s6 + $0x1e8] sm:$0xff] %vm563, %v560
  %626 = vst.msk [vmem:[%s6 + $0x1f0] sm:$0xff] %vm563, %v561
  %627 = vst.msk [vmem:[%s6 + $0x1f8] sm:$0xff] %vm563, %v562
  // Predicated region
  $region26: #{bottleneck_forward.9} parent=0 // pred_check
    _
  $region27: #{bottleneck_forward.9} parent=0 // pred_check_branch
    %629 = sbr.rel (0) target = $region29
  $region28: #{bottleneck_forward.9} parent=0 // pred_region
    _
  $region29: #{bottleneck_forward.9} parent=0 // pred_fallthru
    _
  // Predicated region
  $region30: #{bottleneck_forward.9} parent=0 // pred_check
    _
  $region31: #{bottleneck_forward.9} parent=0 // pred_check_branch
    %631 = sbr.rel (0) target = $region33
  $region32: #{bottleneck_forward.9} parent=0 // pred_region
    _
  $region33: #{bottleneck_forward.9} parent=0 // pred_fallthru
    _

</llo_original>
